<compile_context>
chip_gen: v6e
topology: v6e:2x2x1
jax: 0.10.0
libtpu: 0.0.40
codegen_flags: <defaults>
</compile_context>

<pallas_src>
import jax
import jax.numpy as jnp
import numpy as np
from jax.experimental import pallas as pl
from jax.experimental.pallas import tpu as pltpu

C_FEAT = 1792         # EfficientNet-B4 feature channels
C_SE = 128            # SE bottleneck channels
H1, H2 = 512, 256     # head hidden sizes
NUM_CLASSES = 2
ATTRS = ['N', 'D', 'G', 'C', 'A', 'H', 'M', 'O']
HEADS_PER_STEP = 2    # 8 heads -> grid=(4,); even step count for v7x megacore balance
BN_EPS = 1e-5


# ----------------------------- Pallas kernels ------------------------------

def se_kernel(pooled_ref, sw1_ref, sb1_ref, sw2_ref, sb2_ref, s_ref):
    """One-shot SE prologue: s = sigmoid(relu(pooled @ W1 + b1) @ W2 + b2).

    Weights are bf16 (native MXU path); only the (B, .) activation rows are cast
    to bf16; accumulation and the stored gate are f32.
    Since the SE output is already 1x1 spatial, adaptive_avg_pool2d(se(x)).flatten(1) == s.
    """
    pooled_bf = pooled_ref[...].astype(jnp.bfloat16)                        # (B, 1792) bf16
    z = jnp.dot(pooled_bf, sw1_ref[...],
                preferred_element_type=jnp.float32) + sb1_ref[...]          # (B, 128) f32
    z = jnp.maximum(z, 0.0)                                                 # ReLU
    t = jnp.dot(z.astype(jnp.bfloat16), sw2_ref[...],
                preferred_element_type=jnp.float32) + sb2_ref[...]          # (B, 1792) f32
    s_ref[...] = jax.nn.sigmoid(t)


def multi_head_kernel(s_ref, w1_ref, b1_ref, w2_ref, b2_ref, w3_ref, b3_ref, out_ref):
    """One grid step == HEADS_PER_STEP attribute heads.

    Per head: dot(1792->512)+bias (BN folded) -> SiLU -> dot(512->256)+bias (BN folded)
              -> SiLU -> dot(256->2)+bias.  Dropout is eval-identity.
    Weights stream in bf16 and are fed to the MXU directly; activations are cast
    to bf16 right before each dot; accumulation is f32.
    """
    s_bf = s_ref[...].astype(jnp.bfloat16)          # (B, 1792) bf16, hoisted once per step
    for hh in range(HEADS_PER_STEP):                # static unroll (tiny)
        h = jnp.dot(s_bf, w1_ref[hh],
                    preferred_element_type=jnp.float32) + b1_ref[hh]        # (B, 512) f32
        h = h * jax.nn.sigmoid(h)                                           # SiLU
        h = jnp.dot(h.astype(jnp.bfloat16), w2_ref[hh],
                    preferred_element_type=jnp.float32) + b2_ref[hh]        # (B, 256) f32
        h = h * jax.nn.sigmoid(h)                                           # SiLU
        out_ref[hh] = jnp.dot(h.astype(jnp.bfloat16), w3_ref[hh],
                              preferred_element_type=jnp.float32) + b3_ref[hh]   # (B, 2) f32


# ------------------------------ wrapper -------------------------------------

def model_forward(x_nchw, p):
    """x_nchw: (B, 1792, H, W) backbone feature map.  Returns dict attr -> (B, 2)."""
    B, C, H, W = x_nchw.shape
    assert C == C_FEAT
    A = len(ATTRS)
    assert A % HEADS_PER_STEP == 0

    # Global average pool (AdaptiveAvgPool2d(1)) as a plain XLA reduction over the
    # contiguous spatial axis -- no NCHW->BHWC transpose needed.
    pooled = jnp.mean(x_nchw.reshape(B, C, H * W), axis=-1)                 # (B, C) f32

    # --- SE prologue: computed exactly once (hoisted out of the per-head grid) ---
    s = pl.pallas_call(
        se_kernel,
        grid=(1,),
        in_specs=[
            pl.BlockSpec((B, C_FEAT), lambda i: (0, 0)),          # pooled (f32)
            pl.BlockSpec((C_FEAT, C_SE), lambda i: (0, 0)),       # SE w1 (bf16)
            pl.BlockSpec((1, C_SE), lambda i: (0, 0)),            # SE b1 (f32)
            pl.BlockSpec((C_SE, C_FEAT), lambda i: (0, 0)),       # SE w2 (bf16)
            pl.BlockSpec((1, C_FEAT), lambda i: (0, 0)),          # SE b2 (f32)
        ],
        out_specs=pl.BlockSpec((B, C_FEAT), lambda i: (0, 0)),
        out_shape=jax.ShapeDtypeStruct((B, C_FEAT), jnp.float32),
        compiler_params=pltpu.CompilerParams(vmem_limit_bytes=16 << 20),
    )(pooled, p['se_w1t'], p['se_b1'], p['se_w2t'], p['se_b2'])

    # --- 8 heads, 2 per grid step; independent -> "parallel" (megacore on v7x) ---
    HP = HEADS_PER_STEP
    heads_out = pl.pallas_call(
        multi_head_kernel,
        grid=(A // HP,),
        in_specs=[
            pl.BlockSpec((B, C_FEAT), lambda a: (0, 0)),                 # s gate (f32), DMA'd once
            pl.BlockSpec((HP, C_FEAT, H1), lambda a: (a, 0, 0)),         # head w1 folded (bf16)
            pl.BlockSpec((HP, 1, H1), lambda a: (a, 0, 0)),              # head b1 folded (f32)
            pl.BlockSpec((HP, H1, H2), lambda a: (a, 0, 0)),             # head w2 folded (bf16)
            pl.BlockSpec((HP, 1, H2), lambda a: (a, 0, 0)),              # head b2 folded (f32)
            pl.BlockSpec((HP, H2, NUM_CLASSES), lambda a: (a, 0, 0)),    # head w3 (bf16)
            pl.BlockSpec((HP, 1, NUM_CLASSES), lambda a: (a, 0, 0)),     # head b3 (f32)
        ],
        out_specs=pl.BlockSpec((HP, B, NUM_CLASSES), lambda a: (a, 0, 0)),
        out_shape=jax.ShapeDtypeStruct((A, B, NUM_CLASSES), jnp.float32),
        compiler_params=pltpu.CompilerParams(
            dimension_semantics=("parallel",),   # 4 independent steps -> shards across v7x cores
            vmem_limit_bytes=32 << 20,           # ~8 MiB actual working set; plenty of headroom
        ),
    )(s, p['h_w1f'], p['h_b1f'], p['h_w2f'], p['h_b2f'], p['h_w3t'], p['h_b3'])

    return {attr: heads_out[i] for i, attr in enumerate(ATTRS)}


# ------------------------- reference (pure JAX) ------------------------------

def model_forward_ref(x_nchw, p):
    """Reference on the *prepared* params (BN folded, weights bf16) using the same
    bf16-activation / f32-accumulation recipe as the kernel."""
    def bdot(a, w):
        return jnp.dot(a.astype(jnp.bfloat16), w, preferred_element_type=jnp.float32)

    pooled = jnp.mean(x_nchw, axis=(2, 3))                                  # (B, C)
    z = jnp.maximum(bdot(pooled, p['se_w1t']) + p['se_b1'], 0.0)
    s = jax.nn.sigmoid(bdot(z, p['se_w2t']) + p['se_b2'])                   # (B, C)
    out = {}
    for i, attr in enumerate(ATTRS):
        h = bdot(s, p['h_w1f'][i]) + p['h_b1f'][i, 0]
        h = h * jax.nn.sigmoid(h)
        h = bdot(h, p['h_w2f'][i]) + p['h_b2f'][i, 0]
        h = h * jax.nn.sigmoid(h)
        out[attr] = bdot(h, p['h_w3t'][i]) + p['h_b3'][i, 0]
    return out


# ------------------------------ params ---------------------------------------

def init_params(key):
    """Raw module parameters, mirroring the PyTorch layers (f32, BN separate)."""
    A = len(ATTRS)
    ks = jax.random.split(key, 16)

    def dense(k, shape, fan_in):
        return (jax.random.normal(k, shape, jnp.float32) / np.sqrt(fan_in)).astype(jnp.float32)

    return {
        # SE: Conv2d(1792->128,1) and Conv2d(128->1792,1), stored transposed (in, out)
        'se_w1t': dense(ks[0], (C_FEAT, C_SE), C_FEAT),
        'se_b1': dense(ks[1], (1, C_SE), C_FEAT),
        'se_w2t': dense(ks[2], (C_SE, C_FEAT), C_SE),
        'se_b2': dense(ks[3], (1, C_FEAT), C_SE),
        # heads: stacked over the 8 attributes, weights stored transposed (in, out)
        'h_w1t': dense(ks[4], (A, C_FEAT, H1), C_FEAT),
        'h_b1': dense(ks[5], (A, 1, H1), C_FEAT),
        'h_w2t': dense(ks[6], (A, H1, H2), H1),
        'h_b2': dense(ks[7], (A, 1, H2), H1),
        'h_w3t': dense(ks[8], (A, H2, NUM_CLASSES), H2),
        'h_b3': dense(ks[9], (A, 1, NUM_CLASSES), H2),
        # BatchNorm1d params stacked as [gamma, beta, running_mean, running_var]
        'h_bn1': jnp.stack([
            1.0 + 0.1 * jax.random.normal(ks[10], (A, H1), jnp.float32),
            0.1 * jax.random.normal(ks[11], (A, H1), jnp.float32),
            0.1 * jax.random.normal(ks[12], (A, H1), jnp.float32),
            1.0 + 0.1 * jax.random.uniform(ks[13], (A, H1), jnp.float32),
        ], axis=1),
        'h_bn2': jnp.stack([
            1.0 + 0.1 * jax.random.normal(ks[14], (A, H2), jnp.float32),
            0.1 * jax.random.normal(ks[15], (A, H2), jnp.float32),
            jnp.zeros((A, H2), jnp.float32),
            jnp.ones((A, H2), jnp.float32),
        ], axis=1),
    }


def prepare_params(raw):
    """Fold eval-mode BatchNorm1d into the preceding Linear (exact transform) and
    cast the streamed weight matrices to bf16.  Biases stay f32."""
    p = {
        'se_w1t': raw['se_w1t'].astype(jnp.bfloat16),
        'se_b1': raw['se_b1'],
        'se_w2t': raw['se_w2t'].astype(jnp.bfloat16),
        'se_b2': raw['se_b2'],
        'h_w3t': raw['h_w3t'].astype(jnp.bfloat16),
        'h_b3': raw['h_b3'],
    }
    g1, bt1, rm1, rv1 = (raw['h_bn1'][:, i] for i in range(4))              # each (A, H1)
    s1 = g1 * jax.lax.rsqrt(rv1 + BN_EPS)
    p['h_w1f'] = (raw['h_w1t'] * s1[:, None, :]).astype(jnp.bfloat16)
    p['h_b1f'] = ((raw['h_b1'][:, 0] - rm1) * s1 + bt1)[:, None, :]

    g2, bt2, rm2, rv2 = (raw['h_bn2'][:, i] for i in range(4))              # each (A, H2)
    s2 = g2 * jax.lax.rsqrt(rv2 + BN_EPS)
    p['h_w2f'] = (raw['h_w2t'] * s2[:, None, :]).astype(jnp.bfloat16)
    p['h_b2f'] = ((raw['h_b2'][:, 0] - rm2) * s2 + bt2)[:, None, :]
    return p


# ------------------------------- main -----------------------------------------

if __name__ == "__main__":
    key = jax.random.PRNGKey(0)
    kx, kp = jax.random.split(key)

    # Small, consistent input: the EfficientNet-B4 feature map for a 2-image batch
    # (224x224 input -> 7x7x1792 features).
    B, Hs, Ws = 2, 7, 7
    x = jax.random.normal(kx, (B, C_FEAT, Hs, Ws), jnp.float32)
    params = prepare_params(init_params(kp))

    out = jax.jit(model_forward)(x, params)
    out = jax.block_until_ready(out)

    ref = model_forward_ref(x, params)
    for attr in ATTRS:
        assert out[attr].shape == (B, NUM_CLASSES)
        np.testing.assert_allclose(np.asarray(out[attr]), np.asarray(ref[attr]),
                                   rtol=2e-3, atol=2e-3)

    print("KERNEL_OK")
</pallas_src>

<mosaic_0001>
module attributes {stable_mosaic.version = 11 : i64} {
  func.func @se_kernel(%arg0: i32, %arg1: memref<2x1792xf32, #tpu.memory_space<vmem>>, %arg2: memref<1792x128xbf16, #tpu.memory_space<vmem>>, %arg3: memref<1x128xf32, #tpu.memory_space<vmem>>, %arg4: memref<128x1792xbf16, #tpu.memory_space<vmem>>, %arg5: memref<1x1792xf32, #tpu.memory_space<vmem>>, %arg6: memref<2x1792xf32, #tpu.memory_space<vmem>>) attributes {dimension_semantics = [#tpu.dimension_semantics<arbitrary>], iteration_bounds = array<i64: 1>, scalar_prefetch = 0 : i64, scratch_operands = 0 : i64, tpu.core_type = #tpu.core_type<tc>, window_params = [{pipeline_mode = #tpu.pipeline_mode<synchronous>, transform_indices = @transform_0, window_bounds = array<i64: 2, 1792>}, {pipeline_mode = #tpu.pipeline_mode<synchronous>, transform_indices = @transform_1, window_bounds = array<i64: 1792, 128>}, {pipeline_mode = #tpu.pipeline_mode<synchronous>, transform_indices = @transform_2, window_bounds = array<i64: 1, 128>}, {pipeline_mode = #tpu.pipeline_mode<synchronous>, transform_indices = @transform_3, window_bounds = array<i64: 128, 1792>}, {pipeline_mode = #tpu.pipeline_mode<synchronous>, transform_indices = @transform_4, window_bounds = array<i64: 1, 1792>}, {pipeline_mode = #tpu.pipeline_mode<synchronous>, transform_indices = @transform_5, window_bounds = array<i64: 2, 1792>}]} {
    %c0 = arith.constant 0 : index
    %c0_0 = arith.constant 0 : index
    %0 = vector.load %arg1[%c0, %c0_0] : memref<2x1792xf32, #tpu.memory_space<vmem>>, vector<2x1792xf32>
    %1 = arith.truncf %0 : vector<2x1792xf32> to vector<2x1792xbf16>
    %c0_1 = arith.constant 0 : index
    %c0_2 = arith.constant 0 : index
    %2 = vector.load %arg2[%c0_1, %c0_2] : memref<1792x128xbf16, #tpu.memory_space<vmem>>, vector<1792x128xbf16>
    %cst = arith.constant dense<0.000000e+00> : vector<2x128xf32>
    %3 = tpu.matmul %1, %2, %cst {dimension_numbers = #tpu.dot_dimension_numbers<[1], [0], [0], [1], [0, 0, 1, 1], [], []>} : vector<2x1792xbf16>, vector<1792x128xbf16>, vector<2x128xf32> -> vector<2x128xf32>
    %c0_3 = arith.constant 0 : index
    %c0_4 = arith.constant 0 : index
    %4 = vector.load %arg3[%c0_3, %c0_4] : memref<1x128xf32, #tpu.memory_space<vmem>>, vector<1x128xf32>
    %5 = vector.broadcast %4 : vector<1x128xf32> to vector<2x128xf32>
    %6 = arith.addf %3, %5 : vector<2x128xf32>
    %cst_5 = arith.constant 0.000000e+00 : f32
    %7 = vector.broadcast %cst_5 : f32 to vector<2x128xf32>
    %8 = arith.maximumf %6, %7 : vector<2x128xf32>
    %9 = arith.truncf %8 : vector<2x128xf32> to vector<2x128xbf16>
    %c0_6 = arith.constant 0 : index
    %c0_7 = arith.constant 0 : index
    %10 = vector.load %arg4[%c0_6, %c0_7] : memref<128x1792xbf16, #tpu.memory_space<vmem>>, vector<128x1792xbf16>
    %cst_8 = arith.constant dense<0.000000e+00> : vector<2x1792xf32>
    %11 = tpu.matmul %9, %10, %cst_8 {dimension_numbers = #tpu.dot_dimension_numbers<[1], [0], [0], [1], [0, 0, 1, 1], [], []>} : vector<2x128xbf16>, vector<128x1792xbf16>, vector<2x1792xf32> -> vector<2x1792xf32>
    %c0_9 = arith.constant 0 : index
    %c0_10 = arith.constant 0 : index
    %12 = vector.load %arg5[%c0_9, %c0_10] : memref<1x1792xf32, #tpu.memory_space<vmem>>, vector<1x1792xf32>
    %13 = vector.broadcast %12 : vector<1x1792xf32> to vector<2x1792xf32>
    %14 = arith.addf %11, %13 : vector<2x1792xf32>
    %15 = arith.negf %14 : vector<2x1792xf32>
    %16 = math.exp %15 : vector<2x1792xf32>
    %cst_11 = arith.constant 1.000000e+00 : f32
    %17 = vector.broadcast %cst_11 : f32 to vector<2x1792xf32>
    %18 = arith.addf %17, %16 : vector<2x1792xf32>
    %19 = arith.divf %17, %18 : vector<2x1792xf32>
    %c0_12 = arith.constant 0 : index
    %c0_13 = arith.constant 0 : index
    %20 = vector.load %arg6[%c0_12, %c0_13] : memref<2x1792xf32, #tpu.memory_space<vmem>>, vector<2x1792xf32>
    tpu.vector_store %arg6[%c0_12, %c0_13], %19 {strides = array<i32>} : memref<2x1792xf32, #tpu.memory_space<vmem>>, vector<2x1792xf32>,
    return
  }
  func.func @transform_0(%arg0: i32) -> (i32, i32) {
    %c0_i32 = arith.constant 0 : i32
    %c0_i32_0 = arith.constant 0 : i32
    %c0_i32_1 = arith.constant 0 : i32
    return %c0_i32, %c0_i32_0 : i32, i32
  }
  func.func @transform_1(%arg0: i32) -> (i32, i32) {
    %c0_i32 = arith.constant 0 : i32
    %c0_i32_0 = arith.constant 0 : i32
    %c0_i32_1 = arith.constant 0 : i32
    return %c0_i32, %c0_i32_0 : i32, i32
  }
  func.func @transform_2(%arg0: i32) -> (i32, i32) {
    %c0_i32 = arith.constant 0 : i32
    %c0_i32_0 = arith.constant 0 : i32
    %c0_i32_1 = arith.constant 0 : i32
    return %c0_i32, %c0_i32_0 : i32, i32
  }
  func.func @transform_3(%arg0: i32) -> (i32, i32) {
    %c0_i32 = arith.constant 0 : i32
    %c0_i32_0 = arith.constant 0 : i32
    %c0_i32_1 = arith.constant 0 : i32
    return %c0_i32, %c0_i32_0 : i32, i32
  }
  func.func @transform_4(%arg0: i32) -> (i32, i32) {
    %c0_i32 = arith.constant 0 : i32
    %c0_i32_0 = arith.constant 0 : i32
    %c0_i32_1 = arith.constant 0 : i32
    return %c0_i32, %c0_i32_0 : i32, i32
  }
  func.func @transform_5(%arg0: i32) -> (i32, i32) {
    %c0_i32 = arith.constant 0 : i32
    %c0_i32_0 = arith.constant 0 : i32
    %c0_i32_1 = arith.constant 0 : i32
    return %c0_i32, %c0_i32_0 : i32, i32
  }
}

module attributes {stable_mosaic.version = 11 : i64} {
  func.func @multi_head_kernel(%arg0: i32, %arg1: memref<2x1792xf32, #tpu.memory_space<vmem>>, %arg2: memref<2x1792x512xbf16, #tpu.memory_space<vmem>>, %arg3: memref<2x1x512xf32, #tpu.memory_space<vmem>>, %arg4: memref<2x512x256xbf16, #tpu.memory_space<vmem>>, %arg5: memref<2x1x256xf32, #tpu.memory_space<vmem>>, %arg6: memref<2x256x2xbf16, #tpu.memory_space<vmem>>, %arg7: memref<2x1x2xf32, #tpu.memory_space<vmem>>, %arg8: memref<2x2x2xf32, #tpu.memory_space<vmem>>) attributes {dimension_semantics = [#tpu.dimension_semantics<parallel>], iteration_bounds = array<i64: 4>, scalar_prefetch = 0 : i64, scratch_operands = 0 : i64, tpu.core_type = #tpu.core_type<tc>, window_params = [{pipeline_mode = #tpu.pipeline_mode<synchronous>, transform_indices = @transform_0, window_bounds = array<i64: 2, 1792>}, {transform_indices = @transform_1, window_bounds = array<i64: 2, 1792, 512>}, {transform_indices = @transform_2, window_bounds = array<i64: 2, 1, 512>}, {transform_indices = @transform_3, window_bounds = array<i64: 2, 512, 256>}, {transform_indices = @transform_4, window_bounds = array<i64: 2, 1, 256>}, {transform_indices = @transform_5, window_bounds = array<i64: 2, 256, 2>}, {transform_indices = @transform_6, window_bounds = array<i64: 2, 1, 2>}, {transform_indices = @transform_7, window_bounds = array<i64: 2, 2, 2>}]} {
    %c0 = arith.constant 0 : index
    %c0_0 = arith.constant 0 : index
    %0 = vector.load %arg1[%c0, %c0_0] : memref<2x1792xf32, #tpu.memory_space<vmem>>, vector<2x1792xf32>
    %1 = arith.truncf %0 : vector<2x1792xf32> to vector<2x1792xbf16>
    %c0_1 = arith.constant 0 : index
    %c0_2 = arith.constant 0 : index
    %c0_3 = arith.constant 0 : index
    %2 = vector.load %arg2[%c0_1, %c0_2, %c0_3] : memref<2x1792x512xbf16, #tpu.memory_space<vmem>>, vector<1x1792x512xbf16>
    %3 = vector.shape_cast %2 : vector<1x1792x512xbf16> to vector<1792x512xbf16>
    %cst = arith.constant dense<0.000000e+00> : vector<2x512xf32>
    %4 = tpu.matmul %1, %3, %cst {dimension_numbers = #tpu.dot_dimension_numbers<[1], [0], [0], [1], [0, 0, 1, 1], [], []>} : vector<2x1792xbf16>, vector<1792x512xbf16>, vector<2x512xf32> -> vector<2x512xf32>
    %c0_4 = arith.constant 0 : index
    %c0_5 = arith.constant 0 : index
    %c0_6 = arith.constant 0 : index
    %5 = vector.load %arg3[%c0_4, %c0_5, %c0_6] : memref<2x1x512xf32, #tpu.memory_space<vmem>>, vector<1x1x512xf32>
    %6 = vector.shape_cast %5 : vector<1x1x512xf32> to vector<1x512xf32>
    %7 = vector.broadcast %6 : vector<1x512xf32> to vector<2x512xf32>
    %8 = arith.addf %4, %7 : vector<2x512xf32>
    %9 = arith.negf %8 : vector<2x512xf32>
    %10 = math.exp %9 : vector<2x512xf32>
    %cst_7 = arith.constant 1.000000e+00 : f32
    %11 = vector.broadcast %cst_7 : f32 to vector<2x512xf32>
    %12 = arith.addf %11, %10 : vector<2x512xf32>
    %13 = arith.divf %11, %12 : vector<2x512xf32>
    %14 = arith.mulf %8, %13 : vector<2x512xf32>
    %15 = arith.truncf %14 : vector<2x512xf32> to vector<2x512xbf16>
    %c0_8 = arith.constant 0 : index
    %c0_9 = arith.constant 0 : index
    %c0_10 = arith.constant 0 : index
    %16 = vector.load %arg4[%c0_8, %c0_9, %c0_10] : memref<2x512x256xbf16, #tpu.memory_space<vmem>>, vector<1x512x256xbf16>
    %17 = vector.shape_cast %16 : vector<1x512x256xbf16> to vector<512x256xbf16>
    %cst_11 = arith.constant dense<0.000000e+00> : vector<2x256xf32>
    %18 = tpu.matmul %15, %17, %cst_11 {dimension_numbers = #tpu.dot_dimension_numbers<[1], [0], [0], [1], [0, 0, 1, 1], [], []>} : vector<2x512xbf16>, vector<512x256xbf16>, vector<2x256xf32> -> vector<2x256xf32>
    %c0_12 = arith.constant 0 : index
    %c0_13 = arith.constant 0 : index
    %c0_14 = arith.constant 0 : index
    %19 = vector.load %arg5[%c0_12, %c0_13, %c0_14] : memref<2x1x256xf32, #tpu.memory_space<vmem>>, vector<1x1x256xf32>
    %20 = vector.shape_cast %19 : vector<1x1x256xf32> to vector<1x256xf32>
    %21 = vector.broadcast %20 : vector<1x256xf32> to vector<2x256xf32>
    %22 = arith.addf %18, %21 : vector<2x256xf32>
    %23 = arith.negf %22 : vector<2x256xf32>
    %24 = math.exp %23 : vector<2x256xf32>
    %cst_15 = arith.constant 1.000000e+00 : f32
    %25 = vector.broadcast %cst_15 : f32 to vector<2x256xf32>
    %26 = arith.addf %25, %24 : vector<2x256xf32>
    %27 = arith.divf %25, %26 : vector<2x256xf32>
    %28 = arith.mulf %22, %27 : vector<2x256xf32>
    %29 = arith.truncf %28 : vector<2x256xf32> to vector<2x256xbf16>
    %c0_16 = arith.constant 0 : index
    %c0_17 = arith.constant 0 : index
    %c0_18 = arith.constant 0 : index
    %30 = vector.load %arg6[%c0_16, %c0_17, %c0_18] : memref<2x256x2xbf16, #tpu.memory_space<vmem>>, vector<1x256x2xbf16>
    %31 = vector.shape_cast %30 : vector<1x256x2xbf16> to vector<256x2xbf16>
    %cst_19 = arith.constant dense<0.000000e+00> : vector<2x2xf32>
    %32 = tpu.matmul %29, %31, %cst_19 {dimension_numbers = #tpu.dot_dimension_numbers<[1], [0], [0], [1], [0, 0, 1, 1], [], []>} : vector<2x256xbf16>, vector<256x2xbf16>, vector<2x2xf32> -> vector<2x2xf32>
    %c0_20 = arith.constant 0 : index
    %c0_21 = arith.constant 0 : index
    %c0_22 = arith.constant 0 : index
    %33 = vector.load %arg7[%c0_20, %c0_21, %c0_22] : memref<2x1x2xf32, #tpu.memory_space<vmem>>, vector<1x1x2xf32>
    %34 = vector.shape_cast %33 : vector<1x1x2xf32> to vector<1x2xf32>
    %35 = vector.broadcast %34 : vector<1x2xf32> to vector<2x2xf32>
    %36 = arith.addf %32, %35 : vector<2x2xf32>
    %c0_23 = arith.constant 0 : index
    %c0_24 = arith.constant 0 : index
    %c0_25 = arith.constant 0 : index
    %37 = vector.load %arg8[%c0_23, %c0_24, %c0_25] : memref<2x2x2xf32, #tpu.memory_space<vmem>>, vector<1x2x2xf32>
    %38 = vector.shape_cast %37 : vector<1x2x2xf32> to vector<2x2xf32>
    %39 = vector.shape_cast %36 : vector<2x2xf32> to vector<1x2x2xf32>
    tpu.vector_store %arg8[%c0_23, %c0_24, %c0_25], %39 {strides = array<i32>} : memref<2x2x2xf32, #tpu.memory_space<vmem>>, vector<1x2x2xf32>,
    %c1 = arith.constant 1 : index
    %c0_26 = arith.constant 0 : index
    %c0_27 = arith.constant 0 : index
    %40 = vector.load %arg2[%c1, %c0_26, %c0_27] : memref<2x1792x512xbf16, #tpu.memory_space<vmem>>, vector<1x1792x512xbf16>
    %41 = vector.shape_cast %40 : vector<1x1792x512xbf16> to vector<1792x512xbf16>
    %cst_28 = arith.constant dense<0.000000e+00> : vector<2x512xf32>
    %42 = tpu.matmul %1, %41, %cst_28 {dimension_numbers = #tpu.dot_dimension_numbers<[1], [0], [0], [1], [0, 0, 1, 1], [], []>} : vector<2x1792xbf16>, vector<1792x512xbf16>, vector<2x512xf32> -> vector<2x512xf32>
    %c1_29 = arith.constant 1 : index
    %c0_30 = arith.constant 0 : index
    %c0_31 = arith.constant 0 : index
    %43 = vector.load %arg3[%c1_29, %c0_30, %c0_31] : memref<2x1x512xf32, #tpu.memory_space<vmem>>, vector<1x1x512xf32>
    %44 = vector.shape_cast %43 : vector<1x1x512xf32> to vector<1x512xf32>
    %45 = vector.broadcast %44 : vector<1x512xf32> to vector<2x512xf32>
    %46 = arith.addf %42, %45 : vector<2x512xf32>
    %47 = arith.negf %46 : vector<2x512xf32>
    %48 = math.exp %47 : vector<2x512xf32>
    %cst_32 = arith.constant 1.000000e+00 : f32
    %49 = vector.broadcast %cst_32 : f32 to vector<2x512xf32>
    %50 = arith.addf %49, %48 : vector<2x512xf32>
    %51 = arith.divf %49, %50 : vector<2x512xf32>
    %52 = arith.mulf %46, %51 : vector<2x512xf32>
    %53 = arith.truncf %52 : vector<2x512xf32> to vector<2x512xbf16>
    %c1_33 = arith.constant 1 : index
    %c0_34 = arith.constant 0 : index
    %c0_35 = arith.constant 0 : index
    %54 = vector.load %arg4[%c1_33, %c0_34, %c0_35] : memref<2x512x256xbf16, #tpu.memory_space<vmem>>, vector<1x512x256xbf16>
    %55 = vector.shape_cast %54 : vector<1x512x256xbf16> to vector<512x256xbf16>
    %cst_36 = arith.constant dense<0.000000e+00> : vector<2x256xf32>
    %56 = tpu.matmul %53, %55, %cst_36 {dimension_numbers = #tpu.dot_dimension_numbers<[1], [0], [0], [1], [0, 0, 1, 1], [], []>} : vector<2x512xbf16>, vector<512x256xbf16>, vector<2x256xf32> -> vector<2x256xf32>
    %c1_37 = arith.constant 1 : index
    %c0_38 = arith.constant 0 : index
    %c0_39 = arith.constant 0 : index
    %57 = vector.load %arg5[%c1_37, %c0_38, %c0_39] : memref<2x1x256xf32, #tpu.memory_space<vmem>>, vector<1x1x256xf32>
    %58 = vector.shape_cast %57 : vector<1x1x256xf32> to vector<1x256xf32>
    %59 = vector.broadcast %58 : vector<1x256xf32> to vector<2x256xf32>
    %60 = arith.addf %56, %59 : vector<2x256xf32>
    %61 = arith.negf %60 : vector<2x256xf32>
    %62 = math.exp %61 : vector<2x256xf32>
    %cst_40 = arith.constant 1.000000e+00 : f32
    %63 = vector.broadcast %cst_40 : f32 to vector<2x256xf32>
    %64 = arith.addf %63, %62 : vector<2x256xf32>
    %65 = arith.divf %63, %64 : vector<2x256xf32>
    %66 = arith.mulf %60, %65 : vector<2x256xf32>
    %67 = arith.truncf %66 : vector<2x256xf32> to vector<2x256xbf16>
    %c1_41 = arith.constant 1 : index
    %c0_42 = arith.constant 0 : index
    %c0_43 = arith.constant 0 : index
    %68 = vector.load %arg6[%c1_41, %c0_42, %c0_43] : memref<2x256x2xbf16, #tpu.memory_space<vmem>>, vector<1x256x2xbf16>
    %69 = vector.shape_cast %68 : vector<1x256x2xbf16> to vector<256x2xbf16>
    %cst_44 = arith.constant dense<0.000000e+00> : vector<2x2xf32>
    %70 = tpu.matmul %67, %69, %cst_44 {dimension_numbers = #tpu.dot_dimension_numbers<[1], [0], [0], [1], [0, 0, 1, 1], [], []>} : vector<2x256xbf16>, vector<256x2xbf16>, vector<2x2xf32> -> vector<2x2xf32>
    %c1_45 = arith.constant 1 : index
    %c0_46 = arith.constant 0 : index
    %c0_47 = arith.constant 0 : index
    %71 = vector.load %arg7[%c1_45, %c0_46, %c0_47] : memref<2x1x2xf32, #tpu.memory_space<vmem>>, vector<1x1x2xf32>
    %72 = vector.shape_cast %71 : vector<1x1x2xf32> to vector<1x2xf32>
    %73 = vector.broadcast %72 : vector<1x2xf32> to vector<2x2xf32>
    %74 = arith.addf %70, %73 : vector<2x2xf32>
    %c1_48 = arith.constant 1 : index
    %c0_49 = arith.constant 0 : index
    %c0_50 = arith.constant 0 : index
    %75 = vector.load %arg8[%c1_48, %c0_49, %c0_50] : memref<2x2x2xf32, #tpu.memory_space<vmem>>, vector<1x2x2xf32>
    %76 = vector.shape_cast %75 : vector<1x2x2xf32> to vector<2x2xf32>
    %77 = vector.shape_cast %74 : vector<2x2xf32> to vector<1x2x2xf32>
    tpu.vector_store %arg8[%c1_48, %c0_49, %c0_50], %77 {strides = array<i32>} : memref<2x2x2xf32, #tpu.memory_space<vmem>>, vector<1x2x2xf32>,
    return
  }
  func.func @transform_0(%arg0: i32) -> (i32, i32) {
    %c0_i32 = arith.constant 0 : i32
    %c0_i32_0 = arith.constant 0 : i32
    %c0_i32_1 = arith.constant 0 : i32
    return %c0_i32, %c0_i32_0 : i32, i32
  }
  func.func @transform_1(%arg0: i32) -> (i32, i32, i32) {
    %c0_i32 = arith.constant 0 : i32
    %c0_i32_0 = arith.constant 0 : i32
    %c0_i32_1 = arith.constant 0 : i32
    return %arg0, %c0_i32, %c0_i32_0 : i32, i32, i32
  }
  func.func @transform_2(%arg0: i32) -> (i32, i32, i32) {
    %c0_i32 = arith.constant 0 : i32
    %c0_i32_0 = arith.constant 0 : i32
    %c0_i32_1 = arith.constant 0 : i32
    return %arg0, %c0_i32, %c0_i32_0 : i32, i32, i32
  }
  func.func @transform_3(%arg0: i32) -> (i32, i32, i32) {
    %c0_i32 = arith.constant 0 : i32
    %c0_i32_0 = arith.constant 0 : i32
    %c0_i32_1 = arith.constant 0 : i32
    return %arg0, %c0_i32, %c0_i32_0 : i32, i32, i32
  }
  func.func @transform_4(%arg0: i32) -> (i32, i32, i32) {
    %c0_i32 = arith.constant 0 : i32
    %c0_i32_0 = arith.constant 0 : i32
    %c0_i32_1 = arith.constant 0 : i32
    return %arg0, %c0_i32, %c0_i32_0 : i32, i32, i32
  }
  func.func @transform_5(%arg0: i32) -> (i32, i32, i32) {
    %c0_i32 = arith.constant 0 : i32
    %c0_i32_0 = arith.constant 0 : i32
    %c0_i32_1 = arith.constant 0 : i32
    return %arg0, %c0_i32, %c0_i32_0 : i32, i32, i32
  }
  func.func @transform_6(%arg0: i32) -> (i32, i32, i32) {
    %c0_i32 = arith.constant 0 : i32
    %c0_i32_0 = arith.constant 0 : i32
    %c0_i32_1 = arith.constant 0 : i32
    return %arg0, %c0_i32, %c0_i32_0 : i32, i32, i32
  }
  func.func @transform_7(%arg0: i32) -> (i32, i32, i32) {
    %c0_i32 = arith.constant 0 : i32
    %c0_i32_0 = arith.constant 0 : i32
    %c0_i32_1 = arith.constant 0 : i32
    return %arg0, %c0_i32, %c0_i32_0 : i32, i32, i32
  }
}

</mosaic_0001>

<llo_original>
// kernel: model_forward.2
$region0: #{model_forward.2}
  #allocation0 [shape = 'u32[]', space=smem, size = 0x4, offset = 0x4, fixed_abs, tag = 'smem constant byte address 0x4 - core index']
  #allocation1 [shape = 'u32[144,128]{1,0:T(1,128)}', space=vmem, size = 0x12000, scoped, tag = 'internal scratch']
  %s0 = inlined_call_operand.vmem [shape: f32[2,1792], index: 0, kind: input, shape index: {}]
  %s1 = inlined_call_operand.hbm [shape: bf16[1792,128], index: 1, kind: input, shape index: {}]
  %s2 = inlined_call_operand.hbm [shape: f32[1,128], index: 2, kind: input, shape index: {}]
  %s3 = inlined_call_operand.hbm [shape: bf16[128,1792], index: 3, kind: input, shape index: {}]
  %s4 = inlined_call_operand.hbm [shape: f32[1,1792], index: 4, kind: input, shape index: {}]
  %s5 = inlined_call_operand.vmem [shape: f32[2,1792], index: 5, kind: output, shape index: {}]
  %s6 = sld [smem:[#allocation0]]
  $region46: #{model_forward.2} parent=0
    _
  %s8 = ssub.s32 1, %s6
  %s9 = scalar_select 0, %s8, %s6
  $region1: #{model_forward.2} parent=0
    #allocation2 [shape = 'u8[458752]{0}', space=vmem, size = 0x70000, scoped, tag = 'input window, operand 1, single buffered']
    #allocation3 [shape = 's32[1]{0}', space=sflag, size = 0x4, scoped, tag = 'scoped memory for model_forward.2']
    #allocation4 [shape = 'u8[512]{0}', space=vmem, size = 0x400, scoped, tag = 'input window, operand 2, single buffered']
    #allocation5 [shape = 's32[1]{0}', space=sflag, size = 0x4, scoped, tag = 'scoped memory for model_forward.2']
    #allocation6 [shape = 'u8[458752]{0}', space=vmem, size = 0x70000, scoped, tag = 'input window, operand 3, single buffered']
    #allocation7 [shape = 'u8[7168]{0}', space=vmem, size = 0x1c00, scoped, tag = 'input window, operand 4, single buffered']
    #allocation8 [shape = 's32[1]{0}', space=sflag, size = 0x4, scoped, tag = 'scoped memory for model_forward.2']
    %10 = vsyncpa [#allocation3], 0
    %11 = vsyncpa [#allocation5], 0
    %12 = vsyncpa [#allocation8], 0
    // Predicated region
    $region2: #{model_forward.2} parent=1 // pred_check
      _
    $region3: #{model_forward.2} parent=1 // pred_check_branch
      %14 = sbr.rel (0) target = $region5
    $region4: #{model_forward.2} parent=1 // pred_region
      _
    $region5: #{model_forward.2} parent=1 // pred_fallthru
      _
    // Predicated region
    $region6: #{model_forward.2} parent=1 // pred_check
      _
    $region7: #{model_forward.2} parent=1 // pred_check_branch
      %16 = sbr.rel (0) target = $region9
    $region8: #{model_forward.2} parent=1 // pred_region
      %s18 = ssub.s32 14336, 14336
      %19 = vsyncadd [#allocation3], %s18
      %s20 = sshll.u32 [#allocation2], 4
      %s21 = int_to_ptr.vmem [resolvable:$true] %s20
      %26 = dma.hbm_to_vmem [thread:$0]  %s1, 14336, %s21, [#allocation3], 64, 64, 4
    $region9: #{model_forward.2} parent=1 // pred_fallthru
      _
    // Predicated region
    $region10: #{model_forward.2} parent=1 // pred_check
      _
    $region11: #{model_forward.2} parent=1 // pred_check_branch
      %28 = sbr.rel (0) target = $region13
    $region12: #{model_forward.2} parent=1 // pred_region
      %s30 = ssub.s32 16, 16
      %31 = vsyncadd [#allocation5], %s30
      %s33 = sshll.u32 [#allocation4], 4
      %s34 = int_to_ptr.vmem [resolvable:$true] %s33
      %36 = dma.hbm_to_vmem [thread:$0]  %s2, 16, %s34, [#allocation5]
    $region13: #{model_forward.2} parent=1 // pred_fallthru
      _
    // Predicated region
    $region14: #{model_forward.2} parent=1 // pred_check
      _
    $region15: #{model_forward.2} parent=1 // pred_check_branch
      %38 = sbr.rel (0) target = $region17
    $region16: #{model_forward.2} parent=1 // pred_region
      %s40 = ssub.s32 14336, 14336
      %41 = vsyncadd [#allocation5], %s40
      %s42 = sshll.u32 [#allocation6], 4
      %s43 = int_to_ptr.vmem [resolvable:$true] %s42
      %48 = dma.hbm_to_vmem [thread:$0]  %s3, 14336, %s43, [#allocation5], 896, 896, 56
    $region17: #{model_forward.2} parent=1 // pred_fallthru
      _
    // Predicated region
    $region18: #{model_forward.2} parent=1 // pred_check
      _
    $region19: #{model_forward.2} parent=1 // pred_check_branch
      %50 = sbr.rel (0) target = $region21
    $region20: #{model_forward.2} parent=1 // pred_region
      %s52 = ssub.s32 224, 224
      %53 = vsyncadd [#allocation8], %s52
      %s55 = sshll.u32 [#allocation7], 4
      %s56 = int_to_ptr.vmem [resolvable:$true] %s55
      %58 = dma.hbm_to_vmem [thread:$0]  %s4, 224, %s56, [#allocation8]
    $region21: #{model_forward.2} parent=1 // pred_fallthru
      _
    // Predicated region
    $region22: #{model_forward.2} parent=1 // pred_check
      _
    $region23: #{model_forward.2} parent=1 // pred_check_branch
      %60 = sbr.rel (0) target = $region25
    $region24: #{model_forward.2} parent=1 // pred_region
      %61 = dma.done [#allocation3], 14336
    $region25: #{model_forward.2} parent=1 // pred_fallthru
      _
    // Predicated region
    $region26: #{model_forward.2} parent=1 // pred_check
      _
    $region27: #{model_forward.2} parent=1 // pred_check_branch
      %63 = sbr.rel (0) target = $region29
    $region28: #{model_forward.2} parent=1 // pred_region
      %64 = dma.done [#allocation5], 16
    $region29: #{model_forward.2} parent=1 // pred_fallthru
      _
    // Predicated region
    $region30: #{model_forward.2} parent=1 // pred_check
      _
    $region31: #{model_forward.2} parent=1 // pred_check_branch
      %66 = sbr.rel (0) target = $region33
    $region32: #{model_forward.2} parent=1 // pred_region
      %67 = dma.done [#allocation5], 14336
    $region33: #{model_forward.2} parent=1 // pred_fallthru
      _
    // Predicated region
    $region34: #{model_forward.2} parent=1 // pred_check
      _
    $region35: #{model_forward.2} parent=1 // pred_check_branch
      %69 = sbr.rel (0) target = $region37
    $region36: #{model_forward.2} parent=1 // pred_region
      %70 = dma.done [#allocation8], 224
    $region37: #{model_forward.2} parent=1 // pred_fallthru
      _
    %v72 = vld [vmem:[%s0] sm:$0xff]
    %v73 = vld [vmem:[%s0 + $0x8] sm:$0xff]
    %v74 = vld [vmem:[%s0 + $0x10] sm:$0xff]
    %v75 = vld [vmem:[%s0 + $0x18] sm:$0xf]
    %v80 = vcombine.high %v72, %v72
    %v82 = vunpack.c.l.s4 1983009808
    %v83 = vunpack.c.0.s8 %v82
    %v84 = vlaneseq
    %v85 = vshrl.u32 %v84, 7
    %v86 = vsub.s32 %v83, %v85
    %v87 = vrot.slane %v72, %v86
    %v89 = vunpack.c.l.s4 1983009808
    %v90 = vunpack.c.0.s8 %v89
    %v91 = vlaneseq
    %v92 = vshrl.u32 %v91, 7
    %v93 = vsub.s32 %v90, %v92
    %v94 = vrot.slane %v80, %v93
    %v95 = vcombine.high %v87, %v87
    %v96 = vcombine.high %v94, %v94
    %v97 = vcombine.high %v73, %v73
    %v99 = vunpack.c.l.s4 1983009808
    %v100 = vunpack.c.0.s8 %v99
    %v101 = vlaneseq
    %v102 = vshrl.u32 %v101, 7
    %v103 = vsub.s32 %v100, %v102
    %v104 = vrot.slane %v73, %v103
    %v106 = vunpack.c.l.s4 1983009808
    %v107 = vunpack.c.0.s8 %v106
    %v108 = vlaneseq
    %v109 = vshrl.u32 %v108, 7
    %v110 = vsub.s32 %v107, %v109
    %v111 = vrot.slane %v97, %v110
    %v112 = vcombine.high %v104, %v104
    %v113 = vcombine.high %v111, %v111
    %v114 = vcombine.high %v74, %v74
    %v116 = vunpack.c.l.s4 1983009808
    %v117 = vunpack.c.0.s8 %v116
    %v118 = vlaneseq
    %v119 = vshrl.u32 %v118, 7
    %v120 = vsub.s32 %v117, %v119
    %v121 = vrot.slane %v74, %v120
    %v123 = vunpack.c.l.s4 1983009808
    %v124 = vunpack.c.0.s8 %v123
    %v125 = vlaneseq
    %v126 = vshrl.u32 %v125, 7
    %v127 = vsub.s32 %v124, %v126
    %v128 = vrot.slane %v114, %v127
    %v129 = vcombine.high %v121, %v121
    %v130 = vcombine.high %v128, %v128
    %v132 = vunpack.c.l.s4 1983009808
    %v133 = vunpack.c.0.s8 %v132
    %v134 = vlaneseq
    %v135 = vshrl.u32 %v134, 7
    %v136 = vsub.s32 %v133, %v135
    %v137 = vrot.slane %v75, %v136
    %v138 = vcombine.high %v137, %v137
    %v153 = vpack.c.bf16 %v87, %v87
    %v154 = vpack.c.bf16 %v95, %v95
    %v155 = vpack.c.bf16 %v94, %v94
    %v156 = vpack.c.bf16 %v96, %v96
    %v157 = vpack.c.bf16 %v104, %v104
    %v158 = vpack.c.bf16 %v112, %v112
    %v159 = vpack.c.bf16 %v111, %v111
    %v160 = vpack.c.bf16 %v113, %v113
    %v161 = vpack.c.bf16 %v121, %v121
    %v162 = vpack.c.bf16 %v129, %v129
    %v163 = vpack.c.bf16 %v128, %v128
    %v164 = vpack.c.bf16 %v130, %v130
    %v165 = vpack.c.bf16 %v137, %v137
    %v166 = vpack.c.bf16 %v138, %v138
    %v167 = vld [vmem:[#allocation2] sm:$0xf]
    %v168 = vld [vmem:[#allocation2 + $0x4] sm:$0xf]
    %v169 = vld [vmem:[#allocation2 + $0x8] sm:$0xf]
    %v170 = vld [vmem:[#allocation2 + $0xc] sm:$0xf]
    %v171 = vld [vmem:[#allocation2 + $0x10] sm:$0xf]
    %v172 = vld [vmem:[#allocation2 + $0x14] sm:$0xf]
    %v173 = vld [vmem:[#allocation2 + $0x18] sm:$0xf]
    %v174 = vld [vmem:[#allocation2 + $0x1c] sm:$0xf]
    %v175 = vld [vmem:[#allocation2 + $0x20] sm:$0xf]
    %v176 = vld [vmem:[#allocation2 + $0x24] sm:$0xf]
    %v177 = vld [vmem:[#allocation2 + $0x28] sm:$0xf]
    %v178 = vld [vmem:[#allocation2 + $0x2c] sm:$0xf]
    %v179 = vld [vmem:[#allocation2 + $0x30] sm:$0xf]
    %v180 = vld [vmem:[#allocation2 + $0x34] sm:$0xf]
    %v181 = vld [vmem:[#allocation2 + $0x38] sm:$0xf]
    %v182 = vld [vmem:[#allocation2 + $0x3c] sm:$0xf]
    %v183 = vld [vmem:[#allocation2 + $0x40] sm:$0xf]
    %v184 = vld [vmem:[#allocation2 + $0x44] sm:$0xf]
    %v185 = vld [vmem:[#allocation2 + $0x48] sm:$0xf]
    %v186 = vld [vmem:[#allocation2 + $0x4c] sm:$0xf]
    %v187 = vld [vmem:[#allocation2 + $0x50] sm:$0xf]
    %v188 = vld [vmem:[#allocation2 + $0x54] sm:$0xf]
    %v189 = vld [vmem:[#allocation2 + $0x58] sm:$0xf]
    %v190 = vld [vmem:[#allocation2 + $0x5c] sm:$0xf]
    %v191 = vld [vmem:[#allocation2 + $0x60] sm:$0xf]
    %v192 = vld [vmem:[#allocation2 + $0x64] sm:$0xf]
    %v193 = vld [vmem:[#allocation2 + $0x68] sm:$0xf]
    %v194 = vld [vmem:[#allocation2 + $0x6c] sm:$0xf]
    %v195 = vld [vmem:[#allocation2 + $0x70] sm:$0xf]
    %v196 = vld [vmem:[#allocation2 + $0x74] sm:$0xf]
    %v197 = vld [vmem:[#allocation2 + $0x78] sm:$0xf]
    %v198 = vld [vmem:[#allocation2 + $0x7c] sm:$0xf]
    %v199 = vld [vmem:[#allocation2 + $0x80] sm:$0xf]
    %v200 = vld [vmem:[#allocation2 + $0x84] sm:$0xf]
    %v201 = vld [vmem:[#allocation2 + $0x88] sm:$0xf]
    %v202 = vld [vmem:[#allocation2 + $0x8c] sm:$0xf]
    %v203 = vld [vmem:[#allocation2 + $0x90] sm:$0xf]
    %v204 = vld [vmem:[#allocation2 + $0x94] sm:$0xf]
    %v205 = vld [vmem:[#allocation2 + $0x98] sm:$0xf]
    %v206 = vld [vmem:[#allocation2 + $0x9c] sm:$0xf]
    %v207 = vld [vmem:[#allocation2 + $0xa0] sm:$0xf]
    %v208 = vld [vmem:[#allocation2 + $0xa4] sm:$0xf]
    %v209 = vld [vmem:[#allocation2 + $0xa8] sm:$0xf]
    %v210 = vld [vmem:[#allocation2 + $0xac] sm:$0xf]
    %v211 = vld [vmem:[#allocation2 + $0xb0] sm:$0xf]
    %v212 = vld [vmem:[#allocation2 + $0xb4] sm:$0xf]
    %v213 = vld [vmem:[#allocation2 + $0xb8] sm:$0xf]
    %v214 = vld [vmem:[#allocation2 + $0xbc] sm:$0xf]
    %v215 = vld [vmem:[#allocation2 + $0xc0] sm:$0xf]
    %v216 = vld [vmem:[#allocation2 + $0xc4] sm:$0xf]
    %v217 = vld [vmem:[#allocation2 + $0xc8] sm:$0xf]
    %v218 = vld [vmem:[#allocation2 + $0xcc] sm:$0xf]
    %v219 = vld [vmem:[#allocation2 + $0xd0] sm:$0xf]
    %v220 = vld [vmem:[#allocation2 + $0xd4] sm:$0xf]
    %v221 = vld [vmem:[#allocation2 + $0xd8] sm:$0xf]
    %v222 = vld [vmem:[#allocation2 + $0xdc] sm:$0xf]
    %v223 = vld [vmem:[#allocation2 + $0xe0] sm:$0xf]
    %v224 = vld [vmem:[#allocation2 + $0xe4] sm:$0xf]
    %v225 = vld [vmem:[#allocation2 + $0xe8] sm:$0xf]
    %v226 = vld [vmem:[#allocation2 + $0xec] sm:$0xf]
    %v227 = vld [vmem:[#allocation2 + $0xf0] sm:$0xf]
    %v228 = vld [vmem:[#allocation2 + $0xf4] sm:$0xf]
    %v229 = vld [vmem:[#allocation2 + $0xf8] sm:$0xf]
    %v230 = vld [vmem:[#allocation2 + $0xfc] sm:$0xf]
    %v231 = vld [vmem:[#allocation2 + $0x100] sm:$0xf]
    %v232 = vld [vmem:[#allocation2 + $0x104] sm:$0xf]
    %v233 = vld [vmem:[#allocation2 + $0x108] sm:$0xf]
    %v234 = vld [vmem:[#allocation2 + $0x10c] sm:$0xf]
    %v235 = vld [vmem:[#allocation2 + $0x110] sm:$0xf]
    %v236 = vld [vmem:[#allocation2 + $0x114] sm:$0xf]
    %v237 = vld [vmem:[#allocation2 + $0x118] sm:$0xf]
    %v238 = vld [vmem:[#allocation2 + $0x11c] sm:$0xf]
    %v239 = vld [vmem:[#allocation2 + $0x120] sm:$0xf]
    %v240 = vld [vmem:[#allocation2 + $0x124] sm:$0xf]
    %v241 = vld [vmem:[#allocation2 + $0x128] sm:$0xf]
    %v242 = vld [vmem:[#allocation2 + $0x12c] sm:$0xf]
    %v243 = vld [vmem:[#allocation2 + $0x130] sm:$0xf]
    %v244 = vld [vmem:[#allocation2 + $0x134] sm:$0xf]
    %v245 = vld [vmem:[#allocation2 + $0x138] sm:$0xf]
    %v246 = vld [vmem:[#allocation2 + $0x13c] sm:$0xf]
    %v247 = vld [vmem:[#allocation2 + $0x140] sm:$0xf]
    %v248 = vld [vmem:[#allocation2 + $0x144] sm:$0xf]
    %v249 = vld [vmem:[#allocation2 + $0x148] sm:$0xf]
    %v250 = vld [vmem:[#allocation2 + $0x14c] sm:$0xf]
    %v251 = vld [vmem:[#allocation2 + $0x150] sm:$0xf]
    %v252 = vld [vmem:[#allocation2 + $0x154] sm:$0xf]
    %v253 = vld [vmem:[#allocation2 + $0x158] sm:$0xf]
    %v254 = vld [vmem:[#allocation2 + $0x15c] sm:$0xf]
    %v255 = vld [vmem:[#allocation2 + $0x160] sm:$0xf]
    %v256 = vld [vmem:[#allocation2 + $0x164] sm:$0xf]
    %v257 = vld [vmem:[#allocation2 + $0x168] sm:$0xf]
    %v258 = vld [vmem:[#allocation2 + $0x16c] sm:$0xf]
    %v259 = vld [vmem:[#allocation2 + $0x170] sm:$0xf]
    %v260 = vld [vmem:[#allocation2 + $0x174] sm:$0xf]
    %v261 = vld [vmem:[#allocation2 + $0x178] sm:$0xf]
    %v262 = vld [vmem:[#allocation2 + $0x17c] sm:$0xf]
    %v263 = vld [vmem:[#allocation2 + $0x180] sm:$0xf]
    %v264 = vld [vmem:[#allocation2 + $0x184] sm:$0xf]
    %v265 = vld [vmem:[#allocation2 + $0x188] sm:$0xf]
    %v266 = vld [vmem:[#allocation2 + $0x18c] sm:$0xf]
    %v267 = vld [vmem:[#allocation2 + $0x190] sm:$0xf]
    %v268 = vld [vmem:[#allocation2 + $0x194] sm:$0xf]
    %v269 = vld [vmem:[#allocation2 + $0x198] sm:$0xf]
    %v270 = vld [vmem:[#allocation2 + $0x19c] sm:$0xf]
    %v271 = vld [vmem:[#allocation2 + $0x1a0] sm:$0xf]
    %v272 = vld [vmem:[#allocation2 + $0x1a4] sm:$0xf]
    %v273 = vld [vmem:[#allocation2 + $0x1a8] sm:$0xf]
    %v274 = vld [vmem:[#allocation2 + $0x1ac] sm:$0xf]
    %v275 = vld [vmem:[#allocation2 + $0x1b0] sm:$0xf]
    %v276 = vld [vmem:[#allocation2 + $0x1b4] sm:$0xf]
    %v277 = vld [vmem:[#allocation2 + $0x1b8] sm:$0xf]
    %v278 = vld [vmem:[#allocation2 + $0x1bc] sm:$0xf]
    %v279 = vld [vmem:[#allocation2 + $0x1c0] sm:$0xf]
    %v280 = vld [vmem:[#allocation2 + $0x1c4] sm:$0xf]
    %v281 = vld [vmem:[#allocation2 + $0x1c8] sm:$0xf]
    %v282 = vld [vmem:[#allocation2 + $0x1cc] sm:$0xf]
    %v283 = vld [vmem:[#allocation2 + $0x1d0] sm:$0xf]
    %v284 = vld [vmem:[#allocation2 + $0x1d4] sm:$0xf]
    %v285 = vld [vmem:[#allocation2 + $0x1d8] sm:$0xf]
    %v286 = vld [vmem:[#allocation2 + $0x1dc] sm:$0xf]
    %v287 = vld [vmem:[#allocation2 + $0x1e0] sm:$0xf]
    %v288 = vld [vmem:[#allocation2 + $0x1e4] sm:$0xf]
    %v289 = vld [vmem:[#allocation2 + $0x1e8] sm:$0xf]
    %v290 = vld [vmem:[#allocation2 + $0x1ec] sm:$0xf]
    %v291 = vld [vmem:[#allocation2 + $0x1f0] sm:$0xf]
    %v292 = vld [vmem:[#allocation2 + $0x1f4] sm:$0xf]
    %v293 = vld [vmem:[#allocation2 + $0x1f8] sm:$0xf]
    %v294 = vld [vmem:[#allocation2 + $0x1fc] sm:$0xf]
    %v295 = vld [vmem:[#allocation2 + $0x200] sm:$0xf]
    %v296 = vld [vmem:[#allocation2 + $0x204] sm:$0xf]
    %v297 = vld [vmem:[#allocation2 + $0x208] sm:$0xf]
    %v298 = vld [vmem:[#allocation2 + $0x20c] sm:$0xf]
    %v299 = vld [vmem:[#allocation2 + $0x210] sm:$0xf]
    %v300 = vld [vmem:[#allocation2 + $0x214] sm:$0xf]
    %v301 = vld [vmem:[#allocation2 + $0x218] sm:$0xf]
    %v302 = vld [vmem:[#allocation2 + $0x21c] sm:$0xf]
    %v303 = vld [vmem:[#allocation2 + $0x220] sm:$0xf]
    %v304 = vld [vmem:[#allocation2 + $0x224] sm:$0xf]
    %v305 = vld [vmem:[#allocation2 + $0x228] sm:$0xf]
    %v306 = vld [vmem:[#allocation2 + $0x22c] sm:$0xf]
    %v307 = vld [vmem:[#allocation2 + $0x230] sm:$0xf]
    %v308 = vld [vmem:[#allocation2 + $0x234] sm:$0xf]
    %v309 = vld [vmem:[#allocation2 + $0x238] sm:$0xf]
    %v310 = vld [vmem:[#allocation2 + $0x23c] sm:$0xf]
    %v311 = vld [vmem:[#allocation2 + $0x240] sm:$0xf]
    %v312 = vld [vmem:[#allocation2 + $0x244] sm:$0xf]
    %v313 = vld [vmem:[#allocation2 + $0x248] sm:$0xf]
    %v314 = vld [vmem:[#allocation2 + $0x24c] sm:$0xf]
    %v315 = vld [vmem:[#allocation2 + $0x250] sm:$0xf]
    %v316 = vld [vmem:[#allocation2 + $0x254] sm:$0xf]
    %v317 = vld [vmem:[#allocation2 + $0x258] sm:$0xf]
    %v318 = vld [vmem:[#allocation2 + $0x25c] sm:$0xf]
    %v319 = vld [vmem:[#allocation2 + $0x260] sm:$0xf]
    %v320 = vld [vmem:[#allocation2 + $0x264] sm:$0xf]
    %v321 = vld [vmem:[#allocation2 + $0x268] sm:$0xf]
    %v322 = vld [vmem:[#allocation2 + $0x26c] sm:$0xf]
    %v323 = vld [vmem:[#allocation2 + $0x270] sm:$0xf]
    %v324 = vld [vmem:[#allocation2 + $0x274] sm:$0xf]
    %v325 = vld [vmem:[#allocation2 + $0x278] sm:$0xf]
    %v326 = vld [vmem:[#allocation2 + $0x27c] sm:$0xf]
    %v327 = vld [vmem:[#allocation2 + $0x280] sm:$0xf]
    %v328 = vld [vmem:[#allocation2 + $0x284] sm:$0xf]
    %v329 = vld [vmem:[#allocation2 + $0x288] sm:$0xf]
    %v330 = vld [vmem:[#allocation2 + $0x28c] sm:$0xf]
    %v331 = vld [vmem:[#allocation2 + $0x290] sm:$0xf]
    %v332 = vld [vmem:[#allocation2 + $0x294] sm:$0xf]
    %v333 = vld [vmem:[#allocation2 + $0x298] sm:$0xf]
    %v334 = vld [vmem:[#allocation2 + $0x29c] sm:$0xf]
    %v335 = vld [vmem:[#allocation2 + $0x2a0] sm:$0xf]
    %v336 = vld [vmem:[#allocation2 + $0x2a4] sm:$0xf]
    %v337 = vld [vmem:[#allocation2 + $0x2a8] sm:$0xf]
    %v338 = vld [vmem:[#allocation2 + $0x2ac] sm:$0xf]
    %v339 = vld [vmem:[#allocation2 + $0x2b0] sm:$0xf]
    %v340 = vld [vmem:[#allocation2 + $0x2b4] sm:$0xf]
    %v341 = vld [vmem:[#allocation2 + $0x2b8] sm:$0xf]
    %v342 = vld [vmem:[#allocation2 + $0x2bc] sm:$0xf]
    %v343 = vld [vmem:[#allocation2 + $0x2c0] sm:$0xf]
    %v344 = vld [vmem:[#allocation2 + $0x2c4] sm:$0xf]
    %v345 = vld [vmem:[#allocation2 + $0x2c8] sm:$0xf]
    %v346 = vld [vmem:[#allocation2 + $0x2cc] sm:$0xf]
    %v347 = vld [vmem:[#allocation2 + $0x2d0] sm:$0xf]
    %v348 = vld [vmem:[#allocation2 + $0x2d4] sm:$0xf]
    %v349 = vld [vmem:[#allocation2 + $0x2d8] sm:$0xf]
    %v350 = vld [vmem:[#allocation2 + $0x2dc] sm:$0xf]
    %v351 = vld [vmem:[#allocation2 + $0x2e0] sm:$0xf]
    %v352 = vld [vmem:[#allocation2 + $0x2e4] sm:$0xf]
    %v353 = vld [vmem:[#allocation2 + $0x2e8] sm:$0xf]
    %v354 = vld [vmem:[#allocation2 + $0x2ec] sm:$0xf]
    %v355 = vld [vmem:[#allocation2 + $0x2f0] sm:$0xf]
    %v356 = vld [vmem:[#allocation2 + $0x2f4] sm:$0xf]
    %v357 = vld [vmem:[#allocation2 + $0x2f8] sm:$0xf]
    %v358 = vld [vmem:[#allocation2 + $0x2fc] sm:$0xf]
    %v359 = vld [vmem:[#allocation2 + $0x300] sm:$0xf]
    %v360 = vld [vmem:[#allocation2 + $0x304] sm:$0xf]
    %v361 = vld [vmem:[#allocation2 + $0x308] sm:$0xf]
    %v362 = vld [vmem:[#allocation2 + $0x30c] sm:$0xf]
    %v363 = vld [vmem:[#allocation2 + $0x310] sm:$0xf]
    %v364 = vld [vmem:[#allocation2 + $0x314] sm:$0xf]
    %v365 = vld [vmem:[#allocation2 + $0x318] sm:$0xf]
    %v366 = vld [vmem:[#allocation2 + $0x31c] sm:$0xf]
    %v367 = vld [vmem:[#allocation2 + $0x320] sm:$0xf]
    %v368 = vld [vmem:[#allocation2 + $0x324] sm:$0xf]
    %v369 = vld [vmem:[#allocation2 + $0x328] sm:$0xf]
    %v370 = vld [vmem:[#allocation2 + $0x32c] sm:$0xf]
    %v371 = vld [vmem:[#allocation2 + $0x330] sm:$0xf]
    %v372 = vld [vmem:[#allocation2 + $0x334] sm:$0xf]
    %v373 = vld [vmem:[#allocation2 + $0x338] sm:$0xf]
    %v374 = vld [vmem:[#allocation2 + $0x33c] sm:$0xf]
    %v375 = vld [vmem:[#allocation2 + $0x340] sm:$0xf]
    %v376 = vld [vmem:[#allocation2 + $0x344] sm:$0xf]
    %v377 = vld [vmem:[#allocation2 + $0x348] sm:$0xf]
    %v378 = vld [vmem:[#allocation2 + $0x34c] sm:$0xf]
    %v379 = vld [vmem:[#allocation2 + $0x350] sm:$0xf]
    %v380 = vld [vmem:[#allocation2 + $0x354] sm:$0xf]
    %v381 = vld [vmem:[#allocation2 + $0x358] sm:$0xf]
    %v382 = vld [vmem:[#allocation2 + $0x35c] sm:$0xf]
    %v383 = vld [vmem:[#allocation2 + $0x360] sm:$0xf]
    %v384 = vld [vmem:[#allocation2 + $0x364] sm:$0xf]
    %v385 = vld [vmem:[#allocation2 + $0x368] sm:$0xf]
    %v386 = vld [vmem:[#allocation2 + $0x36c] sm:$0xf]
    %v387 = vld [vmem:[#allocation2 + $0x370] sm:$0xf]
    %v388 = vld [vmem:[#allocation2 + $0x374] sm:$0xf]
    %v389 = vld [vmem:[#allocation2 + $0x378] sm:$0xf]
    %v390 = vld [vmem:[#allocation2 + $0x37c] sm:$0xf]
    %v391 = vld [vmem:[#allocation4] sm:$0x1]
    %v393 = vlaneseq
    %v394 = vshrl.u32 %v393, 7
    %v395 = vsub.s32 0, %v394
    %v396 = vrot.slane %v391, %v395
    %v622 = vunpack.c.l.b16 %v167
    %v623 = vunpack.c.l.b16 %v168
    %v624 = vunpack.c.l.b16 %v169
    %v625 = vunpack.c.l.b16 %v170
    %v626 = vunpack.c.l.b16 %v171
    %v627 = vunpack.c.l.b16 %v172
    %v628 = vunpack.c.l.b16 %v173
    %v629 = vunpack.c.l.b16 %v174
    %v630 = vunpack.c.l.b16 %v175
    %v631 = vunpack.c.l.b16 %v176
    %v632 = vunpack.c.l.b16 %v177
    %v633 = vunpack.c.l.b16 %v178
    %v634 = vunpack.c.l.b16 %v179
    %v635 = vunpack.c.l.b16 %v180
    %v636 = vunpack.c.l.b16 %v181
    %v637 = vunpack.c.l.b16 %v182
    %v638 = vunpack.c.l.b16 %v183
    %v639 = vunpack.c.l.b16 %v184
    %v640 = vunpack.c.l.b16 %v185
    %v641 = vunpack.c.l.b16 %v186
    %v642 = vunpack.c.l.b16 %v187
    %v643 = vunpack.c.l.b16 %v188
    %v644 = vunpack.c.l.b16 %v189
    %v645 = vunpack.c.l.b16 %v190
    %v646 = vunpack.c.l.b16 %v191
    %v647 = vunpack.c.l.b16 %v192
    %v648 = vunpack.c.l.b16 %v193
    %v649 = vunpack.c.l.b16 %v194
    %v650 = vunpack.c.l.b16 %v195
    %v651 = vunpack.c.l.b16 %v196
    %v652 = vunpack.c.l.b16 %v197
    %v653 = vunpack.c.l.b16 %v198
    %v654 = vunpack.c.l.b16 %v199
    %v655 = vunpack.c.l.b16 %v200
    %v656 = vunpack.c.l.b16 %v201
    %v657 = vunpack.c.l.b16 %v202
    %v658 = vunpack.c.l.b16 %v203
    %v659 = vunpack.c.l.b16 %v204
    %v660 = vunpack.c.l.b16 %v205
    %v661 = vunpack.c.l.b16 %v206
    %v662 = vunpack.c.l.b16 %v207
    %v663 = vunpack.c.l.b16 %v208
    %v664 = vunpack.c.l.b16 %v209
    %v665 = vunpack.c.l.b16 %v210
    %v666 = vunpack.c.l.b16 %v211
    %v667 = vunpack.c.l.b16 %v212
    %v668 = vunpack.c.l.b16 %v213
    %v669 = vunpack.c.l.b16 %v214
    %v670 = vunpack.c.l.b16 %v215
    %v671 = vunpack.c.l.b16 %v216
    %v672 = vunpack.c.l.b16 %v217
    %v673 = vunpack.c.l.b16 %v218
    %v674 = vunpack.c.l.b16 %v219
    %v675 = vunpack.c.l.b16 %v220
    %v676 = vunpack.c.l.b16 %v221
    %v677 = vunpack.c.l.b16 %v222
    %v678 = vunpack.c.l.b16 %v223
    %v679 = vunpack.c.l.b16 %v224
    %v680 = vunpack.c.l.b16 %v225
    %v681 = vunpack.c.l.b16 %v226
    %v682 = vunpack.c.l.b16 %v227
    %v683 = vunpack.c.l.b16 %v228
    %v684 = vunpack.c.l.b16 %v229
    %v685 = vunpack.c.l.b16 %v230
    %v686 = vunpack.c.l.b16 %v231
    %v687 = vunpack.c.l.b16 %v232
    %v688 = vunpack.c.l.b16 %v233
    %v689 = vunpack.c.l.b16 %v234
    %v690 = vunpack.c.l.b16 %v235
    %v691 = vunpack.c.l.b16 %v236
    %v692 = vunpack.c.l.b16 %v237
    %v693 = vunpack.c.l.b16 %v238
    %v694 = vunpack.c.l.b16 %v239
    %v695 = vunpack.c.l.b16 %v240
    %v696 = vunpack.c.l.b16 %v241
    %v697 = vunpack.c.l.b16 %v242
    %v698 = vunpack.c.l.b16 %v243
    %v699 = vunpack.c.l.b16 %v244
    %v700 = vunpack.c.l.b16 %v245
    %v701 = vunpack.c.l.b16 %v246
    %v702 = vunpack.c.l.b16 %v247
    %v703 = vunpack.c.l.b16 %v248
    %v704 = vunpack.c.l.b16 %v249
    %v705 = vunpack.c.l.b16 %v250
    %v706 = vunpack.c.l.b16 %v251
    %v707 = vunpack.c.l.b16 %v252
    %v708 = vunpack.c.l.b16 %v253
    %v709 = vunpack.c.l.b16 %v254
    %v710 = vunpack.c.l.b16 %v255
    %v711 = vunpack.c.l.b16 %v256
    %v712 = vunpack.c.l.b16 %v257
    %v713 = vunpack.c.l.b16 %v258
    %v714 = vunpack.c.l.b16 %v259
    %v715 = vunpack.c.l.b16 %v260
    %v716 = vunpack.c.l.b16 %v261
    %v717 = vunpack.c.l.b16 %v262
    %v718 = vunpack.c.l.b16 %v263
    %v719 = vunpack.c.l.b16 %v264
    %v720 = vunpack.c.l.b16 %v265
    %v721 = vunpack.c.l.b16 %v266
    %v722 = vunpack.c.l.b16 %v267
    %v723 = vunpack.c.l.b16 %v268
    %v724 = vunpack.c.l.b16 %v269
    %v725 = vunpack.c.l.b16 %v270
    %v726 = vunpack.c.l.b16 %v271
    %v727 = vunpack.c.l.b16 %v272
    %v728 = vunpack.c.l.b16 %v273
    %v729 = vunpack.c.l.b16 %v274
    %v730 = vunpack.c.l.b16 %v275
    %v731 = vunpack.c.l.b16 %v276
    %v732 = vunpack.c.l.b16 %v277
    %v733 = vunpack.c.l.b16 %v278
    %v734 = vunpack.c.l.b16 %v279
    %v735 = vunpack.c.l.b16 %v280
    %v736 = vunpack.c.l.b16 %v281
    %v737 = vunpack.c.l.b16 %v282
    %v738 = vunpack.c.l.b16 %v283
    %v739 = vunpack.c.l.b16 %v284
    %v740 = vunpack.c.l.b16 %v285
    %v741 = vunpack.c.l.b16 %v286
    %v742 = vunpack.c.l.b16 %v287
    %v743 = vunpack.c.l.b16 %v288
    %v744 = vunpack.c.l.b16 %v289
    %v745 = vunpack.c.l.b16 %v290
    %v746 = vunpack.c.l.b16 %v291
    %v747 = vunpack.c.l.b16 %v292
    %v748 = vunpack.c.l.b16 %v293
    %v749 = vunpack.c.l.b16 %v294
    %v750 = vunpack.c.l.b16 %v295
    %v751 = vunpack.c.l.b16 %v296
    %v752 = vunpack.c.l.b16 %v297
    %v753 = vunpack.c.l.b16 %v298
    %v754 = vunpack.c.l.b16 %v299
    %v755 = vunpack.c.l.b16 %v300
    %v756 = vunpack.c.l.b16 %v301
    %v757 = vunpack.c.l.b16 %v302
    %v758 = vunpack.c.l.b16 %v303
    %v759 = vunpack.c.l.b16 %v304
    %v760 = vunpack.c.l.b16 %v305
    %v761 = vunpack.c.l.b16 %v306
    %v762 = vunpack.c.l.b16 %v307
    %v763 = vunpack.c.l.b16 %v308
    %v764 = vunpack.c.l.b16 %v309
    %v765 = vunpack.c.l.b16 %v310
    %v766 = vunpack.c.l.b16 %v311
    %v767 = vunpack.c.l.b16 %v312
    %v768 = vunpack.c.l.b16 %v313
    %v769 = vunpack.c.l.b16 %v314
    %v770 = vunpack.c.l.b16 %v315
    %v771 = vunpack.c.l.b16 %v316
    %v772 = vunpack.c.l.b16 %v317
    %v773 = vunpack.c.l.b16 %v318
    %v774 = vunpack.c.l.b16 %v319
    %v775 = vunpack.c.l.b16 %v320
    %v776 = vunpack.c.l.b16 %v321
    %v777 = vunpack.c.l.b16 %v322
    %v778 = vunpack.c.l.b16 %v323
    %v779 = vunpack.c.l.b16 %v324
    %v780 = vunpack.c.l.b16 %v325
    %v781 = vunpack.c.l.b16 %v326
    %v782 = vunpack.c.l.b16 %v327
    %v783 = vunpack.c.l.b16 %v328
    %v784 = vunpack.c.l.b16 %v329
    %v785 = vunpack.c.l.b16 %v330
    %v786 = vunpack.c.l.b16 %v331
    %v787 = vunpack.c.l.b16 %v332
    %v788 = vunpack.c.l.b16 %v333
    %v789 = vunpack.c.l.b16 %v334
    %v790 = vunpack.c.l.b16 %v335
    %v791 = vunpack.c.l.b16 %v336
    %v792 = vunpack.c.l.b16 %v337
    %v793 = vunpack.c.l.b16 %v338
    %v794 = vunpack.c.l.b16 %v339
    %v795 = vunpack.c.l.b16 %v340
    %v796 = vunpack.c.l.b16 %v341
    %v797 = vunpack.c.l.b16 %v342
    %v798 = vunpack.c.l.b16 %v343
    %v799 = vunpack.c.l.b16 %v344
    %v800 = vunpack.c.l.b16 %v345
    %v801 = vunpack.c.l.b16 %v346
    %v802 = vunpack.c.l.b16 %v347
    %v803 = vunpack.c.l.b16 %v348
    %v804 = vunpack.c.l.b16 %v349
    %v805 = vunpack.c.l.b16 %v350
    %v806 = vunpack.c.l.b16 %v351
    %v807 = vunpack.c.l.b16 %v352
    %v808 = vunpack.c.l.b16 %v353
    %v809 = vunpack.c.l.b16 %v354
    %v810 = vunpack.c.l.b16 %v355
    %v811 = vunpack.c.l.b16 %v356
    %v812 = vunpack.c.l.b16 %v357
    %v813 = vunpack.c.l.b16 %v358
    %v814 = vunpack.c.l.b16 %v359
    %v815 = vunpack.c.l.b16 %v360
    %v816 = vunpack.c.l.b16 %v361
    %v817 = vunpack.c.l.b16 %v362
    %v818 = vunpack.c.l.b16 %v363
    %v819 = vunpack.c.l.b16 %v364
    %v820 = vunpack.c.l.b16 %v365
    %v821 = vunpack.c.l.b16 %v366
    %v822 = vunpack.c.l.b16 %v367
    %v823 = vunpack.c.l.b16 %v368
    %v824 = vunpack.c.l.b16 %v369
    %v825 = vunpack.c.l.b16 %v370
    %v826 = vunpack.c.l.b16 %v371
    %v827 = vunpack.c.l.b16 %v372
    %v828 = vunpack.c.l.b16 %v373
    %v829 = vunpack.c.l.b16 %v374
    %v830 = vunpack.c.l.b16 %v375
    %v831 = vunpack.c.l.b16 %v376
    %v832 = vunpack.c.l.b16 %v377
    %v833 = vunpack.c.l.b16 %v378
    %v834 = vunpack.c.l.b16 %v379
    %v835 = vunpack.c.l.b16 %v380
    %v836 = vunpack.c.l.b16 %v381
    %v837 = vunpack.c.l.b16 %v382
    %v838 = vunpack.c.l.b16 %v383
    %v839 = vunpack.c.l.b16 %v384
    %v840 = vunpack.c.l.b16 %v385
    %v841 = vunpack.c.l.b16 %v386
    %v842 = vunpack.c.l.b16 %v387
    %v843 = vunpack.c.l.b16 %v388
    %v844 = vunpack.c.l.b16 %v389
    %v845 = vunpack.c.l.b16 %v390
    %v846 = vpack.c.b16 %v623, %v622
    %v847 = vpack.c.b16 %v625, %v624
    %v848 = vpack.c.b16 %v627, %v626
    %v849 = vpack.c.b16 %v629, %v628
    %v850 = vpack.c.b16 %v631, %v630
    %v851 = vpack.c.b16 %v633, %v632
    %v852 = vpack.c.b16 %v635, %v634
    %v853 = vpack.c.b16 %v637, %v636
    %v854 = vpack.c.b16 %v639, %v638
    %v855 = vpack.c.b16 %v641, %v640
    %v856 = vpack.c.b16 %v643, %v642
    %v857 = vpack.c.b16 %v645, %v644
    %v858 = vpack.c.b16 %v647, %v646
    %v859 = vpack.c.b16 %v649, %v648
    %v860 = vpack.c.b16 %v651, %v650
    %v861 = vpack.c.b16 %v653, %v652
    %v862 = vpack.c.b16 %v655, %v654
    %v863 = vpack.c.b16 %v657, %v656
    %v864 = vpack.c.b16 %v659, %v658
    %v865 = vpack.c.b16 %v661, %v660
    %v866 = vpack.c.b16 %v663, %v662
    %v867 = vpack.c.b16 %v665, %v664
    %v868 = vpack.c.b16 %v667, %v666
    %v869 = vpack.c.b16 %v669, %v668
    %v870 = vpack.c.b16 %v671, %v670
    %v871 = vpack.c.b16 %v673, %v672
    %v872 = vpack.c.b16 %v675, %v674
    %v873 = vpack.c.b16 %v677, %v676
    %v874 = vpack.c.b16 %v679, %v678
    %v875 = vpack.c.b16 %v681, %v680
    %v876 = vpack.c.b16 %v683, %v682
    %v877 = vpack.c.b16 %v685, %v684
    %v878 = vpack.c.b16 %v687, %v686
    %v879 = vpack.c.b16 %v689, %v688
    %v880 = vpack.c.b16 %v691, %v690
    %v881 = vpack.c.b16 %v693, %v692
    %v882 = vpack.c.b16 %v695, %v694
    %v883 = vpack.c.b16 %v697, %v696
    %v884 = vpack.c.b16 %v699, %v698
    %v885 = vpack.c.b16 %v701, %v700
    %v886 = vpack.c.b16 %v703, %v702
    %v887 = vpack.c.b16 %v705, %v704
    %v888 = vpack.c.b16 %v707, %v706
    %v889 = vpack.c.b16 %v709, %v708
    %v890 = vpack.c.b16 %v711, %v710
    %v891 = vpack.c.b16 %v713, %v712
    %v892 = vpack.c.b16 %v715, %v714
    %v893 = vpack.c.b16 %v717, %v716
    %v894 = vpack.c.b16 %v719, %v718
    %v895 = vpack.c.b16 %v721, %v720
    %v896 = vpack.c.b16 %v723, %v722
    %v897 = vpack.c.b16 %v725, %v724
    %v898 = vpack.c.b16 %v727, %v726
    %v899 = vpack.c.b16 %v729, %v728
    %v900 = vpack.c.b16 %v731, %v730
    %v901 = vpack.c.b16 %v733, %v732
    %v902 = vpack.c.b16 %v735, %v734
    %v903 = vpack.c.b16 %v737, %v736
    %v904 = vpack.c.b16 %v739, %v738
    %v905 = vpack.c.b16 %v741, %v740
    %v906 = vpack.c.b16 %v743, %v742
    %v907 = vpack.c.b16 %v745, %v744
    %v908 = vpack.c.b16 %v747, %v746
    %v909 = vpack.c.b16 %v749, %v748
    %v910 = vpack.c.b16 %v751, %v750
    %v911 = vpack.c.b16 %v753, %v752
    %v912 = vpack.c.b16 %v755, %v754
    %v913 = vpack.c.b16 %v757, %v756
    %v914 = vpack.c.b16 %v759, %v758
    %v915 = vpack.c.b16 %v761, %v760
    %v916 = vpack.c.b16 %v763, %v762
    %v917 = vpack.c.b16 %v765, %v764
    %v918 = vpack.c.b16 %v767, %v766
    %v919 = vpack.c.b16 %v769, %v768
    %v920 = vpack.c.b16 %v771, %v770
    %v921 = vpack.c.b16 %v773, %v772
    %v922 = vpack.c.b16 %v775, %v774
    %v923 = vpack.c.b16 %v777, %v776
    %v924 = vpack.c.b16 %v779, %v778
    %v925 = vpack.c.b16 %v781, %v780
    %v926 = vpack.c.b16 %v783, %v782
    %v927 = vpack.c.b16 %v785, %v784
    %v928 = vpack.c.b16 %v787, %v786
    %v929 = vpack.c.b16 %v789, %v788
    %v930 = vpack.c.b16 %v791, %v790
    %v931 = vpack.c.b16 %v793, %v792
    %v932 = vpack.c.b16 %v795, %v794
    %v933 = vpack.c.b16 %v797, %v796
    %v934 = vpack.c.b16 %v799, %v798
    %v935 = vpack.c.b16 %v801, %v800
    %v936 = vpack.c.b16 %v803, %v802
    %v937 = vpack.c.b16 %v805, %v804
    %v938 = vpack.c.b16 %v807, %v806
    %v939 = vpack.c.b16 %v809, %v808
    %v940 = vpack.c.b16 %v811, %v810
    %v941 = vpack.c.b16 %v813, %v812
    %v942 = vpack.c.b16 %v815, %v814
    %v943 = vpack.c.b16 %v817, %v816
    %v944 = vpack.c.b16 %v819, %v818
    %v945 = vpack.c.b16 %v821, %v820
    %v946 = vpack.c.b16 %v823, %v822
    %v947 = vpack.c.b16 %v825, %v824
    %v948 = vpack.c.b16 %v827, %v826
    %v949 = vpack.c.b16 %v829, %v828
    %v950 = vpack.c.b16 %v831, %v830
    %v951 = vpack.c.b16 %v833, %v832
    %v952 = vpack.c.b16 %v835, %v834
    %v953 = vpack.c.b16 %v837, %v836
    %v954 = vpack.c.b16 %v839, %v838
    %v955 = vpack.c.b16 %v841, %v840
    %v956 = vpack.c.b16 %v843, %v842
    %v957 = vpack.c.b16 %v845, %v844
    %1070 = vmatprep.subr.bf16.mxu0 0
    %1071 = vmatpush1.bf16.msra.mxu0 %v853
    %1072 = vmatprep.subr.bf16.mxu0 0
    %1073 = vmatpush1.bf16.msra.mxu0 %v852
    %1074 = vmatprep.subr.bf16.mxu0 0
    %1075 = vmatpush1.bf16.msra.mxu0 %v851
    %1076 = vmatprep.subr.bf16.mxu0 0
    %1077 = vmatpush1.bf16.msra.mxu0 %v850
    %1078 = vmatprep.subr.bf16.mxu0 0
    %1079 = vmatpush1.bf16.msra.mxu0 %v849
    %1080 = vmatprep.subr.bf16.mxu0 0
    %1081 = vmatpush1.bf16.msra.mxu0 %v848
    %1082 = vmatprep.subr.bf16.mxu0 0
    %1083 = vmatpush1.bf16.msra.mxu0 %v847
    %1084 = vmatprep.subr.bf16.mxu0 0
    %1085 = vmatpush1.bf16.msra.mxu0 %v846
    %1086 = vmatprep.subr.bf16.mxu0 0
    %1087 = vmatpush2.bf16.msra.mxu0 %v861
    %1088 = vmatprep.subr.bf16.mxu0 0
    %1089 = vmatpush2.bf16.msra.mxu0 %v860
    %1090 = vmatprep.subr.bf16.mxu0 0
    %1091 = vmatpush2.bf16.msra.mxu0 %v859
    %1092 = vmatprep.subr.bf16.mxu0 0
    %1093 = vmatpush2.bf16.msra.mxu0 %v858
    %1094 = vmatprep.subr.bf16.mxu0 0
    %1095 = vmatpush2.bf16.msra.mxu0 %v857
    %1096 = vmatprep.subr.bf16.mxu0 0
    %1097 = vmatpush2.bf16.msra.mxu0 %v856
    %1098 = vmatprep.subr.bf16.mxu0 0
    %1099 = vmatpush2.bf16.msra.mxu0 %v855
    %1100 = vmatprep.subr.bf16.mxu0 0
    %1101 = vmatpush2.bf16.msra.mxu0 %v854
    %1102 = vmatprep.mubr.bf16.mxu0 %v154
    %1103 = vmatmul.mubr.bf16.gmra.mxu0 %v153
    %v1104 = vpop.f32.mrf.mxu0
    %v1105 = vadd.f32 %v396, %v1104
    %v1106 = vpop.f32.mrf.mxu0
    %v1107 = vpop.f32.mrf.mxu0
    %v1108 = vpop.f32.mrf.mxu0
    %1109 = vdwg.mxu0
    %1110 = vmatprep.subr.bf16.mxu0 0
    %1111 = vmatpush1.bf16.msra.mxu0 %v869
    %1112 = vmatprep.subr.bf16.mxu0 0
    %1113 = vmatpush1.bf16.msra.mxu0 %v868
    %1114 = vmatprep.subr.bf16.mxu0 0
    %1115 = vmatpush1.bf16.msra.mxu0 %v867
    %1116 = vmatprep.subr.bf16.mxu0 0
    %1117 = vmatpush1.bf16.msra.mxu0 %v866
    %1118 = vmatprep.subr.bf16.mxu0 0
    %1119 = vmatpush1.bf16.msra.mxu0 %v865
    %1120 = vmatprep.subr.bf16.mxu0 0
    %1121 = vmatpush1.bf16.msra.mxu0 %v864
    %1122 = vmatprep.subr.bf16.mxu0 0
    %1123 = vmatpush1.bf16.msra.mxu0 %v863
    %1124 = vmatprep.subr.bf16.mxu0 0
    %1125 = vmatpush1.bf16.msra.mxu0 %v862
    %1126 = vmatprep.subr.bf16.mxu0 0
    %1127 = vmatpush2.bf16.msra.mxu0 %v877
    %1128 = vmatprep.subr.bf16.mxu0 0
    %1129 = vmatpush2.bf16.msra.mxu0 %v876
    %1130 = vmatprep.subr.bf16.mxu0 0
    %1131 = vmatpush2.bf16.msra.mxu0 %v875
    %1132 = vmatprep.subr.bf16.mxu0 0
    %1133 = vmatpush2.bf16.msra.mxu0 %v874
    %1134 = vmatprep.subr.bf16.mxu0 0
    %1135 = vmatpush2.bf16.msra.mxu0 %v873
    %1136 = vmatprep.subr.bf16.mxu0 0
    %1137 = vmatpush2.bf16.msra.mxu0 %v872
    %1138 = vmatprep.subr.bf16.mxu0 0
    %1139 = vmatpush2.bf16.msra.mxu0 %v871
    %1140 = vmatprep.subr.bf16.mxu0 0
    %1141 = vmatpush2.bf16.msra.mxu0 %v870
    %1142 = vmatprep.mubr.bf16.mxu0 %v156
    %1143 = vmatmul.mubr.bf16.gmra.mxu0 %v155
    %v1144 = vpop.f32.mrf.mxu0
    %v1145 = vadd.f32 %v1105, %v1144
    %v1146 = vpop.f32.mrf.mxu0
    %v1147 = vpop.f32.mrf.mxu0
    %v1148 = vpop.f32.mrf.mxu0
    %1149 = vdwg.mxu0
    %1150 = vmatprep.subr.bf16.mxu0 0
    %1151 = vmatpush1.bf16.msra.mxu0 %v885
    %1152 = vmatprep.subr.bf16.mxu0 0
    %1153 = vmatpush1.bf16.msra.mxu0 %v884
    %1154 = vmatprep.subr.bf16.mxu0 0
    %1155 = vmatpush1.bf16.msra.mxu0 %v883
    %1156 = vmatprep.subr.bf16.mxu0 0
    %1157 = vmatpush1.bf16.msra.mxu0 %v882
    %1158 = vmatprep.subr.bf16.mxu0 0
    %1159 = vmatpush1.bf16.msra.mxu0 %v881
    %1160 = vmatprep.subr.bf16.mxu0 0
    %1161 = vmatpush1.bf16.msra.mxu0 %v880
    %1162 = vmatprep.subr.bf16.mxu0 0
    %1163 = vmatpush1.bf16.msra.mxu0 %v879
    %1164 = vmatprep.subr.bf16.mxu0 0
    %1165 = vmatpush1.bf16.msra.mxu0 %v878
    %1166 = vmatprep.subr.bf16.mxu0 0
    %1167 = vmatpush2.bf16.msra.mxu0 %v893
    %1168 = vmatprep.subr.bf16.mxu0 0
    %1169 = vmatpush2.bf16.msra.mxu0 %v892
    %1170 = vmatprep.subr.bf16.mxu0 0
    %1171 = vmatpush2.bf16.msra.mxu0 %v891
    %1172 = vmatprep.subr.bf16.mxu0 0
    %1173 = vmatpush2.bf16.msra.mxu0 %v890
    %1174 = vmatprep.subr.bf16.mxu0 0
    %1175 = vmatpush2.bf16.msra.mxu0 %v889
    %1176 = vmatprep.subr.bf16.mxu0 0
    %1177 = vmatpush2.bf16.msra.mxu0 %v888
    %1178 = vmatprep.subr.bf16.mxu0 0
    %1179 = vmatpush2.bf16.msra.mxu0 %v887
    %1180 = vmatprep.subr.bf16.mxu0 0
    %1181 = vmatpush2.bf16.msra.mxu0 %v886
    %1182 = vmatprep.mubr.bf16.mxu0 %v158
    %1183 = vmatmul.mubr.bf16.gmra.mxu0 %v157
    %v1184 = vpop.f32.mrf.mxu0
    %v1185 = vadd.f32 %v1145, %v1184
    %v1186 = vpop.f32.mrf.mxu0
    %v1187 = vpop.f32.mrf.mxu0
    %v1188 = vpop.f32.mrf.mxu0
    %1189 = vdwg.mxu0
    %1190 = vmatprep.subr.bf16.mxu0 0
    %1191 = vmatpush1.bf16.msra.mxu0 %v901
    %1192 = vmatprep.subr.bf16.mxu0 0
    %1193 = vmatpush1.bf16.msra.mxu0 %v900
    %1194 = vmatprep.subr.bf16.mxu0 0
    %1195 = vmatpush1.bf16.msra.mxu0 %v899
    %1196 = vmatprep.subr.bf16.mxu0 0
    %1197 = vmatpush1.bf16.msra.mxu0 %v898
    %1198 = vmatprep.subr.bf16.mxu0 0
    %1199 = vmatpush1.bf16.msra.mxu0 %v897
    %1200 = vmatprep.subr.bf16.mxu0 0
    %1201 = vmatpush1.bf16.msra.mxu0 %v896
    %1202 = vmatprep.subr.bf16.mxu0 0
    %1203 = vmatpush1.bf16.msra.mxu0 %v895
    %1204 = vmatprep.subr.bf16.mxu0 0
    %1205 = vmatpush1.bf16.msra.mxu0 %v894
    %1206 = vmatprep.subr.bf16.mxu0 0
    %1207 = vmatpush2.bf16.msra.mxu0 %v909
    %1208 = vmatprep.subr.bf16.mxu0 0
    %1209 = vmatpush2.bf16.msra.mxu0 %v908
    %1210 = vmatprep.subr.bf16.mxu0 0
    %1211 = vmatpush2.bf16.msra.mxu0 %v907
    %1212 = vmatprep.subr.bf16.mxu0 0
    %1213 = vmatpush2.bf16.msra.mxu0 %v906
    %1214 = vmatprep.subr.bf16.mxu0 0
    %1215 = vmatpush2.bf16.msra.mxu0 %v905
    %1216 = vmatprep.subr.bf16.mxu0 0
    %1217 = vmatpush2.bf16.msra.mxu0 %v904
    %1218 = vmatprep.subr.bf16.mxu0 0
    %1219 = vmatpush2.bf16.msra.mxu0 %v903
    %1220 = vmatprep.subr.bf16.mxu0 0
    %1221 = vmatpush2.bf16.msra.mxu0 %v902
    %1222 = vmatprep.mubr.bf16.mxu0 %v160
    %1223 = vmatmul.mubr.bf16.gmra.mxu0 %v159
    %v1224 = vpop.f32.mrf.mxu0
    %v1225 = vadd.f32 %v1185, %v1224
    %v1226 = vpop.f32.mrf.mxu0
    %v1227 = vpop.f32.mrf.mxu0
    %v1228 = vpop.f32.mrf.mxu0
    %1229 = vdwg.mxu0
    %1230 = vmatprep.subr.bf16.mxu0 0
    %1231 = vmatpush1.bf16.msra.mxu0 %v917
    %1232 = vmatprep.subr.bf16.mxu0 0
    %1233 = vmatpush1.bf16.msra.mxu0 %v916
    %1234 = vmatprep.subr.bf16.mxu0 0
    %1235 = vmatpush1.bf16.msra.mxu0 %v915
    %1236 = vmatprep.subr.bf16.mxu0 0
    %1237 = vmatpush1.bf16.msra.mxu0 %v914
    %1238 = vmatprep.subr.bf16.mxu0 0
    %1239 = vmatpush1.bf16.msra.mxu0 %v913
    %1240 = vmatprep.subr.bf16.mxu0 0
    %1241 = vmatpush1.bf16.msra.mxu0 %v912
    %1242 = vmatprep.subr.bf16.mxu0 0
    %1243 = vmatpush1.bf16.msra.mxu0 %v911
    %1244 = vmatprep.subr.bf16.mxu0 0
    %1245 = vmatpush1.bf16.msra.mxu0 %v910
    %1246 = vmatprep.subr.bf16.mxu0 0
    %1247 = vmatpush2.bf16.msra.mxu0 %v925
    %1248 = vmatprep.subr.bf16.mxu0 0
    %1249 = vmatpush2.bf16.msra.mxu0 %v924
    %1250 = vmatprep.subr.bf16.mxu0 0
    %1251 = vmatpush2.bf16.msra.mxu0 %v923
    %1252 = vmatprep.subr.bf16.mxu0 0
    %1253 = vmatpush2.bf16.msra.mxu0 %v922
    %1254 = vmatprep.subr.bf16.mxu0 0
    %1255 = vmatpush2.bf16.msra.mxu0 %v921
    %1256 = vmatprep.subr.bf16.mxu0 0
    %1257 = vmatpush2.bf16.msra.mxu0 %v920
    %1258 = vmatprep.subr.bf16.mxu0 0
    %1259 = vmatpush2.bf16.msra.mxu0 %v919
    %1260 = vmatprep.subr.bf16.mxu0 0
    %1261 = vmatpush2.bf16.msra.mxu0 %v918
    %1262 = vmatprep.mubr.bf16.mxu0 %v162
    %1263 = vmatmul.mubr.bf16.gmra.mxu0 %v161
    %v1264 = vpop.f32.mrf.mxu0
    %v1265 = vadd.f32 %v1225, %v1264
    %v1266 = vpop.f32.mrf.mxu0
    %v1267 = vpop.f32.mrf.mxu0
    %v1268 = vpop.f32.mrf.mxu0
    %1269 = vdwg.mxu0
    %1270 = vmatprep.subr.bf16.mxu0 0
    %1271 = vmatpush1.bf16.msra.mxu0 %v933
    %1272 = vmatprep.subr.bf16.mxu0 0
    %1273 = vmatpush1.bf16.msra.mxu0 %v932
    %1274 = vmatprep.subr.bf16.mxu0 0
    %1275 = vmatpush1.bf16.msra.mxu0 %v931
    %1276 = vmatprep.subr.bf16.mxu0 0
    %1277 = vmatpush1.bf16.msra.mxu0 %v930
    %1278 = vmatprep.subr.bf16.mxu0 0
    %1279 = vmatpush1.bf16.msra.mxu0 %v929
    %1280 = vmatprep.subr.bf16.mxu0 0
    %1281 = vmatpush1.bf16.msra.mxu0 %v928
    %1282 = vmatprep.subr.bf16.mxu0 0
    %1283 = vmatpush1.bf16.msra.mxu0 %v927
    %1284 = vmatprep.subr.bf16.mxu0 0
    %1285 = vmatpush1.bf16.msra.mxu0 %v926
    %1286 = vmatprep.subr.bf16.mxu0 0
    %1287 = vmatpush2.bf16.msra.mxu0 %v941
    %1288 = vmatprep.subr.bf16.mxu0 0
    %1289 = vmatpush2.bf16.msra.mxu0 %v940
    %1290 = vmatprep.subr.bf16.mxu0 0
    %1291 = vmatpush2.bf16.msra.mxu0 %v939
    %1292 = vmatprep.subr.bf16.mxu0 0
    %1293 = vmatpush2.bf16.msra.mxu0 %v938
    %1294 = vmatprep.subr.bf16.mxu0 0
    %1295 = vmatpush2.bf16.msra.mxu0 %v937
    %1296 = vmatprep.subr.bf16.mxu0 0
    %1297 = vmatpush2.bf16.msra.mxu0 %v936
    %1298 = vmatprep.subr.bf16.mxu0 0
    %1299 = vmatpush2.bf16.msra.mxu0 %v935
    %1300 = vmatprep.subr.bf16.mxu0 0
    %1301 = vmatpush2.bf16.msra.mxu0 %v934
    %1302 = vmatprep.mubr.bf16.mxu0 %v164
    %1303 = vmatmul.mubr.bf16.gmra.mxu0 %v163
    %v1304 = vpop.f32.mrf.mxu0
    %v1305 = vadd.f32 %v1265, %v1304
    %v1306 = vpop.f32.mrf.mxu0
    %v1307 = vpop.f32.mrf.mxu0
    %v1308 = vpop.f32.mrf.mxu0
    %1309 = vdwg.mxu0
    %1310 = vmatprep.subr.bf16.mxu0 0
    %1311 = vmatpush1.bf16.msra.mxu0 %v949
    %1312 = vmatprep.subr.bf16.mxu0 0
    %1313 = vmatpush1.bf16.msra.mxu0 %v948
    %1314 = vmatprep.subr.bf16.mxu0 0
    %1315 = vmatpush1.bf16.msra.mxu0 %v947
    %1316 = vmatprep.subr.bf16.mxu0 0
    %1317 = vmatpush1.bf16.msra.mxu0 %v946
    %1318 = vmatprep.subr.bf16.mxu0 0
    %1319 = vmatpush1.bf16.msra.mxu0 %v945
    %1320 = vmatprep.subr.bf16.mxu0 0
    %1321 = vmatpush1.bf16.msra.mxu0 %v944
    %1322 = vmatprep.subr.bf16.mxu0 0
    %1323 = vmatpush1.bf16.msra.mxu0 %v943
    %1324 = vmatprep.subr.bf16.mxu0 0
    %1325 = vmatpush1.bf16.msra.mxu0 %v942
    %1326 = vmatprep.subr.bf16.mxu0 0
    %1327 = vmatpush2.bf16.msra.mxu0 %v957
    %1328 = vmatprep.subr.bf16.mxu0 0
    %1329 = vmatpush2.bf16.msra.mxu0 %v956
    %1330 = vmatprep.subr.bf16.mxu0 0
    %1331 = vmatpush2.bf16.msra.mxu0 %v955
    %1332 = vmatprep.subr.bf16.mxu0 0
    %1333 = vmatpush2.bf16.msra.mxu0 %v954
    %1334 = vmatprep.subr.bf16.mxu0 0
    %1335 = vmatpush2.bf16.msra.mxu0 %v953
    %1336 = vmatprep.subr.bf16.mxu0 0
    %1337 = vmatpush2.bf16.msra.mxu0 %v952
    %1338 = vmatprep.subr.bf16.mxu0 0
    %1339 = vmatpush2.bf16.msra.mxu0 %v951
    %1340 = vmatprep.subr.bf16.mxu0 0
    %1341 = vmatpush2.bf16.msra.mxu0 %v950
    %1342 = vmatprep.mubr.bf16.mxu0 %v166
    %1343 = vmatmul.mubr.bf16.gmra.mxu0 %v165
    %v1344 = vpop.f32.mrf.mxu0
    %v1345 = vadd.f32 %v1305, %v1344
    %v1346 = vpop.f32.mrf.mxu0
    %v1347 = vpop.f32.mrf.mxu0
    %v1348 = vpop.f32.mrf.mxu0
    %1349 = vdwg.mxu0
    %v1350 = vmax.f32 %v1345, 0.0
    %v1351 = vpack.c.bf16 %v1350, %v1350
    %v1352 = vld [vmem:[#allocation6] sm:$0xff]
    %v1353 = vld [vmem:[#allocation6 + $0x8] sm:$0xff]
    %v1354 = vld [vmem:[#allocation6 + $0x10] sm:$0xff]
    %v1355 = vld [vmem:[#allocation6 + $0x18] sm:$0xff]
    %v1356 = vld [vmem:[#allocation6 + $0x20] sm:$0xff]
    %v1357 = vld [vmem:[#allocation6 + $0x28] sm:$0xff]
    %v1358 = vld [vmem:[#allocation6 + $0x30] sm:$0xff]
    %v1359 = vld [vmem:[#allocation6 + $0x38] sm:$0xff]
    %v1360 = vld [vmem:[#allocation6 + $0x40] sm:$0xff]
    %v1361 = vld [vmem:[#allocation6 + $0x48] sm:$0xff]
    %v1362 = vld [vmem:[#allocation6 + $0x50] sm:$0xff]
    %v1363 = vld [vmem:[#allocation6 + $0x58] sm:$0xff]
    %v1364 = vld [vmem:[#allocation6 + $0x60] sm:$0xff]
    %v1365 = vld [vmem:[#allocation6 + $0x68] sm:$0xff]
    %v1366 = vld [vmem:[#allocation6 + $0x70] sm:$0xff]
    %v1367 = vld [vmem:[#allocation6 + $0x78] sm:$0xff]
    %v1368 = vld [vmem:[#allocation6 + $0x80] sm:$0xff]
    %v1369 = vld [vmem:[#allocation6 + $0x88] sm:$0xff]
    %v1370 = vld [vmem:[#allocation6 + $0x90] sm:$0xff]
    %v1371 = vld [vmem:[#allocation6 + $0x98] sm:$0xff]
    %v1372 = vld [vmem:[#allocation6 + $0xa0] sm:$0xff]
    %v1373 = vld [vmem:[#allocation6 + $0xa8] sm:$0xff]
    %v1374 = vld [vmem:[#allocation6 + $0xb0] sm:$0xff]
    %v1375 = vld [vmem:[#allocation6 + $0xb8] sm:$0xff]
    %v1376 = vld [vmem:[#allocation6 + $0xc0] sm:$0xff]
    %v1377 = vld [vmem:[#allocation6 + $0xc8] sm:$0xff]
    %v1378 = vld [vmem:[#allocation6 + $0xd0] sm:$0xff]
    %v1379 = vld [vmem:[#allocation6 + $0xd8] sm:$0xff]
    %v1380 = vld [vmem:[#allocation6 + $0xe0] sm:$0xff]
    %v1381 = vld [vmem:[#allocation6 + $0xe8] sm:$0xff]
    %v1382 = vld [vmem:[#allocation6 + $0xf0] sm:$0xff]
    %v1383 = vld [vmem:[#allocation6 + $0xf8] sm:$0xff]
    %v1384 = vld [vmem:[#allocation6 + $0x100] sm:$0xff]
    %v1385 = vld [vmem:[#allocation6 + $0x108] sm:$0xff]
    %v1386 = vld [vmem:[#allocation6 + $0x110] sm:$0xff]
    %v1387 = vld [vmem:[#allocation6 + $0x118] sm:$0xff]
    %v1388 = vld [vmem:[#allocation6 + $0x120] sm:$0xff]
    %v1389 = vld [vmem:[#allocation6 + $0x128] sm:$0xff]
    %v1390 = vld [vmem:[#allocation6 + $0x130] sm:$0xff]
    %v1391 = vld [vmem:[#allocation6 + $0x138] sm:$0xff]
    %v1392 = vld [vmem:[#allocation6 + $0x140] sm:$0xff]
    %v1393 = vld [vmem:[#allocation6 + $0x148] sm:$0xff]
    %v1394 = vld [vmem:[#allocation6 + $0x150] sm:$0xff]
    %v1395 = vld [vmem:[#allocation6 + $0x158] sm:$0xff]
    %v1396 = vld [vmem:[#allocation6 + $0x160] sm:$0xff]
    %v1397 = vld [vmem:[#allocation6 + $0x168] sm:$0xff]
    %v1398 = vld [vmem:[#allocation6 + $0x170] sm:$0xff]
    %v1399 = vld [vmem:[#allocation6 + $0x178] sm:$0xff]
    %v1400 = vld [vmem:[#allocation6 + $0x180] sm:$0xff]
    %v1401 = vld [vmem:[#allocation6 + $0x188] sm:$0xff]
    %v1402 = vld [vmem:[#allocation6 + $0x190] sm:$0xff]
    %v1403 = vld [vmem:[#allocation6 + $0x198] sm:$0xff]
    %v1404 = vld [vmem:[#allocation6 + $0x1a0] sm:$0xff]
    %v1405 = vld [vmem:[#allocation6 + $0x1a8] sm:$0xff]
    %v1406 = vld [vmem:[#allocation6 + $0x1b0] sm:$0xff]
    %v1407 = vld [vmem:[#allocation6 + $0x1b8] sm:$0xff]
    %v1408 = vld [vmem:[#allocation6 + $0x1c0] sm:$0xff]
    %v1409 = vld [vmem:[#allocation6 + $0x1c8] sm:$0xff]
    %v1410 = vld [vmem:[#allocation6 + $0x1d0] sm:$0xff]
    %v1411 = vld [vmem:[#allocation6 + $0x1d8] sm:$0xff]
    %v1412 = vld [vmem:[#allocation6 + $0x1e0] sm:$0xff]
    %v1413 = vld [vmem:[#allocation6 + $0x1e8] sm:$0xff]
    %v1414 = vld [vmem:[#allocation6 + $0x1f0] sm:$0xff]
    %v1415 = vld [vmem:[#allocation6 + $0x1f8] sm:$0xff]
    %v1416 = vld [vmem:[#allocation6 + $0x200] sm:$0xff]
    %v1417 = vld [vmem:[#allocation6 + $0x208] sm:$0xff]
    %v1418 = vld [vmem:[#allocation6 + $0x210] sm:$0xff]
    %v1419 = vld [vmem:[#allocation6 + $0x218] sm:$0xff]
    %v1420 = vld [vmem:[#allocation6 + $0x220] sm:$0xff]
    %v1421 = vld [vmem:[#allocation6 + $0x228] sm:$0xff]
    %v1422 = vld [vmem:[#allocation6 + $0x230] sm:$0xff]
    %v1423 = vld [vmem:[#allocation6 + $0x238] sm:$0xff]
    %v1424 = vld [vmem:[#allocation6 + $0x240] sm:$0xff]
    %v1425 = vld [vmem:[#allocation6 + $0x248] sm:$0xff]
    %v1426 = vld [vmem:[#allocation6 + $0x250] sm:$0xff]
    %v1427 = vld [vmem:[#allocation6 + $0x258] sm:$0xff]
    %v1428 = vld [vmem:[#allocation6 + $0x260] sm:$0xff]
    %v1429 = vld [vmem:[#allocation6 + $0x268] sm:$0xff]
    %v1430 = vld [vmem:[#allocation6 + $0x270] sm:$0xff]
    %v1431 = vld [vmem:[#allocation6 + $0x278] sm:$0xff]
    %v1432 = vld [vmem:[#allocation6 + $0x280] sm:$0xff]
    %v1433 = vld [vmem:[#allocation6 + $0x288] sm:$0xff]
    %v1434 = vld [vmem:[#allocation6 + $0x290] sm:$0xff]
    %v1435 = vld [vmem:[#allocation6 + $0x298] sm:$0xff]
    %v1436 = vld [vmem:[#allocation6 + $0x2a0] sm:$0xff]
    %v1437 = vld [vmem:[#allocation6 + $0x2a8] sm:$0xff]
    %v1438 = vld [vmem:[#allocation6 + $0x2b0] sm:$0xff]
    %v1439 = vld [vmem:[#allocation6 + $0x2b8] sm:$0xff]
    %v1440 = vld [vmem:[#allocation6 + $0x2c0] sm:$0xff]
    %v1441 = vld [vmem:[#allocation6 + $0x2c8] sm:$0xff]
    %v1442 = vld [vmem:[#allocation6 + $0x2d0] sm:$0xff]
    %v1443 = vld [vmem:[#allocation6 + $0x2d8] sm:$0xff]
    %v1444 = vld [vmem:[#allocation6 + $0x2e0] sm:$0xff]
    %v1445 = vld [vmem:[#allocation6 + $0x2e8] sm:$0xff]
    %v1446 = vld [vmem:[#allocation6 + $0x2f0] sm:$0xff]
    %v1447 = vld [vmem:[#allocation6 + $0x2f8] sm:$0xff]
    %v1448 = vld [vmem:[#allocation6 + $0x300] sm:$0xff]
    %v1449 = vld [vmem:[#allocation6 + $0x308] sm:$0xff]
    %v1450 = vld [vmem:[#allocation6 + $0x310] sm:$0xff]
    %v1451 = vld [vmem:[#allocation6 + $0x318] sm:$0xff]
    %v1452 = vld [vmem:[#allocation6 + $0x320] sm:$0xff]
    %v1453 = vld [vmem:[#allocation6 + $0x328] sm:$0xff]
    %v1454 = vld [vmem:[#allocation6 + $0x330] sm:$0xff]
    %v1455 = vld [vmem:[#allocation6 + $0x338] sm:$0xff]
    %v1456 = vld [vmem:[#allocation6 + $0x340] sm:$0xff]
    %v1457 = vld [vmem:[#allocation6 + $0x348] sm:$0xff]
    %v1458 = vld [vmem:[#allocation6 + $0x350] sm:$0xff]
    %v1459 = vld [vmem:[#allocation6 + $0x358] sm:$0xff]
    %v1460 = vld [vmem:[#allocation6 + $0x360] sm:$0xff]
    %v1461 = vld [vmem:[#allocation6 + $0x368] sm:$0xff]
    %v1462 = vld [vmem:[#allocation6 + $0x370] sm:$0xff]
    %v1463 = vld [vmem:[#allocation6 + $0x378] sm:$0xff]
    %v1464 = vld [vmem:[#allocation7] sm:$0xff]
    %v1465 = vld [vmem:[#allocation7 + $0x8] sm:$0x3f]
    %v1468 = vlaneseq
    %v1469 = vshrl.u32 %v1468, 7
    %v1470 = vsub.s32 0, %v1469
    %v1471 = vrot.slane %v1464, %v1470
    %v1472 = vlaneseq
    %v1473 = vshrl.u32 %v1472, 7
    %v1474 = vsub.s32 1, %v1473
    %v1475 = vrot.slane %v1464, %v1474
    %v1476 = vlaneseq
    %v1477 = vshrl.u32 %v1476, 7
    %v1478 = vsub.s32 2, %v1477
    %v1479 = vrot.slane %v1464, %v1478
    %v1480 = vlaneseq
    %v1481 = vshrl.u32 %v1480, 7
    %v1482 = vsub.s32 3, %v1481
    %v1483 = vrot.slane %v1464, %v1482
    %v1484 = vlaneseq
    %v1485 = vshrl.u32 %v1484, 7
    %v1486 = vsub.s32 4, %v1485
    %v1487 = vrot.slane %v1464, %v1486
    %v1488 = vlaneseq
    %v1489 = vshrl.u32 %v1488, 7
    %v1490 = vsub.s32 5, %v1489
    %v1491 = vrot.slane %v1464, %v1490
    %v1492 = vlaneseq
    %v1493 = vshrl.u32 %v1492, 7
    %v1494 = vsub.s32 6, %v1493
    %v1495 = vrot.slane %v1464, %v1494
    %v1496 = vlaneseq
    %v1497 = vshrl.u32 %v1496, 7
    %v1498 = vsub.s32 7, %v1497
    %v1499 = vrot.slane %v1464, %v1498
    %v1500 = vlaneseq
    %v1501 = vshrl.u32 %v1500, 7
    %v1502 = vsub.s32 0, %v1501
    %v1503 = vrot.slane %v1465, %v1502
    %v1504 = vlaneseq
    %v1505 = vshrl.u32 %v1504, 7
    %v1506 = vsub.s32 1, %v1505
    %v1507 = vrot.slane %v1465, %v1506
    %v1508 = vlaneseq
    %v1509 = vshrl.u32 %v1508, 7
    %v1510 = vsub.s32 2, %v1509
    %v1511 = vrot.slane %v1465, %v1510
    %v1512 = vlaneseq
    %v1513 = vshrl.u32 %v1512, 7
    %v1514 = vsub.s32 3, %v1513
    %v1515 = vrot.slane %v1465, %v1514
    %v1516 = vlaneseq
    %v1517 = vshrl.u32 %v1516, 7
    %v1518 = vsub.s32 4, %v1517
    %v1519 = vrot.slane %v1465, %v1518
    %v1520 = vlaneseq
    %v1521 = vshrl.u32 %v1520, 7
    %v1522 = vsub.s32 5, %v1521
    %v1523 = vrot.slane %v1465, %v1522
    %v1650 = vunpack.c.l.b16 %v1352
    %v1651 = vunpack.c.h.b16 %v1352
    %v1652 = vunpack.c.l.b16 %v1353
    %v1653 = vunpack.c.h.b16 %v1353
    %v1654 = vunpack.c.l.b16 %v1354
    %v1655 = vunpack.c.h.b16 %v1354
    %v1656 = vunpack.c.l.b16 %v1355
    %v1657 = vunpack.c.h.b16 %v1355
    %v1658 = vunpack.c.l.b16 %v1356
    %v1659 = vunpack.c.h.b16 %v1356
    %v1660 = vunpack.c.l.b16 %v1357
    %v1661 = vunpack.c.h.b16 %v1357
    %v1662 = vunpack.c.l.b16 %v1358
    %v1663 = vunpack.c.h.b16 %v1358
    %v1664 = vunpack.c.l.b16 %v1359
    %v1665 = vunpack.c.h.b16 %v1359
    %v1666 = vunpack.c.l.b16 %v1360
    %v1667 = vunpack.c.h.b16 %v1360
    %v1668 = vunpack.c.l.b16 %v1361
    %v1669 = vunpack.c.h.b16 %v1361
    %v1670 = vunpack.c.l.b16 %v1362
    %v1671 = vunpack.c.h.b16 %v1362
    %v1672 = vunpack.c.l.b16 %v1363
    %v1673 = vunpack.c.h.b16 %v1363
    %v1674 = vunpack.c.l.b16 %v1364
    %v1675 = vunpack.c.h.b16 %v1364
    %v1676 = vunpack.c.l.b16 %v1365
    %v1677 = vunpack.c.h.b16 %v1365
    %v1678 = vunpack.c.l.b16 %v1366
    %v1679 = vunpack.c.h.b16 %v1366
    %v1680 = vunpack.c.l.b16 %v1367
    %v1681 = vunpack.c.h.b16 %v1367
    %v1682 = vunpack.c.l.b16 %v1368
    %v1683 = vunpack.c.h.b16 %v1368
    %v1684 = vunpack.c.l.b16 %v1369
    %v1685 = vunpack.c.h.b16 %v1369
    %v1686 = vunpack.c.l.b16 %v1370
    %v1687 = vunpack.c.h.b16 %v1370
    %v1688 = vunpack.c.l.b16 %v1371
    %v1689 = vunpack.c.h.b16 %v1371
    %v1690 = vunpack.c.l.b16 %v1372
    %v1691 = vunpack.c.h.b16 %v1372
    %v1692 = vunpack.c.l.b16 %v1373
    %v1693 = vunpack.c.h.b16 %v1373
    %v1694 = vunpack.c.l.b16 %v1374
    %v1695 = vunpack.c.h.b16 %v1374
    %v1696 = vunpack.c.l.b16 %v1375
    %v1697 = vunpack.c.h.b16 %v1375
    %v1698 = vunpack.c.l.b16 %v1376
    %v1699 = vunpack.c.h.b16 %v1376
    %v1700 = vunpack.c.l.b16 %v1377
    %v1701 = vunpack.c.h.b16 %v1377
    %v1702 = vunpack.c.l.b16 %v1378
    %v1703 = vunpack.c.h.b16 %v1378
    %v1704 = vunpack.c.l.b16 %v1379
    %v1705 = vunpack.c.h.b16 %v1379
    %v1706 = vunpack.c.l.b16 %v1380
    %v1707 = vunpack.c.h.b16 %v1380
    %v1708 = vunpack.c.l.b16 %v1381
    %v1709 = vunpack.c.h.b16 %v1381
    %v1710 = vunpack.c.l.b16 %v1382
    %v1711 = vunpack.c.h.b16 %v1382
    %v1712 = vunpack.c.l.b16 %v1383
    %v1713 = vunpack.c.h.b16 %v1383
    %v1714 = vunpack.c.l.b16 %v1384
    %v1715 = vunpack.c.h.b16 %v1384
    %v1716 = vunpack.c.l.b16 %v1385
    %v1717 = vunpack.c.h.b16 %v1385
    %v1718 = vunpack.c.l.b16 %v1386
    %v1719 = vunpack.c.h.b16 %v1386
    %v1720 = vunpack.c.l.b16 %v1387
    %v1721 = vunpack.c.h.b16 %v1387
    %v1722 = vunpack.c.l.b16 %v1388
    %v1723 = vunpack.c.h.b16 %v1388
    %v1724 = vunpack.c.l.b16 %v1389
    %v1725 = vunpack.c.h.b16 %v1389
    %v1726 = vunpack.c.l.b16 %v1390
    %v1727 = vunpack.c.h.b16 %v1390
    %v1728 = vunpack.c.l.b16 %v1391
    %v1729 = vunpack.c.h.b16 %v1391
    %v1730 = vunpack.c.l.b16 %v1392
    %v1731 = vunpack.c.h.b16 %v1392
    %v1732 = vunpack.c.l.b16 %v1393
    %v1733 = vunpack.c.h.b16 %v1393
    %v1734 = vunpack.c.l.b16 %v1394
    %v1735 = vunpack.c.h.b16 %v1394
    %v1736 = vunpack.c.l.b16 %v1395
    %v1737 = vunpack.c.h.b16 %v1395
    %v1738 = vunpack.c.l.b16 %v1396
    %v1739 = vunpack.c.h.b16 %v1396
    %v1740 = vunpack.c.l.b16 %v1397
    %v1741 = vunpack.c.h.b16 %v1397
    %v1742 = vunpack.c.l.b16 %v1398
    %v1743 = vunpack.c.h.b16 %v1398
    %v1744 = vunpack.c.l.b16 %v1399
    %v1745 = vunpack.c.h.b16 %v1399
    %v1746 = vunpack.c.l.b16 %v1400
    %v1747 = vunpack.c.h.b16 %v1400
    %v1748 = vunpack.c.l.b16 %v1401
    %v1749 = vunpack.c.h.b16 %v1401
    %v1750 = vunpack.c.l.b16 %v1402
    %v1751 = vunpack.c.h.b16 %v1402
    %v1752 = vunpack.c.l.b16 %v1403
    %v1753 = vunpack.c.h.b16 %v1403
    %v1754 = vunpack.c.l.b16 %v1404
    %v1755 = vunpack.c.h.b16 %v1404
    %v1756 = vunpack.c.l.b16 %v1405
    %v1757 = vunpack.c.h.b16 %v1405
    %v1758 = vunpack.c.l.b16 %v1406
    %v1759 = vunpack.c.h.b16 %v1406
    %v1760 = vunpack.c.l.b16 %v1407
    %v1761 = vunpack.c.h.b16 %v1407
    %v1762 = vunpack.c.l.b16 %v1408
    %v1763 = vunpack.c.h.b16 %v1408
    %v1764 = vunpack.c.l.b16 %v1409
    %v1765 = vunpack.c.h.b16 %v1409
    %v1766 = vunpack.c.l.b16 %v1410
    %v1767 = vunpack.c.h.b16 %v1410
    %v1768 = vunpack.c.l.b16 %v1411
    %v1769 = vunpack.c.h.b16 %v1411
    %v1770 = vunpack.c.l.b16 %v1412
    %v1771 = vunpack.c.h.b16 %v1412
    %v1772 = vunpack.c.l.b16 %v1413
    %v1773 = vunpack.c.h.b16 %v1413
    %v1774 = vunpack.c.l.b16 %v1414
    %v1775 = vunpack.c.h.b16 %v1414
    %v1776 = vunpack.c.l.b16 %v1415
    %v1777 = vunpack.c.h.b16 %v1415
    %v1778 = vunpack.c.l.b16 %v1416
    %v1779 = vunpack.c.h.b16 %v1416
    %v1780 = vunpack.c.l.b16 %v1417
    %v1781 = vunpack.c.h.b16 %v1417
    %v1782 = vunpack.c.l.b16 %v1418
    %v1783 = vunpack.c.h.b16 %v1418
    %v1784 = vunpack.c.l.b16 %v1419
    %v1785 = vunpack.c.h.b16 %v1419
    %v1786 = vunpack.c.l.b16 %v1420
    %v1787 = vunpack.c.h.b16 %v1420
    %v1788 = vunpack.c.l.b16 %v1421
    %v1789 = vunpack.c.h.b16 %v1421
    %v1790 = vunpack.c.l.b16 %v1422
    %v1791 = vunpack.c.h.b16 %v1422
    %v1792 = vunpack.c.l.b16 %v1423
    %v1793 = vunpack.c.h.b16 %v1423
    %v1794 = vunpack.c.l.b16 %v1424
    %v1795 = vunpack.c.h.b16 %v1424
    %v1796 = vunpack.c.l.b16 %v1425
    %v1797 = vunpack.c.h.b16 %v1425
    %v1798 = vunpack.c.l.b16 %v1426
    %v1799 = vunpack.c.h.b16 %v1426
    %v1800 = vunpack.c.l.b16 %v1427
    %v1801 = vunpack.c.h.b16 %v1427
    %v1802 = vunpack.c.l.b16 %v1428
    %v1803 = vunpack.c.h.b16 %v1428
    %v1804 = vunpack.c.l.b16 %v1429
    %v1805 = vunpack.c.h.b16 %v1429
    %v1806 = vunpack.c.l.b16 %v1430
    %v1807 = vunpack.c.h.b16 %v1430
    %v1808 = vunpack.c.l.b16 %v1431
    %v1809 = vunpack.c.h.b16 %v1431
    %v1810 = vunpack.c.l.b16 %v1432
    %v1811 = vunpack.c.h.b16 %v1432
    %v1812 = vunpack.c.l.b16 %v1433
    %v1813 = vunpack.c.h.b16 %v1433
    %v1814 = vunpack.c.l.b16 %v1434
    %v1815 = vunpack.c.h.b16 %v1434
    %v1816 = vunpack.c.l.b16 %v1435
    %v1817 = vunpack.c.h.b16 %v1435
    %v1818 = vunpack.c.l.b16 %v1436
    %v1819 = vunpack.c.h.b16 %v1436
    %v1820 = vunpack.c.l.b16 %v1437
    %v1821 = vunpack.c.h.b16 %v1437
    %v1822 = vunpack.c.l.b16 %v1438
    %v1823 = vunpack.c.h.b16 %v1438
    %v1824 = vunpack.c.l.b16 %v1439
    %v1825 = vunpack.c.h.b16 %v1439
    %v1826 = vunpack.c.l.b16 %v1440
    %v1827 = vunpack.c.h.b16 %v1440
    %v1828 = vunpack.c.l.b16 %v1441
    %v1829 = vunpack.c.h.b16 %v1441
    %v1830 = vunpack.c.l.b16 %v1442
    %v1831 = vunpack.c.h.b16 %v1442
    %v1832 = vunpack.c.l.b16 %v1443
    %v1833 = vunpack.c.h.b16 %v1443
    %v1834 = vunpack.c.l.b16 %v1444
    %v1835 = vunpack.c.h.b16 %v1444
    %v1836 = vunpack.c.l.b16 %v1445
    %v1837 = vunpack.c.h.b16 %v1445
    %v1838 = vunpack.c.l.b16 %v1446
    %v1839 = vunpack.c.h.b16 %v1446
    %v1840 = vunpack.c.l.b16 %v1447
    %v1841 = vunpack.c.h.b16 %v1447
    %v1842 = vunpack.c.l.b16 %v1448
    %v1843 = vunpack.c.h.b16 %v1448
    %v1844 = vunpack.c.l.b16 %v1449
    %v1845 = vunpack.c.h.b16 %v1449
    %v1846 = vunpack.c.l.b16 %v1450
    %v1847 = vunpack.c.h.b16 %v1450
    %v1848 = vunpack.c.l.b16 %v1451
    %v1849 = vunpack.c.h.b16 %v1451
    %v1850 = vunpack.c.l.b16 %v1452
    %v1851 = vunpack.c.h.b16 %v1452
    %v1852 = vunpack.c.l.b16 %v1453
    %v1853 = vunpack.c.h.b16 %v1453
    %v1854 = vunpack.c.l.b16 %v1454
    %v1855 = vunpack.c.h.b16 %v1454
    %v1856 = vunpack.c.l.b16 %v1455
    %v1857 = vunpack.c.h.b16 %v1455
    %v1858 = vunpack.c.l.b16 %v1456
    %v1859 = vunpack.c.h.b16 %v1456
    %v1860 = vunpack.c.l.b16 %v1457
    %v1861 = vunpack.c.h.b16 %v1457
    %v1862 = vunpack.c.l.b16 %v1458
    %v1863 = vunpack.c.h.b16 %v1458
    %v1864 = vunpack.c.l.b16 %v1459
    %v1865 = vunpack.c.h.b16 %v1459
    %v1866 = vunpack.c.l.b16 %v1460
    %v1867 = vunpack.c.h.b16 %v1460
    %v1868 = vunpack.c.l.b16 %v1461
    %v1869 = vunpack.c.h.b16 %v1461
    %v1870 = vunpack.c.l.b16 %v1462
    %v1871 = vunpack.c.h.b16 %v1462
    %v1872 = vunpack.c.l.b16 %v1463
    %v1873 = vunpack.c.h.b16 %v1463
    %v1874 = vpack.c.b16 %v1664, %v1650
    %v1875 = vpack.c.b16 %v1665, %v1651
    %v1876 = vpack.c.b16 %v1666, %v1652
    %v1877 = vpack.c.b16 %v1667, %v1653
    %v1878 = vpack.c.b16 %v1668, %v1654
    %v1879 = vpack.c.b16 %v1669, %v1655
    %v1880 = vpack.c.b16 %v1670, %v1656
    %v1881 = vpack.c.b16 %v1671, %v1657
    %v1882 = vpack.c.b16 %v1672, %v1658
    %v1883 = vpack.c.b16 %v1673, %v1659
    %v1884 = vpack.c.b16 %v1674, %v1660
    %v1885 = vpack.c.b16 %v1675, %v1661
    %v1886 = vpack.c.b16 %v1676, %v1662
    %v1887 = vpack.c.b16 %v1677, %v1663
    %v1888 = vpack.c.b16 %v1692, %v1678
    %v1889 = vpack.c.b16 %v1693, %v1679
    %v1890 = vpack.c.b16 %v1694, %v1680
    %v1891 = vpack.c.b16 %v1695, %v1681
    %v1892 = vpack.c.b16 %v1696, %v1682
    %v1893 = vpack.c.b16 %v1697, %v1683
    %v1894 = vpack.c.b16 %v1698, %v1684
    %v1895 = vpack.c.b16 %v1699, %v1685
    %v1896 = vpack.c.b16 %v1700, %v1686
    %v1897 = vpack.c.b16 %v1701, %v1687
    %v1898 = vpack.c.b16 %v1702, %v1688
    %v1899 = vpack.c.b16 %v1703, %v1689
    %v1900 = vpack.c.b16 %v1704, %v1690
    %v1901 = vpack.c.b16 %v1705, %v1691
    %v1902 = vpack.c.b16 %v1720, %v1706
    %v1903 = vpack.c.b16 %v1721, %v1707
    %v1904 = vpack.c.b16 %v1722, %v1708
    %v1905 = vpack.c.b16 %v1723, %v1709
    %v1906 = vpack.c.b16 %v1724, %v1710
    %v1907 = vpack.c.b16 %v1725, %v1711
    %v1908 = vpack.c.b16 %v1726, %v1712
    %v1909 = vpack.c.b16 %v1727, %v1713
    %v1910 = vpack.c.b16 %v1728, %v1714
    %v1911 = vpack.c.b16 %v1729, %v1715
    %v1912 = vpack.c.b16 %v1730, %v1716
    %v1913 = vpack.c.b16 %v1731, %v1717
    %v1914 = vpack.c.b16 %v1732, %v1718
    %v1915 = vpack.c.b16 %v1733, %v1719
    %v1916 = vpack.c.b16 %v1748, %v1734
    %v1917 = vpack.c.b16 %v1749, %v1735
    %v1918 = vpack.c.b16 %v1750, %v1736
    %v1919 = vpack.c.b16 %v1751, %v1737
    %v1920 = vpack.c.b16 %v1752, %v1738
    %v1921 = vpack.c.b16 %v1753, %v1739
    %v1922 = vpack.c.b16 %v1754, %v1740
    %v1923 = vpack.c.b16 %v1755, %v1741
    %v1924 = vpack.c.b16 %v1756, %v1742
    %v1925 = vpack.c.b16 %v1757, %v1743
    %v1926 = vpack.c.b16 %v1758, %v1744
    %v1927 = vpack.c.b16 %v1759, %v1745
    %v1928 = vpack.c.b16 %v1760, %v1746
    %v1929 = vpack.c.b16 %v1761, %v1747
    %v1930 = vpack.c.b16 %v1776, %v1762
    %v1931 = vpack.c.b16 %v1777, %v1763
    %v1932 = vpack.c.b16 %v1778, %v1764
    %v1933 = vpack.c.b16 %v1779, %v1765
    %v1934 = vpack.c.b16 %v1780, %v1766
    %v1935 = vpack.c.b16 %v1781, %v1767
    %v1936 = vpack.c.b16 %v1782, %v1768
    %v1937 = vpack.c.b16 %v1783, %v1769
    %v1938 = vpack.c.b16 %v1784, %v1770
    %v1939 = vpack.c.b16 %v1785, %v1771
    %v1940 = vpack.c.b16 %v1786, %v1772
    %v1941 = vpack.c.b16 %v1787, %v1773
    %v1942 = vpack.c.b16 %v1788, %v1774
    %v1943 = vpack.c.b16 %v1789, %v1775
    %v1944 = vpack.c.b16 %v1804, %v1790
    %v1945 = vpack.c.b16 %v1805, %v1791
    %v1946 = vpack.c.b16 %v1806, %v1792
    %v1947 = vpack.c.b16 %v1807, %v1793
    %v1948 = vpack.c.b16 %v1808, %v1794
    %v1949 = vpack.c.b16 %v1809, %v1795
    %v1950 = vpack.c.b16 %v1810, %v1796
    %v1951 = vpack.c.b16 %v1811, %v1797
    %v1952 = vpack.c.b16 %v1812, %v1798
    %v1953 = vpack.c.b16 %v1813, %v1799
    %v1954 = vpack.c.b16 %v1814, %v1800
    %v1955 = vpack.c.b16 %v1815, %v1801
    %v1956 = vpack.c.b16 %v1816, %v1802
    %v1957 = vpack.c.b16 %v1817, %v1803
    %v1958 = vpack.c.b16 %v1832, %v1818
    %v1959 = vpack.c.b16 %v1833, %v1819
    %v1960 = vpack.c.b16 %v1834, %v1820
    %v1961 = vpack.c.b16 %v1835, %v1821
    %v1962 = vpack.c.b16 %v1836, %v1822
    %v1963 = vpack.c.b16 %v1837, %v1823
    %v1964 = vpack.c.b16 %v1838, %v1824
    %v1965 = vpack.c.b16 %v1839, %v1825
    %v1966 = vpack.c.b16 %v1840, %v1826
    %v1967 = vpack.c.b16 %v1841, %v1827
    %v1968 = vpack.c.b16 %v1842, %v1828
    %v1969 = vpack.c.b16 %v1843, %v1829
    %v1970 = vpack.c.b16 %v1844, %v1830
    %v1971 = vpack.c.b16 %v1845, %v1831
    %v1972 = vpack.c.b16 %v1860, %v1846
    %v1973 = vpack.c.b16 %v1861, %v1847
    %v1974 = vpack.c.b16 %v1862, %v1848
    %v1975 = vpack.c.b16 %v1863, %v1849
    %v1976 = vpack.c.b16 %v1864, %v1850
    %v1977 = vpack.c.b16 %v1865, %v1851
    %v1978 = vpack.c.b16 %v1866, %v1852
    %v1979 = vpack.c.b16 %v1867, %v1853
    %v1980 = vpack.c.b16 %v1868, %v1854
    %v1981 = vpack.c.b16 %v1869, %v1855
    %v1982 = vpack.c.b16 %v1870, %v1856
    %v1983 = vpack.c.b16 %v1871, %v1857
    %v1984 = vpack.c.b16 %v1872, %v1858
    %v1985 = vpack.c.b16 %v1873, %v1859
    %2098 = vmatprep.subr.bf16.mxu0 %v1973
    %2099 = vmatpush1.bf16.msra.mxu0 %v1972
    %2100 = vmatprep.subr.bf16.mxu0 %v1959
    %2101 = vmatpush1.bf16.msra.mxu0 %v1958
    %2102 = vmatprep.subr.bf16.mxu0 %v1945
    %2103 = vmatpush1.bf16.msra.mxu0 %v1944
    %2104 = vmatprep.subr.bf16.mxu0 %v1931
    %2105 = vmatpush1.bf16.msra.mxu0 %v1930
    %2106 = vmatprep.subr.bf16.mxu0 %v1917
    %2107 = vmatpush1.bf16.msra.mxu0 %v1916
    %2108 = vmatprep.subr.bf16.mxu0 %v1903
    %2109 = vmatpush1.bf16.msra.mxu0 %v1902
    %2110 = vmatprep.subr.bf16.mxu0 %v1889
    %2111 = vmatpush1.bf16.msra.mxu0 %v1888
    %2112 = vmatprep.subr.bf16.mxu0 %v1875
    %2113 = vmatpush1.bf16.msra.mxu0 %v1874
    %2114 = vmatprep.subr.bf16.mxu0 0
    %2115 = vmatpush2.bf16.msra.mxu0 0
    %2116 = vmatprep.subr.bf16.mxu0 0
    %2117 = vmatpush2.bf16.msra.mxu0 0
    %2118 = vmatprep.subr.bf16.mxu0 0
    %2119 = vmatpush2.bf16.msra.mxu0 0
    %2120 = vmatprep.subr.bf16.mxu0 0
    %2121 = vmatpush2.bf16.msra.mxu0 0
    %2122 = vmatprep.subr.bf16.mxu0 0
    %2123 = vmatpush2.bf16.msra.mxu0 0
    %2124 = vmatprep.subr.bf16.mxu0 0
    %2125 = vmatpush2.bf16.msra.mxu0 0
    %2126 = vmatprep.subr.bf16.mxu0 0
    %2127 = vmatpush2.bf16.msra.mxu0 0
    %2128 = vmatprep.subr.bf16.mxu0 0
    %2129 = vmatpush2.bf16.msra.mxu0 0
    %2130 = vmatprep.mubr.bf16.mxu0 0
    %2131 = vmatmul.mubr.bf16.gmra.mxu0 %v1351
    %v2132 = vpop.f32.mrf.mxu0
    %v2133 = vadd.f32 %v1471, %v2132
    %v2134 = vpop.f32.mrf.mxu0
    %v2135 = vadd.f32 %v1475, %v2134
    %v2136 = vpop.f32.mrf.mxu0
    %v2137 = vpop.f32.mrf.mxu0
    %2138 = vdwg.mxu0
    %2139 = vmatprep.subr.bf16.mxu0 %v1975
    %2140 = vmatpush1.bf16.msra.mxu0 %v1974
    %2141 = vmatprep.subr.bf16.mxu0 %v1961
    %2142 = vmatpush1.bf16.msra.mxu0 %v1960
    %2143 = vmatprep.subr.bf16.mxu0 %v1947
    %2144 = vmatpush1.bf16.msra.mxu0 %v1946
    %2145 = vmatprep.subr.bf16.mxu0 %v1933
    %2146 = vmatpush1.bf16.msra.mxu0 %v1932
    %2147 = vmatprep.subr.bf16.mxu0 %v1919
    %2148 = vmatpush1.bf16.msra.mxu0 %v1918
    %2149 = vmatprep.subr.bf16.mxu0 %v1905
    %2150 = vmatpush1.bf16.msra.mxu0 %v1904
    %2151 = vmatprep.subr.bf16.mxu0 %v1891
    %2152 = vmatpush1.bf16.msra.mxu0 %v1890
    %2153 = vmatprep.subr.bf16.mxu0 %v1877
    %2154 = vmatpush1.bf16.msra.mxu0 %v1876
    %2155 = vmatprep.subr.bf16.mxu0 0
    %2156 = vmatpush2.bf16.msra.mxu0 0
    %2157 = vmatprep.subr.bf16.mxu0 0
    %2158 = vmatpush2.bf16.msra.mxu0 0
    %2159 = vmatprep.subr.bf16.mxu0 0
    %2160 = vmatpush2.bf16.msra.mxu0 0
    %2161 = vmatprep.subr.bf16.mxu0 0
    %2162 = vmatpush2.bf16.msra.mxu0 0
    %2163 = vmatprep.subr.bf16.mxu0 0
    %2164 = vmatpush2.bf16.msra.mxu0 0
    %2165 = vmatprep.subr.bf16.mxu0 0
    %2166 = vmatpush2.bf16.msra.mxu0 0
    %2167 = vmatprep.subr.bf16.mxu0 0
    %2168 = vmatpush2.bf16.msra.mxu0 0
    %2169 = vmatprep.subr.bf16.mxu0 0
    %2170 = vmatpush2.bf16.msra.mxu0 0
    %2171 = vmatprep.mubr.bf16.mxu0 0
    %2172 = vmatmul.mubr.bf16.gmra.mxu0 %v1351
    %v2173 = vpop.f32.mrf.mxu0
    %v2174 = vadd.f32 %v1479, %v2173
    %v2175 = vpop.f32.mrf.mxu0
    %v2176 = vadd.f32 %v1483, %v2175
    %v2177 = vpop.f32.mrf.mxu0
    %v2178 = vpop.f32.mrf.mxu0
    %2179 = vdwg.mxu0
    %2180 = vmatprep.subr.bf16.mxu0 %v1977
    %2181 = vmatpush1.bf16.msra.mxu0 %v1976
    %2182 = vmatprep.subr.bf16.mxu0 %v1963
    %2183 = vmatpush1.bf16.msra.mxu0 %v1962
    %2184 = vmatprep.subr.bf16.mxu0 %v1949
    %2185 = vmatpush1.bf16.msra.mxu0 %v1948
    %2186 = vmatprep.subr.bf16.mxu0 %v1935
    %2187 = vmatpush1.bf16.msra.mxu0 %v1934
    %2188 = vmatprep.subr.bf16.mxu0 %v1921
    %2189 = vmatpush1.bf16.msra.mxu0 %v1920
    %2190 = vmatprep.subr.bf16.mxu0 %v1907
    %2191 = vmatpush1.bf16.msra.mxu0 %v1906
    %2192 = vmatprep.subr.bf16.mxu0 %v1893
    %2193 = vmatpush1.bf16.msra.mxu0 %v1892
    %2194 = vmatprep.subr.bf16.mxu0 %v1879
    %2195 = vmatpush1.bf16.msra.mxu0 %v1878
    %2196 = vmatprep.subr.bf16.mxu0 0
    %2197 = vmatpush2.bf16.msra.mxu0 0
    %2198 = vmatprep.subr.bf16.mxu0 0
    %2199 = vmatpush2.bf16.msra.mxu0 0
    %2200 = vmatprep.subr.bf16.mxu0 0
    %2201 = vmatpush2.bf16.msra.mxu0 0
    %2202 = vmatprep.subr.bf16.mxu0 0
    %2203 = vmatpush2.bf16.msra.mxu0 0
    %2204 = vmatprep.subr.bf16.mxu0 0
    %2205 = vmatpush2.bf16.msra.mxu0 0
    %2206 = vmatprep.subr.bf16.mxu0 0
    %2207 = vmatpush2.bf16.msra.mxu0 0
    %2208 = vmatprep.subr.bf16.mxu0 0
    %2209 = vmatpush2.bf16.msra.mxu0 0
    %2210 = vmatprep.subr.bf16.mxu0 0
    %2211 = vmatpush2.bf16.msra.mxu0 0
    %2212 = vmatprep.mubr.bf16.mxu0 0
    %2213 = vmatmul.mubr.bf16.gmra.mxu0 %v1351
    %v2214 = vpop.f32.mrf.mxu0
    %v2215 = vadd.f32 %v1487, %v2214
    %v2216 = vpop.f32.mrf.mxu0
    %v2217 = vadd.f32 %v1491, %v2216
    %v2218 = vpop.f32.mrf.mxu0
    %v2219 = vpop.f32.mrf.mxu0
    %2220 = vdwg.mxu0
    %2221 = vmatprep.subr.bf16.mxu0 %v1979
    %2222 = vmatpush1.bf16.msra.mxu0 %v1978
    %2223 = vmatprep.subr.bf16.mxu0 %v1965
    %2224 = vmatpush1.bf16.msra.mxu0 %v1964
    %2225 = vmatprep.subr.bf16.mxu0 %v1951
    %2226 = vmatpush1.bf16.msra.mxu0 %v1950
    %2227 = vmatprep.subr.bf16.mxu0 %v1937
    %2228 = vmatpush1.bf16.msra.mxu0 %v1936
    %2229 = vmatprep.subr.bf16.mxu0 %v1923
    %2230 = vmatpush1.bf16.msra.mxu0 %v1922
    %2231 = vmatprep.subr.bf16.mxu0 %v1909
    %2232 = vmatpush1.bf16.msra.mxu0 %v1908
    %2233 = vmatprep.subr.bf16.mxu0 %v1895
    %2234 = vmatpush1.bf16.msra.mxu0 %v1894
    %2235 = vmatprep.subr.bf16.mxu0 %v1881
    %2236 = vmatpush1.bf16.msra.mxu0 %v1880
    %2237 = vmatprep.subr.bf16.mxu0 0
    %2238 = vmatpush2.bf16.msra.mxu0 0
    %2239 = vmatprep.subr.bf16.mxu0 0
    %2240 = vmatpush2.bf16.msra.mxu0 0
    %2241 = vmatprep.subr.bf16.mxu0 0
    %2242 = vmatpush2.bf16.msra.mxu0 0
    %2243 = vmatprep.subr.bf16.mxu0 0
    %2244 = vmatpush2.bf16.msra.mxu0 0
    %2245 = vmatprep.subr.bf16.mxu0 0
    %2246 = vmatpush2.bf16.msra.mxu0 0
    %2247 = vmatprep.subr.bf16.mxu0 0
    %2248 = vmatpush2.bf16.msra.mxu0 0
    %2249 = vmatprep.subr.bf16.mxu0 0
    %2250 = vmatpush2.bf16.msra.mxu0 0
    %2251 = vmatprep.subr.bf16.mxu0 0
    %2252 = vmatpush2.bf16.msra.mxu0 0
    %2253 = vmatprep.mubr.bf16.mxu0 0
    %2254 = vmatmul.mubr.bf16.gmra.mxu0 %v1351
    %v2255 = vpop.f32.mrf.mxu0
    %v2256 = vadd.f32 %v1495, %v2255
    %v2257 = vpop.f32.mrf.mxu0
    %v2258 = vadd.f32 %v1499, %v2257
    %v2259 = vpop.f32.mrf.mxu0
    %v2260 = vpop.f32.mrf.mxu0
    %2261 = vdwg.mxu0
    %2262 = vmatprep.subr.bf16.mxu0 %v1981
    %2263 = vmatpush1.bf16.msra.mxu0 %v1980
    %2264 = vmatprep.subr.bf16.mxu0 %v1967
    %2265 = vmatpush1.bf16.msra.mxu0 %v1966
    %2266 = vmatprep.subr.bf16.mxu0 %v1953
    %2267 = vmatpush1.bf16.msra.mxu0 %v1952
    %2268 = vmatprep.subr.bf16.mxu0 %v1939
    %2269 = vmatpush1.bf16.msra.mxu0 %v1938
    %2270 = vmatprep.subr.bf16.mxu0 %v1925
    %2271 = vmatpush1.bf16.msra.mxu0 %v1924
    %2272 = vmatprep.subr.bf16.mxu0 %v1911
    %2273 = vmatpush1.bf16.msra.mxu0 %v1910
    %2274 = vmatprep.subr.bf16.mxu0 %v1897
    %2275 = vmatpush1.bf16.msra.mxu0 %v1896
    %2276 = vmatprep.subr.bf16.mxu0 %v1883
    %2277 = vmatpush1.bf16.msra.mxu0 %v1882
    %2278 = vmatprep.subr.bf16.mxu0 0
    %2279 = vmatpush2.bf16.msra.mxu0 0
    %2280 = vmatprep.subr.bf16.mxu0 0
    %2281 = vmatpush2.bf16.msra.mxu0 0
    %2282 = vmatprep.subr.bf16.mxu0 0
    %2283 = vmatpush2.bf16.msra.mxu0 0
    %2284 = vmatprep.subr.bf16.mxu0 0
    %2285 = vmatpush2.bf16.msra.mxu0 0
    %2286 = vmatprep.subr.bf16.mxu0 0
    %2287 = vmatpush2.bf16.msra.mxu0 0
    %2288 = vmatprep.subr.bf16.mxu0 0
    %2289 = vmatpush2.bf16.msra.mxu0 0
    %2290 = vmatprep.subr.bf16.mxu0 0
    %2291 = vmatpush2.bf16.msra.mxu0 0
    %2292 = vmatprep.subr.bf16.mxu0 0
    %2293 = vmatpush2.bf16.msra.mxu0 0
    %2294 = vmatprep.mubr.bf16.mxu0 0
    %2295 = vmatmul.mubr.bf16.gmra.mxu0 %v1351
    %v2296 = vpop.f32.mrf.mxu0
    %v2297 = vadd.f32 %v1503, %v2296
    %v2298 = vpop.f32.mrf.mxu0
    %v2299 = vadd.f32 %v1507, %v2298
    %v2300 = vpop.f32.mrf.mxu0
    %v2301 = vpop.f32.mrf.mxu0
    %2302 = vdwg.mxu0
    %2303 = vmatprep.subr.bf16.mxu0 %v1983
    %2304 = vmatpush1.bf16.msra.mxu0 %v1982
    %2305 = vmatprep.subr.bf16.mxu0 %v1969
    %2306 = vmatpush1.bf16.msra.mxu0 %v1968
    %2307 = vmatprep.subr.bf16.mxu0 %v1955
    %2308 = vmatpush1.bf16.msra.mxu0 %v1954
    %2309 = vmatprep.subr.bf16.mxu0 %v1941
    %2310 = vmatpush1.bf16.msra.mxu0 %v1940
    %2311 = vmatprep.subr.bf16.mxu0 %v1927
    %2312 = vmatpush1.bf16.msra.mxu0 %v1926
    %2313 = vmatprep.subr.bf16.mxu0 %v1913
    %2314 = vmatpush1.bf16.msra.mxu0 %v1912
    %2315 = vmatprep.subr.bf16.mxu0 %v1899
    %2316 = vmatpush1.bf16.msra.mxu0 %v1898
    %2317 = vmatprep.subr.bf16.mxu0 %v1885
    %2318 = vmatpush1.bf16.msra.mxu0 %v1884
    %2319 = vmatprep.subr.bf16.mxu0 0
    %2320 = vmatpush2.bf16.msra.mxu0 0
    %2321 = vmatprep.subr.bf16.mxu0 0
    %2322 = vmatpush2.bf16.msra.mxu0 0
    %2323 = vmatprep.subr.bf16.mxu0 0
    %2324 = vmatpush2.bf16.msra.mxu0 0
    %2325 = vmatprep.subr.bf16.mxu0 0
    %2326 = vmatpush2.bf16.msra.mxu0 0
    %2327 = vmatprep.subr.bf16.mxu0 0
    %2328 = vmatpush2.bf16.msra.mxu0 0
    %2329 = vmatprep.subr.bf16.mxu0 0
    %2330 = vmatpush2.bf16.msra.mxu0 0
    %2331 = vmatprep.subr.bf16.mxu0 0
    %2332 = vmatpush2.bf16.msra.mxu0 0
    %2333 = vmatprep.subr.bf16.mxu0 0
    %2334 = vmatpush2.bf16.msra.mxu0 0
    %2335 = vmatprep.mubr.bf16.mxu0 0
    %2336 = vmatmul.mubr.bf16.gmra.mxu0 %v1351
    %v2337 = vpop.f32.mrf.mxu0
    %v2338 = vadd.f32 %v1511, %v2337
    %v2339 = vpop.f32.mrf.mxu0
    %v2340 = vadd.f32 %v1515, %v2339
    %v2341 = vpop.f32.mrf.mxu0
    %v2342 = vpop.f32.mrf.mxu0
    %2343 = vdwg.mxu0
    %2344 = vmatprep.subr.bf16.mxu0 %v1985
    %2345 = vmatpush1.bf16.msra.mxu0 %v1984
    %2346 = vmatprep.subr.bf16.mxu0 %v1971
    %2347 = vmatpush1.bf16.msra.mxu0 %v1970
    %2348 = vmatprep.subr.bf16.mxu0 %v1957
    %2349 = vmatpush1.bf16.msra.mxu0 %v1956
    %2350 = vmatprep.subr.bf16.mxu0 %v1943
    %2351 = vmatpush1.bf16.msra.mxu0 %v1942
    %2352 = vmatprep.subr.bf16.mxu0 %v1929
    %2353 = vmatpush1.bf16.msra.mxu0 %v1928
    %2354 = vmatprep.subr.bf16.mxu0 %v1915
    %2355 = vmatpush1.bf16.msra.mxu0 %v1914
    %2356 = vmatprep.subr.bf16.mxu0 %v1901
    %2357 = vmatpush1.bf16.msra.mxu0 %v1900
    %2358 = vmatprep.subr.bf16.mxu0 %v1887
    %2359 = vmatpush1.bf16.msra.mxu0 %v1886
    %2360 = vmatprep.subr.bf16.mxu0 0
    %2361 = vmatpush2.bf16.msra.mxu0 0
    %2362 = vmatprep.subr.bf16.mxu0 0
    %2363 = vmatpush2.bf16.msra.mxu0 0
    %2364 = vmatprep.subr.bf16.mxu0 0
    %2365 = vmatpush2.bf16.msra.mxu0 0
    %2366 = vmatprep.subr.bf16.mxu0 0
    %2367 = vmatpush2.bf16.msra.mxu0 0
    %2368 = vmatprep.subr.bf16.mxu0 0
    %2369 = vmatpush2.bf16.msra.mxu0 0
    %2370 = vmatprep.subr.bf16.mxu0 0
    %2371 = vmatpush2.bf16.msra.mxu0 0
    %2372 = vmatprep.subr.bf16.mxu0 0
    %2373 = vmatpush2.bf16.msra.mxu0 0
    %2374 = vmatprep.subr.bf16.mxu0 0
    %2375 = vmatpush2.bf16.msra.mxu0 0
    %2376 = vmatprep.mubr.bf16.mxu0 0
    %2377 = vmatmul.mubr.bf16.gmra.mxu0 %v1351
    %v2378 = vpop.f32.mrf.mxu0
    %v2379 = vadd.f32 %v1519, %v2378
    %v2380 = vpop.f32.mrf.mxu0
    %v2381 = vadd.f32 %v1523, %v2380
    %v2382 = vpop.f32.mrf.mxu0
    %v2383 = vpop.f32.mrf.mxu0
    %2384 = vdwg.mxu0
    %v2385 = vxor.u32 %v2133, 2147483648
    %v2386 = vxor.u32 %v2135, 2147483648
    %v2387 = vxor.u32 %v2174, 2147483648
    %v2388 = vxor.u32 %v2176, 2147483648
    %v2389 = vxor.u32 %v2215, 2147483648
    %v2390 = vxor.u32 %v2217, 2147483648
    %v2391 = vxor.u32 %v2256, 2147483648
    %v2392 = vxor.u32 %v2258, 2147483648
    %v2393 = vxor.u32 %v2297, 2147483648
    %v2394 = vxor.u32 %v2299, 2147483648
    %v2395 = vxor.u32 %v2338, 2147483648
    %v2396 = vxor.u32 %v2340, 2147483648
    %v2397 = vxor.u32 %v2379, 2147483648
    %v2398 = vxor.u32 %v2381, 2147483648
    %v2399 = vmul.f32 %v2385, 1.442695
    %v2400 = vpow.pop %v2399
    %v2401 = vmul.f32 %v2386, 1.442695
    %v2402 = vpow.pop %v2401
    %v2403 = vmul.f32 %v2387, 1.442695
    %v2404 = vpow.pop %v2403
    %v2405 = vmul.f32 %v2388, 1.442695
    %v2406 = vpow.pop %v2405
    %v2407 = vmul.f32 %v2389, 1.442695
    %v2408 = vpow.pop %v2407
    %v2409 = vmul.f32 %v2390, 1.442695
    %v2410 = vpow.pop %v2409
    %v2411 = vmul.f32 %v2391, 1.442695
    %v2412 = vpow.pop %v2411
    %v2413 = vmul.f32 %v2392, 1.442695
    %v2414 = vpow.pop %v2413
    %v2415 = vmul.f32 %v2393, 1.442695
    %v2416 = vpow.pop %v2415
    %v2417 = vmul.f32 %v2394, 1.442695
    %v2418 = vpow.pop %v2417
    %v2419 = vmul.f32 %v2395, 1.442695
    %v2420 = vpow.pop %v2419
    %v2421 = vmul.f32 %v2396, 1.442695
    %v2422 = vpow.pop %v2421
    %v2423 = vmul.f32 %v2397, 1.442695
    %v2424 = vpow.pop %v2423
    %v2425 = vmul.f32 %v2398, 1.442695
    %v2426 = vpow.pop %v2425
    %v2427 = vadd.f32 %v2400, 1.0
    %v2428 = vadd.f32 %v2402, 1.0
    %v2429 = vadd.f32 %v2404, 1.0
    %v2430 = vadd.f32 %v2406, 1.0
    %v2431 = vadd.f32 %v2408, 1.0
    %v2432 = vadd.f32 %v2410, 1.0
    %v2433 = vadd.f32 %v2412, 1.0
    %v2434 = vadd.f32 %v2414, 1.0
    %v2435 = vadd.f32 %v2416, 1.0
    %v2436 = vadd.f32 %v2418, 1.0
    %v2437 = vadd.f32 %v2420, 1.0
    %v2438 = vadd.f32 %v2422, 1.0
    %v2439 = vadd.f32 %v2424, 1.0
    %v2440 = vadd.f32 %v2426, 1.0
    %v2441 = vrcp.pop %v2427
    %v2442 = vmul.f32 1.0, %v2441
    %v2443 = vrcp.pop %v2428
    %v2444 = vmul.f32 1.0, %v2443
    %v2445 = vrcp.pop %v2429
    %v2446 = vmul.f32 1.0, %v2445
    %v2447 = vrcp.pop %v2430
    %v2448 = vmul.f32 1.0, %v2447
    %v2449 = vrcp.pop %v2431
    %v2450 = vmul.f32 1.0, %v2449
    %v2451 = vrcp.pop %v2432
    %v2452 = vmul.f32 1.0, %v2451
    %v2453 = vrcp.pop %v2433
    %v2454 = vmul.f32 1.0, %v2453
    %v2455 = vrcp.pop %v2434
    %v2456 = vmul.f32 1.0, %v2455
    %v2457 = vrcp.pop %v2435
    %v2458 = vmul.f32 1.0, %v2457
    %v2459 = vrcp.pop %v2436
    %v2460 = vmul.f32 1.0, %v2459
    %v2461 = vrcp.pop %v2437
    %v2462 = vmul.f32 1.0, %v2461
    %v2463 = vrcp.pop %v2438
    %v2464 = vmul.f32 1.0, %v2463
    %v2465 = vrcp.pop %v2439
    %v2466 = vmul.f32 1.0, %v2465
    %v2467 = vrcp.pop %v2440
    %v2468 = vmul.f32 1.0, %v2467
    %v2483 = vcombine.low %v2442, %v2444
    %v2484 = vcombine.low %v2446, %v2448
    %v2486 = vunpack.c.l.s4 1983009808
    %v2487 = vunpack.c.0.s8 %v2486
    %v2488 = vlaneseq
    %v2489 = vshrl.u32 %v2488, 7
    %v2490 = vsub.s32 %v2487, %v2489
    %v2491 = vrot.slane %v2483, %v2490
    %v2493 = vunpack.c.l.s4 1983009808
    %v2494 = vunpack.c.0.s8 %v2493
    %v2495 = vlaneseq
    %v2496 = vshrl.u32 %v2495, 7
    %v2497 = vsub.s32 %v2494, %v2496
    %v2498 = vrot.slane %v2484, %v2497
    %v2499 = vcombine.low %v2491, %v2498
    %v2500 = vcombine.low %v2450, %v2452
    %v2501 = vcombine.low %v2454, %v2456
    %v2503 = vunpack.c.l.s4 1983009808
    %v2504 = vunpack.c.0.s8 %v2503
    %v2505 = vlaneseq
    %v2506 = vshrl.u32 %v2505, 7
    %v2507 = vsub.s32 %v2504, %v2506
    %v2508 = vrot.slane %v2500, %v2507
    %v2510 = vunpack.c.l.s4 1983009808
    %v2511 = vunpack.c.0.s8 %v2510
    %v2512 = vlaneseq
    %v2513 = vshrl.u32 %v2512, 7
    %v2514 = vsub.s32 %v2511, %v2513
    %v2515 = vrot.slane %v2501, %v2514
    %v2516 = vcombine.low %v2508, %v2515
    %v2517 = vcombine.low %v2458, %v2460
    %v2518 = vcombine.low %v2462, %v2464
    %v2520 = vunpack.c.l.s4 1983009808
    %v2521 = vunpack.c.0.s8 %v2520
    %v2522 = vlaneseq
    %v2523 = vshrl.u32 %v2522, 7
    %v2524 = vsub.s32 %v2521, %v2523
    %v2525 = vrot.slane %v2517, %v2524
    %v2527 = vunpack.c.l.s4 1983009808
    %v2528 = vunpack.c.0.s8 %v2527
    %v2529 = vlaneseq
    %v2530 = vshrl.u32 %v2529, 7
    %v2531 = vsub.s32 %v2528, %v2530
    %v2532 = vrot.slane %v2518, %v2531
    %v2533 = vcombine.low %v2525, %v2532
    %v2534 = vcombine.low %v2466, %v2468
    %v2536 = vunpack.c.l.s4 1983009808
    %v2537 = vunpack.c.0.s8 %v2536
    %v2538 = vlaneseq
    %v2539 = vshrl.u32 %v2538, 7
    %v2540 = vsub.s32 %v2537, %v2539
    %v2541 = vrot.slane %v2534, %v2540
    %2546 = vst [vmem:[%s5] sm:$0xff] %v2499
    %2547 = vst [vmem:[%s5 + $0x8] sm:$0xff] %v2516
    %2548 = vst [vmem:[%s5 + $0x10] sm:$0xff] %v2533
    %2549 = vst [vmem:[%s5 + $0x18] sm:$0xf] %v2541
    // Predicated region
    $region38: #{model_forward.2} parent=1 // pred_check
      _
    $region39: #{model_forward.2} parent=1 // pred_check_branch
      %2551 = sbr.rel (0) target = $region41
    $region40: #{model_forward.2} parent=1 // pred_region
      _
    $region41: #{model_forward.2} parent=1 // pred_fallthru
      _
    // Predicated region
    $region42: #{model_forward.2} parent=1 // pred_check
      _
    $region43: #{model_forward.2} parent=1 // pred_check_branch
      %2553 = sbr.rel (0) target = $region45
    $region44: #{model_forward.2} parent=1 // pred_region
      _
    $region45: #{model_forward.2} parent=1 // pred_fallthru
      _
    %2554 = vsyncpa [#allocation3], 1
    %2555 = vsyncpa [#allocation5], 1
    %2556 = vsyncpa [#allocation8], 1

// kernel: model_forward.3
$region0: #{model_forward.3}
  #allocation0 [shape = 'u32[]', space=smem, size = 0x4, offset = 0x4, fixed_abs, tag = 'smem constant byte address 0x4 - core index']
  #allocation1 [shape = 'u32[144,128]{1,0:T(1,128)}', space=vmem, size = 0x12000, scoped, tag = 'internal scratch']
  %s0 = inlined_call_operand.vmem [shape: f32[2,1792], index: 0, kind: input, shape index: {}]
  %s1 = inlined_call_operand.hbm [shape: bf16[8,1792,512], index: 1, kind: input, shape index: {}]
  %s2 = inlined_call_operand.hbm [shape: f32[8,1,512], index: 2, kind: input, shape index: {}]
  %s3 = inlined_call_operand.hbm [shape: bf16[8,512,256], index: 3, kind: input, shape index: {}]
  %s4 = inlined_call_operand.hbm [shape: f32[8,1,256], index: 4, kind: input, shape index: {}]
  %s5 = inlined_call_operand.vmem [shape: bf16[8,256,2], index: 5, kind: input, shape index: {}]
  %s6 = inlined_call_operand.vmem [shape: f32[8,1,2], index: 6, kind: input, shape index: {}]
  %s7 = inlined_call_operand.vmem [shape: f32[8,2,2], index: 7, kind: output, shape index: {}]
  %s8 = sld [smem:[#allocation0]]
  $region77: #{model_forward.3} parent=0
    _
  %s10 = ssub.s32 1, %s8
  %s11 = scalar_select 0, %s10, %s8
  $region1: #{model_forward.3} parent=0
    #allocation2 [shape = 'u8[7340032]{0}', space=vmem, size = 0x700000, scoped, tag = 'input window, operand 1']
    #allocation3 [shape = 's32[2]{0}', space=sflag, size = 0x8, scoped, tag = 'scoped memory for model_forward.3']
    #allocation4 [shape = 'u8[8192]{0}', space=vmem, size = 0x2000, scoped, tag = 'input window, operand 2']
    #allocation5 [shape = 's32[2]{0}', space=sflag, size = 0x8, scoped, tag = 'scoped memory for model_forward.3']
    #allocation6 [shape = 'u8[1048576]{0}', space=vmem, size = 0x100000, scoped, tag = 'input window, operand 3']
    #allocation7 [shape = 'u8[4096]{0}', space=vmem, size = 0x1000, scoped, tag = 'input window, operand 4']
    #allocation8 [shape = 's32[2]{0}', space=sflag, size = 0x8, scoped, tag = 'scoped memory for model_forward.3']
    %12 = vsyncpa [#allocation3], 0
    %s13 = scalar_lea.sflag [#allocation3], 1
    %14 = vsyncpa %s13, 0
    %15 = vsyncpa [#allocation5], 0
    %s16 = scalar_lea.sflag [#allocation5], 1
    %17 = vsyncpa %s16, 0
    %18 = vsyncpa [#allocation8], 0
    %s19 = scalar_lea.sflag [#allocation8], 1
    %20 = vsyncpa %s19, 0
    loop: start=0, step=1, limit=6
    $region2: #{model_forward.3} parent=1 // loop_pre_header
      _
    $region3: #{model_forward.3} parent=1 // loop_header
      %s22 = sphi 0, %s26
      %p23 = scmp.ge.s32.totalorder %s22, 6
      %s30 = sphi 0, %s30
      %s32 = sphi 0, %s30
      %s33 = sphi 0, %s32
      %s47 = sphi 0, %s33
      %s53 = sphi 0, %s55
      %s56 = sphi 0, %s53
      %s57 = sphi 0, %s56
      %s73 = sphi 0, %s57
      %s79 = sphi 0, %s81
      %s82 = sphi 0, %s79
      %s83 = sphi 0, %s82
      %s99 = sphi 0, %s83
      %s105 = sphi 0, %s107
      %s108 = sphi 0, %s105
      %s109 = sphi 0, %s108
      %s125 = sphi 0, %s109
      %s131 = sphi 0, %s133
      %s134 = sphi 0, %s131
      %s135 = sphi 0, %s134
      %s151 = sphi 0, %s135
      %s157 = sphi 0, %s159
      %s160 = sphi 0, %s157
      %s161 = sphi 0, %s160
      %s177 = sphi 0, %s161
      %s183 = sphi 0, %s185
      %s186 = sphi 0, %s183
      %s187 = sphi 0, %s186
      %s203 = sphi 0, %s187
      %s209 = sphi 0, %s211
      %s212 = sphi 0, %s209
      %s213 = sphi 0, %s212
      %s229 = sphi 0, %s213
    $region4: #{model_forward.3} parent=1 // loop_header_branch
      %25 = sbr.rel (%p23) target = $region8
    $region5: #{model_forward.3} parent=1 // loop_body
      %s27 = ssub.s32 %s22, 1
      %s28 = ssub.s32 %s22, 2
      %s29 = sadd.s32 %s22, 1
      %s31 = sadd.s32 %s30, 1
      %p34 = scmp.eq.s32.totalorder %s22, 3
      %p35 = scmp.ne.s32.totalorder %s30, %s32
      %p36 = scmp.eq.s32.totalorder %s22, 0
      %p37 = por %p35, %p36
      %p38 = scmp.ne.s32.totalorder %s30, %s32
      %p39 = scmp.eq.s32.totalorder %s27, 3
      %p40 = por %p38, %p39
      %p41 = scmp.ne.s32.totalorder %s32, %s33
      %p42 = scmp.eq.s32.totalorder %s27, 0
      %p43 = por %p41, %p42
      %p44 = scmp.ne.s32.totalorder %s32, %s33
      %p45 = scmp.eq.s32.totalorder %s28, 3
      %p46 = por %p44, %p45
      %p48 = scmp.ne.s32.totalorder %s33, %s47
      %p49 = scmp.eq.s32.totalorder %s28, 0
      %p50 = por %p48, %p49
      %s51 = ssub.s32 %s22, %s29
      %p52 = scmp.eq.s32.totalorder %s51, 0
      %s54 = sadd.s32 %s53, 1
      %s55 = scalar_select %p52, %s53, %s54
      %p58 = pneg %p52
      %p59 = scmp.eq.s32.totalorder %s22, 3
      %p60 = por %p58, %p59
      %p61 = scmp.ne.s32.totalorder %s53, %s56
      %p62 = scmp.eq.s32.totalorder %s22, 0
      %p63 = por %p61, %p62
      %p64 = scmp.ne.s32.totalorder %s53, %s56
      %p65 = scmp.eq.s32.totalorder %s27, 3
      %p66 = por %p64, %p65
      %p67 = scmp.ne.s32.totalorder %s56, %s57
      %p68 = scmp.eq.s32.totalorder %s27, 0
      %p69 = por %p67, %p68
      %p70 = scmp.ne.s32.totalorder %s56, %s57
      %p71 = scmp.eq.s32.totalorder %s28, 3
      %p72 = por %p70, %p71
      %p74 = scmp.ne.s32.totalorder %s57, %s73
      %p75 = scmp.eq.s32.totalorder %s28, 0
      %p76 = por %p74, %p75
      %s77 = ssub.s32 %s22, %s29
      %p78 = scmp.eq.s32.totalorder %s77, 0
      %s80 = sadd.s32 %s79, 1
      %s81 = scalar_select %p78, %s79, %s80
      %p84 = pneg %p78
      %p85 = scmp.eq.s32.totalorder %s22, 3
      %p86 = por %p84, %p85
      %p87 = scmp.ne.s32.totalorder %s79, %s82
      %p88 = scmp.eq.s32.totalorder %s22, 0
      %p89 = por %p87, %p88
      %p90 = scmp.ne.s32.totalorder %s79, %s82
      %p91 = scmp.eq.s32.totalorder %s27, 3
      %p92 = por %p90, %p91
      %p93 = scmp.ne.s32.totalorder %s82, %s83
      %p94 = scmp.eq.s32.totalorder %s27, 0
      %p95 = por %p93, %p94
      %p96 = scmp.ne.s32.totalorder %s82, %s83
      %p97 = scmp.eq.s32.totalorder %s28, 3
      %p98 = por %p96, %p97
      %p100 = scmp.ne.s32.totalorder %s83, %s99
      %p101 = scmp.eq.s32.totalorder %s28, 0
      %p102 = por %p100, %p101
      %s103 = ssub.s32 %s22, %s29
      %p104 = scmp.eq.s32.totalorder %s103, 0
      %s106 = sadd.s32 %s105, 1
      %s107 = scalar_select %p104, %s105, %s106
      %p110 = pneg %p104
      %p111 = scmp.eq.s32.totalorder %s22, 3
      %p112 = por %p110, %p111
      %p113 = scmp.ne.s32.totalorder %s105, %s108
      %p114 = scmp.eq.s32.totalorder %s22, 0
      %p115 = por %p113, %p114
      %p116 = scmp.ne.s32.totalorder %s105, %s108
      %p117 = scmp.eq.s32.totalorder %s27, 3
      %p118 = por %p116, %p117
      %p119 = scmp.ne.s32.totalorder %s108, %s109
      %p120 = scmp.eq.s32.totalorder %s27, 0
      %p121 = por %p119, %p120
      %p122 = scmp.ne.s32.totalorder %s108, %s109
      %p123 = scmp.eq.s32.totalorder %s28, 3
      %p124 = por %p122, %p123
      %p126 = scmp.ne.s32.totalorder %s109, %s125
      %p127 = scmp.eq.s32.totalorder %s28, 0
      %p128 = por %p126, %p127
      %s129 = ssub.s32 %s22, %s29
      %p130 = scmp.eq.s32.totalorder %s129, 0
      %s132 = sadd.s32 %s131, 1
      %s133 = scalar_select %p130, %s131, %s132
      %p136 = pneg %p130
      %p137 = scmp.eq.s32.totalorder %s22, 3
      %p138 = por %p136, %p137
      %p139 = scmp.ne.s32.totalorder %s131, %s134
      %p140 = scmp.eq.s32.totalorder %s22, 0
      %p141 = por %p139, %p140
      %p142 = scmp.ne.s32.totalorder %s131, %s134
      %p143 = scmp.eq.s32.totalorder %s27, 3
      %p144 = por %p142, %p143
      %p145 = scmp.ne.s32.totalorder %s134, %s135
      %p146 = scmp.eq.s32.totalorder %s27, 0
      %p147 = por %p145, %p146
      %p148 = scmp.ne.s32.totalorder %s134, %s135
      %p149 = scmp.eq.s32.totalorder %s28, 3
      %p150 = por %p148, %p149
      %p152 = scmp.ne.s32.totalorder %s135, %s151
      %p153 = scmp.eq.s32.totalorder %s28, 0
      %p154 = por %p152, %p153
      %s155 = ssub.s32 %s22, %s29
      %p156 = scmp.eq.s32.totalorder %s155, 0
      %s158 = sadd.s32 %s157, 1
      %s159 = scalar_select %p156, %s157, %s158
      %p162 = pneg %p156
      %p163 = scmp.eq.s32.totalorder %s22, 3
      %p164 = por %p162, %p163
      %p165 = scmp.ne.s32.totalorder %s157, %s160
      %p166 = scmp.eq.s32.totalorder %s22, 0
      %p167 = por %p165, %p166
      %p168 = scmp.ne.s32.totalorder %s157, %s160
      %p169 = scmp.eq.s32.totalorder %s27, 3
      %p170 = por %p168, %p169
      %p171 = scmp.ne.s32.totalorder %s160, %s161
      %p172 = scmp.eq.s32.totalorder %s27, 0
      %p173 = por %p171, %p172
      %p174 = scmp.ne.s32.totalorder %s160, %s161
      %p175 = scmp.eq.s32.totalorder %s28, 3
      %p176 = por %p174, %p175
      %p178 = scmp.ne.s32.totalorder %s161, %s177
      %p179 = scmp.eq.s32.totalorder %s28, 0
      %p180 = por %p178, %p179
      %s181 = ssub.s32 %s22, %s29
      %p182 = scmp.eq.s32.totalorder %s181, 0
      %s184 = sadd.s32 %s183, 1
      %s185 = scalar_select %p182, %s183, %s184
      %p188 = pneg %p182
      %p189 = scmp.eq.s32.totalorder %s22, 3
      %p190 = por %p188, %p189
      %p191 = scmp.ne.s32.totalorder %s183, %s186
      %p192 = scmp.eq.s32.totalorder %s22, 0
      %p193 = por %p191, %p192
      %p194 = scmp.ne.s32.totalorder %s183, %s186
      %p195 = scmp.eq.s32.totalorder %s27, 3
      %p196 = por %p194, %p195
      %p197 = scmp.ne.s32.totalorder %s186, %s187
      %p198 = scmp.eq.s32.totalorder %s27, 0
      %p199 = por %p197, %p198
      %p200 = scmp.ne.s32.totalorder %s186, %s187
      %p201 = scmp.eq.s32.totalorder %s28, 3
      %p202 = por %p200, %p201
      %p204 = scmp.ne.s32.totalorder %s187, %s203
      %p205 = scmp.eq.s32.totalorder %s28, 0
      %p206 = por %p204, %p205
      %s207 = ssub.s32 %s22, %s29
      %p208 = scmp.eq.s32.totalorder %s207, 0
      %s210 = sadd.s32 %s209, 1
      %s211 = scalar_select %p208, %s209, %s210
      %p214 = pneg %p208
      %p215 = scmp.eq.s32.totalorder %s22, 3
      %p216 = por %p214, %p215
      %p217 = scmp.ne.s32.totalorder %s209, %s212
      %p218 = scmp.eq.s32.totalorder %s22, 0
      %p219 = por %p217, %p218
      %p220 = scmp.ne.s32.totalorder %s209, %s212
      %p221 = scmp.eq.s32.totalorder %s27, 3
      %p222 = por %p220, %p221
      %p223 = scmp.ne.s32.totalorder %s212, %s213
      %p224 = scmp.eq.s32.totalorder %s27, 0
      %p225 = por %p223, %p224
      %p226 = scmp.ne.s32.totalorder %s212, %s213
      %p227 = scmp.eq.s32.totalorder %s28, 3
      %p228 = por %p226, %p227
      %p230 = scmp.ne.s32.totalorder %s213, %s229
      %p231 = scmp.eq.s32.totalorder %s28, 0
      %p232 = por %p230, %p231
      %p233 = scmp.le.s32.totalorder 1, %s22
      %p234 = scmp.lt.s32.totalorder %s22, 5
      %p235 = pnand %p233, %p234
      %p236 = pneg %p235
      // Predicated region
      $region9: #{model_forward.3} parent=5 // pred_check
        _
      $region10: #{model_forward.3} parent=5 // pred_check_branch
        %238 = sbr.rel (%p235) target = $region12
      $region11: #{model_forward.3} parent=5 // pred_region
        %s239 = ssub.s32 %s22, 1
        // Predicated region
        $region13: #{model_forward.3} parent=11 // pred_check
          %p240 = pneg %p43
        $region14: #{model_forward.3} parent=11 // pred_check_branch
          %242 = sbr.rel (%p240) target = $region16
        $region15: #{model_forward.3} parent=11 // pred_region
          _
        $region16: #{model_forward.3} parent=11 // pred_fallthru
          _
      $region12: #{model_forward.3} parent=5 // pred_fallthru
        _
      %p243 = scmp.lt.s32.totalorder %s22, 4
      // Predicated region
      $region17: #{model_forward.3} parent=5 // pred_check
        %p244 = pneg %p243
      $region18: #{model_forward.3} parent=5 // pred_check_branch
        %246 = sbr.rel (%p244) target = $region20
      $region19: #{model_forward.3} parent=5 // pred_region
        // Predicated region
        $region21: #{model_forward.3} parent=19 // pred_check
          %p247 = pneg %p63
        $region22: #{model_forward.3} parent=19 // pred_check_branch
          %249 = sbr.rel (%p247) target = $region24
        $region23: #{model_forward.3} parent=19 // pred_region
          %s250 = sand.u32 %s53, 1
          %s251 = scalar_lea.sflag [#allocation3], %s250
          %s252 = sand.u32 %s53, 1
          %s253 = smul.addr %s252, 7168
          %s254 = scalar_lea.vmem [#allocation2], %s253
          %s255 = smul.u32 2, %s22
          %s257 = ssub.s32 114688, 114688
          %258 = vsyncadd %s251, %s257
          %s259 = smul.addr %s255, 896
          %s260 = smul.addr %s259, 64
          %s261 = scalar_lea.hbm %s1, %s260
          %s262 = sshll.u32 %s254, 4
          %s263 = int_to_ptr.vmem [resolvable:$true] %s262
          %268 = dma.hbm_to_vmem [thread:$0]  %s261, 114688, %s263, %s251, 256, 256, 16
        $region24: #{model_forward.3} parent=19 // pred_fallthru
          _
        // Predicated region
        $region25: #{model_forward.3} parent=19 // pred_check
          %p269 = pneg %p89
        $region26: #{model_forward.3} parent=19 // pred_check_branch
          %271 = sbr.rel (%p269) target = $region28
        $region27: #{model_forward.3} parent=19 // pred_region
          %s272 = sand.u32 %s22, 1
          %s273 = scalar_lea.sflag [#allocation5], %s272
          %s274 = sand.u32 %s79, 1
          %s275 = smul.addr %s274, 8
          %s276 = scalar_lea.vmem [#allocation4], %s275
          %s277 = smul.u32 2, %s22
          %s279 = ssub.s32 128, 128
          %280 = vsyncadd %s273, %s279
          %s281 = smul.addr %s277, 4
          %s282 = smul.addr %s281, 16
          %s283 = scalar_lea.hbm %s2, %s282
          %s284 = sshll.u32 %s276, 4
          %s285 = int_to_ptr.vmem [resolvable:$true] %s284
          %290 = dma.hbm_to_vmem [thread:$0]  %s283, 128, %s285, %s273, 64, 64, 4
        $region28: #{model_forward.3} parent=19 // pred_fallthru
          _
        // Predicated region
        $region29: #{model_forward.3} parent=19 // pred_check
          %p291 = pneg %p115
        $region30: #{model_forward.3} parent=19 // pred_check_branch
          %293 = sbr.rel (%p291) target = $region32
        $region31: #{model_forward.3} parent=19 // pred_region
          %s294 = sand.u32 %s22, 1
          %s295 = scalar_lea.sflag [#allocation5], %s294
          %s296 = sand.u32 %s105, 1
          %s297 = smul.addr %s296, 1024
          %s298 = scalar_lea.vmem [#allocation6], %s297
          %s299 = smul.u32 2, %s22
          %s301 = ssub.s32 16384, 16384
          %302 = vsyncadd %s295, %s301
          %s303 = smul.addr %s299, 128
          %s304 = smul.addr %s303, 64
          %s305 = scalar_lea.hbm %s3, %s304
          %s306 = sshll.u32 %s298, 4
          %s307 = int_to_ptr.vmem [resolvable:$true] %s306
          %312 = dma.hbm_to_vmem [thread:$0]  %s305, 16384, %s307, %s295, 128, 128, 8
        $region32: #{model_forward.3} parent=19 // pred_fallthru
          _
        // Predicated region
        $region33: #{model_forward.3} parent=19 // pred_check
          %p313 = pneg %p141
        $region34: #{model_forward.3} parent=19 // pred_check_branch
          %315 = sbr.rel (%p313) target = $region36
        $region35: #{model_forward.3} parent=19 // pred_region
          %s316 = sand.u32 %s131, 1
          %s317 = scalar_lea.sflag [#allocation8], %s316
          %s318 = sand.u32 %s131, 1
          %s319 = smul.addr %s318, 4
          %s320 = scalar_lea.vmem [#allocation7], %s319
          %s321 = smul.u32 2, %s22
          %s323 = ssub.s32 64, 64
          %324 = vsyncadd %s317, %s323
          %s325 = smul.addr %s321, 2
          %s326 = smul.addr %s325, 16
          %s327 = scalar_lea.hbm %s4, %s326
          %s328 = sshll.u32 %s320, 4
          %s329 = int_to_ptr.vmem [resolvable:$true] %s328
          %334 = dma.hbm_to_vmem [thread:$0]  %s327, 64, %s329, %s317, 32, 32, 2
        $region36: #{model_forward.3} parent=19 // pred_fallthru
          _
        // Predicated region
        $region37: #{model_forward.3} parent=19 // pred_check
          %p335 = pneg %p167
        $region38: #{model_forward.3} parent=19 // pred_check_branch
          %337 = sbr.rel (%p335) target = $region40
        $region39: #{model_forward.3} parent=19 // pred_region
          %s338 = smul.u32 2, %s22
          %p339 = scmp.lt.s32.totalorder %s338, 7
          %s340 = scalar_select %p339, %s338, 7
          %s341 = smul.addr %s340, 32
          %s342 = smul.addr %s341, 4
          %s343 = scalar_lea.vmem %s5, %s342
          %s344 = smul.u32 2, %s22
        $region40: #{model_forward.3} parent=19 // pred_fallthru
          _
        // Predicated region
        $region41: #{model_forward.3} parent=19 // pred_check
          %p345 = pneg %p193
        $region42: #{model_forward.3} parent=19 // pred_check_branch
          %347 = sbr.rel (%p345) target = $region44
        $region43: #{model_forward.3} parent=19 // pred_region
          %s348 = smul.u32 2, %s22
          %p349 = scmp.lt.s32.totalorder %s348, 7
          %s350 = scalar_select %p349, %s348, 7
          %s351 = scalar_lea.vmem %s6, %s350
          %s352 = smul.u32 2, %s22
        $region44: #{model_forward.3} parent=19 // pred_fallthru
          _
      $region20: #{model_forward.3} parent=5 // pred_fallthru
        _
      %p353 = scmp.le.s32.totalorder 1, %s22
      %p354 = scmp.lt.s32.totalorder %s22, 5
      %p355 = pnand %p353, %p354
      %p356 = pneg %p355
      // Predicated region
      $region45: #{model_forward.3} parent=5 // pred_check
        _
      $region46: #{model_forward.3} parent=5 // pred_check_branch
        %358 = sbr.rel (%p355) target = $region48
      $region47: #{model_forward.3} parent=5 // pred_region
        %s359 = ssub.s32 %s22, 1
        %s360 = sand.u32 %s56, 1
        %s361 = scalar_lea.sflag [#allocation3], %s360
        %s362 = sand.u32 %s56, 1
        %s363 = smul.addr %s362, 7168
        %s364 = scalar_lea.vmem [#allocation2], %s363
        // Predicated region
        $region49: #{model_forward.3} parent=47 // pred_check
          %p365 = pneg %p69
        $region50: #{model_forward.3} parent=47 // pred_check_branch
          %367 = sbr.rel (%p365) target = $region52
        $region51: #{model_forward.3} parent=47 // pred_region
          %368 = dma.done %s361, 114688
        $region52: #{model_forward.3} parent=47 // pred_fallthru
          _
        %s369 = sand.u32 %s27, 1
        %s370 = scalar_lea.sflag [#allocation5], %s369
        %s371 = sand.u32 %s82, 1
        %s372 = smul.addr %s371, 8
        %s373 = scalar_lea.vmem [#allocation4], %s372
        // Predicated region
        $region53: #{model_forward.3} parent=47 // pred_check
          %p374 = pneg %p95
        $region54: #{model_forward.3} parent=47 // pred_check_branch
          %376 = sbr.rel (%p374) target = $region56
        $region55: #{model_forward.3} parent=47 // pred_region
          %377 = dma.done %s370, 128
        $region56: #{model_forward.3} parent=47 // pred_fallthru
          _
        %s378 = sand.u32 %s27, 1
        %s379 = scalar_lea.sflag [#allocation5], %s378
        %s380 = sand.u32 %s108, 1
        %s381 = smul.addr %s380, 1024
        %s382 = scalar_lea.vmem [#allocation6], %s381
        // Predicated region
        $region57: #{model_forward.3} parent=47 // pred_check
          %p383 = pneg %p121
        $region58: #{model_forward.3} parent=47 // pred_check_branch
          %385 = sbr.rel (%p383) target = $region60
        $region59: #{model_forward.3} parent=47 // pred_region
          %386 = dma.done %s379, 16384
        $region60: #{model_forward.3} parent=47 // pred_fallthru
          _
        %s387 = sand.u32 %s134, 1
        %s388 = scalar_lea.sflag [#allocation8], %s387
        %s389 = sand.u32 %s134, 1
        %s390 = smul.addr %s389, 4
        %s391 = scalar_lea.vmem [#allocation7], %s390
        // Predicated region
        $region61: #{model_forward.3} parent=47 // pred_check
          %p392 = pneg %p147
        $region62: #{model_forward.3} parent=47 // pred_check_branch
          %394 = sbr.rel (%p392) target = $region64
        $region63: #{model_forward.3} parent=47 // pred_region
          %395 = dma.done %s388, 64
        $region64: #{model_forward.3} parent=47 // pred_fallthru
          _
        %p396 = pneg %p43
        %p397 = pneg %p40
        %s398 = sand.u32 %s56, 1
        %s399 = scalar_lea.sflag [#allocation3], %s398
        %s400 = sand.u32 %s56, 1
        %s401 = smul.addr %s400, 7168
        %s402 = scalar_lea.vmem [#allocation2], %s401
        %p403 = pneg %p69
        %p404 = pneg %p66
        %s405 = sand.u32 %s27, 1
        %s406 = scalar_lea.sflag [#allocation5], %s405
        %s407 = sand.u32 %s82, 1
        %s408 = smul.addr %s407, 8
        %s409 = scalar_lea.vmem [#allocation4], %s408
        %p410 = pneg %p95
        %p411 = pneg %p92
        %s412 = sand.u32 %s27, 1
        %s413 = scalar_lea.sflag [#allocation5], %s412
        %s414 = sand.u32 %s108, 1
        %s415 = smul.addr %s414, 1024
        %s416 = scalar_lea.vmem [#allocation6], %s415
        %p417 = pneg %p121
        %p418 = pneg %p118
        %s419 = sand.u32 %s134, 1
        %s420 = scalar_lea.sflag [#allocation8], %s419
        %s421 = sand.u32 %s134, 1
        %s422 = smul.addr %s421, 4
        %s423 = scalar_lea.vmem [#allocation7], %s422
        %p424 = pneg %p147
        %p425 = pneg %p144
        %s426 = smul.u32 2, %s27
        %p427 = scmp.lt.s32.totalorder %s426, 7
        %s428 = scalar_select %p427, %s426, 7
        %s429 = smul.addr %s428, 32
        %s430 = smul.addr %s429, 4
        %s431 = scalar_lea.vmem %s5, %s430
        %p432 = pneg %p173
        %p433 = pneg %p170
        %s434 = smul.u32 2, %s27
        %p435 = scmp.lt.s32.totalorder %s434, 7
        %s436 = scalar_select %p435, %s434, 7
        %s437 = scalar_lea.vmem %s6, %s436
        %p438 = pneg %p199
        %p439 = pneg %p196
        %p440 = pneg %p225
        %p441 = pneg %p222
        %s442 = smul.u32 2, %s27
        %p443 = scmp.lt.s32.totalorder %s442, 7
        %s444 = scalar_select %p443, %s442, 7
        %s445 = smul.addr %s444, 2
        %s446 = scalar_lea.vmem %s7, %s445
        %s447 = smul.u32 2, %s27
        %s448 = smul.u32 2, %s27
        %s449 = smul.u32 2, %s27
        %s450 = smul.u32 2, %s27
        %s451 = smul.u32 2, %s27
        %p452 = scmp.lt.s32.totalorder %s451, 7
        %s453 = scalar_select %p452, %s451, 7
        %s454 = smul.addr %s453, 32
        %s455 = smul.addr %s454, 4
        %s456 = scalar_lea.vmem %s5, %s455
        %s457 = smul.u32 2, %s27
        %s458 = smul.u32 2, %s27
        %p459 = scmp.lt.s32.totalorder %s458, 7
        %s460 = scalar_select %p459, %s458, 7
        %s461 = scalar_lea.vmem %s6, %s460
        %s462 = smul.u32 2, %s27
        %s463 = smul.u32 2, %s27
        %p464 = scmp.lt.s32.totalorder %s463, 7
        %s465 = scalar_select %p464, %s463, 7
        %s466 = smul.addr %s465, 2
        %s467 = scalar_lea.vmem %s7, %s466
        %s468 = smul.u32 2, %s27
        %v470 = vld [vmem:[%s0] sm:$0xff]
        %v471 = vld [vmem:[%s0 + $0x8] sm:$0xff]
        %v472 = vld [vmem:[%s0 + $0x10] sm:$0xff]
        %v473 = vld [vmem:[%s0 + $0x18] sm:$0xf]
        %v478 = vcombine.high %v470, %v470
        %v480 = vunpack.c.l.s4 1983009808
        %v481 = vunpack.c.0.s8 %v480
        %v482 = vlaneseq
        %v483 = vshrl.u32 %v482, 7
        %v484 = vsub.s32 %v481, %v483
        %v485 = vrot.slane %v470, %v484
        %v487 = vunpack.c.l.s4 1983009808
        %v488 = vunpack.c.0.s8 %v487
        %v489 = vlaneseq
        %v490 = vshrl.u32 %v489, 7
        %v491 = vsub.s32 %v488, %v490
        %v492 = vrot.slane %v478, %v491
        %v493 = vcombine.high %v485, %v485
        %v494 = vcombine.high %v492, %v492
        %v495 = vcombine.high %v471, %v471
        %v497 = vunpack.c.l.s4 1983009808
        %v498 = vunpack.c.0.s8 %v497
        %v499 = vlaneseq
        %v500 = vshrl.u32 %v499, 7
        %v501 = vsub.s32 %v498, %v500
        %v502 = vrot.slane %v471, %v501
        %v504 = vunpack.c.l.s4 1983009808
        %v505 = vunpack.c.0.s8 %v504
        %v506 = vlaneseq
        %v507 = vshrl.u32 %v506, 7
        %v508 = vsub.s32 %v505, %v507
        %v509 = vrot.slane %v495, %v508
        %v510 = vcombine.high %v502, %v502
        %v511 = vcombine.high %v509, %v509
        %v512 = vcombine.high %v472, %v472
        %v514 = vunpack.c.l.s4 1983009808
        %v515 = vunpack.c.0.s8 %v514
        %v516 = vlaneseq
        %v517 = vshrl.u32 %v516, 7
        %v518 = vsub.s32 %v515, %v517
        %v519 = vrot.slane %v472, %v518
        %v521 = vunpack.c.l.s4 1983009808
        %v522 = vunpack.c.0.s8 %v521
        %v523 = vlaneseq
        %v524 = vshrl.u32 %v523, 7
        %v525 = vsub.s32 %v522, %v524
        %v526 = vrot.slane %v512, %v525
        %v527 = vcombine.high %v519, %v519
        %v528 = vcombine.high %v526, %v526
        %v530 = vunpack.c.l.s4 1983009808
        %v531 = vunpack.c.0.s8 %v530
        %v532 = vlaneseq
        %v533 = vshrl.u32 %v532, 7
        %v534 = vsub.s32 %v531, %v533
        %v535 = vrot.slane %v473, %v534
        %v536 = vcombine.high %v535, %v535
        %v551 = vpack.c.bf16 %v485, %v485
        %v552 = vpack.c.bf16 %v493, %v493
        %v553 = vpack.c.bf16 %v492, %v492
        %v554 = vpack.c.bf16 %v494, %v494
        %v555 = vpack.c.bf16 %v502, %v502
        %v556 = vpack.c.bf16 %v510, %v510
        %v557 = vpack.c.bf16 %v509, %v509
        %v558 = vpack.c.bf16 %v511, %v511
        %v559 = vpack.c.bf16 %v519, %v519
        %v560 = vpack.c.bf16 %v527, %v527
        %v561 = vpack.c.bf16 %v526, %v526
        %v562 = vpack.c.bf16 %v528, %v528
        %v563 = vpack.c.bf16 %v535, %v535
        %v564 = vpack.c.bf16 %v536, %v536
        %v565 = vld [vmem:[%s364] sm:$0xff]
        %v566 = vld [vmem:[%s364 + $0x8] sm:$0xff]
        %v567 = vld [vmem:[%s364 + $0x10] sm:$0xff]
        %v568 = vld [vmem:[%s364 + $0x18] sm:$0xff]
        %v569 = vld [vmem:[%s364 + $0x20] sm:$0xff]
        %v570 = vld [vmem:[%s364 + $0x28] sm:$0xff]
        %v571 = vld [vmem:[%s364 + $0x30] sm:$0xff]
        %v572 = vld [vmem:[%s364 + $0x38] sm:$0xff]
        %v573 = vld [vmem:[%s364 + $0x40] sm:$0xff]
        %v574 = vld [vmem:[%s364 + $0x48] sm:$0xff]
        %v575 = vld [vmem:[%s364 + $0x50] sm:$0xff]
        %v576 = vld [vmem:[%s364 + $0x58] sm:$0xff]
        %v577 = vld [vmem:[%s364 + $0x60] sm:$0xff]
        %v578 = vld [vmem:[%s364 + $0x68] sm:$0xff]
        %v579 = vld [vmem:[%s364 + $0x70] sm:$0xff]
        %v580 = vld [vmem:[%s364 + $0x78] sm:$0xff]
        %v581 = vld [vmem:[%s364 + $0x80] sm:$0xff]
        %v582 = vld [vmem:[%s364 + $0x88] sm:$0xff]
        %v583 = vld [vmem:[%s364 + $0x90] sm:$0xff]
        %v584 = vld [vmem:[%s364 + $0x98] sm:$0xff]
        %v585 = vld [vmem:[%s364 + $0xa0] sm:$0xff]
        %v586 = vld [vmem:[%s364 + $0xa8] sm:$0xff]
        %v587 = vld [vmem:[%s364 + $0xb0] sm:$0xff]
        %v588 = vld [vmem:[%s364 + $0xb8] sm:$0xff]
        %v589 = vld [vmem:[%s364 + $0xc0] sm:$0xff]
        %v590 = vld [vmem:[%s364 + $0xc8] sm:$0xff]
        %v591 = vld [vmem:[%s364 + $0xd0] sm:$0xff]
        %v592 = vld [vmem:[%s364 + $0xd8] sm:$0xff]
        %v593 = vld [vmem:[%s364 + $0xe0] sm:$0xff]
        %v594 = vld [vmem:[%s364 + $0xe8] sm:$0xff]
        %v595 = vld [vmem:[%s364 + $0xf0] sm:$0xff]
        %v596 = vld [vmem:[%s364 + $0xf8] sm:$0xff]
        %v597 = vld [vmem:[%s364 + $0x100] sm:$0xff]
        %v598 = vld [vmem:[%s364 + $0x108] sm:$0xff]
        %v599 = vld [vmem:[%s364 + $0x110] sm:$0xff]
        %v600 = vld [vmem:[%s364 + $0x118] sm:$0xff]
        %v601 = vld [vmem:[%s364 + $0x120] sm:$0xff]
        %v602 = vld [vmem:[%s364 + $0x128] sm:$0xff]
        %v603 = vld [vmem:[%s364 + $0x130] sm:$0xff]
        %v604 = vld [vmem:[%s364 + $0x138] sm:$0xff]
        %v605 = vld [vmem:[%s364 + $0x140] sm:$0xff]
        %v606 = vld [vmem:[%s364 + $0x148] sm:$0xff]
        %v607 = vld [vmem:[%s364 + $0x150] sm:$0xff]
        %v608 = vld [vmem:[%s364 + $0x158] sm:$0xff]
        %v609 = vld [vmem:[%s364 + $0x160] sm:$0xff]
        %v610 = vld [vmem:[%s364 + $0x168] sm:$0xff]
        %v611 = vld [vmem:[%s364 + $0x170] sm:$0xff]
        %v612 = vld [vmem:[%s364 + $0x178] sm:$0xff]
        %v613 = vld [vmem:[%s364 + $0x180] sm:$0xff]
        %v614 = vld [vmem:[%s364 + $0x188] sm:$0xff]
        %v615 = vld [vmem:[%s364 + $0x190] sm:$0xff]
        %v616 = vld [vmem:[%s364 + $0x198] sm:$0xff]
        %v617 = vld [vmem:[%s364 + $0x1a0] sm:$0xff]
        %v618 = vld [vmem:[%s364 + $0x1a8] sm:$0xff]
        %v619 = vld [vmem:[%s364 + $0x1b0] sm:$0xff]
        %v620 = vld [vmem:[%s364 + $0x1b8] sm:$0xff]
        %v621 = vld [vmem:[%s364 + $0x1c0] sm:$0xff]
        %v622 = vld [vmem:[%s364 + $0x1c8] sm:$0xff]
        %v623 = vld [vmem:[%s364 + $0x1d0] sm:$0xff]
        %v624 = vld [vmem:[%s364 + $0x1d8] sm:$0xff]
        %v625 = vld [vmem:[%s364 + $0x1e0] sm:$0xff]
        %v626 = vld [vmem:[%s364 + $0x1e8] sm:$0xff]
        %v627 = vld [vmem:[%s364 + $0x1f0] sm:$0xff]
        %v628 = vld [vmem:[%s364 + $0x1f8] sm:$0xff]
        %v629 = vld [vmem:[%s364 + $0x200] sm:$0xff]
        %v630 = vld [vmem:[%s364 + $0x208] sm:$0xff]
        %v631 = vld [vmem:[%s364 + $0x210] sm:$0xff]
        %v632 = vld [vmem:[%s364 + $0x218] sm:$0xff]
        %v633 = vld [vmem:[%s364 + $0x220] sm:$0xff]
        %v634 = vld [vmem:[%s364 + $0x228] sm:$0xff]
        %v635 = vld [vmem:[%s364 + $0x230] sm:$0xff]
        %v636 = vld [vmem:[%s364 + $0x238] sm:$0xff]
        %v637 = vld [vmem:[%s364 + $0x240] sm:$0xff]
        %v638 = vld [vmem:[%s364 + $0x248] sm:$0xff]
        %v639 = vld [vmem:[%s364 + $0x250] sm:$0xff]
        %v640 = vld [vmem:[%s364 + $0x258] sm:$0xff]
        %v641 = vld [vmem:[%s364 + $0x260] sm:$0xff]
        %v642 = vld [vmem:[%s364 + $0x268] sm:$0xff]
        %v643 = vld [vmem:[%s364 + $0x270] sm:$0xff]
        %v644 = vld [vmem:[%s364 + $0x278] sm:$0xff]
        %v645 = vld [vmem:[%s364 + $0x280] sm:$0xff]
        %v646 = vld [vmem:[%s364 + $0x288] sm:$0xff]
        %v647 = vld [vmem:[%s364 + $0x290] sm:$0xff]
        %v648 = vld [vmem:[%s364 + $0x298] sm:$0xff]
        %v649 = vld [vmem:[%s364 + $0x2a0] sm:$0xff]
        %v650 = vld [vmem:[%s364 + $0x2a8] sm:$0xff]
        %v651 = vld [vmem:[%s364 + $0x2b0] sm:$0xff]
        %v652 = vld [vmem:[%s364 + $0x2b8] sm:$0xff]
        %v653 = vld [vmem:[%s364 + $0x2c0] sm:$0xff]
        %v654 = vld [vmem:[%s364 + $0x2c8] sm:$0xff]
        %v655 = vld [vmem:[%s364 + $0x2d0] sm:$0xff]
        %v656 = vld [vmem:[%s364 + $0x2d8] sm:$0xff]
        %v657 = vld [vmem:[%s364 + $0x2e0] sm:$0xff]
        %v658 = vld [vmem:[%s364 + $0x2e8] sm:$0xff]
        %v659 = vld [vmem:[%s364 + $0x2f0] sm:$0xff]
        %v660 = vld [vmem:[%s364 + $0x2f8] sm:$0xff]
        %v661 = vld [vmem:[%s364 + $0x300] sm:$0xff]
        %v662 = vld [vmem:[%s364 + $0x308] sm:$0xff]
        %v663 = vld [vmem:[%s364 + $0x310] sm:$0xff]
        %v664 = vld [vmem:[%s364 + $0x318] sm:$0xff]
        %v665 = vld [vmem:[%s364 + $0x320] sm:$0xff]
        %v666 = vld [vmem:[%s364 + $0x328] sm:$0xff]
        %v667 = vld [vmem:[%s364 + $0x330] sm:$0xff]
        %v668 = vld [vmem:[%s364 + $0x338] sm:$0xff]
        %v669 = vld [vmem:[%s364 + $0x340] sm:$0xff]
        %v670 = vld [vmem:[%s364 + $0x348] sm:$0xff]
        %v671 = vld [vmem:[%s364 + $0x350] sm:$0xff]
        %v672 = vld [vmem:[%s364 + $0x358] sm:$0xff]
        %v673 = vld [vmem:[%s364 + $0x360] sm:$0xff]
        %v674 = vld [vmem:[%s364 + $0x368] sm:$0xff]
        %v675 = vld [vmem:[%s364 + $0x370] sm:$0xff]
        %v676 = vld [vmem:[%s364 + $0x378] sm:$0xff]
        %v677 = vld [vmem:[%s364 + $0x380] sm:$0xff]
        %v678 = vld [vmem:[%s364 + $0x388] sm:$0xff]
        %v679 = vld [vmem:[%s364 + $0x390] sm:$0xff]
        %v680 = vld [vmem:[%s364 + $0x398] sm:$0xff]
        %v681 = vld [vmem:[%s364 + $0x3a0] sm:$0xff]
        %v682 = vld [vmem:[%s364 + $0x3a8] sm:$0xff]
        %v683 = vld [vmem:[%s364 + $0x3b0] sm:$0xff]
        %v684 = vld [vmem:[%s364 + $0x3b8] sm:$0xff]
        %v685 = vld [vmem:[%s364 + $0x3c0] sm:$0xff]
        %v686 = vld [vmem:[%s364 + $0x3c8] sm:$0xff]
        %v687 = vld [vmem:[%s364 + $0x3d0] sm:$0xff]
        %v688 = vld [vmem:[%s364 + $0x3d8] sm:$0xff]
        %v689 = vld [vmem:[%s364 + $0x3e0] sm:$0xff]
        %v690 = vld [vmem:[%s364 + $0x3e8] sm:$0xff]
        %v691 = vld [vmem:[%s364 + $0x3f0] sm:$0xff]
        %v692 = vld [vmem:[%s364 + $0x3f8] sm:$0xff]
        %v693 = vld [vmem:[%s364 + $0x400] sm:$0xff]
        %v694 = vld [vmem:[%s364 + $0x408] sm:$0xff]
        %v695 = vld [vmem:[%s364 + $0x410] sm:$0xff]
        %v696 = vld [vmem:[%s364 + $0x418] sm:$0xff]
        %v697 = vld [vmem:[%s364 + $0x420] sm:$0xff]
        %v698 = vld [vmem:[%s364 + $0x428] sm:$0xff]
        %v699 = vld [vmem:[%s364 + $0x430] sm:$0xff]
        %v700 = vld [vmem:[%s364 + $0x438] sm:$0xff]
        %v701 = vld [vmem:[%s364 + $0x440] sm:$0xff]
        %v702 = vld [vmem:[%s364 + $0x448] sm:$0xff]
        %v703 = vld [vmem:[%s364 + $0x450] sm:$0xff]
        %v704 = vld [vmem:[%s364 + $0x458] sm:$0xff]
        %v705 = vld [vmem:[%s364 + $0x460] sm:$0xff]
        %v706 = vld [vmem:[%s364 + $0x468] sm:$0xff]
        %v707 = vld [vmem:[%s364 + $0x470] sm:$0xff]
        %v708 = vld [vmem:[%s364 + $0x478] sm:$0xff]
        %v709 = vld [vmem:[%s364 + $0x480] sm:$0xff]
        %v710 = vld [vmem:[%s364 + $0x488] sm:$0xff]
        %v711 = vld [vmem:[%s364 + $0x490] sm:$0xff]
        %v712 = vld [vmem:[%s364 + $0x498] sm:$0xff]
        %v713 = vld [vmem:[%s364 + $0x4a0] sm:$0xff]
        %v714 = vld [vmem:[%s364 + $0x4a8] sm:$0xff]
        %v715 = vld [vmem:[%s364 + $0x4b0] sm:$0xff]
        %v716 = vld [vmem:[%s364 + $0x4b8] sm:$0xff]
        %v717 = vld [vmem:[%s364 + $0x4c0] sm:$0xff]
        %v718 = vld [vmem:[%s364 + $0x4c8] sm:$0xff]
        %v719 = vld [vmem:[%s364 + $0x4d0] sm:$0xff]
        %v720 = vld [vmem:[%s364 + $0x4d8] sm:$0xff]
        %v721 = vld [vmem:[%s364 + $0x4e0] sm:$0xff]
        %v722 = vld [vmem:[%s364 + $0x4e8] sm:$0xff]
        %v723 = vld [vmem:[%s364 + $0x4f0] sm:$0xff]
        %v724 = vld [vmem:[%s364 + $0x4f8] sm:$0xff]
        %v725 = vld [vmem:[%s364 + $0x500] sm:$0xff]
        %v726 = vld [vmem:[%s364 + $0x508] sm:$0xff]
        %v727 = vld [vmem:[%s364 + $0x510] sm:$0xff]
        %v728 = vld [vmem:[%s364 + $0x518] sm:$0xff]
        %v729 = vld [vmem:[%s364 + $0x520] sm:$0xff]
        %v730 = vld [vmem:[%s364 + $0x528] sm:$0xff]
        %v731 = vld [vmem:[%s364 + $0x530] sm:$0xff]
        %v732 = vld [vmem:[%s364 + $0x538] sm:$0xff]
        %v733 = vld [vmem:[%s364 + $0x540] sm:$0xff]
        %v734 = vld [vmem:[%s364 + $0x548] sm:$0xff]
        %v735 = vld [vmem:[%s364 + $0x550] sm:$0xff]
        %v736 = vld [vmem:[%s364 + $0x558] sm:$0xff]
        %v737 = vld [vmem:[%s364 + $0x560] sm:$0xff]
        %v738 = vld [vmem:[%s364 + $0x568] sm:$0xff]
        %v739 = vld [vmem:[%s364 + $0x570] sm:$0xff]
        %v740 = vld [vmem:[%s364 + $0x578] sm:$0xff]
        %v741 = vld [vmem:[%s364 + $0x580] sm:$0xff]
        %v742 = vld [vmem:[%s364 + $0x588] sm:$0xff]
        %v743 = vld [vmem:[%s364 + $0x590] sm:$0xff]
        %v744 = vld [vmem:[%s364 + $0x598] sm:$0xff]
        %v745 = vld [vmem:[%s364 + $0x5a0] sm:$0xff]
        %v746 = vld [vmem:[%s364 + $0x5a8] sm:$0xff]
        %v747 = vld [vmem:[%s364 + $0x5b0] sm:$0xff]
        %v748 = vld [vmem:[%s364 + $0x5b8] sm:$0xff]
        %v749 = vld [vmem:[%s364 + $0x5c0] sm:$0xff]
        %v750 = vld [vmem:[%s364 + $0x5c8] sm:$0xff]
        %v751 = vld [vmem:[%s364 + $0x5d0] sm:$0xff]
        %v752 = vld [vmem:[%s364 + $0x5d8] sm:$0xff]
        %v753 = vld [vmem:[%s364 + $0x5e0] sm:$0xff]
        %v754 = vld [vmem:[%s364 + $0x5e8] sm:$0xff]
        %v755 = vld [vmem:[%s364 + $0x5f0] sm:$0xff]
        %v756 = vld [vmem:[%s364 + $0x5f8] sm:$0xff]
        %v757 = vld [vmem:[%s364 + $0x600] sm:$0xff]
        %v758 = vld [vmem:[%s364 + $0x608] sm:$0xff]
        %v759 = vld [vmem:[%s364 + $0x610] sm:$0xff]
        %v760 = vld [vmem:[%s364 + $0x618] sm:$0xff]
        %v761 = vld [vmem:[%s364 + $0x620] sm:$0xff]
        %v762 = vld [vmem:[%s364 + $0x628] sm:$0xff]
        %v763 = vld [vmem:[%s364 + $0x630] sm:$0xff]
        %v764 = vld [vmem:[%s364 + $0x638] sm:$0xff]
        %v765 = vld [vmem:[%s364 + $0x640] sm:$0xff]
        %v766 = vld [vmem:[%s364 + $0x648] sm:$0xff]
        %v767 = vld [vmem:[%s364 + $0x650] sm:$0xff]
        %v768 = vld [vmem:[%s364 + $0x658] sm:$0xff]
        %v769 = vld [vmem:[%s364 + $0x660] sm:$0xff]
        %v770 = vld [vmem:[%s364 + $0x668] sm:$0xff]
        %v771 = vld [vmem:[%s364 + $0x670] sm:$0xff]
        %v772 = vld [vmem:[%s364 + $0x678] sm:$0xff]
        %v773 = vld [vmem:[%s364 + $0x680] sm:$0xff]
        %v774 = vld [vmem:[%s364 + $0x688] sm:$0xff]
        %v775 = vld [vmem:[%s364 + $0x690] sm:$0xff]
        %v776 = vld [vmem:[%s364 + $0x698] sm:$0xff]
        %v777 = vld [vmem:[%s364 + $0x6a0] sm:$0xff]
        %v778 = vld [vmem:[%s364 + $0x6a8] sm:$0xff]
        %v779 = vld [vmem:[%s364 + $0x6b0] sm:$0xff]
        %v780 = vld [vmem:[%s364 + $0x6b8] sm:$0xff]
        %v781 = vld [vmem:[%s364 + $0x6c0] sm:$0xff]
        %v782 = vld [vmem:[%s364 + $0x6c8] sm:$0xff]
        %v783 = vld [vmem:[%s364 + $0x6d0] sm:$0xff]
        %v784 = vld [vmem:[%s364 + $0x6d8] sm:$0xff]
        %v785 = vld [vmem:[%s364 + $0x6e0] sm:$0xff]
        %v786 = vld [vmem:[%s364 + $0x6e8] sm:$0xff]
        %v787 = vld [vmem:[%s364 + $0x6f0] sm:$0xff]
        %v788 = vld [vmem:[%s364 + $0x6f8] sm:$0xff]
        %v789 = vld [vmem:[%s364 + $0x700] sm:$0xff]
        %v790 = vld [vmem:[%s364 + $0x708] sm:$0xff]
        %v791 = vld [vmem:[%s364 + $0x710] sm:$0xff]
        %v792 = vld [vmem:[%s364 + $0x718] sm:$0xff]
        %v793 = vld [vmem:[%s364 + $0x720] sm:$0xff]
        %v794 = vld [vmem:[%s364 + $0x728] sm:$0xff]
        %v795 = vld [vmem:[%s364 + $0x730] sm:$0xff]
        %v796 = vld [vmem:[%s364 + $0x738] sm:$0xff]
        %v797 = vld [vmem:[%s364 + $0x740] sm:$0xff]
        %v798 = vld [vmem:[%s364 + $0x748] sm:$0xff]
        %v799 = vld [vmem:[%s364 + $0x750] sm:$0xff]
        %v800 = vld [vmem:[%s364 + $0x758] sm:$0xff]
        %v801 = vld [vmem:[%s364 + $0x760] sm:$0xff]
        %v802 = vld [vmem:[%s364 + $0x768] sm:$0xff]
        %v803 = vld [vmem:[%s364 + $0x770] sm:$0xff]
        %v804 = vld [vmem:[%s364 + $0x778] sm:$0xff]
        %v805 = vld [vmem:[%s364 + $0x780] sm:$0xff]
        %v806 = vld [vmem:[%s364 + $0x788] sm:$0xff]
        %v807 = vld [vmem:[%s364 + $0x790] sm:$0xff]
        %v808 = vld [vmem:[%s364 + $0x798] sm:$0xff]
        %v809 = vld [vmem:[%s364 + $0x7a0] sm:$0xff]
        %v810 = vld [vmem:[%s364 + $0x7a8] sm:$0xff]
        %v811 = vld [vmem:[%s364 + $0x7b0] sm:$0xff]
        %v812 = vld [vmem:[%s364 + $0x7b8] sm:$0xff]
        %v813 = vld [vmem:[%s364 + $0x7c0] sm:$0xff]
        %v814 = vld [vmem:[%s364 + $0x7c8] sm:$0xff]
        %v815 = vld [vmem:[%s364 + $0x7d0] sm:$0xff]
        %v816 = vld [vmem:[%s364 + $0x7d8] sm:$0xff]
        %v817 = vld [vmem:[%s364 + $0x7e0] sm:$0xff]
        %v818 = vld [vmem:[%s364 + $0x7e8] sm:$0xff]
        %v819 = vld [vmem:[%s364 + $0x7f0] sm:$0xff]
        %v820 = vld [vmem:[%s364 + $0x7f8] sm:$0xff]
        %v821 = vld [vmem:[%s364 + $0x800] sm:$0xff]
        %v822 = vld [vmem:[%s364 + $0x808] sm:$0xff]
        %v823 = vld [vmem:[%s364 + $0x810] sm:$0xff]
        %v824 = vld [vmem:[%s364 + $0x818] sm:$0xff]
        %v825 = vld [vmem:[%s364 + $0x820] sm:$0xff]
        %v826 = vld [vmem:[%s364 + $0x828] sm:$0xff]
        %v827 = vld [vmem:[%s364 + $0x830] sm:$0xff]
        %v828 = vld [vmem:[%s364 + $0x838] sm:$0xff]
        %v829 = vld [vmem:[%s364 + $0x840] sm:$0xff]
        %v830 = vld [vmem:[%s364 + $0x848] sm:$0xff]
        %v831 = vld [vmem:[%s364 + $0x850] sm:$0xff]
        %v832 = vld [vmem:[%s364 + $0x858] sm:$0xff]
        %v833 = vld [vmem:[%s364 + $0x860] sm:$0xff]
        %v834 = vld [vmem:[%s364 + $0x868] sm:$0xff]
        %v835 = vld [vmem:[%s364 + $0x870] sm:$0xff]
        %v836 = vld [vmem:[%s364 + $0x878] sm:$0xff]
        %v837 = vld [vmem:[%s364 + $0x880] sm:$0xff]
        %v838 = vld [vmem:[%s364 + $0x888] sm:$0xff]
        %v839 = vld [vmem:[%s364 + $0x890] sm:$0xff]
        %v840 = vld [vmem:[%s364 + $0x898] sm:$0xff]
        %v841 = vld [vmem:[%s364 + $0x8a0] sm:$0xff]
        %v842 = vld [vmem:[%s364 + $0x8a8] sm:$0xff]
        %v843 = vld [vmem:[%s364 + $0x8b0] sm:$0xff]
        %v844 = vld [vmem:[%s364 + $0x8b8] sm:$0xff]
        %v845 = vld [vmem:[%s364 + $0x8c0] sm:$0xff]
        %v846 = vld [vmem:[%s364 + $0x8c8] sm:$0xff]
        %v847 = vld [vmem:[%s364 + $0x8d0] sm:$0xff]
        %v848 = vld [vmem:[%s364 + $0x8d8] sm:$0xff]
        %v849 = vld [vmem:[%s364 + $0x8e0] sm:$0xff]
        %v850 = vld [vmem:[%s364 + $0x8e8] sm:$0xff]
        %v851 = vld [vmem:[%s364 + $0x8f0] sm:$0xff]
        %v852 = vld [vmem:[%s364 + $0x8f8] sm:$0xff]
        %v853 = vld [vmem:[%s364 + $0x900] sm:$0xff]
        %v854 = vld [vmem:[%s364 + $0x908] sm:$0xff]
        %v855 = vld [vmem:[%s364 + $0x910] sm:$0xff]
        %v856 = vld [vmem:[%s364 + $0x918] sm:$0xff]
        %v857 = vld [vmem:[%s364 + $0x920] sm:$0xff]
        %v858 = vld [vmem:[%s364 + $0x928] sm:$0xff]
        %v859 = vld [vmem:[%s364 + $0x930] sm:$0xff]
        %v860 = vld [vmem:[%s364 + $0x938] sm:$0xff]
        %v861 = vld [vmem:[%s364 + $0x940] sm:$0xff]
        %v862 = vld [vmem:[%s364 + $0x948] sm:$0xff]
        %v863 = vld [vmem:[%s364 + $0x950] sm:$0xff]
        %v864 = vld [vmem:[%s364 + $0x958] sm:$0xff]
        %v865 = vld [vmem:[%s364 + $0x960] sm:$0xff]
        %v866 = vld [vmem:[%s364 + $0x968] sm:$0xff]
        %v867 = vld [vmem:[%s364 + $0x970] sm:$0xff]
        %v868 = vld [vmem:[%s364 + $0x978] sm:$0xff]
        %v869 = vld [vmem:[%s364 + $0x980] sm:$0xff]
        %v870 = vld [vmem:[%s364 + $0x988] sm:$0xff]
        %v871 = vld [vmem:[%s364 + $0x990] sm:$0xff]
        %v872 = vld [vmem:[%s364 + $0x998] sm:$0xff]
        %v873 = vld [vmem:[%s364 + $0x9a0] sm:$0xff]
        %v874 = vld [vmem:[%s364 + $0x9a8] sm:$0xff]
        %v875 = vld [vmem:[%s364 + $0x9b0] sm:$0xff]
        %v876 = vld [vmem:[%s364 + $0x9b8] sm:$0xff]
        %v877 = vld [vmem:[%s364 + $0x9c0] sm:$0xff]
        %v878 = vld [vmem:[%s364 + $0x9c8] sm:$0xff]
        %v879 = vld [vmem:[%s364 + $0x9d0] sm:$0xff]
        %v880 = vld [vmem:[%s364 + $0x9d8] sm:$0xff]
        %v881 = vld [vmem:[%s364 + $0x9e0] sm:$0xff]
        %v882 = vld [vmem:[%s364 + $0x9e8] sm:$0xff]
        %v883 = vld [vmem:[%s364 + $0x9f0] sm:$0xff]
        %v884 = vld [vmem:[%s364 + $0x9f8] sm:$0xff]
        %v885 = vld [vmem:[%s364 + $0xa00] sm:$0xff]
        %v886 = vld [vmem:[%s364 + $0xa08] sm:$0xff]
        %v887 = vld [vmem:[%s364 + $0xa10] sm:$0xff]
        %v888 = vld [vmem:[%s364 + $0xa18] sm:$0xff]
        %v889 = vld [vmem:[%s364 + $0xa20] sm:$0xff]
        %v890 = vld [vmem:[%s364 + $0xa28] sm:$0xff]
        %v891 = vld [vmem:[%s364 + $0xa30] sm:$0xff]
        %v892 = vld [vmem:[%s364 + $0xa38] sm:$0xff]
        %v893 = vld [vmem:[%s364 + $0xa40] sm:$0xff]
        %v894 = vld [vmem:[%s364 + $0xa48] sm:$0xff]
        %v895 = vld [vmem:[%s364 + $0xa50] sm:$0xff]
        %v896 = vld [vmem:[%s364 + $0xa58] sm:$0xff]
        %v897 = vld [vmem:[%s364 + $0xa60] sm:$0xff]
        %v898 = vld [vmem:[%s364 + $0xa68] sm:$0xff]
        %v899 = vld [vmem:[%s364 + $0xa70] sm:$0xff]
        %v900 = vld [vmem:[%s364 + $0xa78] sm:$0xff]
        %v901 = vld [vmem:[%s364 + $0xa80] sm:$0xff]
        %v902 = vld [vmem:[%s364 + $0xa88] sm:$0xff]
        %v903 = vld [vmem:[%s364 + $0xa90] sm:$0xff]
        %v904 = vld [vmem:[%s364 + $0xa98] sm:$0xff]
        %v905 = vld [vmem:[%s364 + $0xaa0] sm:$0xff]
        %v906 = vld [vmem:[%s364 + $0xaa8] sm:$0xff]
        %v907 = vld [vmem:[%s364 + $0xab0] sm:$0xff]
        %v908 = vld [vmem:[%s364 + $0xab8] sm:$0xff]
        %v909 = vld [vmem:[%s364 + $0xac0] sm:$0xff]
        %v910 = vld [vmem:[%s364 + $0xac8] sm:$0xff]
        %v911 = vld [vmem:[%s364 + $0xad0] sm:$0xff]
        %v912 = vld [vmem:[%s364 + $0xad8] sm:$0xff]
        %v913 = vld [vmem:[%s364 + $0xae0] sm:$0xff]
        %v914 = vld [vmem:[%s364 + $0xae8] sm:$0xff]
        %v915 = vld [vmem:[%s364 + $0xaf0] sm:$0xff]
        %v916 = vld [vmem:[%s364 + $0xaf8] sm:$0xff]
        %v917 = vld [vmem:[%s364 + $0xb00] sm:$0xff]
        %v918 = vld [vmem:[%s364 + $0xb08] sm:$0xff]
        %v919 = vld [vmem:[%s364 + $0xb10] sm:$0xff]
        %v920 = vld [vmem:[%s364 + $0xb18] sm:$0xff]
        %v921 = vld [vmem:[%s364 + $0xb20] sm:$0xff]
        %v922 = vld [vmem:[%s364 + $0xb28] sm:$0xff]
        %v923 = vld [vmem:[%s364 + $0xb30] sm:$0xff]
        %v924 = vld [vmem:[%s364 + $0xb38] sm:$0xff]
        %v925 = vld [vmem:[%s364 + $0xb40] sm:$0xff]
        %v926 = vld [vmem:[%s364 + $0xb48] sm:$0xff]
        %v927 = vld [vmem:[%s364 + $0xb50] sm:$0xff]
        %v928 = vld [vmem:[%s364 + $0xb58] sm:$0xff]
        %v929 = vld [vmem:[%s364 + $0xb60] sm:$0xff]
        %v930 = vld [vmem:[%s364 + $0xb68] sm:$0xff]
        %v931 = vld [vmem:[%s364 + $0xb70] sm:$0xff]
        %v932 = vld [vmem:[%s364 + $0xb78] sm:$0xff]
        %v933 = vld [vmem:[%s364 + $0xb80] sm:$0xff]
        %v934 = vld [vmem:[%s364 + $0xb88] sm:$0xff]
        %v935 = vld [vmem:[%s364 + $0xb90] sm:$0xff]
        %v936 = vld [vmem:[%s364 + $0xb98] sm:$0xff]
        %v937 = vld [vmem:[%s364 + $0xba0] sm:$0xff]
        %v938 = vld [vmem:[%s364 + $0xba8] sm:$0xff]
        %v939 = vld [vmem:[%s364 + $0xbb0] sm:$0xff]
        %v940 = vld [vmem:[%s364 + $0xbb8] sm:$0xff]
        %v941 = vld [vmem:[%s364 + $0xbc0] sm:$0xff]
        %v942 = vld [vmem:[%s364 + $0xbc8] sm:$0xff]
        %v943 = vld [vmem:[%s364 + $0xbd0] sm:$0xff]
        %v944 = vld [vmem:[%s364 + $0xbd8] sm:$0xff]
        %v945 = vld [vmem:[%s364 + $0xbe0] sm:$0xff]
        %v946 = vld [vmem:[%s364 + $0xbe8] sm:$0xff]
        %v947 = vld [vmem:[%s364 + $0xbf0] sm:$0xff]
        %v948 = vld [vmem:[%s364 + $0xbf8] sm:$0xff]
        %v949 = vld [vmem:[%s364 + $0xc00] sm:$0xff]
        %v950 = vld [vmem:[%s364 + $0xc08] sm:$0xff]
        %v951 = vld [vmem:[%s364 + $0xc10] sm:$0xff]
        %v952 = vld [vmem:[%s364 + $0xc18] sm:$0xff]
        %v953 = vld [vmem:[%s364 + $0xc20] sm:$0xff]
        %v954 = vld [vmem:[%s364 + $0xc28] sm:$0xff]
        %v955 = vld [vmem:[%s364 + $0xc30] sm:$0xff]
        %v956 = vld [vmem:[%s364 + $0xc38] sm:$0xff]
        %v957 = vld [vmem:[%s364 + $0xc40] sm:$0xff]
        %v958 = vld [vmem:[%s364 + $0xc48] sm:$0xff]
        %v959 = vld [vmem:[%s364 + $0xc50] sm:$0xff]
        %v960 = vld [vmem:[%s364 + $0xc58] sm:$0xff]
        %v961 = vld [vmem:[%s364 + $0xc60] sm:$0xff]
        %v962 = vld [vmem:[%s364 + $0xc68] sm:$0xff]
        %v963 = vld [vmem:[%s364 + $0xc70] sm:$0xff]
        %v964 = vld [vmem:[%s364 + $0xc78] sm:$0xff]
        %v965 = vld [vmem:[%s364 + $0xc80] sm:$0xff]
        %v966 = vld [vmem:[%s364 + $0xc88] sm:$0xff]
        %v967 = vld [vmem:[%s364 + $0xc90] sm:$0xff]
        %v968 = vld [vmem:[%s364 + $0xc98] sm:$0xff]
        %v969 = vld [vmem:[%s364 + $0xca0] sm:$0xff]
        %v970 = vld [vmem:[%s364 + $0xca8] sm:$0xff]
        %v971 = vld [vmem:[%s364 + $0xcb0] sm:$0xff]
        %v972 = vld [vmem:[%s364 + $0xcb8] sm:$0xff]
        %v973 = vld [vmem:[%s364 + $0xcc0] sm:$0xff]
        %v974 = vld [vmem:[%s364 + $0xcc8] sm:$0xff]
        %v975 = vld [vmem:[%s364 + $0xcd0] sm:$0xff]
        %v976 = vld [vmem:[%s364 + $0xcd8] sm:$0xff]
        %v977 = vld [vmem:[%s364 + $0xce0] sm:$0xff]
        %v978 = vld [vmem:[%s364 + $0xce8] sm:$0xff]
        %v979 = vld [vmem:[%s364 + $0xcf0] sm:$0xff]
        %v980 = vld [vmem:[%s364 + $0xcf8] sm:$0xff]
        %v981 = vld [vmem:[%s364 + $0xd00] sm:$0xff]
        %v982 = vld [vmem:[%s364 + $0xd08] sm:$0xff]
        %v983 = vld [vmem:[%s364 + $0xd10] sm:$0xff]
        %v984 = vld [vmem:[%s364 + $0xd18] sm:$0xff]
        %v985 = vld [vmem:[%s364 + $0xd20] sm:$0xff]
        %v986 = vld [vmem:[%s364 + $0xd28] sm:$0xff]
        %v987 = vld [vmem:[%s364 + $0xd30] sm:$0xff]
        %v988 = vld [vmem:[%s364 + $0xd38] sm:$0xff]
        %v989 = vld [vmem:[%s364 + $0xd40] sm:$0xff]
        %v990 = vld [vmem:[%s364 + $0xd48] sm:$0xff]
        %v991 = vld [vmem:[%s364 + $0xd50] sm:$0xff]
        %v992 = vld [vmem:[%s364 + $0xd58] sm:$0xff]
        %v993 = vld [vmem:[%s364 + $0xd60] sm:$0xff]
        %v994 = vld [vmem:[%s364 + $0xd68] sm:$0xff]
        %v995 = vld [vmem:[%s364 + $0xd70] sm:$0xff]
        %v996 = vld [vmem:[%s364 + $0xd78] sm:$0xff]
        %v997 = vld [vmem:[%s364 + $0xd80] sm:$0xff]
        %v998 = vld [vmem:[%s364 + $0xd88] sm:$0xff]
        %v999 = vld [vmem:[%s364 + $0xd90] sm:$0xff]
        %v1000 = vld [vmem:[%s364 + $0xd98] sm:$0xff]
        %v1001 = vld [vmem:[%s364 + $0xda0] sm:$0xff]
        %v1002 = vld [vmem:[%s364 + $0xda8] sm:$0xff]
        %v1003 = vld [vmem:[%s364 + $0xdb0] sm:$0xff]
        %v1004 = vld [vmem:[%s364 + $0xdb8] sm:$0xff]
        %v1005 = vld [vmem:[%s364 + $0xdc0] sm:$0xff]
        %v1006 = vld [vmem:[%s364 + $0xdc8] sm:$0xff]
        %v1007 = vld [vmem:[%s364 + $0xdd0] sm:$0xff]
        %v1008 = vld [vmem:[%s364 + $0xdd8] sm:$0xff]
        %v1009 = vld [vmem:[%s364 + $0xde0] sm:$0xff]
        %v1010 = vld [vmem:[%s364 + $0xde8] sm:$0xff]
        %v1011 = vld [vmem:[%s364 + $0xdf0] sm:$0xff]
        %v1012 = vld [vmem:[%s364 + $0xdf8] sm:$0xff]
        %v1013 = vld [vmem:[%s373] sm:$0xf]
        %v1015 = vlaneseq
        %v1016 = vshrl.u32 %v1015, 7
        %v1017 = vsub.s32 0, %v1016
        %v1018 = vrot.slane %v1013, %v1017
        %v1019 = vlaneseq
        %v1020 = vshrl.u32 %v1019, 7
        %v1021 = vsub.s32 1, %v1020
        %v1022 = vrot.slane %v1013, %v1021
        %v1023 = vlaneseq
        %v1024 = vshrl.u32 %v1023, 7
        %v1025 = vsub.s32 2, %v1024
        %v1026 = vrot.slane %v1013, %v1025
        %v1027 = vlaneseq
        %v1028 = vshrl.u32 %v1027, 7
        %v1029 = vsub.s32 3, %v1028
        %v1030 = vrot.slane %v1013, %v1029
        %v1483 = vunpack.c.l.b16 %v565
        %v1484 = vunpack.c.h.b16 %v565
        %v1485 = vunpack.c.l.b16 %v566
        %v1486 = vunpack.c.h.b16 %v566
        %v1487 = vunpack.c.l.b16 %v567
        %v1488 = vunpack.c.h.b16 %v567
        %v1489 = vunpack.c.l.b16 %v568
        %v1490 = vunpack.c.h.b16 %v568
        %v1491 = vunpack.c.l.b16 %v569
        %v1492 = vunpack.c.h.b16 %v569
        %v1493 = vunpack.c.l.b16 %v570
        %v1494 = vunpack.c.h.b16 %v570
        %v1495 = vunpack.c.l.b16 %v571
        %v1496 = vunpack.c.h.b16 %v571
        %v1497 = vunpack.c.l.b16 %v572
        %v1498 = vunpack.c.h.b16 %v572
        %v1499 = vunpack.c.l.b16 %v573
        %v1500 = vunpack.c.h.b16 %v573
        %v1501 = vunpack.c.l.b16 %v574
        %v1502 = vunpack.c.h.b16 %v574
        %v1503 = vunpack.c.l.b16 %v575
        %v1504 = vunpack.c.h.b16 %v575
        %v1505 = vunpack.c.l.b16 %v576
        %v1506 = vunpack.c.h.b16 %v576
        %v1507 = vunpack.c.l.b16 %v577
        %v1508 = vunpack.c.h.b16 %v577
        %v1509 = vunpack.c.l.b16 %v578
        %v1510 = vunpack.c.h.b16 %v578
        %v1511 = vunpack.c.l.b16 %v579
        %v1512 = vunpack.c.h.b16 %v579
        %v1513 = vunpack.c.l.b16 %v580
        %v1514 = vunpack.c.h.b16 %v580
        %v1515 = vunpack.c.l.b16 %v581
        %v1516 = vunpack.c.h.b16 %v581
        %v1517 = vunpack.c.l.b16 %v582
        %v1518 = vunpack.c.h.b16 %v582
        %v1519 = vunpack.c.l.b16 %v583
        %v1520 = vunpack.c.h.b16 %v583
        %v1521 = vunpack.c.l.b16 %v584
        %v1522 = vunpack.c.h.b16 %v584
        %v1523 = vunpack.c.l.b16 %v585
        %v1524 = vunpack.c.h.b16 %v585
        %v1525 = vunpack.c.l.b16 %v586
        %v1526 = vunpack.c.h.b16 %v586
        %v1527 = vunpack.c.l.b16 %v587
        %v1528 = vunpack.c.h.b16 %v587
        %v1529 = vunpack.c.l.b16 %v588
        %v1530 = vunpack.c.h.b16 %v588
        %v1531 = vunpack.c.l.b16 %v589
        %v1532 = vunpack.c.h.b16 %v589
        %v1533 = vunpack.c.l.b16 %v590
        %v1534 = vunpack.c.h.b16 %v590
        %v1535 = vunpack.c.l.b16 %v591
        %v1536 = vunpack.c.h.b16 %v591
        %v1537 = vunpack.c.l.b16 %v592
        %v1538 = vunpack.c.h.b16 %v592
        %v1539 = vunpack.c.l.b16 %v593
        %v1540 = vunpack.c.h.b16 %v593
        %v1541 = vunpack.c.l.b16 %v594
        %v1542 = vunpack.c.h.b16 %v594
        %v1543 = vunpack.c.l.b16 %v595
        %v1544 = vunpack.c.h.b16 %v595
        %v1545 = vunpack.c.l.b16 %v596
        %v1546 = vunpack.c.h.b16 %v596
        %v1547 = vunpack.c.l.b16 %v597
        %v1548 = vunpack.c.h.b16 %v597
        %v1549 = vunpack.c.l.b16 %v598
        %v1550 = vunpack.c.h.b16 %v598
        %v1551 = vunpack.c.l.b16 %v599
        %v1552 = vunpack.c.h.b16 %v599
        %v1553 = vunpack.c.l.b16 %v600
        %v1554 = vunpack.c.h.b16 %v600
        %v1555 = vunpack.c.l.b16 %v601
        %v1556 = vunpack.c.h.b16 %v601
        %v1557 = vunpack.c.l.b16 %v602
        %v1558 = vunpack.c.h.b16 %v602
        %v1559 = vunpack.c.l.b16 %v603
        %v1560 = vunpack.c.h.b16 %v603
        %v1561 = vunpack.c.l.b16 %v604
        %v1562 = vunpack.c.h.b16 %v604
        %v1563 = vunpack.c.l.b16 %v605
        %v1564 = vunpack.c.h.b16 %v605
        %v1565 = vunpack.c.l.b16 %v606
        %v1566 = vunpack.c.h.b16 %v606
        %v1567 = vunpack.c.l.b16 %v607
        %v1568 = vunpack.c.h.b16 %v607
        %v1569 = vunpack.c.l.b16 %v608
        %v1570 = vunpack.c.h.b16 %v608
        %v1571 = vunpack.c.l.b16 %v609
        %v1572 = vunpack.c.h.b16 %v609
        %v1573 = vunpack.c.l.b16 %v610
        %v1574 = vunpack.c.h.b16 %v610
        %v1575 = vunpack.c.l.b16 %v611
        %v1576 = vunpack.c.h.b16 %v611
        %v1577 = vunpack.c.l.b16 %v612
        %v1578 = vunpack.c.h.b16 %v612
        %v1579 = vunpack.c.l.b16 %v613
        %v1580 = vunpack.c.h.b16 %v613
        %v1581 = vunpack.c.l.b16 %v614
        %v1582 = vunpack.c.h.b16 %v614
        %v1583 = vunpack.c.l.b16 %v615
        %v1584 = vunpack.c.h.b16 %v615
        %v1585 = vunpack.c.l.b16 %v616
        %v1586 = vunpack.c.h.b16 %v616
        %v1587 = vunpack.c.l.b16 %v617
        %v1588 = vunpack.c.h.b16 %v617
        %v1589 = vunpack.c.l.b16 %v618
        %v1590 = vunpack.c.h.b16 %v618
        %v1591 = vunpack.c.l.b16 %v619
        %v1592 = vunpack.c.h.b16 %v619
        %v1593 = vunpack.c.l.b16 %v620
        %v1594 = vunpack.c.h.b16 %v620
        %v1595 = vunpack.c.l.b16 %v621
        %v1596 = vunpack.c.h.b16 %v621
        %v1597 = vunpack.c.l.b16 %v622
        %v1598 = vunpack.c.h.b16 %v622
        %v1599 = vunpack.c.l.b16 %v623
        %v1600 = vunpack.c.h.b16 %v623
        %v1601 = vunpack.c.l.b16 %v624
        %v1602 = vunpack.c.h.b16 %v624
        %v1603 = vunpack.c.l.b16 %v625
        %v1604 = vunpack.c.h.b16 %v625
        %v1605 = vunpack.c.l.b16 %v626
        %v1606 = vunpack.c.h.b16 %v626
        %v1607 = vunpack.c.l.b16 %v627
        %v1608 = vunpack.c.h.b16 %v627
        %v1609 = vunpack.c.l.b16 %v628
        %v1610 = vunpack.c.h.b16 %v628
        %v1611 = vunpack.c.l.b16 %v629
        %v1612 = vunpack.c.h.b16 %v629
        %v1613 = vunpack.c.l.b16 %v630
        %v1614 = vunpack.c.h.b16 %v630
        %v1615 = vunpack.c.l.b16 %v631
        %v1616 = vunpack.c.h.b16 %v631
        %v1617 = vunpack.c.l.b16 %v632
        %v1618 = vunpack.c.h.b16 %v632
        %v1619 = vunpack.c.l.b16 %v633
        %v1620 = vunpack.c.h.b16 %v633
        %v1621 = vunpack.c.l.b16 %v634
        %v1622 = vunpack.c.h.b16 %v634
        %v1623 = vunpack.c.l.b16 %v635
        %v1624 = vunpack.c.h.b16 %v635
        %v1625 = vunpack.c.l.b16 %v636
        %v1626 = vunpack.c.h.b16 %v636
        %v1627 = vunpack.c.l.b16 %v637
        %v1628 = vunpack.c.h.b16 %v637
        %v1629 = vunpack.c.l.b16 %v638
        %v1630 = vunpack.c.h.b16 %v638
        %v1631 = vunpack.c.l.b16 %v639
        %v1632 = vunpack.c.h.b16 %v639
        %v1633 = vunpack.c.l.b16 %v640
        %v1634 = vunpack.c.h.b16 %v640
        %v1635 = vunpack.c.l.b16 %v641
        %v1636 = vunpack.c.h.b16 %v641
        %v1637 = vunpack.c.l.b16 %v642
        %v1638 = vunpack.c.h.b16 %v642
        %v1639 = vunpack.c.l.b16 %v643
        %v1640 = vunpack.c.h.b16 %v643
        %v1641 = vunpack.c.l.b16 %v644
        %v1642 = vunpack.c.h.b16 %v644
        %v1643 = vunpack.c.l.b16 %v645
        %v1644 = vunpack.c.h.b16 %v645
        %v1645 = vunpack.c.l.b16 %v646
        %v1646 = vunpack.c.h.b16 %v646
        %v1647 = vunpack.c.l.b16 %v647
        %v1648 = vunpack.c.h.b16 %v647
        %v1649 = vunpack.c.l.b16 %v648
        %v1650 = vunpack.c.h.b16 %v648
        %v1651 = vunpack.c.l.b16 %v649
        %v1652 = vunpack.c.h.b16 %v649
        %v1653 = vunpack.c.l.b16 %v650
        %v1654 = vunpack.c.h.b16 %v650
        %v1655 = vunpack.c.l.b16 %v651
        %v1656 = vunpack.c.h.b16 %v651
        %v1657 = vunpack.c.l.b16 %v652
        %v1658 = vunpack.c.h.b16 %v652
        %v1659 = vunpack.c.l.b16 %v653
        %v1660 = vunpack.c.h.b16 %v653
        %v1661 = vunpack.c.l.b16 %v654
        %v1662 = vunpack.c.h.b16 %v654
        %v1663 = vunpack.c.l.b16 %v655
        %v1664 = vunpack.c.h.b16 %v655
        %v1665 = vunpack.c.l.b16 %v656
        %v1666 = vunpack.c.h.b16 %v656
        %v1667 = vunpack.c.l.b16 %v657
        %v1668 = vunpack.c.h.b16 %v657
        %v1669 = vunpack.c.l.b16 %v658
        %v1670 = vunpack.c.h.b16 %v658
        %v1671 = vunpack.c.l.b16 %v659
        %v1672 = vunpack.c.h.b16 %v659
        %v1673 = vunpack.c.l.b16 %v660
        %v1674 = vunpack.c.h.b16 %v660
        %v1675 = vunpack.c.l.b16 %v661
        %v1676 = vunpack.c.h.b16 %v661
        %v1677 = vunpack.c.l.b16 %v662
        %v1678 = vunpack.c.h.b16 %v662
        %v1679 = vunpack.c.l.b16 %v663
        %v1680 = vunpack.c.h.b16 %v663
        %v1681 = vunpack.c.l.b16 %v664
        %v1682 = vunpack.c.h.b16 %v664
        %v1683 = vunpack.c.l.b16 %v665
        %v1684 = vunpack.c.h.b16 %v665
        %v1685 = vunpack.c.l.b16 %v666
        %v1686 = vunpack.c.h.b16 %v666
        %v1687 = vunpack.c.l.b16 %v667
        %v1688 = vunpack.c.h.b16 %v667
        %v1689 = vunpack.c.l.b16 %v668
        %v1690 = vunpack.c.h.b16 %v668
        %v1691 = vunpack.c.l.b16 %v669
        %v1692 = vunpack.c.h.b16 %v669
        %v1693 = vunpack.c.l.b16 %v670
        %v1694 = vunpack.c.h.b16 %v670
        %v1695 = vunpack.c.l.b16 %v671
        %v1696 = vunpack.c.h.b16 %v671
        %v1697 = vunpack.c.l.b16 %v672
        %v1698 = vunpack.c.h.b16 %v672
        %v1699 = vunpack.c.l.b16 %v673
        %v1700 = vunpack.c.h.b16 %v673
        %v1701 = vunpack.c.l.b16 %v674
        %v1702 = vunpack.c.h.b16 %v674
        %v1703 = vunpack.c.l.b16 %v675
        %v1704 = vunpack.c.h.b16 %v675
        %v1705 = vunpack.c.l.b16 %v676
        %v1706 = vunpack.c.h.b16 %v676
        %v1707 = vunpack.c.l.b16 %v677
        %v1708 = vunpack.c.h.b16 %v677
        %v1709 = vunpack.c.l.b16 %v678
        %v1710 = vunpack.c.h.b16 %v678
        %v1711 = vunpack.c.l.b16 %v679
        %v1712 = vunpack.c.h.b16 %v679
        %v1713 = vunpack.c.l.b16 %v680
        %v1714 = vunpack.c.h.b16 %v680
        %v1715 = vunpack.c.l.b16 %v681
        %v1716 = vunpack.c.h.b16 %v681
        %v1717 = vunpack.c.l.b16 %v682
        %v1718 = vunpack.c.h.b16 %v682
        %v1719 = vunpack.c.l.b16 %v683
        %v1720 = vunpack.c.h.b16 %v683
        %v1721 = vunpack.c.l.b16 %v684
        %v1722 = vunpack.c.h.b16 %v684
        %v1723 = vunpack.c.l.b16 %v685
        %v1724 = vunpack.c.h.b16 %v685
        %v1725 = vunpack.c.l.b16 %v686
        %v1726 = vunpack.c.h.b16 %v686
        %v1727 = vunpack.c.l.b16 %v687
        %v1728 = vunpack.c.h.b16 %v687
        %v1729 = vunpack.c.l.b16 %v688
        %v1730 = vunpack.c.h.b16 %v688
        %v1731 = vunpack.c.l.b16 %v689
        %v1732 = vunpack.c.h.b16 %v689
        %v1733 = vunpack.c.l.b16 %v690
        %v1734 = vunpack.c.h.b16 %v690
        %v1735 = vunpack.c.l.b16 %v691
        %v1736 = vunpack.c.h.b16 %v691
        %v1737 = vunpack.c.l.b16 %v692
        %v1738 = vunpack.c.h.b16 %v692
        %v1739 = vunpack.c.l.b16 %v693
        %v1740 = vunpack.c.h.b16 %v693
        %v1741 = vunpack.c.l.b16 %v694
        %v1742 = vunpack.c.h.b16 %v694
        %v1743 = vunpack.c.l.b16 %v695
        %v1744 = vunpack.c.h.b16 %v695
        %v1745 = vunpack.c.l.b16 %v696
        %v1746 = vunpack.c.h.b16 %v696
        %v1747 = vunpack.c.l.b16 %v697
        %v1748 = vunpack.c.h.b16 %v697
        %v1749 = vunpack.c.l.b16 %v698
        %v1750 = vunpack.c.h.b16 %v698
        %v1751 = vunpack.c.l.b16 %v699
        %v1752 = vunpack.c.h.b16 %v699
        %v1753 = vunpack.c.l.b16 %v700
        %v1754 = vunpack.c.h.b16 %v700
        %v1755 = vunpack.c.l.b16 %v701
        %v1756 = vunpack.c.h.b16 %v701
        %v1757 = vunpack.c.l.b16 %v702
        %v1758 = vunpack.c.h.b16 %v702
        %v1759 = vunpack.c.l.b16 %v703
        %v1760 = vunpack.c.h.b16 %v703
        %v1761 = vunpack.c.l.b16 %v704
        %v1762 = vunpack.c.h.b16 %v704
        %v1763 = vunpack.c.l.b16 %v705
        %v1764 = vunpack.c.h.b16 %v705
        %v1765 = vunpack.c.l.b16 %v706
        %v1766 = vunpack.c.h.b16 %v706
        %v1767 = vunpack.c.l.b16 %v707
        %v1768 = vunpack.c.h.b16 %v707
        %v1769 = vunpack.c.l.b16 %v708
        %v1770 = vunpack.c.h.b16 %v708
        %v1771 = vunpack.c.l.b16 %v709
        %v1772 = vunpack.c.h.b16 %v709
        %v1773 = vunpack.c.l.b16 %v710
        %v1774 = vunpack.c.h.b16 %v710
        %v1775 = vunpack.c.l.b16 %v711
        %v1776 = vunpack.c.h.b16 %v711
        %v1777 = vunpack.c.l.b16 %v712
        %v1778 = vunpack.c.h.b16 %v712
        %v1779 = vunpack.c.l.b16 %v713
        %v1780 = vunpack.c.h.b16 %v713
        %v1781 = vunpack.c.l.b16 %v714
        %v1782 = vunpack.c.h.b16 %v714
        %v1783 = vunpack.c.l.b16 %v715
        %v1784 = vunpack.c.h.b16 %v715
        %v1785 = vunpack.c.l.b16 %v716
        %v1786 = vunpack.c.h.b16 %v716
        %v1787 = vunpack.c.l.b16 %v717
        %v1788 = vunpack.c.h.b16 %v717
        %v1789 = vunpack.c.l.b16 %v718
        %v1790 = vunpack.c.h.b16 %v718
        %v1791 = vunpack.c.l.b16 %v719
        %v1792 = vunpack.c.h.b16 %v719
        %v1793 = vunpack.c.l.b16 %v720
        %v1794 = vunpack.c.h.b16 %v720
        %v1795 = vunpack.c.l.b16 %v721
        %v1796 = vunpack.c.h.b16 %v721
        %v1797 = vunpack.c.l.b16 %v722
        %v1798 = vunpack.c.h.b16 %v722
        %v1799 = vunpack.c.l.b16 %v723
        %v1800 = vunpack.c.h.b16 %v723
        %v1801 = vunpack.c.l.b16 %v724
        %v1802 = vunpack.c.h.b16 %v724
        %v1803 = vunpack.c.l.b16 %v725
        %v1804 = vunpack.c.h.b16 %v725
        %v1805 = vunpack.c.l.b16 %v726
        %v1806 = vunpack.c.h.b16 %v726
        %v1807 = vunpack.c.l.b16 %v727
        %v1808 = vunpack.c.h.b16 %v727
        %v1809 = vunpack.c.l.b16 %v728
        %v1810 = vunpack.c.h.b16 %v728
        %v1811 = vunpack.c.l.b16 %v729
        %v1812 = vunpack.c.h.b16 %v729
        %v1813 = vunpack.c.l.b16 %v730
        %v1814 = vunpack.c.h.b16 %v730
        %v1815 = vunpack.c.l.b16 %v731
        %v1816 = vunpack.c.h.b16 %v731
        %v1817 = vunpack.c.l.b16 %v732
        %v1818 = vunpack.c.h.b16 %v732
        %v1819 = vunpack.c.l.b16 %v733
        %v1820 = vunpack.c.h.b16 %v733
        %v1821 = vunpack.c.l.b16 %v734
        %v1822 = vunpack.c.h.b16 %v734
        %v1823 = vunpack.c.l.b16 %v735
        %v1824 = vunpack.c.h.b16 %v735
        %v1825 = vunpack.c.l.b16 %v736
        %v1826 = vunpack.c.h.b16 %v736
        %v1827 = vunpack.c.l.b16 %v737
        %v1828 = vunpack.c.h.b16 %v737
        %v1829 = vunpack.c.l.b16 %v738
        %v1830 = vunpack.c.h.b16 %v738
        %v1831 = vunpack.c.l.b16 %v739
        %v1832 = vunpack.c.h.b16 %v739
        %v1833 = vunpack.c.l.b16 %v740
        %v1834 = vunpack.c.h.b16 %v740
        %v1835 = vunpack.c.l.b16 %v741
        %v1836 = vunpack.c.h.b16 %v741
        %v1837 = vunpack.c.l.b16 %v742
        %v1838 = vunpack.c.h.b16 %v742
        %v1839 = vunpack.c.l.b16 %v743
        %v1840 = vunpack.c.h.b16 %v743
        %v1841 = vunpack.c.l.b16 %v744
        %v1842 = vunpack.c.h.b16 %v744
        %v1843 = vunpack.c.l.b16 %v745
        %v1844 = vunpack.c.h.b16 %v745
        %v1845 = vunpack.c.l.b16 %v746
        %v1846 = vunpack.c.h.b16 %v746
        %v1847 = vunpack.c.l.b16 %v747
        %v1848 = vunpack.c.h.b16 %v747
        %v1849 = vunpack.c.l.b16 %v748
        %v1850 = vunpack.c.h.b16 %v748
        %v1851 = vunpack.c.l.b16 %v749
        %v1852 = vunpack.c.h.b16 %v749
        %v1853 = vunpack.c.l.b16 %v750
        %v1854 = vunpack.c.h.b16 %v750
        %v1855 = vunpack.c.l.b16 %v751
        %v1856 = vunpack.c.h.b16 %v751
        %v1857 = vunpack.c.l.b16 %v752
        %v1858 = vunpack.c.h.b16 %v752
        %v1859 = vunpack.c.l.b16 %v753
        %v1860 = vunpack.c.h.b16 %v753
        %v1861 = vunpack.c.l.b16 %v754
        %v1862 = vunpack.c.h.b16 %v754
        %v1863 = vunpack.c.l.b16 %v755
        %v1864 = vunpack.c.h.b16 %v755
        %v1865 = vunpack.c.l.b16 %v756
        %v1866 = vunpack.c.h.b16 %v756
        %v1867 = vunpack.c.l.b16 %v757
        %v1868 = vunpack.c.h.b16 %v757
        %v1869 = vunpack.c.l.b16 %v758
        %v1870 = vunpack.c.h.b16 %v758
        %v1871 = vunpack.c.l.b16 %v759
        %v1872 = vunpack.c.h.b16 %v759
        %v1873 = vunpack.c.l.b16 %v760
        %v1874 = vunpack.c.h.b16 %v760
        %v1875 = vunpack.c.l.b16 %v761
        %v1876 = vunpack.c.h.b16 %v761
        %v1877 = vunpack.c.l.b16 %v762
        %v1878 = vunpack.c.h.b16 %v762
        %v1879 = vunpack.c.l.b16 %v763
        %v1880 = vunpack.c.h.b16 %v763
        %v1881 = vunpack.c.l.b16 %v764
        %v1882 = vunpack.c.h.b16 %v764
        %v1883 = vunpack.c.l.b16 %v765
        %v1884 = vunpack.c.h.b16 %v765
        %v1885 = vunpack.c.l.b16 %v766
        %v1886 = vunpack.c.h.b16 %v766
        %v1887 = vunpack.c.l.b16 %v767
        %v1888 = vunpack.c.h.b16 %v767
        %v1889 = vunpack.c.l.b16 %v768
        %v1890 = vunpack.c.h.b16 %v768
        %v1891 = vunpack.c.l.b16 %v769
        %v1892 = vunpack.c.h.b16 %v769
        %v1893 = vunpack.c.l.b16 %v770
        %v1894 = vunpack.c.h.b16 %v770
        %v1895 = vunpack.c.l.b16 %v771
        %v1896 = vunpack.c.h.b16 %v771
        %v1897 = vunpack.c.l.b16 %v772
        %v1898 = vunpack.c.h.b16 %v772
        %v1899 = vunpack.c.l.b16 %v773
        %v1900 = vunpack.c.h.b16 %v773
        %v1901 = vunpack.c.l.b16 %v774
        %v1902 = vunpack.c.h.b16 %v774
        %v1903 = vunpack.c.l.b16 %v775
        %v1904 = vunpack.c.h.b16 %v775
        %v1905 = vunpack.c.l.b16 %v776
        %v1906 = vunpack.c.h.b16 %v776
        %v1907 = vunpack.c.l.b16 %v777
        %v1908 = vunpack.c.h.b16 %v777
        %v1909 = vunpack.c.l.b16 %v778
        %v1910 = vunpack.c.h.b16 %v778
        %v1911 = vunpack.c.l.b16 %v779
        %v1912 = vunpack.c.h.b16 %v779
        %v1913 = vunpack.c.l.b16 %v780
        %v1914 = vunpack.c.h.b16 %v780
        %v1915 = vunpack.c.l.b16 %v781
        %v1916 = vunpack.c.h.b16 %v781
        %v1917 = vunpack.c.l.b16 %v782
        %v1918 = vunpack.c.h.b16 %v782
        %v1919 = vunpack.c.l.b16 %v783
        %v1920 = vunpack.c.h.b16 %v783
        %v1921 = vunpack.c.l.b16 %v784
        %v1922 = vunpack.c.h.b16 %v784
        %v1923 = vunpack.c.l.b16 %v785
        %v1924 = vunpack.c.h.b16 %v785
        %v1925 = vunpack.c.l.b16 %v786
        %v1926 = vunpack.c.h.b16 %v786
        %v1927 = vunpack.c.l.b16 %v787
        %v1928 = vunpack.c.h.b16 %v787
        %v1929 = vunpack.c.l.b16 %v788
        %v1930 = vunpack.c.h.b16 %v788
        %v1931 = vunpack.c.l.b16 %v789
        %v1932 = vunpack.c.h.b16 %v789
        %v1933 = vunpack.c.l.b16 %v790
        %v1934 = vunpack.c.h.b16 %v790
        %v1935 = vunpack.c.l.b16 %v791
        %v1936 = vunpack.c.h.b16 %v791
        %v1937 = vunpack.c.l.b16 %v792
        %v1938 = vunpack.c.h.b16 %v792
        %v1939 = vunpack.c.l.b16 %v793
        %v1940 = vunpack.c.h.b16 %v793
        %v1941 = vunpack.c.l.b16 %v794
        %v1942 = vunpack.c.h.b16 %v794
        %v1943 = vunpack.c.l.b16 %v795
        %v1944 = vunpack.c.h.b16 %v795
        %v1945 = vunpack.c.l.b16 %v796
        %v1946 = vunpack.c.h.b16 %v796
        %v1947 = vunpack.c.l.b16 %v797
        %v1948 = vunpack.c.h.b16 %v797
        %v1949 = vunpack.c.l.b16 %v798
        %v1950 = vunpack.c.h.b16 %v798
        %v1951 = vunpack.c.l.b16 %v799
        %v1952 = vunpack.c.h.b16 %v799
        %v1953 = vunpack.c.l.b16 %v800
        %v1954 = vunpack.c.h.b16 %v800
        %v1955 = vunpack.c.l.b16 %v801
        %v1956 = vunpack.c.h.b16 %v801
        %v1957 = vunpack.c.l.b16 %v802
        %v1958 = vunpack.c.h.b16 %v802
        %v1959 = vunpack.c.l.b16 %v803
        %v1960 = vunpack.c.h.b16 %v803
        %v1961 = vunpack.c.l.b16 %v804
        %v1962 = vunpack.c.h.b16 %v804
        %v1963 = vunpack.c.l.b16 %v805
        %v1964 = vunpack.c.h.b16 %v805
        %v1965 = vunpack.c.l.b16 %v806
        %v1966 = vunpack.c.h.b16 %v806
        %v1967 = vunpack.c.l.b16 %v807
        %v1968 = vunpack.c.h.b16 %v807
        %v1969 = vunpack.c.l.b16 %v808
        %v1970 = vunpack.c.h.b16 %v808
        %v1971 = vunpack.c.l.b16 %v809
        %v1972 = vunpack.c.h.b16 %v809
        %v1973 = vunpack.c.l.b16 %v810
        %v1974 = vunpack.c.h.b16 %v810
        %v1975 = vunpack.c.l.b16 %v811
        %v1976 = vunpack.c.h.b16 %v811
        %v1977 = vunpack.c.l.b16 %v812
        %v1978 = vunpack.c.h.b16 %v812
        %v1979 = vunpack.c.l.b16 %v813
        %v1980 = vunpack.c.h.b16 %v813
        %v1981 = vunpack.c.l.b16 %v814
        %v1982 = vunpack.c.h.b16 %v814
        %v1983 = vunpack.c.l.b16 %v815
        %v1984 = vunpack.c.h.b16 %v815
        %v1985 = vunpack.c.l.b16 %v816
        %v1986 = vunpack.c.h.b16 %v816
        %v1987 = vunpack.c.l.b16 %v817
        %v1988 = vunpack.c.h.b16 %v817
        %v1989 = vunpack.c.l.b16 %v818
        %v1990 = vunpack.c.h.b16 %v818
        %v1991 = vunpack.c.l.b16 %v819
        %v1992 = vunpack.c.h.b16 %v819
        %v1993 = vunpack.c.l.b16 %v820
        %v1994 = vunpack.c.h.b16 %v820
        %v1995 = vunpack.c.l.b16 %v821
        %v1996 = vunpack.c.h.b16 %v821
        %v1997 = vunpack.c.l.b16 %v822
        %v1998 = vunpack.c.h.b16 %v822
        %v1999 = vunpack.c.l.b16 %v823
        %v2000 = vunpack.c.h.b16 %v823
        %v2001 = vunpack.c.l.b16 %v824
        %v2002 = vunpack.c.h.b16 %v824
        %v2003 = vunpack.c.l.b16 %v825
        %v2004 = vunpack.c.h.b16 %v825
        %v2005 = vunpack.c.l.b16 %v826
        %v2006 = vunpack.c.h.b16 %v826
        %v2007 = vunpack.c.l.b16 %v827
        %v2008 = vunpack.c.h.b16 %v827
        %v2009 = vunpack.c.l.b16 %v828
        %v2010 = vunpack.c.h.b16 %v828
        %v2011 = vunpack.c.l.b16 %v829
        %v2012 = vunpack.c.h.b16 %v829
        %v2013 = vunpack.c.l.b16 %v830
        %v2014 = vunpack.c.h.b16 %v830
        %v2015 = vunpack.c.l.b16 %v831
        %v2016 = vunpack.c.h.b16 %v831
        %v2017 = vunpack.c.l.b16 %v832
        %v2018 = vunpack.c.h.b16 %v832
        %v2019 = vunpack.c.l.b16 %v833
        %v2020 = vunpack.c.h.b16 %v833
        %v2021 = vunpack.c.l.b16 %v834
        %v2022 = vunpack.c.h.b16 %v834
        %v2023 = vunpack.c.l.b16 %v835
        %v2024 = vunpack.c.h.b16 %v835
        %v2025 = vunpack.c.l.b16 %v836
        %v2026 = vunpack.c.h.b16 %v836
        %v2027 = vunpack.c.l.b16 %v837
        %v2028 = vunpack.c.h.b16 %v837
        %v2029 = vunpack.c.l.b16 %v838
        %v2030 = vunpack.c.h.b16 %v838
        %v2031 = vunpack.c.l.b16 %v839
        %v2032 = vunpack.c.h.b16 %v839
        %v2033 = vunpack.c.l.b16 %v840
        %v2034 = vunpack.c.h.b16 %v840
        %v2035 = vunpack.c.l.b16 %v841
        %v2036 = vunpack.c.h.b16 %v841
        %v2037 = vunpack.c.l.b16 %v842
        %v2038 = vunpack.c.h.b16 %v842
        %v2039 = vunpack.c.l.b16 %v843
        %v2040 = vunpack.c.h.b16 %v843
        %v2041 = vunpack.c.l.b16 %v844
        %v2042 = vunpack.c.h.b16 %v844
        %v2043 = vunpack.c.l.b16 %v845
        %v2044 = vunpack.c.h.b16 %v845
        %v2045 = vunpack.c.l.b16 %v846
        %v2046 = vunpack.c.h.b16 %v846
        %v2047 = vunpack.c.l.b16 %v847
        %v2048 = vunpack.c.h.b16 %v847
        %v2049 = vunpack.c.l.b16 %v848
        %v2050 = vunpack.c.h.b16 %v848
        %v2051 = vunpack.c.l.b16 %v849
        %v2052 = vunpack.c.h.b16 %v849
        %v2053 = vunpack.c.l.b16 %v850
        %v2054 = vunpack.c.h.b16 %v850
        %v2055 = vunpack.c.l.b16 %v851
        %v2056 = vunpack.c.h.b16 %v851
        %v2057 = vunpack.c.l.b16 %v852
        %v2058 = vunpack.c.h.b16 %v852
        %v2059 = vunpack.c.l.b16 %v853
        %v2060 = vunpack.c.h.b16 %v853
        %v2061 = vunpack.c.l.b16 %v854
        %v2062 = vunpack.c.h.b16 %v854
        %v2063 = vunpack.c.l.b16 %v855
        %v2064 = vunpack.c.h.b16 %v855
        %v2065 = vunpack.c.l.b16 %v856
        %v2066 = vunpack.c.h.b16 %v856
        %v2067 = vunpack.c.l.b16 %v857
        %v2068 = vunpack.c.h.b16 %v857
        %v2069 = vunpack.c.l.b16 %v858
        %v2070 = vunpack.c.h.b16 %v858
        %v2071 = vunpack.c.l.b16 %v859
        %v2072 = vunpack.c.h.b16 %v859
        %v2073 = vunpack.c.l.b16 %v860
        %v2074 = vunpack.c.h.b16 %v860
        %v2075 = vunpack.c.l.b16 %v861
        %v2076 = vunpack.c.h.b16 %v861
        %v2077 = vunpack.c.l.b16 %v862
        %v2078 = vunpack.c.h.b16 %v862
        %v2079 = vunpack.c.l.b16 %v863
        %v2080 = vunpack.c.h.b16 %v863
        %v2081 = vunpack.c.l.b16 %v864
        %v2082 = vunpack.c.h.b16 %v864
        %v2083 = vunpack.c.l.b16 %v865
        %v2084 = vunpack.c.h.b16 %v865
        %v2085 = vunpack.c.l.b16 %v866
        %v2086 = vunpack.c.h.b16 %v866
        %v2087 = vunpack.c.l.b16 %v867
        %v2088 = vunpack.c.h.b16 %v867
        %v2089 = vunpack.c.l.b16 %v868
        %v2090 = vunpack.c.h.b16 %v868
        %v2091 = vunpack.c.l.b16 %v869
        %v2092 = vunpack.c.h.b16 %v869
        %v2093 = vunpack.c.l.b16 %v870
        %v2094 = vunpack.c.h.b16 %v870
        %v2095 = vunpack.c.l.b16 %v871
        %v2096 = vunpack.c.h.b16 %v871
        %v2097 = vunpack.c.l.b16 %v872
        %v2098 = vunpack.c.h.b16 %v872
        %v2099 = vunpack.c.l.b16 %v873
        %v2100 = vunpack.c.h.b16 %v873
        %v2101 = vunpack.c.l.b16 %v874
        %v2102 = vunpack.c.h.b16 %v874
        %v2103 = vunpack.c.l.b16 %v875
        %v2104 = vunpack.c.h.b16 %v875
        %v2105 = vunpack.c.l.b16 %v876
        %v2106 = vunpack.c.h.b16 %v876
        %v2107 = vunpack.c.l.b16 %v877
        %v2108 = vunpack.c.h.b16 %v877
        %v2109 = vunpack.c.l.b16 %v878
        %v2110 = vunpack.c.h.b16 %v878
        %v2111 = vunpack.c.l.b16 %v879
        %v2112 = vunpack.c.h.b16 %v879
        %v2113 = vunpack.c.l.b16 %v880
        %v2114 = vunpack.c.h.b16 %v880
        %v2115 = vunpack.c.l.b16 %v881
        %v2116 = vunpack.c.h.b16 %v881
        %v2117 = vunpack.c.l.b16 %v882
        %v2118 = vunpack.c.h.b16 %v882
        %v2119 = vunpack.c.l.b16 %v883
        %v2120 = vunpack.c.h.b16 %v883
        %v2121 = vunpack.c.l.b16 %v884
        %v2122 = vunpack.c.h.b16 %v884
        %v2123 = vunpack.c.l.b16 %v885
        %v2124 = vunpack.c.h.b16 %v885
        %v2125 = vunpack.c.l.b16 %v886
        %v2126 = vunpack.c.h.b16 %v886
        %v2127 = vunpack.c.l.b16 %v887
        %v2128 = vunpack.c.h.b16 %v887
        %v2129 = vunpack.c.l.b16 %v888
        %v2130 = vunpack.c.h.b16 %v888
        %v2131 = vunpack.c.l.b16 %v889
        %v2132 = vunpack.c.h.b16 %v889
        %v2133 = vunpack.c.l.b16 %v890
        %v2134 = vunpack.c.h.b16 %v890
        %v2135 = vunpack.c.l.b16 %v891
        %v2136 = vunpack.c.h.b16 %v891
        %v2137 = vunpack.c.l.b16 %v892
        %v2138 = vunpack.c.h.b16 %v892
        %v2139 = vunpack.c.l.b16 %v893
        %v2140 = vunpack.c.h.b16 %v893
        %v2141 = vunpack.c.l.b16 %v894
        %v2142 = vunpack.c.h.b16 %v894
        %v2143 = vunpack.c.l.b16 %v895
        %v2144 = vunpack.c.h.b16 %v895
        %v2145 = vunpack.c.l.b16 %v896
        %v2146 = vunpack.c.h.b16 %v896
        %v2147 = vunpack.c.l.b16 %v897
        %v2148 = vunpack.c.h.b16 %v897
        %v2149 = vunpack.c.l.b16 %v898
        %v2150 = vunpack.c.h.b16 %v898
        %v2151 = vunpack.c.l.b16 %v899
        %v2152 = vunpack.c.h.b16 %v899
        %v2153 = vunpack.c.l.b16 %v900
        %v2154 = vunpack.c.h.b16 %v900
        %v2155 = vunpack.c.l.b16 %v901
        %v2156 = vunpack.c.h.b16 %v901
        %v2157 = vunpack.c.l.b16 %v902
        %v2158 = vunpack.c.h.b16 %v902
        %v2159 = vunpack.c.l.b16 %v903
        %v2160 = vunpack.c.h.b16 %v903
        %v2161 = vunpack.c.l.b16 %v904
        %v2162 = vunpack.c.h.b16 %v904
        %v2163 = vunpack.c.l.b16 %v905
        %v2164 = vunpack.c.h.b16 %v905
        %v2165 = vunpack.c.l.b16 %v906
        %v2166 = vunpack.c.h.b16 %v906
        %v2167 = vunpack.c.l.b16 %v907
        %v2168 = vunpack.c.h.b16 %v907
        %v2169 = vunpack.c.l.b16 %v908
        %v2170 = vunpack.c.h.b16 %v908
        %v2171 = vunpack.c.l.b16 %v909
        %v2172 = vunpack.c.h.b16 %v909
        %v2173 = vunpack.c.l.b16 %v910
        %v2174 = vunpack.c.h.b16 %v910
        %v2175 = vunpack.c.l.b16 %v911
        %v2176 = vunpack.c.h.b16 %v911
        %v2177 = vunpack.c.l.b16 %v912
        %v2178 = vunpack.c.h.b16 %v912
        %v2179 = vunpack.c.l.b16 %v913
        %v2180 = vunpack.c.h.b16 %v913
        %v2181 = vunpack.c.l.b16 %v914
        %v2182 = vunpack.c.h.b16 %v914
        %v2183 = vunpack.c.l.b16 %v915
        %v2184 = vunpack.c.h.b16 %v915
        %v2185 = vunpack.c.l.b16 %v916
        %v2186 = vunpack.c.h.b16 %v916
        %v2187 = vunpack.c.l.b16 %v917
        %v2188 = vunpack.c.h.b16 %v917
        %v2189 = vunpack.c.l.b16 %v918
        %v2190 = vunpack.c.h.b16 %v918
        %v2191 = vunpack.c.l.b16 %v919
        %v2192 = vunpack.c.h.b16 %v919
        %v2193 = vunpack.c.l.b16 %v920
        %v2194 = vunpack.c.h.b16 %v920
        %v2195 = vunpack.c.l.b16 %v921
        %v2196 = vunpack.c.h.b16 %v921
        %v2197 = vunpack.c.l.b16 %v922
        %v2198 = vunpack.c.h.b16 %v922
        %v2199 = vunpack.c.l.b16 %v923
        %v2200 = vunpack.c.h.b16 %v923
        %v2201 = vunpack.c.l.b16 %v924
        %v2202 = vunpack.c.h.b16 %v924
        %v2203 = vunpack.c.l.b16 %v925
        %v2204 = vunpack.c.h.b16 %v925
        %v2205 = vunpack.c.l.b16 %v926
        %v2206 = vunpack.c.h.b16 %v926
        %v2207 = vunpack.c.l.b16 %v927
        %v2208 = vunpack.c.h.b16 %v927
        %v2209 = vunpack.c.l.b16 %v928
        %v2210 = vunpack.c.h.b16 %v928
        %v2211 = vunpack.c.l.b16 %v929
        %v2212 = vunpack.c.h.b16 %v929
        %v2213 = vunpack.c.l.b16 %v930
        %v2214 = vunpack.c.h.b16 %v930
        %v2215 = vunpack.c.l.b16 %v931
        %v2216 = vunpack.c.h.b16 %v931
        %v2217 = vunpack.c.l.b16 %v932
        %v2218 = vunpack.c.h.b16 %v932
        %v2219 = vunpack.c.l.b16 %v933
        %v2220 = vunpack.c.h.b16 %v933
        %v2221 = vunpack.c.l.b16 %v934
        %v2222 = vunpack.c.h.b16 %v934
        %v2223 = vunpack.c.l.b16 %v935
        %v2224 = vunpack.c.h.b16 %v935
        %v2225 = vunpack.c.l.b16 %v936
        %v2226 = vunpack.c.h.b16 %v936
        %v2227 = vunpack.c.l.b16 %v937
        %v2228 = vunpack.c.h.b16 %v937
        %v2229 = vunpack.c.l.b16 %v938
        %v2230 = vunpack.c.h.b16 %v938
        %v2231 = vunpack.c.l.b16 %v939
        %v2232 = vunpack.c.h.b16 %v939
        %v2233 = vunpack.c.l.b16 %v940
        %v2234 = vunpack.c.h.b16 %v940
        %v2235 = vunpack.c.l.b16 %v941
        %v2236 = vunpack.c.h.b16 %v941
        %v2237 = vunpack.c.l.b16 %v942
        %v2238 = vunpack.c.h.b16 %v942
        %v2239 = vunpack.c.l.b16 %v943
        %v2240 = vunpack.c.h.b16 %v943
        %v2241 = vunpack.c.l.b16 %v944
        %v2242 = vunpack.c.h.b16 %v944
        %v2243 = vunpack.c.l.b16 %v945
        %v2244 = vunpack.c.h.b16 %v945
        %v2245 = vunpack.c.l.b16 %v946
        %v2246 = vunpack.c.h.b16 %v946
        %v2247 = vunpack.c.l.b16 %v947
        %v2248 = vunpack.c.h.b16 %v947
        %v2249 = vunpack.c.l.b16 %v948
        %v2250 = vunpack.c.h.b16 %v948
        %v2251 = vunpack.c.l.b16 %v949
        %v2252 = vunpack.c.h.b16 %v949
        %v2253 = vunpack.c.l.b16 %v950
        %v2254 = vunpack.c.h.b16 %v950
        %v2255 = vunpack.c.l.b16 %v951
        %v2256 = vunpack.c.h.b16 %v951
        %v2257 = vunpack.c.l.b16 %v952
        %v2258 = vunpack.c.h.b16 %v952
        %v2259 = vunpack.c.l.b16 %v953
        %v2260 = vunpack.c.h.b16 %v953
        %v2261 = vunpack.c.l.b16 %v954
        %v2262 = vunpack.c.h.b16 %v954
        %v2263 = vunpack.c.l.b16 %v955
        %v2264 = vunpack.c.h.b16 %v955
        %v2265 = vunpack.c.l.b16 %v956
        %v2266 = vunpack.c.h.b16 %v956
        %v2267 = vunpack.c.l.b16 %v957
        %v2268 = vunpack.c.h.b16 %v957
        %v2269 = vunpack.c.l.b16 %v958
        %v2270 = vunpack.c.h.b16 %v958
        %v2271 = vunpack.c.l.b16 %v959
        %v2272 = vunpack.c.h.b16 %v959
        %v2273 = vunpack.c.l.b16 %v960
        %v2274 = vunpack.c.h.b16 %v960
        %v2275 = vunpack.c.l.b16 %v961
        %v2276 = vunpack.c.h.b16 %v961
        %v2277 = vunpack.c.l.b16 %v962
        %v2278 = vunpack.c.h.b16 %v962
        %v2279 = vunpack.c.l.b16 %v963
        %v2280 = vunpack.c.h.b16 %v963
        %v2281 = vunpack.c.l.b16 %v964
        %v2282 = vunpack.c.h.b16 %v964
        %v2283 = vunpack.c.l.b16 %v965
        %v2284 = vunpack.c.h.b16 %v965
        %v2285 = vunpack.c.l.b16 %v966
        %v2286 = vunpack.c.h.b16 %v966
        %v2287 = vunpack.c.l.b16 %v967
        %v2288 = vunpack.c.h.b16 %v967
        %v2289 = vunpack.c.l.b16 %v968
        %v2290 = vunpack.c.h.b16 %v968
        %v2291 = vunpack.c.l.b16 %v969
        %v2292 = vunpack.c.h.b16 %v969
        %v2293 = vunpack.c.l.b16 %v970
        %v2294 = vunpack.c.h.b16 %v970
        %v2295 = vunpack.c.l.b16 %v971
        %v2296 = vunpack.c.h.b16 %v971
        %v2297 = vunpack.c.l.b16 %v972
        %v2298 = vunpack.c.h.b16 %v972
        %v2299 = vunpack.c.l.b16 %v973
        %v2300 = vunpack.c.h.b16 %v973
        %v2301 = vunpack.c.l.b16 %v974
        %v2302 = vunpack.c.h.b16 %v974
        %v2303 = vunpack.c.l.b16 %v975
        %v2304 = vunpack.c.h.b16 %v975
        %v2305 = vunpack.c.l.b16 %v976
        %v2306 = vunpack.c.h.b16 %v976
        %v2307 = vunpack.c.l.b16 %v977
        %v2308 = vunpack.c.h.b16 %v977
        %v2309 = vunpack.c.l.b16 %v978
        %v2310 = vunpack.c.h.b16 %v978
        %v2311 = vunpack.c.l.b16 %v979
        %v2312 = vunpack.c.h.b16 %v979
        %v2313 = vunpack.c.l.b16 %v980
        %v2314 = vunpack.c.h.b16 %v980
        %v2315 = vunpack.c.l.b16 %v981
        %v2316 = vunpack.c.h.b16 %v981
        %v2317 = vunpack.c.l.b16 %v982
        %v2318 = vunpack.c.h.b16 %v982
        %v2319 = vunpack.c.l.b16 %v983
        %v2320 = vunpack.c.h.b16 %v983
        %v2321 = vunpack.c.l.b16 %v984
        %v2322 = vunpack.c.h.b16 %v984
        %v2323 = vunpack.c.l.b16 %v985
        %v2324 = vunpack.c.h.b16 %v985
        %v2325 = vunpack.c.l.b16 %v986
        %v2326 = vunpack.c.h.b16 %v986
        %v2327 = vunpack.c.l.b16 %v987
        %v2328 = vunpack.c.h.b16 %v987
        %v2329 = vunpack.c.l.b16 %v988
        %v2330 = vunpack.c.h.b16 %v988
        %v2331 = vunpack.c.l.b16 %v989
        %v2332 = vunpack.c.h.b16 %v989
        %v2333 = vunpack.c.l.b16 %v990
        %v2334 = vunpack.c.h.b16 %v990
        %v2335 = vunpack.c.l.b16 %v991
        %v2336 = vunpack.c.h.b16 %v991
        %v2337 = vunpack.c.l.b16 %v992
        %v2338 = vunpack.c.h.b16 %v992
        %v2339 = vunpack.c.l.b16 %v993
        %v2340 = vunpack.c.h.b16 %v993
        %v2341 = vunpack.c.l.b16 %v994
        %v2342 = vunpack.c.h.b16 %v994
        %v2343 = vunpack.c.l.b16 %v995
        %v2344 = vunpack.c.h.b16 %v995
        %v2345 = vunpack.c.l.b16 %v996
        %v2346 = vunpack.c.h.b16 %v996
        %v2347 = vunpack.c.l.b16 %v997
        %v2348 = vunpack.c.h.b16 %v997
        %v2349 = vunpack.c.l.b16 %v998
        %v2350 = vunpack.c.h.b16 %v998
        %v2351 = vunpack.c.l.b16 %v999
        %v2352 = vunpack.c.h.b16 %v999
        %v2353 = vunpack.c.l.b16 %v1000
        %v2354 = vunpack.c.h.b16 %v1000
        %v2355 = vunpack.c.l.b16 %v1001
        %v2356 = vunpack.c.h.b16 %v1001
        %v2357 = vunpack.c.l.b16 %v1002
        %v2358 = vunpack.c.h.b16 %v1002
        %v2359 = vunpack.c.l.b16 %v1003
        %v2360 = vunpack.c.h.b16 %v1003
        %v2361 = vunpack.c.l.b16 %v1004
        %v2362 = vunpack.c.h.b16 %v1004
        %v2363 = vunpack.c.l.b16 %v1005
        %v2364 = vunpack.c.h.b16 %v1005
        %v2365 = vunpack.c.l.b16 %v1006
        %v2366 = vunpack.c.h.b16 %v1006
        %v2367 = vunpack.c.l.b16 %v1007
        %v2368 = vunpack.c.h.b16 %v1007
        %v2369 = vunpack.c.l.b16 %v1008
        %v2370 = vunpack.c.h.b16 %v1008
        %v2371 = vunpack.c.l.b16 %v1009
        %v2372 = vunpack.c.h.b16 %v1009
        %v2373 = vunpack.c.l.b16 %v1010
        %v2374 = vunpack.c.h.b16 %v1010
        %v2375 = vunpack.c.l.b16 %v1011
        %v2376 = vunpack.c.h.b16 %v1011
        %v2377 = vunpack.c.l.b16 %v1012
        %v2378 = vunpack.c.h.b16 %v1012
        %v2379 = vpack.c.b16 %v1487, %v1483
        %v2380 = vpack.c.b16 %v1488, %v1484
        %v2381 = vpack.c.b16 %v1489, %v1485
        %v2382 = vpack.c.b16 %v1490, %v1486
        %v2383 = vpack.c.b16 %v1495, %v1491
        %v2384 = vpack.c.b16 %v1496, %v1492
        %v2385 = vpack.c.b16 %v1497, %v1493
        %v2386 = vpack.c.b16 %v1498, %v1494
        %v2387 = vpack.c.b16 %v1503, %v1499
        %v2388 = vpack.c.b16 %v1504, %v1500
        %v2389 = vpack.c.b16 %v1505, %v1501
        %v2390 = vpack.c.b16 %v1506, %v1502
        %v2391 = vpack.c.b16 %v1511, %v1507
        %v2392 = vpack.c.b16 %v1512, %v1508
        %v2393 = vpack.c.b16 %v1513, %v1509
        %v2394 = vpack.c.b16 %v1514, %v1510
        %v2395 = vpack.c.b16 %v1519, %v1515
        %v2396 = vpack.c.b16 %v1520, %v1516
        %v2397 = vpack.c.b16 %v1521, %v1517
        %v2398 = vpack.c.b16 %v1522, %v1518
        %v2399 = vpack.c.b16 %v1527, %v1523
        %v2400 = vpack.c.b16 %v1528, %v1524
        %v2401 = vpack.c.b16 %v1529, %v1525
        %v2402 = vpack.c.b16 %v1530, %v1526
        %v2403 = vpack.c.b16 %v1535, %v1531
        %v2404 = vpack.c.b16 %v1536, %v1532
        %v2405 = vpack.c.b16 %v1537, %v1533
        %v2406 = vpack.c.b16 %v1538, %v1534
        %v2407 = vpack.c.b16 %v1543, %v1539
        %v2408 = vpack.c.b16 %v1544, %v1540
        %v2409 = vpack.c.b16 %v1545, %v1541
        %v2410 = vpack.c.b16 %v1546, %v1542
        %v2411 = vpack.c.b16 %v1551, %v1547
        %v2412 = vpack.c.b16 %v1552, %v1548
        %v2413 = vpack.c.b16 %v1553, %v1549
        %v2414 = vpack.c.b16 %v1554, %v1550
        %v2415 = vpack.c.b16 %v1559, %v1555
        %v2416 = vpack.c.b16 %v1560, %v1556
        %v2417 = vpack.c.b16 %v1561, %v1557
        %v2418 = vpack.c.b16 %v1562, %v1558
        %v2419 = vpack.c.b16 %v1567, %v1563
        %v2420 = vpack.c.b16 %v1568, %v1564
        %v2421 = vpack.c.b16 %v1569, %v1565
        %v2422 = vpack.c.b16 %v1570, %v1566
        %v2423 = vpack.c.b16 %v1575, %v1571
        %v2424 = vpack.c.b16 %v1576, %v1572
        %v2425 = vpack.c.b16 %v1577, %v1573
        %v2426 = vpack.c.b16 %v1578, %v1574
        %v2427 = vpack.c.b16 %v1583, %v1579
        %v2428 = vpack.c.b16 %v1584, %v1580
        %v2429 = vpack.c.b16 %v1585, %v1581
        %v2430 = vpack.c.b16 %v1586, %v1582
        %v2431 = vpack.c.b16 %v1591, %v1587
        %v2432 = vpack.c.b16 %v1592, %v1588
        %v2433 = vpack.c.b16 %v1593, %v1589
        %v2434 = vpack.c.b16 %v1594, %v1590
        %v2435 = vpack.c.b16 %v1599, %v1595
        %v2436 = vpack.c.b16 %v1600, %v1596
        %v2437 = vpack.c.b16 %v1601, %v1597
        %v2438 = vpack.c.b16 %v1602, %v1598
        %v2439 = vpack.c.b16 %v1607, %v1603
        %v2440 = vpack.c.b16 %v1608, %v1604
        %v2441 = vpack.c.b16 %v1609, %v1605
        %v2442 = vpack.c.b16 %v1610, %v1606
        %v2443 = vpack.c.b16 %v1615, %v1611
        %v2444 = vpack.c.b16 %v1616, %v1612
        %v2445 = vpack.c.b16 %v1617, %v1613
        %v2446 = vpack.c.b16 %v1618, %v1614
        %v2447 = vpack.c.b16 %v1623, %v1619
        %v2448 = vpack.c.b16 %v1624, %v1620
        %v2449 = vpack.c.b16 %v1625, %v1621
        %v2450 = vpack.c.b16 %v1626, %v1622
        %v2451 = vpack.c.b16 %v1631, %v1627
        %v2452 = vpack.c.b16 %v1632, %v1628
        %v2453 = vpack.c.b16 %v1633, %v1629
        %v2454 = vpack.c.b16 %v1634, %v1630
        %v2455 = vpack.c.b16 %v1639, %v1635
        %v2456 = vpack.c.b16 %v1640, %v1636
        %v2457 = vpack.c.b16 %v1641, %v1637
        %v2458 = vpack.c.b16 %v1642, %v1638
        %v2459 = vpack.c.b16 %v1647, %v1643
        %v2460 = vpack.c.b16 %v1648, %v1644
        %v2461 = vpack.c.b16 %v1649, %v1645
        %v2462 = vpack.c.b16 %v1650, %v1646
        %v2463 = vpack.c.b16 %v1655, %v1651
        %v2464 = vpack.c.b16 %v1656, %v1652
        %v2465 = vpack.c.b16 %v1657, %v1653
        %v2466 = vpack.c.b16 %v1658, %v1654
        %v2467 = vpack.c.b16 %v1663, %v1659
        %v2468 = vpack.c.b16 %v1664, %v1660
        %v2469 = vpack.c.b16 %v1665, %v1661
        %v2470 = vpack.c.b16 %v1666, %v1662
        %v2471 = vpack.c.b16 %v1671, %v1667
        %v2472 = vpack.c.b16 %v1672, %v1668
        %v2473 = vpack.c.b16 %v1673, %v1669
        %v2474 = vpack.c.b16 %v1674, %v1670
        %v2475 = vpack.c.b16 %v1679, %v1675
        %v2476 = vpack.c.b16 %v1680, %v1676
        %v2477 = vpack.c.b16 %v1681, %v1677
        %v2478 = vpack.c.b16 %v1682, %v1678
        %v2479 = vpack.c.b16 %v1687, %v1683
        %v2480 = vpack.c.b16 %v1688, %v1684
        %v2481 = vpack.c.b16 %v1689, %v1685
        %v2482 = vpack.c.b16 %v1690, %v1686
        %v2483 = vpack.c.b16 %v1695, %v1691
        %v2484 = vpack.c.b16 %v1696, %v1692
        %v2485 = vpack.c.b16 %v1697, %v1693
        %v2486 = vpack.c.b16 %v1698, %v1694
        %v2487 = vpack.c.b16 %v1703, %v1699
        %v2488 = vpack.c.b16 %v1704, %v1700
        %v2489 = vpack.c.b16 %v1705, %v1701
        %v2490 = vpack.c.b16 %v1706, %v1702
        %v2491 = vpack.c.b16 %v1711, %v1707
        %v2492 = vpack.c.b16 %v1712, %v1708
        %v2493 = vpack.c.b16 %v1713, %v1709
        %v2494 = vpack.c.b16 %v1714, %v1710
        %v2495 = vpack.c.b16 %v1719, %v1715
        %v2496 = vpack.c.b16 %v1720, %v1716
        %v2497 = vpack.c.b16 %v1721, %v1717
        %v2498 = vpack.c.b16 %v1722, %v1718
        %v2499 = vpack.c.b16 %v1727, %v1723
        %v2500 = vpack.c.b16 %v1728, %v1724
        %v2501 = vpack.c.b16 %v1729, %v1725
        %v2502 = vpack.c.b16 %v1730, %v1726
        %v2503 = vpack.c.b16 %v1735, %v1731
        %v2504 = vpack.c.b16 %v1736, %v1732
        %v2505 = vpack.c.b16 %v1737, %v1733
        %v2506 = vpack.c.b16 %v1738, %v1734
        %v2507 = vpack.c.b16 %v1743, %v1739
        %v2508 = vpack.c.b16 %v1744, %v1740
        %v2509 = vpack.c.b16 %v1745, %v1741
        %v2510 = vpack.c.b16 %v1746, %v1742
        %v2511 = vpack.c.b16 %v1751, %v1747
        %v2512 = vpack.c.b16 %v1752, %v1748
        %v2513 = vpack.c.b16 %v1753, %v1749
        %v2514 = vpack.c.b16 %v1754, %v1750
        %v2515 = vpack.c.b16 %v1759, %v1755
        %v2516 = vpack.c.b16 %v1760, %v1756
        %v2517 = vpack.c.b16 %v1761, %v1757
        %v2518 = vpack.c.b16 %v1762, %v1758
        %v2519 = vpack.c.b16 %v1767, %v1763
        %v2520 = vpack.c.b16 %v1768, %v1764
        %v2521 = vpack.c.b16 %v1769, %v1765
        %v2522 = vpack.c.b16 %v1770, %v1766
        %v2523 = vpack.c.b16 %v1775, %v1771
        %v2524 = vpack.c.b16 %v1776, %v1772
        %v2525 = vpack.c.b16 %v1777, %v1773
        %v2526 = vpack.c.b16 %v1778, %v1774
        %v2527 = vpack.c.b16 %v1783, %v1779
        %v2528 = vpack.c.b16 %v1784, %v1780
        %v2529 = vpack.c.b16 %v1785, %v1781
        %v2530 = vpack.c.b16 %v1786, %v1782
        %v2531 = vpack.c.b16 %v1791, %v1787
        %v2532 = vpack.c.b16 %v1792, %v1788
        %v2533 = vpack.c.b16 %v1793, %v1789
        %v2534 = vpack.c.b16 %v1794, %v1790
        %v2535 = vpack.c.b16 %v1799, %v1795
        %v2536 = vpack.c.b16 %v1800, %v1796
        %v2537 = vpack.c.b16 %v1801, %v1797
        %v2538 = vpack.c.b16 %v1802, %v1798
        %v2539 = vpack.c.b16 %v1807, %v1803
        %v2540 = vpack.c.b16 %v1808, %v1804
        %v2541 = vpack.c.b16 %v1809, %v1805
        %v2542 = vpack.c.b16 %v1810, %v1806
        %v2543 = vpack.c.b16 %v1815, %v1811
        %v2544 = vpack.c.b16 %v1816, %v1812
        %v2545 = vpack.c.b16 %v1817, %v1813
        %v2546 = vpack.c.b16 %v1818, %v1814
        %v2547 = vpack.c.b16 %v1823, %v1819
        %v2548 = vpack.c.b16 %v1824, %v1820
        %v2549 = vpack.c.b16 %v1825, %v1821
        %v2550 = vpack.c.b16 %v1826, %v1822
        %v2551 = vpack.c.b16 %v1831, %v1827
        %v2552 = vpack.c.b16 %v1832, %v1828
        %v2553 = vpack.c.b16 %v1833, %v1829
        %v2554 = vpack.c.b16 %v1834, %v1830
        %v2555 = vpack.c.b16 %v1839, %v1835
        %v2556 = vpack.c.b16 %v1840, %v1836
        %v2557 = vpack.c.b16 %v1841, %v1837
        %v2558 = vpack.c.b16 %v1842, %v1838
        %v2559 = vpack.c.b16 %v1847, %v1843
        %v2560 = vpack.c.b16 %v1848, %v1844
        %v2561 = vpack.c.b16 %v1849, %v1845
        %v2562 = vpack.c.b16 %v1850, %v1846
        %v2563 = vpack.c.b16 %v1855, %v1851
        %v2564 = vpack.c.b16 %v1856, %v1852
        %v2565 = vpack.c.b16 %v1857, %v1853
        %v2566 = vpack.c.b16 %v1858, %v1854
        %v2567 = vpack.c.b16 %v1863, %v1859
        %v2568 = vpack.c.b16 %v1864, %v1860
        %v2569 = vpack.c.b16 %v1865, %v1861
        %v2570 = vpack.c.b16 %v1866, %v1862
        %v2571 = vpack.c.b16 %v1871, %v1867
        %v2572 = vpack.c.b16 %v1872, %v1868
        %v2573 = vpack.c.b16 %v1873, %v1869
        %v2574 = vpack.c.b16 %v1874, %v1870
        %v2575 = vpack.c.b16 %v1879, %v1875
        %v2576 = vpack.c.b16 %v1880, %v1876
        %v2577 = vpack.c.b16 %v1881, %v1877
        %v2578 = vpack.c.b16 %v1882, %v1878
        %v2579 = vpack.c.b16 %v1887, %v1883
        %v2580 = vpack.c.b16 %v1888, %v1884
        %v2581 = vpack.c.b16 %v1889, %v1885
        %v2582 = vpack.c.b16 %v1890, %v1886
        %v2583 = vpack.c.b16 %v1895, %v1891
        %v2584 = vpack.c.b16 %v1896, %v1892
        %v2585 = vpack.c.b16 %v1897, %v1893
        %v2586 = vpack.c.b16 %v1898, %v1894
        %v2587 = vpack.c.b16 %v1903, %v1899
        %v2588 = vpack.c.b16 %v1904, %v1900
        %v2589 = vpack.c.b16 %v1905, %v1901
        %v2590 = vpack.c.b16 %v1906, %v1902
        %v2591 = vpack.c.b16 %v1911, %v1907
        %v2592 = vpack.c.b16 %v1912, %v1908
        %v2593 = vpack.c.b16 %v1913, %v1909
        %v2594 = vpack.c.b16 %v1914, %v1910
        %v2595 = vpack.c.b16 %v1919, %v1915
        %v2596 = vpack.c.b16 %v1920, %v1916
        %v2597 = vpack.c.b16 %v1921, %v1917
        %v2598 = vpack.c.b16 %v1922, %v1918
        %v2599 = vpack.c.b16 %v1927, %v1923
        %v2600 = vpack.c.b16 %v1928, %v1924
        %v2601 = vpack.c.b16 %v1929, %v1925
        %v2602 = vpack.c.b16 %v1930, %v1926
        %v2603 = vpack.c.b16 %v1935, %v1931
        %v2604 = vpack.c.b16 %v1936, %v1932
        %v2605 = vpack.c.b16 %v1937, %v1933
        %v2606 = vpack.c.b16 %v1938, %v1934
        %v2607 = vpack.c.b16 %v1943, %v1939
        %v2608 = vpack.c.b16 %v1944, %v1940
        %v2609 = vpack.c.b16 %v1945, %v1941
        %v2610 = vpack.c.b16 %v1946, %v1942
        %v2611 = vpack.c.b16 %v1951, %v1947
        %v2612 = vpack.c.b16 %v1952, %v1948
        %v2613 = vpack.c.b16 %v1953, %v1949
        %v2614 = vpack.c.b16 %v1954, %v1950
        %v2615 = vpack.c.b16 %v1959, %v1955
        %v2616 = vpack.c.b16 %v1960, %v1956
        %v2617 = vpack.c.b16 %v1961, %v1957
        %v2618 = vpack.c.b16 %v1962, %v1958
        %v2619 = vpack.c.b16 %v1967, %v1963
        %v2620 = vpack.c.b16 %v1968, %v1964
        %v2621 = vpack.c.b16 %v1969, %v1965
        %v2622 = vpack.c.b16 %v1970, %v1966
        %v2623 = vpack.c.b16 %v1975, %v1971
        %v2624 = vpack.c.b16 %v1976, %v1972
        %v2625 = vpack.c.b16 %v1977, %v1973
        %v2626 = vpack.c.b16 %v1978, %v1974
        %v2627 = vpack.c.b16 %v1983, %v1979
        %v2628 = vpack.c.b16 %v1984, %v1980
        %v2629 = vpack.c.b16 %v1985, %v1981
        %v2630 = vpack.c.b16 %v1986, %v1982
        %v2631 = vpack.c.b16 %v1991, %v1987
        %v2632 = vpack.c.b16 %v1992, %v1988
        %v2633 = vpack.c.b16 %v1993, %v1989
        %v2634 = vpack.c.b16 %v1994, %v1990
        %v2635 = vpack.c.b16 %v1999, %v1995
        %v2636 = vpack.c.b16 %v2000, %v1996
        %v2637 = vpack.c.b16 %v2001, %v1997
        %v2638 = vpack.c.b16 %v2002, %v1998
        %v2639 = vpack.c.b16 %v2007, %v2003
        %v2640 = vpack.c.b16 %v2008, %v2004
        %v2641 = vpack.c.b16 %v2009, %v2005
        %v2642 = vpack.c.b16 %v2010, %v2006
        %v2643 = vpack.c.b16 %v2015, %v2011
        %v2644 = vpack.c.b16 %v2016, %v2012
        %v2645 = vpack.c.b16 %v2017, %v2013
        %v2646 = vpack.c.b16 %v2018, %v2014
        %v2647 = vpack.c.b16 %v2023, %v2019
        %v2648 = vpack.c.b16 %v2024, %v2020
        %v2649 = vpack.c.b16 %v2025, %v2021
        %v2650 = vpack.c.b16 %v2026, %v2022
        %v2651 = vpack.c.b16 %v2031, %v2027
        %v2652 = vpack.c.b16 %v2032, %v2028
        %v2653 = vpack.c.b16 %v2033, %v2029
        %v2654 = vpack.c.b16 %v2034, %v2030
        %v2655 = vpack.c.b16 %v2039, %v2035
        %v2656 = vpack.c.b16 %v2040, %v2036
        %v2657 = vpack.c.b16 %v2041, %v2037
        %v2658 = vpack.c.b16 %v2042, %v2038
        %v2659 = vpack.c.b16 %v2047, %v2043
        %v2660 = vpack.c.b16 %v2048, %v2044
        %v2661 = vpack.c.b16 %v2049, %v2045
        %v2662 = vpack.c.b16 %v2050, %v2046
        %v2663 = vpack.c.b16 %v2055, %v2051
        %v2664 = vpack.c.b16 %v2056, %v2052
        %v2665 = vpack.c.b16 %v2057, %v2053
        %v2666 = vpack.c.b16 %v2058, %v2054
        %v2667 = vpack.c.b16 %v2063, %v2059
        %v2668 = vpack.c.b16 %v2064, %v2060
        %v2669 = vpack.c.b16 %v2065, %v2061
        %v2670 = vpack.c.b16 %v2066, %v2062
        %v2671 = vpack.c.b16 %v2071, %v2067
        %v2672 = vpack.c.b16 %v2072, %v2068
        %v2673 = vpack.c.b16 %v2073, %v2069
        %v2674 = vpack.c.b16 %v2074, %v2070
        %v2675 = vpack.c.b16 %v2079, %v2075
        %v2676 = vpack.c.b16 %v2080, %v2076
        %v2677 = vpack.c.b16 %v2081, %v2077
        %v2678 = vpack.c.b16 %v2082, %v2078
        %v2679 = vpack.c.b16 %v2087, %v2083
        %v2680 = vpack.c.b16 %v2088, %v2084
        %v2681 = vpack.c.b16 %v2089, %v2085
        %v2682 = vpack.c.b16 %v2090, %v2086
        %v2683 = vpack.c.b16 %v2095, %v2091
        %v2684 = vpack.c.b16 %v2096, %v2092
        %v2685 = vpack.c.b16 %v2097, %v2093
        %v2686 = vpack.c.b16 %v2098, %v2094
        %v2687 = vpack.c.b16 %v2103, %v2099
        %v2688 = vpack.c.b16 %v2104, %v2100
        %v2689 = vpack.c.b16 %v2105, %v2101
        %v2690 = vpack.c.b16 %v2106, %v2102
        %v2691 = vpack.c.b16 %v2111, %v2107
        %v2692 = vpack.c.b16 %v2112, %v2108
        %v2693 = vpack.c.b16 %v2113, %v2109
        %v2694 = vpack.c.b16 %v2114, %v2110
        %v2695 = vpack.c.b16 %v2119, %v2115
        %v2696 = vpack.c.b16 %v2120, %v2116
        %v2697 = vpack.c.b16 %v2121, %v2117
        %v2698 = vpack.c.b16 %v2122, %v2118
        %v2699 = vpack.c.b16 %v2127, %v2123
        %v2700 = vpack.c.b16 %v2128, %v2124
        %v2701 = vpack.c.b16 %v2129, %v2125
        %v2702 = vpack.c.b16 %v2130, %v2126
        %v2703 = vpack.c.b16 %v2135, %v2131
        %v2704 = vpack.c.b16 %v2136, %v2132
        %v2705 = vpack.c.b16 %v2137, %v2133
        %v2706 = vpack.c.b16 %v2138, %v2134
        %v2707 = vpack.c.b16 %v2143, %v2139
        %v2708 = vpack.c.b16 %v2144, %v2140
        %v2709 = vpack.c.b16 %v2145, %v2141
        %v2710 = vpack.c.b16 %v2146, %v2142
        %v2711 = vpack.c.b16 %v2151, %v2147
        %v2712 = vpack.c.b16 %v2152, %v2148
        %v2713 = vpack.c.b16 %v2153, %v2149
        %v2714 = vpack.c.b16 %v2154, %v2150
        %v2715 = vpack.c.b16 %v2159, %v2155
        %v2716 = vpack.c.b16 %v2160, %v2156
        %v2717 = vpack.c.b16 %v2161, %v2157
        %v2718 = vpack.c.b16 %v2162, %v2158
        %v2719 = vpack.c.b16 %v2167, %v2163
        %v2720 = vpack.c.b16 %v2168, %v2164
        %v2721 = vpack.c.b16 %v2169, %v2165
        %v2722 = vpack.c.b16 %v2170, %v2166
        %v2723 = vpack.c.b16 %v2175, %v2171
        %v2724 = vpack.c.b16 %v2176, %v2172
        %v2725 = vpack.c.b16 %v2177, %v2173
        %v2726 = vpack.c.b16 %v2178, %v2174
        %v2727 = vpack.c.b16 %v2183, %v2179
        %v2728 = vpack.c.b16 %v2184, %v2180
        %v2729 = vpack.c.b16 %v2185, %v2181
        %v2730 = vpack.c.b16 %v2186, %v2182
        %v2731 = vpack.c.b16 %v2191, %v2187
        %v2732 = vpack.c.b16 %v2192, %v2188
        %v2733 = vpack.c.b16 %v2193, %v2189
        %v2734 = vpack.c.b16 %v2194, %v2190
        %v2735 = vpack.c.b16 %v2199, %v2195
        %v2736 = vpack.c.b16 %v2200, %v2196
        %v2737 = vpack.c.b16 %v2201, %v2197
        %v2738 = vpack.c.b16 %v2202, %v2198
        %v2739 = vpack.c.b16 %v2207, %v2203
        %v2740 = vpack.c.b16 %v2208, %v2204
        %v2741 = vpack.c.b16 %v2209, %v2205
        %v2742 = vpack.c.b16 %v2210, %v2206
        %v2743 = vpack.c.b16 %v2215, %v2211
        %v2744 = vpack.c.b16 %v2216, %v2212
        %v2745 = vpack.c.b16 %v2217, %v2213
        %v2746 = vpack.c.b16 %v2218, %v2214
        %v2747 = vpack.c.b16 %v2223, %v2219
        %v2748 = vpack.c.b16 %v2224, %v2220
        %v2749 = vpack.c.b16 %v2225, %v2221
        %v2750 = vpack.c.b16 %v2226, %v2222
        %v2751 = vpack.c.b16 %v2231, %v2227
        %v2752 = vpack.c.b16 %v2232, %v2228
        %v2753 = vpack.c.b16 %v2233, %v2229
        %v2754 = vpack.c.b16 %v2234, %v2230
        %v2755 = vpack.c.b16 %v2239, %v2235
        %v2756 = vpack.c.b16 %v2240, %v2236
        %v2757 = vpack.c.b16 %v2241, %v2237
        %v2758 = vpack.c.b16 %v2242, %v2238
        %v2759 = vpack.c.b16 %v2247, %v2243
        %v2760 = vpack.c.b16 %v2248, %v2244
        %v2761 = vpack.c.b16 %v2249, %v2245
        %v2762 = vpack.c.b16 %v2250, %v2246
        %v2763 = vpack.c.b16 %v2255, %v2251
        %v2764 = vpack.c.b16 %v2256, %v2252
        %v2765 = vpack.c.b16 %v2257, %v2253
        %v2766 = vpack.c.b16 %v2258, %v2254
        %v2767 = vpack.c.b16 %v2263, %v2259
        %v2768 = vpack.c.b16 %v2264, %v2260
        %v2769 = vpack.c.b16 %v2265, %v2261
        %v2770 = vpack.c.b16 %v2266, %v2262
        %v2771 = vpack.c.b16 %v2271, %v2267
        %v2772 = vpack.c.b16 %v2272, %v2268
        %v2773 = vpack.c.b16 %v2273, %v2269
        %v2774 = vpack.c.b16 %v2274, %v2270
        %v2775 = vpack.c.b16 %v2279, %v2275
        %v2776 = vpack.c.b16 %v2280, %v2276
        %v2777 = vpack.c.b16 %v2281, %v2277
        %v2778 = vpack.c.b16 %v2282, %v2278
        %v2779 = vpack.c.b16 %v2287, %v2283
        %v2780 = vpack.c.b16 %v2288, %v2284
        %v2781 = vpack.c.b16 %v2289, %v2285
        %v2782 = vpack.c.b16 %v2290, %v2286
        %v2783 = vpack.c.b16 %v2295, %v2291
        %v2784 = vpack.c.b16 %v2296, %v2292
        %v2785 = vpack.c.b16 %v2297, %v2293
        %v2786 = vpack.c.b16 %v2298, %v2294
        %v2787 = vpack.c.b16 %v2303, %v2299
        %v2788 = vpack.c.b16 %v2304, %v2300
        %v2789 = vpack.c.b16 %v2305, %v2301
        %v2790 = vpack.c.b16 %v2306, %v2302
        %v2791 = vpack.c.b16 %v2311, %v2307
        %v2792 = vpack.c.b16 %v2312, %v2308
        %v2793 = vpack.c.b16 %v2313, %v2309
        %v2794 = vpack.c.b16 %v2314, %v2310
        %v2795 = vpack.c.b16 %v2319, %v2315
        %v2796 = vpack.c.b16 %v2320, %v2316
        %v2797 = vpack.c.b16 %v2321, %v2317
        %v2798 = vpack.c.b16 %v2322, %v2318
        %v2799 = vpack.c.b16 %v2327, %v2323
        %v2800 = vpack.c.b16 %v2328, %v2324
        %v2801 = vpack.c.b16 %v2329, %v2325
        %v2802 = vpack.c.b16 %v2330, %v2326
        %v2803 = vpack.c.b16 %v2335, %v2331
        %v2804 = vpack.c.b16 %v2336, %v2332
        %v2805 = vpack.c.b16 %v2337, %v2333
        %v2806 = vpack.c.b16 %v2338, %v2334
        %v2807 = vpack.c.b16 %v2343, %v2339
        %v2808 = vpack.c.b16 %v2344, %v2340
        %v2809 = vpack.c.b16 %v2345, %v2341
        %v2810 = vpack.c.b16 %v2346, %v2342
        %v2811 = vpack.c.b16 %v2351, %v2347
        %v2812 = vpack.c.b16 %v2352, %v2348
        %v2813 = vpack.c.b16 %v2353, %v2349
        %v2814 = vpack.c.b16 %v2354, %v2350
        %v2815 = vpack.c.b16 %v2359, %v2355
        %v2816 = vpack.c.b16 %v2360, %v2356
        %v2817 = vpack.c.b16 %v2361, %v2357
        %v2818 = vpack.c.b16 %v2362, %v2358
        %v2819 = vpack.c.b16 %v2367, %v2363
        %v2820 = vpack.c.b16 %v2368, %v2364
        %v2821 = vpack.c.b16 %v2369, %v2365
        %v2822 = vpack.c.b16 %v2370, %v2366
        %v2823 = vpack.c.b16 %v2375, %v2371
        %v2824 = vpack.c.b16 %v2376, %v2372
        %v2825 = vpack.c.b16 %v2377, %v2373
        %v2826 = vpack.c.b16 %v2378, %v2374
        %3275 = vmatprep.subr.bf16.mxu0 %v2408
        %3276 = vmatpush1.bf16.msra.mxu0 %v2407
        %3277 = vmatprep.subr.bf16.mxu0 %v2404
        %3278 = vmatpush1.bf16.msra.mxu0 %v2403
        %3279 = vmatprep.subr.bf16.mxu0 %v2400
        %3280 = vmatpush1.bf16.msra.mxu0 %v2399
        %3281 = vmatprep.subr.bf16.mxu0 %v2396
        %3282 = vmatpush1.bf16.msra.mxu0 %v2395
        %3283 = vmatprep.subr.bf16.mxu0 %v2392
        %3284 = vmatpush1.bf16.msra.mxu0 %v2391
        %3285 = vmatprep.subr.bf16.mxu0 %v2388
        %3286 = vmatpush1.bf16.msra.mxu0 %v2387
        %3287 = vmatprep.subr.bf16.mxu0 %v2384
        %3288 = vmatpush1.bf16.msra.mxu0 %v2383
        %3289 = vmatprep.subr.bf16.mxu0 %v2380
        %3290 = vmatpush1.bf16.msra.mxu0 %v2379
        %3291 = vmatprep.subr.bf16.mxu0 %v2440
        %3292 = vmatpush2.bf16.msra.mxu0 %v2439
        %3293 = vmatprep.subr.bf16.mxu0 %v2436
        %3294 = vmatpush2.bf16.msra.mxu0 %v2435
        %3295 = vmatprep.subr.bf16.mxu0 %v2432
        %3296 = vmatpush2.bf16.msra.mxu0 %v2431
        %3297 = vmatprep.subr.bf16.mxu0 %v2428
        %3298 = vmatpush2.bf16.msra.mxu0 %v2427
        %3299 = vmatprep.subr.bf16.mxu0 %v2424
        %3300 = vmatpush2.bf16.msra.mxu0 %v2423
        %3301 = vmatprep.subr.bf16.mxu0 %v2420
        %3302 = vmatpush2.bf16.msra.mxu0 %v2419
        %3303 = vmatprep.subr.bf16.mxu0 %v2416
        %3304 = vmatpush2.bf16.msra.mxu0 %v2415
        %3305 = vmatprep.subr.bf16.mxu0 %v2412
        %3306 = vmatpush2.bf16.msra.mxu0 %v2411
        %3307 = vmatprep.mubr.bf16.mxu0 %v552
        %3308 = vmatmul.mubr.bf16.gmra.mxu0 %v551
        %v3309 = vpop.f32.mrf.mxu0
        %v3310 = vadd.f32 %v1018, %v3309
        %v3311 = vpop.f32.mrf.mxu0
        %v3312 = vadd.f32 %v1022, %v3311
        %v3313 = vpop.f32.mrf.mxu0
        %v3314 = vpop.f32.mrf.mxu0
        %3315 = vdwg.mxu0
        %3316 = vmatprep.subr.bf16.mxu0 %v2472
        %3317 = vmatpush1.bf16.msra.mxu0 %v2471
        %3318 = vmatprep.subr.bf16.mxu0 %v2468
        %3319 = vmatpush1.bf16.msra.mxu0 %v2467
        %3320 = vmatprep.subr.bf16.mxu0 %v2464
        %3321 = vmatpush1.bf16.msra.mxu0 %v2463
        %3322 = vmatprep.subr.bf16.mxu0 %v2460
        %3323 = vmatpush1.bf16.msra.mxu0 %v2459
        %3324 = vmatprep.subr.bf16.mxu0 %v2456
        %3325 = vmatpush1.bf16.msra.mxu0 %v2455
        %3326 = vmatprep.subr.bf16.mxu0 %v2452
        %3327 = vmatpush1.bf16.msra.mxu0 %v2451
        %3328 = vmatprep.subr.bf16.mxu0 %v2448
        %3329 = vmatpush1.bf16.msra.mxu0 %v2447
        %3330 = vmatprep.subr.bf16.mxu0 %v2444
        %3331 = vmatpush1.bf16.msra.mxu0 %v2443
        %3332 = vmatprep.subr.bf16.mxu0 %v2504
        %3333 = vmatpush2.bf16.msra.mxu0 %v2503
        %3334 = vmatprep.subr.bf16.mxu0 %v2500
        %3335 = vmatpush2.bf16.msra.mxu0 %v2499
        %3336 = vmatprep.subr.bf16.mxu0 %v2496
        %3337 = vmatpush2.bf16.msra.mxu0 %v2495
        %3338 = vmatprep.subr.bf16.mxu0 %v2492
        %3339 = vmatpush2.bf16.msra.mxu0 %v2491
        %3340 = vmatprep.subr.bf16.mxu0 %v2488
        %3341 = vmatpush2.bf16.msra.mxu0 %v2487
        %3342 = vmatprep.subr.bf16.mxu0 %v2484
        %3343 = vmatpush2.bf16.msra.mxu0 %v2483
        %3344 = vmatprep.subr.bf16.mxu0 %v2480
        %3345 = vmatpush2.bf16.msra.mxu0 %v2479
        %3346 = vmatprep.subr.bf16.mxu0 %v2476
        %3347 = vmatpush2.bf16.msra.mxu0 %v2475
        %3348 = vmatprep.mubr.bf16.mxu0 %v554
        %3349 = vmatmul.mubr.bf16.gmra.mxu0 %v553
        %v3350 = vpop.f32.mrf.mxu0
        %v3351 = vadd.f32 %v3310, %v3350
        %v3352 = vpop.f32.mrf.mxu0
        %v3353 = vadd.f32 %v3312, %v3352
        %v3354 = vpop.f32.mrf.mxu0
        %v3355 = vpop.f32.mrf.mxu0
        %3356 = vdwg.mxu0
        %3357 = vmatprep.subr.bf16.mxu0 %v2536
        %3358 = vmatpush1.bf16.msra.mxu0 %v2535
        %3359 = vmatprep.subr.bf16.mxu0 %v2532
        %3360 = vmatpush1.bf16.msra.mxu0 %v2531
        %3361 = vmatprep.subr.bf16.mxu0 %v2528
        %3362 = vmatpush1.bf16.msra.mxu0 %v2527
        %3363 = vmatprep.subr.bf16.mxu0 %v2524
        %3364 = vmatpush1.bf16.msra.mxu0 %v2523
        %3365 = vmatprep.subr.bf16.mxu0 %v2520
        %3366 = vmatpush1.bf16.msra.mxu0 %v2519
        %3367 = vmatprep.subr.bf16.mxu0 %v2516
        %3368 = vmatpush1.bf16.msra.mxu0 %v2515
        %3369 = vmatprep.subr.bf16.mxu0 %v2512
        %3370 = vmatpush1.bf16.msra.mxu0 %v2511
        %3371 = vmatprep.subr.bf16.mxu0 %v2508
        %3372 = vmatpush1.bf16.msra.mxu0 %v2507
        %3373 = vmatprep.subr.bf16.mxu0 %v2568
        %3374 = vmatpush2.bf16.msra.mxu0 %v2567
        %3375 = vmatprep.subr.bf16.mxu0 %v2564
        %3376 = vmatpush2.bf16.msra.mxu0 %v2563
        %3377 = vmatprep.subr.bf16.mxu0 %v2560
        %3378 = vmatpush2.bf16.msra.mxu0 %v2559
        %3379 = vmatprep.subr.bf16.mxu0 %v2556
        %3380 = vmatpush2.bf16.msra.mxu0 %v2555
        %3381 = vmatprep.subr.bf16.mxu0 %v2552
        %3382 = vmatpush2.bf16.msra.mxu0 %v2551
        %3383 = vmatprep.subr.bf16.mxu0 %v2548
        %3384 = vmatpush2.bf16.msra.mxu0 %v2547
        %3385 = vmatprep.subr.bf16.mxu0 %v2544
        %3386 = vmatpush2.bf16.msra.mxu0 %v2543
        %3387 = vmatprep.subr.bf16.mxu0 %v2540
        %3388 = vmatpush2.bf16.msra.mxu0 %v2539
        %3389 = vmatprep.mubr.bf16.mxu0 %v556
        %3390 = vmatmul.mubr.bf16.gmra.mxu0 %v555
        %v3391 = vpop.f32.mrf.mxu0
        %v3392 = vadd.f32 %v3351, %v3391
        %v3393 = vpop.f32.mrf.mxu0
        %v3394 = vadd.f32 %v3353, %v3393
        %v3395 = vpop.f32.mrf.mxu0
        %v3396 = vpop.f32.mrf.mxu0
        %3397 = vdwg.mxu0
        %3398 = vmatprep.subr.bf16.mxu0 %v2600
        %3399 = vmatpush1.bf16.msra.mxu0 %v2599
        %3400 = vmatprep.subr.bf16.mxu0 %v2596
        %3401 = vmatpush1.bf16.msra.mxu0 %v2595
        %3402 = vmatprep.subr.bf16.mxu0 %v2592
        %3403 = vmatpush1.bf16.msra.mxu0 %v2591
        %3404 = vmatprep.subr.bf16.mxu0 %v2588
        %3405 = vmatpush1.bf16.msra.mxu0 %v2587
        %3406 = vmatprep.subr.bf16.mxu0 %v2584
        %3407 = vmatpush1.bf16.msra.mxu0 %v2583
        %3408 = vmatprep.subr.bf16.mxu0 %v2580
        %3409 = vmatpush1.bf16.msra.mxu0 %v2579
        %3410 = vmatprep.subr.bf16.mxu0 %v2576
        %3411 = vmatpush1.bf16.msra.mxu0 %v2575
        %3412 = vmatprep.subr.bf16.mxu0 %v2572
        %3413 = vmatpush1.bf16.msra.mxu0 %v2571
        %3414 = vmatprep.subr.bf16.mxu0 %v2632
        %3415 = vmatpush2.bf16.msra.mxu0 %v2631
        %3416 = vmatprep.subr.bf16.mxu0 %v2628
        %3417 = vmatpush2.bf16.msra.mxu0 %v2627
        %3418 = vmatprep.subr.bf16.mxu0 %v2624
        %3419 = vmatpush2.bf16.msra.mxu0 %v2623
        %3420 = vmatprep.subr.bf16.mxu0 %v2620
        %3421 = vmatpush2.bf16.msra.mxu0 %v2619
        %3422 = vmatprep.subr.bf16.mxu0 %v2616
        %3423 = vmatpush2.bf16.msra.mxu0 %v2615
        %3424 = vmatprep.subr.bf16.mxu0 %v2612
        %3425 = vmatpush2.bf16.msra.mxu0 %v2611
        %3426 = vmatprep.subr.bf16.mxu0 %v2608
        %3427 = vmatpush2.bf16.msra.mxu0 %v2607
        %3428 = vmatprep.subr.bf16.mxu0 %v2604
        %3429 = vmatpush2.bf16.msra.mxu0 %v2603
        %3430 = vmatprep.mubr.bf16.mxu0 %v558
        %3431 = vmatmul.mubr.bf16.gmra.mxu0 %v557
        %v3432 = vpop.f32.mrf.mxu0
        %v3433 = vadd.f32 %v3392, %v3432
        %v3434 = vpop.f32.mrf.mxu0
        %v3435 = vadd.f32 %v3394, %v3434
        %v3436 = vpop.f32.mrf.mxu0
        %v3437 = vpop.f32.mrf.mxu0
        %3438 = vdwg.mxu0
        %3439 = vmatprep.subr.bf16.mxu0 %v2664
        %3440 = vmatpush1.bf16.msra.mxu0 %v2663
        %3441 = vmatprep.subr.bf16.mxu0 %v2660
        %3442 = vmatpush1.bf16.msra.mxu0 %v2659
        %3443 = vmatprep.subr.bf16.mxu0 %v2656
        %3444 = vmatpush1.bf16.msra.mxu0 %v2655
        %3445 = vmatprep.subr.bf16.mxu0 %v2652
        %3446 = vmatpush1.bf16.msra.mxu0 %v2651
        %3447 = vmatprep.subr.bf16.mxu0 %v2648
        %3448 = vmatpush1.bf16.msra.mxu0 %v2647
        %3449 = vmatprep.subr.bf16.mxu0 %v2644
        %3450 = vmatpush1.bf16.msra.mxu0 %v2643
        %3451 = vmatprep.subr.bf16.mxu0 %v2640
        %3452 = vmatpush1.bf16.msra.mxu0 %v2639
        %3453 = vmatprep.subr.bf16.mxu0 %v2636
        %3454 = vmatpush1.bf16.msra.mxu0 %v2635
        %3455 = vmatprep.subr.bf16.mxu0 %v2696
        %3456 = vmatpush2.bf16.msra.mxu0 %v2695
        %3457 = vmatprep.subr.bf16.mxu0 %v2692
        %3458 = vmatpush2.bf16.msra.mxu0 %v2691
        %3459 = vmatprep.subr.bf16.mxu0 %v2688
        %3460 = vmatpush2.bf16.msra.mxu0 %v2687
        %3461 = vmatprep.subr.bf16.mxu0 %v2684
        %3462 = vmatpush2.bf16.msra.mxu0 %v2683
        %3463 = vmatprep.subr.bf16.mxu0 %v2680
        %3464 = vmatpush2.bf16.msra.mxu0 %v2679
        %3465 = vmatprep.subr.bf16.mxu0 %v2676
        %3466 = vmatpush2.bf16.msra.mxu0 %v2675
        %3467 = vmatprep.subr.bf16.mxu0 %v2672
        %3468 = vmatpush2.bf16.msra.mxu0 %v2671
        %3469 = vmatprep.subr.bf16.mxu0 %v2668
        %3470 = vmatpush2.bf16.msra.mxu0 %v2667
        %3471 = vmatprep.mubr.bf16.mxu0 %v560
        %3472 = vmatmul.mubr.bf16.gmra.mxu0 %v559
        %v3473 = vpop.f32.mrf.mxu0
        %v3474 = vadd.f32 %v3433, %v3473
        %v3475 = vpop.f32.mrf.mxu0
        %v3476 = vadd.f32 %v3435, %v3475
        %v3477 = vpop.f32.mrf.mxu0
        %v3478 = vpop.f32.mrf.mxu0
        %3479 = vdwg.mxu0
        %3480 = vmatprep.subr.bf16.mxu0 %v2728
        %3481 = vmatpush1.bf16.msra.mxu0 %v2727
        %3482 = vmatprep.subr.bf16.mxu0 %v2724
        %3483 = vmatpush1.bf16.msra.mxu0 %v2723
        %3484 = vmatprep.subr.bf16.mxu0 %v2720
        %3485 = vmatpush1.bf16.msra.mxu0 %v2719
        %3486 = vmatprep.subr.bf16.mxu0 %v2716
        %3487 = vmatpush1.bf16.msra.mxu0 %v2715
        %3488 = vmatprep.subr.bf16.mxu0 %v2712
        %3489 = vmatpush1.bf16.msra.mxu0 %v2711
        %3490 = vmatprep.subr.bf16.mxu0 %v2708
        %3491 = vmatpush1.bf16.msra.mxu0 %v2707
        %3492 = vmatprep.subr.bf16.mxu0 %v2704
        %3493 = vmatpush1.bf16.msra.mxu0 %v2703
        %3494 = vmatprep.subr.bf16.mxu0 %v2700
        %3495 = vmatpush1.bf16.msra.mxu0 %v2699
        %3496 = vmatprep.subr.bf16.mxu0 %v2760
        %3497 = vmatpush2.bf16.msra.mxu0 %v2759
        %3498 = vmatprep.subr.bf16.mxu0 %v2756
        %3499 = vmatpush2.bf16.msra.mxu0 %v2755
        %3500 = vmatprep.subr.bf16.mxu0 %v2752
        %3501 = vmatpush2.bf16.msra.mxu0 %v2751
        %3502 = vmatprep.subr.bf16.mxu0 %v2748
        %3503 = vmatpush2.bf16.msra.mxu0 %v2747
        %3504 = vmatprep.subr.bf16.mxu0 %v2744
        %3505 = vmatpush2.bf16.msra.mxu0 %v2743
        %3506 = vmatprep.subr.bf16.mxu0 %v2740
        %3507 = vmatpush2.bf16.msra.mxu0 %v2739
        %3508 = vmatprep.subr.bf16.mxu0 %v2736
        %3509 = vmatpush2.bf16.msra.mxu0 %v2735
        %3510 = vmatprep.subr.bf16.mxu0 %v2732
        %3511 = vmatpush2.bf16.msra.mxu0 %v2731
        %3512 = vmatprep.mubr.bf16.mxu0 %v562
        %3513 = vmatmul.mubr.bf16.gmra.mxu0 %v561
        %v3514 = vpop.f32.mrf.mxu0
        %v3515 = vadd.f32 %v3474, %v3514
        %v3516 = vpop.f32.mrf.mxu0
        %v3517 = vadd.f32 %v3476, %v3516
        %v3518 = vpop.f32.mrf.mxu0
        %v3519 = vpop.f32.mrf.mxu0
        %3520 = vdwg.mxu0
        %3521 = vmatprep.subr.bf16.mxu0 %v2792
        %3522 = vmatpush1.bf16.msra.mxu0 %v2791
        %3523 = vmatprep.subr.bf16.mxu0 %v2788
        %3524 = vmatpush1.bf16.msra.mxu0 %v2787
        %3525 = vmatprep.subr.bf16.mxu0 %v2784
        %3526 = vmatpush1.bf16.msra.mxu0 %v2783
        %3527 = vmatprep.subr.bf16.mxu0 %v2780
        %3528 = vmatpush1.bf16.msra.mxu0 %v2779
        %3529 = vmatprep.subr.bf16.mxu0 %v2776
        %3530 = vmatpush1.bf16.msra.mxu0 %v2775
        %3531 = vmatprep.subr.bf16.mxu0 %v2772
        %3532 = vmatpush1.bf16.msra.mxu0 %v2771
        %3533 = vmatprep.subr.bf16.mxu0 %v2768
        %3534 = vmatpush1.bf16.msra.mxu0 %v2767
        %3535 = vmatprep.subr.bf16.mxu0 %v2764
        %3536 = vmatpush1.bf16.msra.mxu0 %v2763
        %3537 = vmatprep.subr.bf16.mxu0 %v2824
        %3538 = vmatpush2.bf16.msra.mxu0 %v2823
        %3539 = vmatprep.subr.bf16.mxu0 %v2820
        %3540 = vmatpush2.bf16.msra.mxu0 %v2819
        %3541 = vmatprep.subr.bf16.mxu0 %v2816
        %3542 = vmatpush2.bf16.msra.mxu0 %v2815
        %3543 = vmatprep.subr.bf16.mxu0 %v2812
        %3544 = vmatpush2.bf16.msra.mxu0 %v2811
        %3545 = vmatprep.subr.bf16.mxu0 %v2808
        %3546 = vmatpush2.bf16.msra.mxu0 %v2807
        %3547 = vmatprep.subr.bf16.mxu0 %v2804
        %3548 = vmatpush2.bf16.msra.mxu0 %v2803
        %3549 = vmatprep.subr.bf16.mxu0 %v2800
        %3550 = vmatpush2.bf16.msra.mxu0 %v2799
        %3551 = vmatprep.subr.bf16.mxu0 %v2796
        %3552 = vmatpush2.bf16.msra.mxu0 %v2795
        %3553 = vmatprep.mubr.bf16.mxu0 %v564
        %3554 = vmatmul.mubr.bf16.gmra.mxu0 %v563
        %v3555 = vpop.f32.mrf.mxu0
        %v3556 = vadd.f32 %v3515, %v3555
        %v3557 = vpop.f32.mrf.mxu0
        %v3558 = vadd.f32 %v3517, %v3557
        %v3559 = vpop.f32.mrf.mxu0
        %v3560 = vpop.f32.mrf.mxu0
        %3561 = vdwg.mxu0
        %3562 = vmatprep.subr.bf16.mxu0 %v2410
        %3563 = vmatpush1.bf16.msra.mxu0 %v2409
        %3564 = vmatprep.subr.bf16.mxu0 %v2406
        %3565 = vmatpush1.bf16.msra.mxu0 %v2405
        %3566 = vmatprep.subr.bf16.mxu0 %v2402
        %3567 = vmatpush1.bf16.msra.mxu0 %v2401
        %3568 = vmatprep.subr.bf16.mxu0 %v2398
        %3569 = vmatpush1.bf16.msra.mxu0 %v2397
        %3570 = vmatprep.subr.bf16.mxu0 %v2394
        %3571 = vmatpush1.bf16.msra.mxu0 %v2393
        %3572 = vmatprep.subr.bf16.mxu0 %v2390
        %3573 = vmatpush1.bf16.msra.mxu0 %v2389
        %3574 = vmatprep.subr.bf16.mxu0 %v2386
        %3575 = vmatpush1.bf16.msra.mxu0 %v2385
        %3576 = vmatprep.subr.bf16.mxu0 %v2382
        %3577 = vmatpush1.bf16.msra.mxu0 %v2381
        %3578 = vmatprep.subr.bf16.mxu0 %v2442
        %3579 = vmatpush2.bf16.msra.mxu0 %v2441
        %3580 = vmatprep.subr.bf16.mxu0 %v2438
        %3581 = vmatpush2.bf16.msra.mxu0 %v2437
        %3582 = vmatprep.subr.bf16.mxu0 %v2434
        %3583 = vmatpush2.bf16.msra.mxu0 %v2433
        %3584 = vmatprep.subr.bf16.mxu0 %v2430
        %3585 = vmatpush2.bf16.msra.mxu0 %v2429
        %3586 = vmatprep.subr.bf16.mxu0 %v2426
        %3587 = vmatpush2.bf16.msra.mxu0 %v2425
        %3588 = vmatprep.subr.bf16.mxu0 %v2422
        %3589 = vmatpush2.bf16.msra.mxu0 %v2421
        %3590 = vmatprep.subr.bf16.mxu0 %v2418
        %3591 = vmatpush2.bf16.msra.mxu0 %v2417
        %3592 = vmatprep.subr.bf16.mxu0 %v2414
        %3593 = vmatpush2.bf16.msra.mxu0 %v2413
        %3594 = vmatprep.mubr.bf16.mxu0 %v552
        %3595 = vmatmul.mubr.bf16.gmra.mxu0 %v551
        %v3596 = vpop.f32.mrf.mxu0
        %v3597 = vadd.f32 %v1026, %v3596
        %v3598 = vpop.f32.mrf.mxu0
        %v3599 = vadd.f32 %v1030, %v3598
        %v3600 = vpop.f32.mrf.mxu0
        %v3601 = vpop.f32.mrf.mxu0
        %3602 = vdwg.mxu0
        %3603 = vmatprep.subr.bf16.mxu0 %v2474
        %3604 = vmatpush1.bf16.msra.mxu0 %v2473
        %3605 = vmatprep.subr.bf16.mxu0 %v2470
        %3606 = vmatpush1.bf16.msra.mxu0 %v2469
        %3607 = vmatprep.subr.bf16.mxu0 %v2466
        %3608 = vmatpush1.bf16.msra.mxu0 %v2465
        %3609 = vmatprep.subr.bf16.mxu0 %v2462
        %3610 = vmatpush1.bf16.msra.mxu0 %v2461
        %3611 = vmatprep.subr.bf16.mxu0 %v2458
        %3612 = vmatpush1.bf16.msra.mxu0 %v2457
        %3613 = vmatprep.subr.bf16.mxu0 %v2454
        %3614 = vmatpush1.bf16.msra.mxu0 %v2453
        %3615 = vmatprep.subr.bf16.mxu0 %v2450
        %3616 = vmatpush1.bf16.msra.mxu0 %v2449
        %3617 = vmatprep.subr.bf16.mxu0 %v2446
        %3618 = vmatpush1.bf16.msra.mxu0 %v2445
        %3619 = vmatprep.subr.bf16.mxu0 %v2506
        %3620 = vmatpush2.bf16.msra.mxu0 %v2505
        %3621 = vmatprep.subr.bf16.mxu0 %v2502
        %3622 = vmatpush2.bf16.msra.mxu0 %v2501
        %3623 = vmatprep.subr.bf16.mxu0 %v2498
        %3624 = vmatpush2.bf16.msra.mxu0 %v2497
        %3625 = vmatprep.subr.bf16.mxu0 %v2494
        %3626 = vmatpush2.bf16.msra.mxu0 %v2493
        %3627 = vmatprep.subr.bf16.mxu0 %v2490
        %3628 = vmatpush2.bf16.msra.mxu0 %v2489
        %3629 = vmatprep.subr.bf16.mxu0 %v2486
        %3630 = vmatpush2.bf16.msra.mxu0 %v2485
        %3631 = vmatprep.subr.bf16.mxu0 %v2482
        %3632 = vmatpush2.bf16.msra.mxu0 %v2481
        %3633 = vmatprep.subr.bf16.mxu0 %v2478
        %3634 = vmatpush2.bf16.msra.mxu0 %v2477
        %3635 = vmatprep.mubr.bf16.mxu0 %v554
        %3636 = vmatmul.mubr.bf16.gmra.mxu0 %v553
        %v3637 = vpop.f32.mrf.mxu0
        %v3638 = vadd.f32 %v3597, %v3637
        %v3639 = vpop.f32.mrf.mxu0
        %v3640 = vadd.f32 %v3599, %v3639
        %v3641 = vpop.f32.mrf.mxu0
        %v3642 = vpop.f32.mrf.mxu0
        %3643 = vdwg.mxu0
        %3644 = vmatprep.subr.bf16.mxu0 %v2538
        %3645 = vmatpush1.bf16.msra.mxu0 %v2537
        %3646 = vmatprep.subr.bf16.mxu0 %v2534
        %3647 = vmatpush1.bf16.msra.mxu0 %v2533
        %3648 = vmatprep.subr.bf16.mxu0 %v2530
        %3649 = vmatpush1.bf16.msra.mxu0 %v2529
        %3650 = vmatprep.subr.bf16.mxu0 %v2526
        %3651 = vmatpush1.bf16.msra.mxu0 %v2525
        %3652 = vmatprep.subr.bf16.mxu0 %v2522
        %3653 = vmatpush1.bf16.msra.mxu0 %v2521
        %3654 = vmatprep.subr.bf16.mxu0 %v2518
        %3655 = vmatpush1.bf16.msra.mxu0 %v2517
        %3656 = vmatprep.subr.bf16.mxu0 %v2514
        %3657 = vmatpush1.bf16.msra.mxu0 %v2513
        %3658 = vmatprep.subr.bf16.mxu0 %v2510
        %3659 = vmatpush1.bf16.msra.mxu0 %v2509
        %3660 = vmatprep.subr.bf16.mxu0 %v2570
        %3661 = vmatpush2.bf16.msra.mxu0 %v2569
        %3662 = vmatprep.subr.bf16.mxu0 %v2566
        %3663 = vmatpush2.bf16.msra.mxu0 %v2565
        %3664 = vmatprep.subr.bf16.mxu0 %v2562
        %3665 = vmatpush2.bf16.msra.mxu0 %v2561
        %3666 = vmatprep.subr.bf16.mxu0 %v2558
        %3667 = vmatpush2.bf16.msra.mxu0 %v2557
        %3668 = vmatprep.subr.bf16.mxu0 %v2554
        %3669 = vmatpush2.bf16.msra.mxu0 %v2553
        %3670 = vmatprep.subr.bf16.mxu0 %v2550
        %3671 = vmatpush2.bf16.msra.mxu0 %v2549
        %3672 = vmatprep.subr.bf16.mxu0 %v2546
        %3673 = vmatpush2.bf16.msra.mxu0 %v2545
        %3674 = vmatprep.subr.bf16.mxu0 %v2542
        %3675 = vmatpush2.bf16.msra.mxu0 %v2541
        %3676 = vmatprep.mubr.bf16.mxu0 %v556
        %3677 = vmatmul.mubr.bf16.gmra.mxu0 %v555
        %v3678 = vpop.f32.mrf.mxu0
        %v3679 = vadd.f32 %v3638, %v3678
        %v3680 = vpop.f32.mrf.mxu0
        %v3681 = vadd.f32 %v3640, %v3680
        %v3682 = vpop.f32.mrf.mxu0
        %v3683 = vpop.f32.mrf.mxu0
        %3684 = vdwg.mxu0
        %3685 = vmatprep.subr.bf16.mxu0 %v2602
        %3686 = vmatpush1.bf16.msra.mxu0 %v2601
        %3687 = vmatprep.subr.bf16.mxu0 %v2598
        %3688 = vmatpush1.bf16.msra.mxu0 %v2597
        %3689 = vmatprep.subr.bf16.mxu0 %v2594
        %3690 = vmatpush1.bf16.msra.mxu0 %v2593
        %3691 = vmatprep.subr.bf16.mxu0 %v2590
        %3692 = vmatpush1.bf16.msra.mxu0 %v2589
        %3693 = vmatprep.subr.bf16.mxu0 %v2586
        %3694 = vmatpush1.bf16.msra.mxu0 %v2585
        %3695 = vmatprep.subr.bf16.mxu0 %v2582
        %3696 = vmatpush1.bf16.msra.mxu0 %v2581
        %3697 = vmatprep.subr.bf16.mxu0 %v2578
        %3698 = vmatpush1.bf16.msra.mxu0 %v2577
        %3699 = vmatprep.subr.bf16.mxu0 %v2574
        %3700 = vmatpush1.bf16.msra.mxu0 %v2573
        %3701 = vmatprep.subr.bf16.mxu0 %v2634
        %3702 = vmatpush2.bf16.msra.mxu0 %v2633
        %3703 = vmatprep.subr.bf16.mxu0 %v2630
        %3704 = vmatpush2.bf16.msra.mxu0 %v2629
        %3705 = vmatprep.subr.bf16.mxu0 %v2626
        %3706 = vmatpush2.bf16.msra.mxu0 %v2625
        %3707 = vmatprep.subr.bf16.mxu0 %v2622
        %3708 = vmatpush2.bf16.msra.mxu0 %v2621
        %3709 = vmatprep.subr.bf16.mxu0 %v2618
        %3710 = vmatpush2.bf16.msra.mxu0 %v2617
        %3711 = vmatprep.subr.bf16.mxu0 %v2614
        %3712 = vmatpush2.bf16.msra.mxu0 %v2613
        %3713 = vmatprep.subr.bf16.mxu0 %v2610
        %3714 = vmatpush2.bf16.msra.mxu0 %v2609
        %3715 = vmatprep.subr.bf16.mxu0 %v2606
        %3716 = vmatpush2.bf16.msra.mxu0 %v2605
        %3717 = vmatprep.mubr.bf16.mxu0 %v558
        %3718 = vmatmul.mubr.bf16.gmra.mxu0 %v557
        %v3719 = vpop.f32.mrf.mxu0
        %v3720 = vadd.f32 %v3679, %v3719
        %v3721 = vpop.f32.mrf.mxu0
        %v3722 = vadd.f32 %v3681, %v3721
        %v3723 = vpop.f32.mrf.mxu0
        %v3724 = vpop.f32.mrf.mxu0
        %3725 = vdwg.mxu0
        %3726 = vmatprep.subr.bf16.mxu0 %v2666
        %3727 = vmatpush1.bf16.msra.mxu0 %v2665
        %3728 = vmatprep.subr.bf16.mxu0 %v2662
        %3729 = vmatpush1.bf16.msra.mxu0 %v2661
        %3730 = vmatprep.subr.bf16.mxu0 %v2658
        %3731 = vmatpush1.bf16.msra.mxu0 %v2657
        %3732 = vmatprep.subr.bf16.mxu0 %v2654
        %3733 = vmatpush1.bf16.msra.mxu0 %v2653
        %3734 = vmatprep.subr.bf16.mxu0 %v2650
        %3735 = vmatpush1.bf16.msra.mxu0 %v2649
        %3736 = vmatprep.subr.bf16.mxu0 %v2646
        %3737 = vmatpush1.bf16.msra.mxu0 %v2645
        %3738 = vmatprep.subr.bf16.mxu0 %v2642
        %3739 = vmatpush1.bf16.msra.mxu0 %v2641
        %3740 = vmatprep.subr.bf16.mxu0 %v2638
        %3741 = vmatpush1.bf16.msra.mxu0 %v2637
        %3742 = vmatprep.subr.bf16.mxu0 %v2698
        %3743 = vmatpush2.bf16.msra.mxu0 %v2697
        %3744 = vmatprep.subr.bf16.mxu0 %v2694
        %3745 = vmatpush2.bf16.msra.mxu0 %v2693
        %3746 = vmatprep.subr.bf16.mxu0 %v2690
        %3747 = vmatpush2.bf16.msra.mxu0 %v2689
        %3748 = vmatprep.subr.bf16.mxu0 %v2686
        %3749 = vmatpush2.bf16.msra.mxu0 %v2685
        %3750 = vmatprep.subr.bf16.mxu0 %v2682
        %3751 = vmatpush2.bf16.msra.mxu0 %v2681
        %3752 = vmatprep.subr.bf16.mxu0 %v2678
        %3753 = vmatpush2.bf16.msra.mxu0 %v2677
        %3754 = vmatprep.subr.bf16.mxu0 %v2674
        %3755 = vmatpush2.bf16.msra.mxu0 %v2673
        %3756 = vmatprep.subr.bf16.mxu0 %v2670
        %3757 = vmatpush2.bf16.msra.mxu0 %v2669
        %3758 = vmatprep.mubr.bf16.mxu0 %v560
        %3759 = vmatmul.mubr.bf16.gmra.mxu0 %v559
        %v3760 = vpop.f32.mrf.mxu0
        %v3761 = vadd.f32 %v3720, %v3760
        %v3762 = vpop.f32.mrf.mxu0
        %v3763 = vadd.f32 %v3722, %v3762
        %v3764 = vpop.f32.mrf.mxu0
        %v3765 = vpop.f32.mrf.mxu0
        %3766 = vdwg.mxu0
        %3767 = vmatprep.subr.bf16.mxu0 %v2730
        %3768 = vmatpush1.bf16.msra.mxu0 %v2729
        %3769 = vmatprep.subr.bf16.mxu0 %v2726
        %3770 = vmatpush1.bf16.msra.mxu0 %v2725
        %3771 = vmatprep.subr.bf16.mxu0 %v2722
        %3772 = vmatpush1.bf16.msra.mxu0 %v2721
        %3773 = vmatprep.subr.bf16.mxu0 %v2718
        %3774 = vmatpush1.bf16.msra.mxu0 %v2717
        %3775 = vmatprep.subr.bf16.mxu0 %v2714
        %3776 = vmatpush1.bf16.msra.mxu0 %v2713
        %3777 = vmatprep.subr.bf16.mxu0 %v2710
        %3778 = vmatpush1.bf16.msra.mxu0 %v2709
        %3779 = vmatprep.subr.bf16.mxu0 %v2706
        %3780 = vmatpush1.bf16.msra.mxu0 %v2705
        %3781 = vmatprep.subr.bf16.mxu0 %v2702
        %3782 = vmatpush1.bf16.msra.mxu0 %v2701
        %3783 = vmatprep.subr.bf16.mxu0 %v2762
        %3784 = vmatpush2.bf16.msra.mxu0 %v2761
        %3785 = vmatprep.subr.bf16.mxu0 %v2758
        %3786 = vmatpush2.bf16.msra.mxu0 %v2757
        %3787 = vmatprep.subr.bf16.mxu0 %v2754
        %3788 = vmatpush2.bf16.msra.mxu0 %v2753
        %3789 = vmatprep.subr.bf16.mxu0 %v2750
        %3790 = vmatpush2.bf16.msra.mxu0 %v2749
        %3791 = vmatprep.subr.bf16.mxu0 %v2746
        %3792 = vmatpush2.bf16.msra.mxu0 %v2745
        %3793 = vmatprep.subr.bf16.mxu0 %v2742
        %3794 = vmatpush2.bf16.msra.mxu0 %v2741
        %3795 = vmatprep.subr.bf16.mxu0 %v2738
        %3796 = vmatpush2.bf16.msra.mxu0 %v2737
        %3797 = vmatprep.subr.bf16.mxu0 %v2734
        %3798 = vmatpush2.bf16.msra.mxu0 %v2733
        %3799 = vmatprep.mubr.bf16.mxu0 %v562
        %3800 = vmatmul.mubr.bf16.gmra.mxu0 %v561
        %v3801 = vpop.f32.mrf.mxu0
        %v3802 = vadd.f32 %v3761, %v3801
        %v3803 = vpop.f32.mrf.mxu0
        %v3804 = vadd.f32 %v3763, %v3803
        %v3805 = vpop.f32.mrf.mxu0
        %v3806 = vpop.f32.mrf.mxu0
        %3807 = vdwg.mxu0
        %3808 = vmatprep.subr.bf16.mxu0 %v2794
        %3809 = vmatpush1.bf16.msra.mxu0 %v2793
        %3810 = vmatprep.subr.bf16.mxu0 %v2790
        %3811 = vmatpush1.bf16.msra.mxu0 %v2789
        %3812 = vmatprep.subr.bf16.mxu0 %v2786
        %3813 = vmatpush1.bf16.msra.mxu0 %v2785
        %3814 = vmatprep.subr.bf16.mxu0 %v2782
        %3815 = vmatpush1.bf16.msra.mxu0 %v2781
        %3816 = vmatprep.subr.bf16.mxu0 %v2778
        %3817 = vmatpush1.bf16.msra.mxu0 %v2777
        %3818 = vmatprep.subr.bf16.mxu0 %v2774
        %3819 = vmatpush1.bf16.msra.mxu0 %v2773
        %3820 = vmatprep.subr.bf16.mxu0 %v2770
        %3821 = vmatpush1.bf16.msra.mxu0 %v2769
        %3822 = vmatprep.subr.bf16.mxu0 %v2766
        %3823 = vmatpush1.bf16.msra.mxu0 %v2765
        %3824 = vmatprep.subr.bf16.mxu0 %v2826
        %3825 = vmatpush2.bf16.msra.mxu0 %v2825
        %3826 = vmatprep.subr.bf16.mxu0 %v2822
        %3827 = vmatpush2.bf16.msra.mxu0 %v2821
        %3828 = vmatprep.subr.bf16.mxu0 %v2818
        %3829 = vmatpush2.bf16.msra.mxu0 %v2817
        %3830 = vmatprep.subr.bf16.mxu0 %v2814
        %3831 = vmatpush2.bf16.msra.mxu0 %v2813
        %3832 = vmatprep.subr.bf16.mxu0 %v2810
        %3833 = vmatpush2.bf16.msra.mxu0 %v2809
        %3834 = vmatprep.subr.bf16.mxu0 %v2806
        %3835 = vmatpush2.bf16.msra.mxu0 %v2805
        %3836 = vmatprep.subr.bf16.mxu0 %v2802
        %3837 = vmatpush2.bf16.msra.mxu0 %v2801
        %3838 = vmatprep.subr.bf16.mxu0 %v2798
        %3839 = vmatpush2.bf16.msra.mxu0 %v2797
        %3840 = vmatprep.mubr.bf16.mxu0 %v564
        %3841 = vmatmul.mubr.bf16.gmra.mxu0 %v563
        %v3842 = vpop.f32.mrf.mxu0
        %v3843 = vadd.f32 %v3802, %v3842
        %v3844 = vpop.f32.mrf.mxu0
        %v3845 = vadd.f32 %v3804, %v3844
        %v3846 = vpop.f32.mrf.mxu0
        %v3847 = vpop.f32.mrf.mxu0
        %3848 = vdwg.mxu0
        %v3849 = vxor.u32 %v3556, 2147483648
        %v3850 = vxor.u32 %v3558, 2147483648
        %v3851 = vxor.u32 %v3843, 2147483648
        %v3852 = vxor.u32 %v3845, 2147483648
        %v3853 = vmul.f32 %v3849, 1.442695
        %v3854 = vpow.pop %v3853
        %v3855 = vmul.f32 %v3850, 1.442695
        %v3856 = vpow.pop %v3855
        %v3857 = vmul.f32 %v3851, 1.442695
        %v3858 = vpow.pop %v3857
        %v3859 = vmul.f32 %v3852, 1.442695
        %v3860 = vpow.pop %v3859
        %v3861 = vadd.f32 %v3854, 1.0
        %v3862 = vadd.f32 %v3856, 1.0
        %v3863 = vadd.f32 %v3858, 1.0
        %v3864 = vadd.f32 %v3860, 1.0
        %v3865 = vrcp.pop %v3861
        %v3866 = vmul.f32 1.0, %v3865
        %v3867 = vrcp.pop %v3862
        %v3868 = vmul.f32 1.0, %v3867
        %v3869 = vrcp.pop %v3863
        %v3870 = vmul.f32 1.0, %v3869
        %v3871 = vrcp.pop %v3864
        %v3872 = vmul.f32 1.0, %v3871
        %v3873 = vmul.f32 %v3556, %v3866
        %v3874 = vmul.f32 %v3558, %v3868
        %v3875 = vmul.f32 %v3843, %v3870
        %v3876 = vmul.f32 %v3845, %v3872
        %v3877 = vpack.c.bf16 %v3873, %v3873
        %v3878 = vpack.c.bf16 %v3874, %v3874
        %v3879 = vpack.c.bf16 %v3875, %v3875
        %v3880 = vpack.c.bf16 %v3876, %v3876
        %v3881 = vld [vmem:[%s382] sm:$0xff]
        %v3882 = vld [vmem:[%s382 + $0x8] sm:$0xff]
        %v3883 = vld [vmem:[%s382 + $0x10] sm:$0xff]
        %v3884 = vld [vmem:[%s382 + $0x18] sm:$0xff]
        %v3885 = vld [vmem:[%s382 + $0x20] sm:$0xff]
        %v3886 = vld [vmem:[%s382 + $0x28] sm:$0xff]
        %v3887 = vld [vmem:[%s382 + $0x30] sm:$0xff]
        %v3888 = vld [vmem:[%s382 + $0x38] sm:$0xff]
        %v3889 = vld [vmem:[%s382 + $0x40] sm:$0xff]
        %v3890 = vld [vmem:[%s382 + $0x48] sm:$0xff]
        %v3891 = vld [vmem:[%s382 + $0x50] sm:$0xff]
        %v3892 = vld [vmem:[%s382 + $0x58] sm:$0xff]
        %v3893 = vld [vmem:[%s382 + $0x60] sm:$0xff]
        %v3894 = vld [vmem:[%s382 + $0x68] sm:$0xff]
        %v3895 = vld [vmem:[%s382 + $0x70] sm:$0xff]
        %v3896 = vld [vmem:[%s382 + $0x78] sm:$0xff]
        %v3897 = vld [vmem:[%s382 + $0x80] sm:$0xff]
        %v3898 = vld [vmem:[%s382 + $0x88] sm:$0xff]
        %v3899 = vld [vmem:[%s382 + $0x90] sm:$0xff]
        %v3900 = vld [vmem:[%s382 + $0x98] sm:$0xff]
        %v3901 = vld [vmem:[%s382 + $0xa0] sm:$0xff]
        %v3902 = vld [vmem:[%s382 + $0xa8] sm:$0xff]
        %v3903 = vld [vmem:[%s382 + $0xb0] sm:$0xff]
        %v3904 = vld [vmem:[%s382 + $0xb8] sm:$0xff]
        %v3905 = vld [vmem:[%s382 + $0xc0] sm:$0xff]
        %v3906 = vld [vmem:[%s382 + $0xc8] sm:$0xff]
        %v3907 = vld [vmem:[%s382 + $0xd0] sm:$0xff]
        %v3908 = vld [vmem:[%s382 + $0xd8] sm:$0xff]
        %v3909 = vld [vmem:[%s382 + $0xe0] sm:$0xff]
        %v3910 = vld [vmem:[%s382 + $0xe8] sm:$0xff]
        %v3911 = vld [vmem:[%s382 + $0xf0] sm:$0xff]
        %v3912 = vld [vmem:[%s382 + $0xf8] sm:$0xff]
        %v3913 = vld [vmem:[%s382 + $0x100] sm:$0xff]
        %v3914 = vld [vmem:[%s382 + $0x108] sm:$0xff]
        %v3915 = vld [vmem:[%s382 + $0x110] sm:$0xff]
        %v3916 = vld [vmem:[%s382 + $0x118] sm:$0xff]
        %v3917 = vld [vmem:[%s382 + $0x120] sm:$0xff]
        %v3918 = vld [vmem:[%s382 + $0x128] sm:$0xff]
        %v3919 = vld [vmem:[%s382 + $0x130] sm:$0xff]
        %v3920 = vld [vmem:[%s382 + $0x138] sm:$0xff]
        %v3921 = vld [vmem:[%s382 + $0x140] sm:$0xff]
        %v3922 = vld [vmem:[%s382 + $0x148] sm:$0xff]
        %v3923 = vld [vmem:[%s382 + $0x150] sm:$0xff]
        %v3924 = vld [vmem:[%s382 + $0x158] sm:$0xff]
        %v3925 = vld [vmem:[%s382 + $0x160] sm:$0xff]
        %v3926 = vld [vmem:[%s382 + $0x168] sm:$0xff]
        %v3927 = vld [vmem:[%s382 + $0x170] sm:$0xff]
        %v3928 = vld [vmem:[%s382 + $0x178] sm:$0xff]
        %v3929 = vld [vmem:[%s382 + $0x180] sm:$0xff]
        %v3930 = vld [vmem:[%s382 + $0x188] sm:$0xff]
        %v3931 = vld [vmem:[%s382 + $0x190] sm:$0xff]
        %v3932 = vld [vmem:[%s382 + $0x198] sm:$0xff]
        %v3933 = vld [vmem:[%s382 + $0x1a0] sm:$0xff]
        %v3934 = vld [vmem:[%s382 + $0x1a8] sm:$0xff]
        %v3935 = vld [vmem:[%s382 + $0x1b0] sm:$0xff]
        %v3936 = vld [vmem:[%s382 + $0x1b8] sm:$0xff]
        %v3937 = vld [vmem:[%s382 + $0x1c0] sm:$0xff]
        %v3938 = vld [vmem:[%s382 + $0x1c8] sm:$0xff]
        %v3939 = vld [vmem:[%s382 + $0x1d0] sm:$0xff]
        %v3940 = vld [vmem:[%s382 + $0x1d8] sm:$0xff]
        %v3941 = vld [vmem:[%s382 + $0x1e0] sm:$0xff]
        %v3942 = vld [vmem:[%s382 + $0x1e8] sm:$0xff]
        %v3943 = vld [vmem:[%s382 + $0x1f0] sm:$0xff]
        %v3944 = vld [vmem:[%s382 + $0x1f8] sm:$0xff]
        %v3945 = vld [vmem:[%s391] sm:$0x3]
        %v3947 = vlaneseq
        %v3948 = vshrl.u32 %v3947, 7
        %v3949 = vsub.s32 0, %v3948
        %v3950 = vrot.slane %v3945, %v3949
        %v3951 = vlaneseq
        %v3952 = vshrl.u32 %v3951, 7
        %v3953 = vsub.s32 1, %v3952
        %v3954 = vrot.slane %v3945, %v3953
        %v4021 = vunpack.c.l.b16 %v3881
        %v4022 = vunpack.c.h.b16 %v3881
        %v4023 = vunpack.c.l.b16 %v3882
        %v4024 = vunpack.c.h.b16 %v3882
        %v4025 = vunpack.c.l.b16 %v3883
        %v4026 = vunpack.c.h.b16 %v3883
        %v4027 = vunpack.c.l.b16 %v3884
        %v4028 = vunpack.c.h.b16 %v3884
        %v4029 = vunpack.c.l.b16 %v3885
        %v4030 = vunpack.c.h.b16 %v3885
        %v4031 = vunpack.c.l.b16 %v3886
        %v4032 = vunpack.c.h.b16 %v3886
        %v4033 = vunpack.c.l.b16 %v3887
        %v4034 = vunpack.c.h.b16 %v3887
        %v4035 = vunpack.c.l.b16 %v3888
        %v4036 = vunpack.c.h.b16 %v3888
        %v4037 = vunpack.c.l.b16 %v3889
        %v4038 = vunpack.c.h.b16 %v3889
        %v4039 = vunpack.c.l.b16 %v3890
        %v4040 = vunpack.c.h.b16 %v3890
        %v4041 = vunpack.c.l.b16 %v3891
        %v4042 = vunpack.c.h.b16 %v3891
        %v4043 = vunpack.c.l.b16 %v3892
        %v4044 = vunpack.c.h.b16 %v3892
        %v4045 = vunpack.c.l.b16 %v3893
        %v4046 = vunpack.c.h.b16 %v3893
        %v4047 = vunpack.c.l.b16 %v3894
        %v4048 = vunpack.c.h.b16 %v3894
        %v4049 = vunpack.c.l.b16 %v3895
        %v4050 = vunpack.c.h.b16 %v3895
        %v4051 = vunpack.c.l.b16 %v3896
        %v4052 = vunpack.c.h.b16 %v3896
        %v4053 = vunpack.c.l.b16 %v3897
        %v4054 = vunpack.c.h.b16 %v3897
        %v4055 = vunpack.c.l.b16 %v3898
        %v4056 = vunpack.c.h.b16 %v3898
        %v4057 = vunpack.c.l.b16 %v3899
        %v4058 = vunpack.c.h.b16 %v3899
        %v4059 = vunpack.c.l.b16 %v3900
        %v4060 = vunpack.c.h.b16 %v3900
        %v4061 = vunpack.c.l.b16 %v3901
        %v4062 = vunpack.c.h.b16 %v3901
        %v4063 = vunpack.c.l.b16 %v3902
        %v4064 = vunpack.c.h.b16 %v3902
        %v4065 = vunpack.c.l.b16 %v3903
        %v4066 = vunpack.c.h.b16 %v3903
        %v4067 = vunpack.c.l.b16 %v3904
        %v4068 = vunpack.c.h.b16 %v3904
        %v4069 = vunpack.c.l.b16 %v3905
        %v4070 = vunpack.c.h.b16 %v3905
        %v4071 = vunpack.c.l.b16 %v3906
        %v4072 = vunpack.c.h.b16 %v3906
        %v4073 = vunpack.c.l.b16 %v3907
        %v4074 = vunpack.c.h.b16 %v3907
        %v4075 = vunpack.c.l.b16 %v3908
        %v4076 = vunpack.c.h.b16 %v3908
        %v4077 = vunpack.c.l.b16 %v3909
        %v4078 = vunpack.c.h.b16 %v3909
        %v4079 = vunpack.c.l.b16 %v3910
        %v4080 = vunpack.c.h.b16 %v3910
        %v4081 = vunpack.c.l.b16 %v3911
        %v4082 = vunpack.c.h.b16 %v3911
        %v4083 = vunpack.c.l.b16 %v3912
        %v4084 = vunpack.c.h.b16 %v3912
        %v4085 = vunpack.c.l.b16 %v3913
        %v4086 = vunpack.c.h.b16 %v3913
        %v4087 = vunpack.c.l.b16 %v3914
        %v4088 = vunpack.c.h.b16 %v3914
        %v4089 = vunpack.c.l.b16 %v3915
        %v4090 = vunpack.c.h.b16 %v3915
        %v4091 = vunpack.c.l.b16 %v3916
        %v4092 = vunpack.c.h.b16 %v3916
        %v4093 = vunpack.c.l.b16 %v3917
        %v4094 = vunpack.c.h.b16 %v3917
        %v4095 = vunpack.c.l.b16 %v3918
        %v4096 = vunpack.c.h.b16 %v3918
        %v4097 = vunpack.c.l.b16 %v3919
        %v4098 = vunpack.c.h.b16 %v3919
        %v4099 = vunpack.c.l.b16 %v3920
        %v4100 = vunpack.c.h.b16 %v3920
        %v4101 = vunpack.c.l.b16 %v3921
        %v4102 = vunpack.c.h.b16 %v3921
        %v4103 = vunpack.c.l.b16 %v3922
        %v4104 = vunpack.c.h.b16 %v3922
        %v4105 = vunpack.c.l.b16 %v3923
        %v4106 = vunpack.c.h.b16 %v3923
        %v4107 = vunpack.c.l.b16 %v3924
        %v4108 = vunpack.c.h.b16 %v3924
        %v4109 = vunpack.c.l.b16 %v3925
        %v4110 = vunpack.c.h.b16 %v3925
        %v4111 = vunpack.c.l.b16 %v3926
        %v4112 = vunpack.c.h.b16 %v3926
        %v4113 = vunpack.c.l.b16 %v3927
        %v4114 = vunpack.c.h.b16 %v3927
        %v4115 = vunpack.c.l.b16 %v3928
        %v4116 = vunpack.c.h.b16 %v3928
        %v4117 = vunpack.c.l.b16 %v3929
        %v4118 = vunpack.c.h.b16 %v3929
        %v4119 = vunpack.c.l.b16 %v3930
        %v4120 = vunpack.c.h.b16 %v3930
        %v4121 = vunpack.c.l.b16 %v3931
        %v4122 = vunpack.c.h.b16 %v3931
        %v4123 = vunpack.c.l.b16 %v3932
        %v4124 = vunpack.c.h.b16 %v3932
        %v4125 = vunpack.c.l.b16 %v3933
        %v4126 = vunpack.c.h.b16 %v3933
        %v4127 = vunpack.c.l.b16 %v3934
        %v4128 = vunpack.c.h.b16 %v3934
        %v4129 = vunpack.c.l.b16 %v3935
        %v4130 = vunpack.c.h.b16 %v3935
        %v4131 = vunpack.c.l.b16 %v3936
        %v4132 = vunpack.c.h.b16 %v3936
        %v4133 = vunpack.c.l.b16 %v3937
        %v4134 = vunpack.c.h.b16 %v3937
        %v4135 = vunpack.c.l.b16 %v3938
        %v4136 = vunpack.c.h.b16 %v3938
        %v4137 = vunpack.c.l.b16 %v3939
        %v4138 = vunpack.c.h.b16 %v3939
        %v4139 = vunpack.c.l.b16 %v3940
        %v4140 = vunpack.c.h.b16 %v3940
        %v4141 = vunpack.c.l.b16 %v3941
        %v4142 = vunpack.c.h.b16 %v3941
        %v4143 = vunpack.c.l.b16 %v3942
        %v4144 = vunpack.c.h.b16 %v3942
        %v4145 = vunpack.c.l.b16 %v3943
        %v4146 = vunpack.c.h.b16 %v3943
        %v4147 = vunpack.c.l.b16 %v3944
        %v4148 = vunpack.c.h.b16 %v3944
        %v4149 = vpack.c.b16 %v4023, %v4021
        %v4150 = vpack.c.b16 %v4024, %v4022
        %v4151 = vpack.c.b16 %v4027, %v4025
        %v4152 = vpack.c.b16 %v4028, %v4026
        %v4153 = vpack.c.b16 %v4031, %v4029
        %v4154 = vpack.c.b16 %v4032, %v4030
        %v4155 = vpack.c.b16 %v4035, %v4033
        %v4156 = vpack.c.b16 %v4036, %v4034
        %v4157 = vpack.c.b16 %v4039, %v4037
        %v4158 = vpack.c.b16 %v4040, %v4038
        %v4159 = vpack.c.b16 %v4043, %v4041
        %v4160 = vpack.c.b16 %v4044, %v4042
        %v4161 = vpack.c.b16 %v4047, %v4045
        %v4162 = vpack.c.b16 %v4048, %v4046
        %v4163 = vpack.c.b16 %v4051, %v4049
        %v4164 = vpack.c.b16 %v4052, %v4050
        %v4165 = vpack.c.b16 %v4055, %v4053
        %v4166 = vpack.c.b16 %v4056, %v4054
        %v4167 = vpack.c.b16 %v4059, %v4057
        %v4168 = vpack.c.b16 %v4060, %v4058
        %v4169 = vpack.c.b16 %v4063, %v4061
        %v4170 = vpack.c.b16 %v4064, %v4062
        %v4171 = vpack.c.b16 %v4067, %v4065
        %v4172 = vpack.c.b16 %v4068, %v4066
        %v4173 = vpack.c.b16 %v4071, %v4069
        %v4174 = vpack.c.b16 %v4072, %v4070
        %v4175 = vpack.c.b16 %v4075, %v4073
        %v4176 = vpack.c.b16 %v4076, %v4074
        %v4177 = vpack.c.b16 %v4079, %v4077
        %v4178 = vpack.c.b16 %v4080, %v4078
        %v4179 = vpack.c.b16 %v4083, %v4081
        %v4180 = vpack.c.b16 %v4084, %v4082
        %v4181 = vpack.c.b16 %v4087, %v4085
        %v4182 = vpack.c.b16 %v4088, %v4086
        %v4183 = vpack.c.b16 %v4091, %v4089
        %v4184 = vpack.c.b16 %v4092, %v4090
        %v4185 = vpack.c.b16 %v4095, %v4093
        %v4186 = vpack.c.b16 %v4096, %v4094
        %v4187 = vpack.c.b16 %v4099, %v4097
        %v4188 = vpack.c.b16 %v4100, %v4098
        %v4189 = vpack.c.b16 %v4103, %v4101
        %v4190 = vpack.c.b16 %v4104, %v4102
        %v4191 = vpack.c.b16 %v4107, %v4105
        %v4192 = vpack.c.b16 %v4108, %v4106
        %v4193 = vpack.c.b16 %v4111, %v4109
        %v4194 = vpack.c.b16 %v4112, %v4110
        %v4195 = vpack.c.b16 %v4115, %v4113
        %v4196 = vpack.c.b16 %v4116, %v4114
        %v4197 = vpack.c.b16 %v4119, %v4117
        %v4198 = vpack.c.b16 %v4120, %v4118
        %v4199 = vpack.c.b16 %v4123, %v4121
        %v4200 = vpack.c.b16 %v4124, %v4122
        %v4201 = vpack.c.b16 %v4127, %v4125
        %v4202 = vpack.c.b16 %v4128, %v4126
        %v4203 = vpack.c.b16 %v4131, %v4129
        %v4204 = vpack.c.b16 %v4132, %v4130
        %v4205 = vpack.c.b16 %v4135, %v4133
        %v4206 = vpack.c.b16 %v4136, %v4134
        %v4207 = vpack.c.b16 %v4139, %v4137
        %v4208 = vpack.c.b16 %v4140, %v4138
        %v4209 = vpack.c.b16 %v4143, %v4141
        %v4210 = vpack.c.b16 %v4144, %v4142
        %v4211 = vpack.c.b16 %v4147, %v4145
        %v4212 = vpack.c.b16 %v4148, %v4146
        %4277 = vmatprep.subr.bf16.mxu0 %v4164
        %4278 = vmatpush1.bf16.msra.mxu0 %v4163
        %4279 = vmatprep.subr.bf16.mxu0 %v4162
        %4280 = vmatpush1.bf16.msra.mxu0 %v4161
        %4281 = vmatprep.subr.bf16.mxu0 %v4160
        %4282 = vmatpush1.bf16.msra.mxu0 %v4159
        %4283 = vmatprep.subr.bf16.mxu0 %v4158
        %4284 = vmatpush1.bf16.msra.mxu0 %v4157
        %4285 = vmatprep.subr.bf16.mxu0 %v4156
        %4286 = vmatpush1.bf16.msra.mxu0 %v4155
        %4287 = vmatprep.subr.bf16.mxu0 %v4154
        %4288 = vmatpush1.bf16.msra.mxu0 %v4153
        %4289 = vmatprep.subr.bf16.mxu0 %v4152
        %4290 = vmatpush1.bf16.msra.mxu0 %v4151
        %4291 = vmatprep.subr.bf16.mxu0 %v4150
        %4292 = vmatpush1.bf16.msra.mxu0 %v4149
        %4293 = vmatprep.subr.bf16.mxu0 %v4180
        %4294 = vmatpush2.bf16.msra.mxu0 %v4179
        %4295 = vmatprep.subr.bf16.mxu0 %v4178
        %4296 = vmatpush2.bf16.msra.mxu0 %v4177
        %4297 = vmatprep.subr.bf16.mxu0 %v4176
        %4298 = vmatpush2.bf16.msra.mxu0 %v4175
        %4299 = vmatprep.subr.bf16.mxu0 %v4174
        %4300 = vmatpush2.bf16.msra.mxu0 %v4173
        %4301 = vmatprep.subr.bf16.mxu0 %v4172
        %4302 = vmatpush2.bf16.msra.mxu0 %v4171
        %4303 = vmatprep.subr.bf16.mxu0 %v4170
        %4304 = vmatpush2.bf16.msra.mxu0 %v4169
        %4305 = vmatprep.subr.bf16.mxu0 %v4168
        %4306 = vmatpush2.bf16.msra.mxu0 %v4167
        %4307 = vmatprep.subr.bf16.mxu0 %v4166
        %4308 = vmatpush2.bf16.msra.mxu0 %v4165
        %4309 = vmatprep.mubr.bf16.mxu0 %v3878
        %4310 = vmatmul.mubr.bf16.gmra.mxu0 %v3877
        %v4311 = vpop.f32.mrf.mxu0
        %v4312 = vadd.f32 %v3950, %v4311
        %v4313 = vpop.f32.mrf.mxu0
        %v4314 = vadd.f32 %v3954, %v4313
        %v4315 = vpop.f32.mrf.mxu0
        %v4316 = vpop.f32.mrf.mxu0
        %4317 = vdwg.mxu0
        %4318 = vmatprep.subr.bf16.mxu0 %v4196
        %4319 = vmatpush1.bf16.msra.mxu0 %v4195
        %4320 = vmatprep.subr.bf16.mxu0 %v4194
        %4321 = vmatpush1.bf16.msra.mxu0 %v4193
        %4322 = vmatprep.subr.bf16.mxu0 %v4192
        %4323 = vmatpush1.bf16.msra.mxu0 %v4191
        %4324 = vmatprep.subr.bf16.mxu0 %v4190
        %4325 = vmatpush1.bf16.msra.mxu0 %v4189
        %4326 = vmatprep.subr.bf16.mxu0 %v4188
        %4327 = vmatpush1.bf16.msra.mxu0 %v4187
        %4328 = vmatprep.subr.bf16.mxu0 %v4186
        %4329 = vmatpush1.bf16.msra.mxu0 %v4185
        %4330 = vmatprep.subr.bf16.mxu0 %v4184
        %4331 = vmatpush1.bf16.msra.mxu0 %v4183
        %4332 = vmatprep.subr.bf16.mxu0 %v4182
        %4333 = vmatpush1.bf16.msra.mxu0 %v4181
        %4334 = vmatprep.subr.bf16.mxu0 %v4212
        %4335 = vmatpush2.bf16.msra.mxu0 %v4211
        %4336 = vmatprep.subr.bf16.mxu0 %v4210
        %4337 = vmatpush2.bf16.msra.mxu0 %v4209
        %4338 = vmatprep.subr.bf16.mxu0 %v4208
        %4339 = vmatpush2.bf16.msra.mxu0 %v4207
        %4340 = vmatprep.subr.bf16.mxu0 %v4206
        %4341 = vmatpush2.bf16.msra.mxu0 %v4205
        %4342 = vmatprep.subr.bf16.mxu0 %v4204
        %4343 = vmatpush2.bf16.msra.mxu0 %v4203
        %4344 = vmatprep.subr.bf16.mxu0 %v4202
        %4345 = vmatpush2.bf16.msra.mxu0 %v4201
        %4346 = vmatprep.subr.bf16.mxu0 %v4200
        %4347 = vmatpush2.bf16.msra.mxu0 %v4199
        %4348 = vmatprep.subr.bf16.mxu0 %v4198
        %4349 = vmatpush2.bf16.msra.mxu0 %v4197
        %4350 = vmatprep.mubr.bf16.mxu0 %v3880
        %4351 = vmatmul.mubr.bf16.gmra.mxu0 %v3879
        %v4352 = vpop.f32.mrf.mxu0
        %v4353 = vadd.f32 %v4312, %v4352
        %v4354 = vpop.f32.mrf.mxu0
        %v4355 = vadd.f32 %v4314, %v4354
        %v4356 = vpop.f32.mrf.mxu0
        %v4357 = vpop.f32.mrf.mxu0
        %4358 = vdwg.mxu0
        %v4359 = vxor.u32 %v4353, 2147483648
        %v4360 = vxor.u32 %v4355, 2147483648
        %v4361 = vmul.f32 %v4359, 1.442695
        %v4362 = vpow.pop %v4361
        %v4363 = vmul.f32 %v4360, 1.442695
        %v4364 = vpow.pop %v4363
        %v4365 = vadd.f32 %v4362, 1.0
        %v4366 = vadd.f32 %v4364, 1.0
        %v4367 = vrcp.pop %v4365
        %v4368 = vmul.f32 1.0, %v4367
        %v4369 = vrcp.pop %v4366
        %v4370 = vmul.f32 1.0, %v4369
        %v4371 = vmul.f32 %v4353, %v4368
        %v4372 = vmul.f32 %v4355, %v4370
        %v4373 = vpack.c.bf16 %v4371, %v4371
        %v4374 = vpack.c.bf16 %v4372, %v4372
        %v4375 = vld [vmem:[%s456] sm:$0xf]
        %v4376 = vld [vmem:[%s456 + $0x4] sm:$0xf]
        %v4377 = vld [vmem:[%s456 + $0x8] sm:$0xf]
        %v4378 = vld [vmem:[%s456 + $0xc] sm:$0xf]
        %v4379 = vld [vmem:[%s456 + $0x10] sm:$0xf]
        %v4380 = vld [vmem:[%s456 + $0x14] sm:$0xf]
        %v4381 = vld [vmem:[%s456 + $0x18] sm:$0xf]
        %v4382 = vld [vmem:[%s456 + $0x1c] sm:$0xf]
        %v4383 = vld [vmem:[%s456 + $0x20] sm:$0xf]
        %v4384 = vld [vmem:[%s456 + $0x24] sm:$0xf]
        %v4385 = vld [vmem:[%s456 + $0x28] sm:$0xf]
        %v4386 = vld [vmem:[%s456 + $0x2c] sm:$0xf]
        %v4387 = vld [vmem:[%s456 + $0x30] sm:$0xf]
        %v4388 = vld [vmem:[%s456 + $0x34] sm:$0xf]
        %v4389 = vld [vmem:[%s456 + $0x38] sm:$0xf]
        %v4390 = vld [vmem:[%s456 + $0x3c] sm:$0xf]
        %v4391 = vld [vmem:[%s456 + $0x40] sm:$0xf]
        %v4392 = vld [vmem:[%s456 + $0x44] sm:$0xf]
        %v4393 = vld [vmem:[%s456 + $0x48] sm:$0xf]
        %v4394 = vld [vmem:[%s456 + $0x4c] sm:$0xf]
        %v4395 = vld [vmem:[%s456 + $0x50] sm:$0xf]
        %v4396 = vld [vmem:[%s456 + $0x54] sm:$0xf]
        %v4397 = vld [vmem:[%s456 + $0x58] sm:$0xf]
        %v4398 = vld [vmem:[%s456 + $0x5c] sm:$0xf]
        %v4399 = vld [vmem:[%s456 + $0x60] sm:$0xf]
        %v4400 = vld [vmem:[%s456 + $0x64] sm:$0xf]
        %v4401 = vld [vmem:[%s456 + $0x68] sm:$0xf]
        %v4402 = vld [vmem:[%s456 + $0x6c] sm:$0xf]
        %v4403 = vld [vmem:[%s456 + $0x70] sm:$0xf]
        %v4404 = vld [vmem:[%s456 + $0x74] sm:$0xf]
        %v4405 = vld [vmem:[%s456 + $0x78] sm:$0xf]
        %v4406 = vld [vmem:[%s456 + $0x7c] sm:$0xf]
        %v4407 = vld [vmem:[%s461] sm:$0x1]
        %v4409 = vlaneseq
        %v4410 = vshrl.u32 %v4409, 7
        %v4411 = vsub.s32 0, %v4410
        %v4412 = vrot.slane %v4407, %v4411
        %v4446 = vunpack.c.l.b16 %v4375
        %v4447 = vunpack.c.l.b16 %v4376
        %v4448 = vunpack.c.l.b16 %v4377
        %v4449 = vunpack.c.l.b16 %v4378
        %v4450 = vunpack.c.l.b16 %v4379
        %v4451 = vunpack.c.l.b16 %v4380
        %v4452 = vunpack.c.l.b16 %v4381
        %v4453 = vunpack.c.l.b16 %v4382
        %v4454 = vunpack.c.l.b16 %v4383
        %v4455 = vunpack.c.l.b16 %v4384
        %v4456 = vunpack.c.l.b16 %v4385
        %v4457 = vunpack.c.l.b16 %v4386
        %v4458 = vunpack.c.l.b16 %v4387
        %v4459 = vunpack.c.l.b16 %v4388
        %v4460 = vunpack.c.l.b16 %v4389
        %v4461 = vunpack.c.l.b16 %v4390
        %v4462 = vunpack.c.l.b16 %v4391
        %v4463 = vunpack.c.l.b16 %v4392
        %v4464 = vunpack.c.l.b16 %v4393
        %v4465 = vunpack.c.l.b16 %v4394
        %v4466 = vunpack.c.l.b16 %v4395
        %v4467 = vunpack.c.l.b16 %v4396
        %v4468 = vunpack.c.l.b16 %v4397
        %v4469 = vunpack.c.l.b16 %v4398
        %v4470 = vunpack.c.l.b16 %v4399
        %v4471 = vunpack.c.l.b16 %v4400
        %v4472 = vunpack.c.l.b16 %v4401
        %v4473 = vunpack.c.l.b16 %v4402
        %v4474 = vunpack.c.l.b16 %v4403
        %v4475 = vunpack.c.l.b16 %v4404
        %v4476 = vunpack.c.l.b16 %v4405
        %v4477 = vunpack.c.l.b16 %v4406
        %v4478 = vpack.c.b16 %v4447, %v4446
        %v4479 = vpack.c.b16 %v4449, %v4448
        %v4480 = vpack.c.b16 %v4451, %v4450
        %v4481 = vpack.c.b16 %v4453, %v4452
        %v4482 = vpack.c.b16 %v4455, %v4454
        %v4483 = vpack.c.b16 %v4457, %v4456
        %v4484 = vpack.c.b16 %v4459, %v4458
        %v4485 = vpack.c.b16 %v4461, %v4460
        %v4486 = vpack.c.b16 %v4463, %v4462
        %v4487 = vpack.c.b16 %v4465, %v4464
        %v4488 = vpack.c.b16 %v4467, %v4466
        %v4489 = vpack.c.b16 %v4469, %v4468
        %v4490 = vpack.c.b16 %v4471, %v4470
        %v4491 = vpack.c.b16 %v4473, %v4472
        %v4492 = vpack.c.b16 %v4475, %v4474
        %v4493 = vpack.c.b16 %v4477, %v4476
        %4510 = vmatprep.subr.bf16.mxu0 0
        %4511 = vmatpush1.bf16.msra.mxu0 %v4485
        %4512 = vmatprep.subr.bf16.mxu0 0
        %4513 = vmatpush1.bf16.msra.mxu0 %v4484
        %4514 = vmatprep.subr.bf16.mxu0 0
        %4515 = vmatpush1.bf16.msra.mxu0 %v4483
        %4516 = vmatprep.subr.bf16.mxu0 0
        %4517 = vmatpush1.bf16.msra.mxu0 %v4482
        %4518 = vmatprep.subr.bf16.mxu0 0
        %4519 = vmatpush1.bf16.msra.mxu0 %v4481
        %4520 = vmatprep.subr.bf16.mxu0 0
        %4521 = vmatpush1.bf16.msra.mxu0 %v4480
        %4522 = vmatprep.subr.bf16.mxu0 0
        %4523 = vmatpush1.bf16.msra.mxu0 %v4479
        %4524 = vmatprep.subr.bf16.mxu0 0
        %4525 = vmatpush1.bf16.msra.mxu0 %v4478
        %4526 = vmatprep.subr.bf16.mxu0 0
        %4527 = vmatpush2.bf16.msra.mxu0 %v4493
        %4528 = vmatprep.subr.bf16.mxu0 0
        %4529 = vmatpush2.bf16.msra.mxu0 %v4492
        %4530 = vmatprep.subr.bf16.mxu0 0
        %4531 = vmatpush2.bf16.msra.mxu0 %v4491
        %4532 = vmatprep.subr.bf16.mxu0 0
        %4533 = vmatpush2.bf16.msra.mxu0 %v4490
        %4534 = vmatprep.subr.bf16.mxu0 0
        %4535 = vmatpush2.bf16.msra.mxu0 %v4489
        %4536 = vmatprep.subr.bf16.mxu0 0
        %4537 = vmatpush2.bf16.msra.mxu0 %v4488
        %4538 = vmatprep.subr.bf16.mxu0 0
        %4539 = vmatpush2.bf16.msra.mxu0 %v4487
        %4540 = vmatprep.subr.bf16.mxu0 0
        %4541 = vmatpush2.bf16.msra.mxu0 %v4486
        %4542 = vmatprep.mubr.bf16.mxu0 %v4374
        %4543 = vmatmul.mubr.bf16.gmra.mxu0 %v4373
        %v4544 = vpop.f32.mrf.mxu0
        %v4545 = vadd.f32 %v4412, %v4544
        %v4546 = vpop.f32.mrf.mxu0
        %v4547 = vpop.f32.mrf.mxu0
        %v4548 = vpop.f32.mrf.mxu0
        %4549 = vdwg.mxu0
        %vm4550 = vcmask 9216
        %4551 = vst.msk [vmem:[%s467] sm:$0x3] %vm4550, %v4545
        %s4552 = scalar_lea.vmem %s364, 3584 [#allocation2]
        %v4553 = vld [vmem:[%s4552] sm:$0xff]
        %v4554 = vld [vmem:[%s4552 + $0x8] sm:$0xff]
        %v4555 = vld [vmem:[%s4552 + $0x10] sm:$0xff]
        %v4556 = vld [vmem:[%s4552 + $0x18] sm:$0xff]
        %v4557 = vld [vmem:[%s4552 + $0x20] sm:$0xff]
        %v4558 = vld [vmem:[%s4552 + $0x28] sm:$0xff]
        %v4559 = vld [vmem:[%s4552 + $0x30] sm:$0xff]
        %v4560 = vld [vmem:[%s4552 + $0x38] sm:$0xff]
        %v4561 = vld [vmem:[%s4552 + $0x40] sm:$0xff]
        %v4562 = vld [vmem:[%s4552 + $0x48] sm:$0xff]
        %v4563 = vld [vmem:[%s4552 + $0x50] sm:$0xff]
        %v4564 = vld [vmem:[%s4552 + $0x58] sm:$0xff]
        %v4565 = vld [vmem:[%s4552 + $0x60] sm:$0xff]
        %v4566 = vld [vmem:[%s4552 + $0x68] sm:$0xff]
        %v4567 = vld [vmem:[%s4552 + $0x70] sm:$0xff]
        %v4568 = vld [vmem:[%s4552 + $0x78] sm:$0xff]
        %v4569 = vld [vmem:[%s4552 + $0x80] sm:$0xff]
        %v4570 = vld [vmem:[%s4552 + $0x88] sm:$0xff]
        %v4571 = vld [vmem:[%s4552 + $0x90] sm:$0xff]
        %v4572 = vld [vmem:[%s4552 + $0x98] sm:$0xff]
        %v4573 = vld [vmem:[%s4552 + $0xa0] sm:$0xff]
        %v4574 = vld [vmem:[%s4552 + $0xa8] sm:$0xff]
        %v4575 = vld [vmem:[%s4552 + $0xb0] sm:$0xff]
        %v4576 = vld [vmem:[%s4552 + $0xb8] sm:$0xff]
        %v4577 = vld [vmem:[%s4552 + $0xc0] sm:$0xff]
        %v4578 = vld [vmem:[%s4552 + $0xc8] sm:$0xff]
        %v4579 = vld [vmem:[%s4552 + $0xd0] sm:$0xff]
        %v4580 = vld [vmem:[%s4552 + $0xd8] sm:$0xff]
        %v4581 = vld [vmem:[%s4552 + $0xe0] sm:$0xff]
        %v4582 = vld [vmem:[%s4552 + $0xe8] sm:$0xff]
        %v4583 = vld [vmem:[%s4552 + $0xf0] sm:$0xff]
        %v4584 = vld [vmem:[%s4552 + $0xf8] sm:$0xff]
        %v4585 = vld [vmem:[%s4552 + $0x100] sm:$0xff]
        %v4586 = vld [vmem:[%s4552 + $0x108] sm:$0xff]
        %v4587 = vld [vmem:[%s4552 + $0x110] sm:$0xff]
        %v4588 = vld [vmem:[%s4552 + $0x118] sm:$0xff]
        %v4589 = vld [vmem:[%s4552 + $0x120] sm:$0xff]
        %v4590 = vld [vmem:[%s4552 + $0x128] sm:$0xff]
        %v4591 = vld [vmem:[%s4552 + $0x130] sm:$0xff]
        %v4592 = vld [vmem:[%s4552 + $0x138] sm:$0xff]
        %v4593 = vld [vmem:[%s4552 + $0x140] sm:$0xff]
        %v4594 = vld [vmem:[%s4552 + $0x148] sm:$0xff]
        %v4595 = vld [vmem:[%s4552 + $0x150] sm:$0xff]
        %v4596 = vld [vmem:[%s4552 + $0x158] sm:$0xff]
        %v4597 = vld [vmem:[%s4552 + $0x160] sm:$0xff]
        %v4598 = vld [vmem:[%s4552 + $0x168] sm:$0xff]
        %v4599 = vld [vmem:[%s4552 + $0x170] sm:$0xff]
        %v4600 = vld [vmem:[%s4552 + $0x178] sm:$0xff]
        %v4601 = vld [vmem:[%s4552 + $0x180] sm:$0xff]
        %v4602 = vld [vmem:[%s4552 + $0x188] sm:$0xff]
        %v4603 = vld [vmem:[%s4552 + $0x190] sm:$0xff]
        %v4604 = vld [vmem:[%s4552 + $0x198] sm:$0xff]
        %v4605 = vld [vmem:[%s4552 + $0x1a0] sm:$0xff]
        %v4606 = vld [vmem:[%s4552 + $0x1a8] sm:$0xff]
        %v4607 = vld [vmem:[%s4552 + $0x1b0] sm:$0xff]
        %v4608 = vld [vmem:[%s4552 + $0x1b8] sm:$0xff]
        %v4609 = vld [vmem:[%s4552 + $0x1c0] sm:$0xff]
        %v4610 = vld [vmem:[%s4552 + $0x1c8] sm:$0xff]
        %v4611 = vld [vmem:[%s4552 + $0x1d0] sm:$0xff]
        %v4612 = vld [vmem:[%s4552 + $0x1d8] sm:$0xff]
        %v4613 = vld [vmem:[%s4552 + $0x1e0] sm:$0xff]
        %v4614 = vld [vmem:[%s4552 + $0x1e8] sm:$0xff]
        %v4615 = vld [vmem:[%s4552 + $0x1f0] sm:$0xff]
        %v4616 = vld [vmem:[%s4552 + $0x1f8] sm:$0xff]
        %v4617 = vld [vmem:[%s4552 + $0x200] sm:$0xff]
        %v4618 = vld [vmem:[%s4552 + $0x208] sm:$0xff]
        %v4619 = vld [vmem:[%s4552 + $0x210] sm:$0xff]
        %v4620 = vld [vmem:[%s4552 + $0x218] sm:$0xff]
        %v4621 = vld [vmem:[%s4552 + $0x220] sm:$0xff]
        %v4622 = vld [vmem:[%s4552 + $0x228] sm:$0xff]
        %v4623 = vld [vmem:[%s4552 + $0x230] sm:$0xff]
        %v4624 = vld [vmem:[%s4552 + $0x238] sm:$0xff]
        %v4625 = vld [vmem:[%s4552 + $0x240] sm:$0xff]
        %v4626 = vld [vmem:[%s4552 + $0x248] sm:$0xff]
        %v4627 = vld [vmem:[%s4552 + $0x250] sm:$0xff]
        %v4628 = vld [vmem:[%s4552 + $0x258] sm:$0xff]
        %v4629 = vld [vmem:[%s4552 + $0x260] sm:$0xff]
        %v4630 = vld [vmem:[%s4552 + $0x268] sm:$0xff]
        %v4631 = vld [vmem:[%s4552 + $0x270] sm:$0xff]
        %v4632 = vld [vmem:[%s4552 + $0x278] sm:$0xff]
        %v4633 = vld [vmem:[%s4552 + $0x280] sm:$0xff]
        %v4634 = vld [vmem:[%s4552 + $0x288] sm:$0xff]
        %v4635 = vld [vmem:[%s4552 + $0x290] sm:$0xff]
        %v4636 = vld [vmem:[%s4552 + $0x298] sm:$0xff]
        %v4637 = vld [vmem:[%s4552 + $0x2a0] sm:$0xff]
        %v4638 = vld [vmem:[%s4552 + $0x2a8] sm:$0xff]
        %v4639 = vld [vmem:[%s4552 + $0x2b0] sm:$0xff]
        %v4640 = vld [vmem:[%s4552 + $0x2b8] sm:$0xff]
        %v4641 = vld [vmem:[%s4552 + $0x2c0] sm:$0xff]
        %v4642 = vld [vmem:[%s4552 + $0x2c8] sm:$0xff]
        %v4643 = vld [vmem:[%s4552 + $0x2d0] sm:$0xff]
        %v4644 = vld [vmem:[%s4552 + $0x2d8] sm:$0xff]
        %v4645 = vld [vmem:[%s4552 + $0x2e0] sm:$0xff]
        %v4646 = vld [vmem:[%s4552 + $0x2e8] sm:$0xff]
        %v4647 = vld [vmem:[%s4552 + $0x2f0] sm:$0xff]
        %v4648 = vld [vmem:[%s4552 + $0x2f8] sm:$0xff]
        %v4649 = vld [vmem:[%s4552 + $0x300] sm:$0xff]
        %v4650 = vld [vmem:[%s4552 + $0x308] sm:$0xff]
        %v4651 = vld [vmem:[%s4552 + $0x310] sm:$0xff]
        %v4652 = vld [vmem:[%s4552 + $0x318] sm:$0xff]
        %v4653 = vld [vmem:[%s4552 + $0x320] sm:$0xff]
        %v4654 = vld [vmem:[%s4552 + $0x328] sm:$0xff]
        %v4655 = vld [vmem:[%s4552 + $0x330] sm:$0xff]
        %v4656 = vld [vmem:[%s4552 + $0x338] sm:$0xff]
        %v4657 = vld [vmem:[%s4552 + $0x340] sm:$0xff]
        %v4658 = vld [vmem:[%s4552 + $0x348] sm:$0xff]
        %v4659 = vld [vmem:[%s4552 + $0x350] sm:$0xff]
        %v4660 = vld [vmem:[%s4552 + $0x358] sm:$0xff]
        %v4661 = vld [vmem:[%s4552 + $0x360] sm:$0xff]
        %v4662 = vld [vmem:[%s4552 + $0x368] sm:$0xff]
        %v4663 = vld [vmem:[%s4552 + $0x370] sm:$0xff]
        %v4664 = vld [vmem:[%s4552 + $0x378] sm:$0xff]
        %v4665 = vld [vmem:[%s4552 + $0x380] sm:$0xff]
        %v4666 = vld [vmem:[%s4552 + $0x388] sm:$0xff]
        %v4667 = vld [vmem:[%s4552 + $0x390] sm:$0xff]
        %v4668 = vld [vmem:[%s4552 + $0x398] sm:$0xff]
        %v4669 = vld [vmem:[%s4552 + $0x3a0] sm:$0xff]
        %v4670 = vld [vmem:[%s4552 + $0x3a8] sm:$0xff]
        %v4671 = vld [vmem:[%s4552 + $0x3b0] sm:$0xff]
        %v4672 = vld [vmem:[%s4552 + $0x3b8] sm:$0xff]
        %v4673 = vld [vmem:[%s4552 + $0x3c0] sm:$0xff]
        %v4674 = vld [vmem:[%s4552 + $0x3c8] sm:$0xff]
        %v4675 = vld [vmem:[%s4552 + $0x3d0] sm:$0xff]
        %v4676 = vld [vmem:[%s4552 + $0x3d8] sm:$0xff]
        %v4677 = vld [vmem:[%s4552 + $0x3e0] sm:$0xff]
        %v4678 = vld [vmem:[%s4552 + $0x3e8] sm:$0xff]
        %v4679 = vld [vmem:[%s4552 + $0x3f0] sm:$0xff]
        %v4680 = vld [vmem:[%s4552 + $0x3f8] sm:$0xff]
        %v4681 = vld [vmem:[%s4552 + $0x400] sm:$0xff]
        %v4682 = vld [vmem:[%s4552 + $0x408] sm:$0xff]
        %v4683 = vld [vmem:[%s4552 + $0x410] sm:$0xff]
        %v4684 = vld [vmem:[%s4552 + $0x418] sm:$0xff]
        %v4685 = vld [vmem:[%s4552 + $0x420] sm:$0xff]
        %v4686 = vld [vmem:[%s4552 + $0x428] sm:$0xff]
        %v4687 = vld [vmem:[%s4552 + $0x430] sm:$0xff]
        %v4688 = vld [vmem:[%s4552 + $0x438] sm:$0xff]
        %v4689 = vld [vmem:[%s4552 + $0x440] sm:$0xff]
        %v4690 = vld [vmem:[%s4552 + $0x448] sm:$0xff]
        %v4691 = vld [vmem:[%s4552 + $0x450] sm:$0xff]
        %v4692 = vld [vmem:[%s4552 + $0x458] sm:$0xff]
        %v4693 = vld [vmem:[%s4552 + $0x460] sm:$0xff]
        %v4694 = vld [vmem:[%s4552 + $0x468] sm:$0xff]
        %v4695 = vld [vmem:[%s4552 + $0x470] sm:$0xff]
        %v4696 = vld [vmem:[%s4552 + $0x478] sm:$0xff]
        %v4697 = vld [vmem:[%s4552 + $0x480] sm:$0xff]
        %v4698 = vld [vmem:[%s4552 + $0x488] sm:$0xff]
        %v4699 = vld [vmem:[%s4552 + $0x490] sm:$0xff]
        %v4700 = vld [vmem:[%s4552 + $0x498] sm:$0xff]
        %v4701 = vld [vmem:[%s4552 + $0x4a0] sm:$0xff]
        %v4702 = vld [vmem:[%s4552 + $0x4a8] sm:$0xff]
        %v4703 = vld [vmem:[%s4552 + $0x4b0] sm:$0xff]
        %v4704 = vld [vmem:[%s4552 + $0x4b8] sm:$0xff]
        %v4705 = vld [vmem:[%s4552 + $0x4c0] sm:$0xff]
        %v4706 = vld [vmem:[%s4552 + $0x4c8] sm:$0xff]
        %v4707 = vld [vmem:[%s4552 + $0x4d0] sm:$0xff]
        %v4708 = vld [vmem:[%s4552 + $0x4d8] sm:$0xff]
        %v4709 = vld [vmem:[%s4552 + $0x4e0] sm:$0xff]
        %v4710 = vld [vmem:[%s4552 + $0x4e8] sm:$0xff]
        %v4711 = vld [vmem:[%s4552 + $0x4f0] sm:$0xff]
        %v4712 = vld [vmem:[%s4552 + $0x4f8] sm:$0xff]
        %v4713 = vld [vmem:[%s4552 + $0x500] sm:$0xff]
        %v4714 = vld [vmem:[%s4552 + $0x508] sm:$0xff]
        %v4715 = vld [vmem:[%s4552 + $0x510] sm:$0xff]
        %v4716 = vld [vmem:[%s4552 + $0x518] sm:$0xff]
        %v4717 = vld [vmem:[%s4552 + $0x520] sm:$0xff]
        %v4718 = vld [vmem:[%s4552 + $0x528] sm:$0xff]
        %v4719 = vld [vmem:[%s4552 + $0x530] sm:$0xff]
        %v4720 = vld [vmem:[%s4552 + $0x538] sm:$0xff]
        %v4721 = vld [vmem:[%s4552 + $0x540] sm:$0xff]
        %v4722 = vld [vmem:[%s4552 + $0x548] sm:$0xff]
        %v4723 = vld [vmem:[%s4552 + $0x550] sm:$0xff]
        %v4724 = vld [vmem:[%s4552 + $0x558] sm:$0xff]
        %v4725 = vld [vmem:[%s4552 + $0x560] sm:$0xff]
        %v4726 = vld [vmem:[%s4552 + $0x568] sm:$0xff]
        %v4727 = vld [vmem:[%s4552 + $0x570] sm:$0xff]
        %v4728 = vld [vmem:[%s4552 + $0x578] sm:$0xff]
        %v4729 = vld [vmem:[%s4552 + $0x580] sm:$0xff]
        %v4730 = vld [vmem:[%s4552 + $0x588] sm:$0xff]
        %v4731 = vld [vmem:[%s4552 + $0x590] sm:$0xff]
        %v4732 = vld [vmem:[%s4552 + $0x598] sm:$0xff]
        %v4733 = vld [vmem:[%s4552 + $0x5a0] sm:$0xff]
        %v4734 = vld [vmem:[%s4552 + $0x5a8] sm:$0xff]
        %v4735 = vld [vmem:[%s4552 + $0x5b0] sm:$0xff]
        %v4736 = vld [vmem:[%s4552 + $0x5b8] sm:$0xff]
        %v4737 = vld [vmem:[%s4552 + $0x5c0] sm:$0xff]
        %v4738 = vld [vmem:[%s4552 + $0x5c8] sm:$0xff]
        %v4739 = vld [vmem:[%s4552 + $0x5d0] sm:$0xff]
        %v4740 = vld [vmem:[%s4552 + $0x5d8] sm:$0xff]
        %v4741 = vld [vmem:[%s4552 + $0x5e0] sm:$0xff]
        %v4742 = vld [vmem:[%s4552 + $0x5e8] sm:$0xff]
        %v4743 = vld [vmem:[%s4552 + $0x5f0] sm:$0xff]
        %v4744 = vld [vmem:[%s4552 + $0x5f8] sm:$0xff]
        %v4745 = vld [vmem:[%s4552 + $0x600] sm:$0xff]
        %v4746 = vld [vmem:[%s4552 + $0x608] sm:$0xff]
        %v4747 = vld [vmem:[%s4552 + $0x610] sm:$0xff]
        %v4748 = vld [vmem:[%s4552 + $0x618] sm:$0xff]
        %v4749 = vld [vmem:[%s4552 + $0x620] sm:$0xff]
        %v4750 = vld [vmem:[%s4552 + $0x628] sm:$0xff]
        %v4751 = vld [vmem:[%s4552 + $0x630] sm:$0xff]
        %v4752 = vld [vmem:[%s4552 + $0x638] sm:$0xff]
        %v4753 = vld [vmem:[%s4552 + $0x640] sm:$0xff]
        %v4754 = vld [vmem:[%s4552 + $0x648] sm:$0xff]
        %v4755 = vld [vmem:[%s4552 + $0x650] sm:$0xff]
        %v4756 = vld [vmem:[%s4552 + $0x658] sm:$0xff]
        %v4757 = vld [vmem:[%s4552 + $0x660] sm:$0xff]
        %v4758 = vld [vmem:[%s4552 + $0x668] sm:$0xff]
        %v4759 = vld [vmem:[%s4552 + $0x670] sm:$0xff]
        %v4760 = vld [vmem:[%s4552 + $0x678] sm:$0xff]
        %v4761 = vld [vmem:[%s4552 + $0x680] sm:$0xff]
        %v4762 = vld [vmem:[%s4552 + $0x688] sm:$0xff]
        %v4763 = vld [vmem:[%s4552 + $0x690] sm:$0xff]
        %v4764 = vld [vmem:[%s4552 + $0x698] sm:$0xff]
        %v4765 = vld [vmem:[%s4552 + $0x6a0] sm:$0xff]
        %v4766 = vld [vmem:[%s4552 + $0x6a8] sm:$0xff]
        %v4767 = vld [vmem:[%s4552 + $0x6b0] sm:$0xff]
        %v4768 = vld [vmem:[%s4552 + $0x6b8] sm:$0xff]
        %v4769 = vld [vmem:[%s4552 + $0x6c0] sm:$0xff]
        %v4770 = vld [vmem:[%s4552 + $0x6c8] sm:$0xff]
        %v4771 = vld [vmem:[%s4552 + $0x6d0] sm:$0xff]
        %v4772 = vld [vmem:[%s4552 + $0x6d8] sm:$0xff]
        %v4773 = vld [vmem:[%s4552 + $0x6e0] sm:$0xff]
        %v4774 = vld [vmem:[%s4552 + $0x6e8] sm:$0xff]
        %v4775 = vld [vmem:[%s4552 + $0x6f0] sm:$0xff]
        %v4776 = vld [vmem:[%s4552 + $0x6f8] sm:$0xff]
        %v4777 = vld [vmem:[%s4552 + $0x700] sm:$0xff]
        %v4778 = vld [vmem:[%s4552 + $0x708] sm:$0xff]
        %v4779 = vld [vmem:[%s4552 + $0x710] sm:$0xff]
        %v4780 = vld [vmem:[%s4552 + $0x718] sm:$0xff]
        %v4781 = vld [vmem:[%s4552 + $0x720] sm:$0xff]
        %v4782 = vld [vmem:[%s4552 + $0x728] sm:$0xff]
        %v4783 = vld [vmem:[%s4552 + $0x730] sm:$0xff]
        %v4784 = vld [vmem:[%s4552 + $0x738] sm:$0xff]
        %v4785 = vld [vmem:[%s4552 + $0x740] sm:$0xff]
        %v4786 = vld [vmem:[%s4552 + $0x748] sm:$0xff]
        %v4787 = vld [vmem:[%s4552 + $0x750] sm:$0xff]
        %v4788 = vld [vmem:[%s4552 + $0x758] sm:$0xff]
        %v4789 = vld [vmem:[%s4552 + $0x760] sm:$0xff]
        %v4790 = vld [vmem:[%s4552 + $0x768] sm:$0xff]
        %v4791 = vld [vmem:[%s4552 + $0x770] sm:$0xff]
        %v4792 = vld [vmem:[%s4552 + $0x778] sm:$0xff]
        %v4793 = vld [vmem:[%s4552 + $0x780] sm:$0xff]
        %v4794 = vld [vmem:[%s4552 + $0x788] sm:$0xff]
        %v4795 = vld [vmem:[%s4552 + $0x790] sm:$0xff]
        %v4796 = vld [vmem:[%s4552 + $0x798] sm:$0xff]
        %v4797 = vld [vmem:[%s4552 + $0x7a0] sm:$0xff]
        %v4798 = vld [vmem:[%s4552 + $0x7a8] sm:$0xff]
        %v4799 = vld [vmem:[%s4552 + $0x7b0] sm:$0xff]
        %v4800 = vld [vmem:[%s4552 + $0x7b8] sm:$0xff]
        %v4801 = vld [vmem:[%s4552 + $0x7c0] sm:$0xff]
        %v4802 = vld [vmem:[%s4552 + $0x7c8] sm:$0xff]
        %v4803 = vld [vmem:[%s4552 + $0x7d0] sm:$0xff]
        %v4804 = vld [vmem:[%s4552 + $0x7d8] sm:$0xff]
        %v4805 = vld [vmem:[%s4552 + $0x7e0] sm:$0xff]
        %v4806 = vld [vmem:[%s4552 + $0x7e8] sm:$0xff]
        %v4807 = vld [vmem:[%s4552 + $0x7f0] sm:$0xff]
        %v4808 = vld [vmem:[%s4552 + $0x7f8] sm:$0xff]
        %v4809 = vld [vmem:[%s4552 + $0x800] sm:$0xff]
        %v4810 = vld [vmem:[%s4552 + $0x808] sm:$0xff]
        %v4811 = vld [vmem:[%s4552 + $0x810] sm:$0xff]
        %v4812 = vld [vmem:[%s4552 + $0x818] sm:$0xff]
        %v4813 = vld [vmem:[%s4552 + $0x820] sm:$0xff]
        %v4814 = vld [vmem:[%s4552 + $0x828] sm:$0xff]
        %v4815 = vld [vmem:[%s4552 + $0x830] sm:$0xff]
        %v4816 = vld [vmem:[%s4552 + $0x838] sm:$0xff]
        %v4817 = vld [vmem:[%s4552 + $0x840] sm:$0xff]
        %v4818 = vld [vmem:[%s4552 + $0x848] sm:$0xff]
        %v4819 = vld [vmem:[%s4552 + $0x850] sm:$0xff]
        %v4820 = vld [vmem:[%s4552 + $0x858] sm:$0xff]
        %v4821 = vld [vmem:[%s4552 + $0x860] sm:$0xff]
        %v4822 = vld [vmem:[%s4552 + $0x868] sm:$0xff]
        %v4823 = vld [vmem:[%s4552 + $0x870] sm:$0xff]
        %v4824 = vld [vmem:[%s4552 + $0x878] sm:$0xff]
        %v4825 = vld [vmem:[%s4552 + $0x880] sm:$0xff]
        %v4826 = vld [vmem:[%s4552 + $0x888] sm:$0xff]
        %v4827 = vld [vmem:[%s4552 + $0x890] sm:$0xff]
        %v4828 = vld [vmem:[%s4552 + $0x898] sm:$0xff]
        %v4829 = vld [vmem:[%s4552 + $0x8a0] sm:$0xff]
        %v4830 = vld [vmem:[%s4552 + $0x8a8] sm:$0xff]
        %v4831 = vld [vmem:[%s4552 + $0x8b0] sm:$0xff]
        %v4832 = vld [vmem:[%s4552 + $0x8b8] sm:$0xff]
        %v4833 = vld [vmem:[%s4552 + $0x8c0] sm:$0xff]
        %v4834 = vld [vmem:[%s4552 + $0x8c8] sm:$0xff]
        %v4835 = vld [vmem:[%s4552 + $0x8d0] sm:$0xff]
        %v4836 = vld [vmem:[%s4552 + $0x8d8] sm:$0xff]
        %v4837 = vld [vmem:[%s4552 + $0x8e0] sm:$0xff]
        %v4838 = vld [vmem:[%s4552 + $0x8e8] sm:$0xff]
        %v4839 = vld [vmem:[%s4552 + $0x8f0] sm:$0xff]
        %v4840 = vld [vmem:[%s4552 + $0x8f8] sm:$0xff]
        %v4841 = vld [vmem:[%s4552 + $0x900] sm:$0xff]
        %v4842 = vld [vmem:[%s4552 + $0x908] sm:$0xff]
        %v4843 = vld [vmem:[%s4552 + $0x910] sm:$0xff]
        %v4844 = vld [vmem:[%s4552 + $0x918] sm:$0xff]
        %v4845 = vld [vmem:[%s4552 + $0x920] sm:$0xff]
        %v4846 = vld [vmem:[%s4552 + $0x928] sm:$0xff]
        %v4847 = vld [vmem:[%s4552 + $0x930] sm:$0xff]
        %v4848 = vld [vmem:[%s4552 + $0x938] sm:$0xff]
        %v4849 = vld [vmem:[%s4552 + $0x940] sm:$0xff]
        %v4850 = vld [vmem:[%s4552 + $0x948] sm:$0xff]
        %v4851 = vld [vmem:[%s4552 + $0x950] sm:$0xff]
        %v4852 = vld [vmem:[%s4552 + $0x958] sm:$0xff]
        %v4853 = vld [vmem:[%s4552 + $0x960] sm:$0xff]
        %v4854 = vld [vmem:[%s4552 + $0x968] sm:$0xff]
        %v4855 = vld [vmem:[%s4552 + $0x970] sm:$0xff]
        %v4856 = vld [vmem:[%s4552 + $0x978] sm:$0xff]
        %v4857 = vld [vmem:[%s4552 + $0x980] sm:$0xff]
        %v4858 = vld [vmem:[%s4552 + $0x988] sm:$0xff]
        %v4859 = vld [vmem:[%s4552 + $0x990] sm:$0xff]
        %v4860 = vld [vmem:[%s4552 + $0x998] sm:$0xff]
        %v4861 = vld [vmem:[%s4552 + $0x9a0] sm:$0xff]
        %v4862 = vld [vmem:[%s4552 + $0x9a8] sm:$0xff]
        %v4863 = vld [vmem:[%s4552 + $0x9b0] sm:$0xff]
        %v4864 = vld [vmem:[%s4552 + $0x9b8] sm:$0xff]
        %v4865 = vld [vmem:[%s4552 + $0x9c0] sm:$0xff]
        %v4866 = vld [vmem:[%s4552 + $0x9c8] sm:$0xff]
        %v4867 = vld [vmem:[%s4552 + $0x9d0] sm:$0xff]
        %v4868 = vld [vmem:[%s4552 + $0x9d8] sm:$0xff]
        %v4869 = vld [vmem:[%s4552 + $0x9e0] sm:$0xff]
        %v4870 = vld [vmem:[%s4552 + $0x9e8] sm:$0xff]
        %v4871 = vld [vmem:[%s4552 + $0x9f0] sm:$0xff]
        %v4872 = vld [vmem:[%s4552 + $0x9f8] sm:$0xff]
        %v4873 = vld [vmem:[%s4552 + $0xa00] sm:$0xff]
        %v4874 = vld [vmem:[%s4552 + $0xa08] sm:$0xff]
        %v4875 = vld [vmem:[%s4552 + $0xa10] sm:$0xff]
        %v4876 = vld [vmem:[%s4552 + $0xa18] sm:$0xff]
        %v4877 = vld [vmem:[%s4552 + $0xa20] sm:$0xff]
        %v4878 = vld [vmem:[%s4552 + $0xa28] sm:$0xff]
        %v4879 = vld [vmem:[%s4552 + $0xa30] sm:$0xff]
        %v4880 = vld [vmem:[%s4552 + $0xa38] sm:$0xff]
        %v4881 = vld [vmem:[%s4552 + $0xa40] sm:$0xff]
        %v4882 = vld [vmem:[%s4552 + $0xa48] sm:$0xff]
        %v4883 = vld [vmem:[%s4552 + $0xa50] sm:$0xff]
        %v4884 = vld [vmem:[%s4552 + $0xa58] sm:$0xff]
        %v4885 = vld [vmem:[%s4552 + $0xa60] sm:$0xff]
        %v4886 = vld [vmem:[%s4552 + $0xa68] sm:$0xff]
        %v4887 = vld [vmem:[%s4552 + $0xa70] sm:$0xff]
        %v4888 = vld [vmem:[%s4552 + $0xa78] sm:$0xff]
        %v4889 = vld [vmem:[%s4552 + $0xa80] sm:$0xff]
        %v4890 = vld [vmem:[%s4552 + $0xa88] sm:$0xff]
        %v4891 = vld [vmem:[%s4552 + $0xa90] sm:$0xff]
        %v4892 = vld [vmem:[%s4552 + $0xa98] sm:$0xff]
        %v4893 = vld [vmem:[%s4552 + $0xaa0] sm:$0xff]
        %v4894 = vld [vmem:[%s4552 + $0xaa8] sm:$0xff]
        %v4895 = vld [vmem:[%s4552 + $0xab0] sm:$0xff]
        %v4896 = vld [vmem:[%s4552 + $0xab8] sm:$0xff]
        %v4897 = vld [vmem:[%s4552 + $0xac0] sm:$0xff]
        %v4898 = vld [vmem:[%s4552 + $0xac8] sm:$0xff]
        %v4899 = vld [vmem:[%s4552 + $0xad0] sm:$0xff]
        %v4900 = vld [vmem:[%s4552 + $0xad8] sm:$0xff]
        %v4901 = vld [vmem:[%s4552 + $0xae0] sm:$0xff]
        %v4902 = vld [vmem:[%s4552 + $0xae8] sm:$0xff]
        %v4903 = vld [vmem:[%s4552 + $0xaf0] sm:$0xff]
        %v4904 = vld [vmem:[%s4552 + $0xaf8] sm:$0xff]
        %v4905 = vld [vmem:[%s4552 + $0xb00] sm:$0xff]
        %v4906 = vld [vmem:[%s4552 + $0xb08] sm:$0xff]
        %v4907 = vld [vmem:[%s4552 + $0xb10] sm:$0xff]
        %v4908 = vld [vmem:[%s4552 + $0xb18] sm:$0xff]
        %v4909 = vld [vmem:[%s4552 + $0xb20] sm:$0xff]
        %v4910 = vld [vmem:[%s4552 + $0xb28] sm:$0xff]
        %v4911 = vld [vmem:[%s4552 + $0xb30] sm:$0xff]
        %v4912 = vld [vmem:[%s4552 + $0xb38] sm:$0xff]
        %v4913 = vld [vmem:[%s4552 + $0xb40] sm:$0xff]
        %v4914 = vld [vmem:[%s4552 + $0xb48] sm:$0xff]
        %v4915 = vld [vmem:[%s4552 + $0xb50] sm:$0xff]
        %v4916 = vld [vmem:[%s4552 + $0xb58] sm:$0xff]
        %v4917 = vld [vmem:[%s4552 + $0xb60] sm:$0xff]
        %v4918 = vld [vmem:[%s4552 + $0xb68] sm:$0xff]
        %v4919 = vld [vmem:[%s4552 + $0xb70] sm:$0xff]
        %v4920 = vld [vmem:[%s4552 + $0xb78] sm:$0xff]
        %v4921 = vld [vmem:[%s4552 + $0xb80] sm:$0xff]
        %v4922 = vld [vmem:[%s4552 + $0xb88] sm:$0xff]
        %v4923 = vld [vmem:[%s4552 + $0xb90] sm:$0xff]
        %v4924 = vld [vmem:[%s4552 + $0xb98] sm:$0xff]
        %v4925 = vld [vmem:[%s4552 + $0xba0] sm:$0xff]
        %v4926 = vld [vmem:[%s4552 + $0xba8] sm:$0xff]
        %v4927 = vld [vmem:[%s4552 + $0xbb0] sm:$0xff]
        %v4928 = vld [vmem:[%s4552 + $0xbb8] sm:$0xff]
        %v4929 = vld [vmem:[%s4552 + $0xbc0] sm:$0xff]
        %v4930 = vld [vmem:[%s4552 + $0xbc8] sm:$0xff]
        %v4931 = vld [vmem:[%s4552 + $0xbd0] sm:$0xff]
        %v4932 = vld [vmem:[%s4552 + $0xbd8] sm:$0xff]
        %v4933 = vld [vmem:[%s4552 + $0xbe0] sm:$0xff]
        %v4934 = vld [vmem:[%s4552 + $0xbe8] sm:$0xff]
        %v4935 = vld [vmem:[%s4552 + $0xbf0] sm:$0xff]
        %v4936 = vld [vmem:[%s4552 + $0xbf8] sm:$0xff]
        %v4937 = vld [vmem:[%s4552 + $0xc00] sm:$0xff]
        %v4938 = vld [vmem:[%s4552 + $0xc08] sm:$0xff]
        %v4939 = vld [vmem:[%s4552 + $0xc10] sm:$0xff]
        %v4940 = vld [vmem:[%s4552 + $0xc18] sm:$0xff]
        %v4941 = vld [vmem:[%s4552 + $0xc20] sm:$0xff]
        %v4942 = vld [vmem:[%s4552 + $0xc28] sm:$0xff]
        %v4943 = vld [vmem:[%s4552 + $0xc30] sm:$0xff]
        %v4944 = vld [vmem:[%s4552 + $0xc38] sm:$0xff]
        %v4945 = vld [vmem:[%s4552 + $0xc40] sm:$0xff]
        %v4946 = vld [vmem:[%s4552 + $0xc48] sm:$0xff]
        %v4947 = vld [vmem:[%s4552 + $0xc50] sm:$0xff]
        %v4948 = vld [vmem:[%s4552 + $0xc58] sm:$0xff]
        %v4949 = vld [vmem:[%s4552 + $0xc60] sm:$0xff]
        %v4950 = vld [vmem:[%s4552 + $0xc68] sm:$0xff]
        %v4951 = vld [vmem:[%s4552 + $0xc70] sm:$0xff]
        %v4952 = vld [vmem:[%s4552 + $0xc78] sm:$0xff]
        %v4953 = vld [vmem:[%s4552 + $0xc80] sm:$0xff]
        %v4954 = vld [vmem:[%s4552 + $0xc88] sm:$0xff]
        %v4955 = vld [vmem:[%s4552 + $0xc90] sm:$0xff]
        %v4956 = vld [vmem:[%s4552 + $0xc98] sm:$0xff]
        %v4957 = vld [vmem:[%s4552 + $0xca0] sm:$0xff]
        %v4958 = vld [vmem:[%s4552 + $0xca8] sm:$0xff]
        %v4959 = vld [vmem:[%s4552 + $0xcb0] sm:$0xff]
        %v4960 = vld [vmem:[%s4552 + $0xcb8] sm:$0xff]
        %v4961 = vld [vmem:[%s4552 + $0xcc0] sm:$0xff]
        %v4962 = vld [vmem:[%s4552 + $0xcc8] sm:$0xff]
        %v4963 = vld [vmem:[%s4552 + $0xcd0] sm:$0xff]
        %v4964 = vld [vmem:[%s4552 + $0xcd8] sm:$0xff]
        %v4965 = vld [vmem:[%s4552 + $0xce0] sm:$0xff]
        %v4966 = vld [vmem:[%s4552 + $0xce8] sm:$0xff]
        %v4967 = vld [vmem:[%s4552 + $0xcf0] sm:$0xff]
        %v4968 = vld [vmem:[%s4552 + $0xcf8] sm:$0xff]
        %v4969 = vld [vmem:[%s4552 + $0xd00] sm:$0xff]
        %v4970 = vld [vmem:[%s4552 + $0xd08] sm:$0xff]
        %v4971 = vld [vmem:[%s4552 + $0xd10] sm:$0xff]
        %v4972 = vld [vmem:[%s4552 + $0xd18] sm:$0xff]
        %v4973 = vld [vmem:[%s4552 + $0xd20] sm:$0xff]
        %v4974 = vld [vmem:[%s4552 + $0xd28] sm:$0xff]
        %v4975 = vld [vmem:[%s4552 + $0xd30] sm:$0xff]
        %v4976 = vld [vmem:[%s4552 + $0xd38] sm:$0xff]
        %v4977 = vld [vmem:[%s4552 + $0xd40] sm:$0xff]
        %v4978 = vld [vmem:[%s4552 + $0xd48] sm:$0xff]
        %v4979 = vld [vmem:[%s4552 + $0xd50] sm:$0xff]
        %v4980 = vld [vmem:[%s4552 + $0xd58] sm:$0xff]
        %v4981 = vld [vmem:[%s4552 + $0xd60] sm:$0xff]
        %v4982 = vld [vmem:[%s4552 + $0xd68] sm:$0xff]
        %v4983 = vld [vmem:[%s4552 + $0xd70] sm:$0xff]
        %v4984 = vld [vmem:[%s4552 + $0xd78] sm:$0xff]
        %v4985 = vld [vmem:[%s4552 + $0xd80] sm:$0xff]
        %v4986 = vld [vmem:[%s4552 + $0xd88] sm:$0xff]
        %v4987 = vld [vmem:[%s4552 + $0xd90] sm:$0xff]
        %v4988 = vld [vmem:[%s4552 + $0xd98] sm:$0xff]
        %v4989 = vld [vmem:[%s4552 + $0xda0] sm:$0xff]
        %v4990 = vld [vmem:[%s4552 + $0xda8] sm:$0xff]
        %v4991 = vld [vmem:[%s4552 + $0xdb0] sm:$0xff]
        %v4992 = vld [vmem:[%s4552 + $0xdb8] sm:$0xff]
        %v4993 = vld [vmem:[%s4552 + $0xdc0] sm:$0xff]
        %v4994 = vld [vmem:[%s4552 + $0xdc8] sm:$0xff]
        %v4995 = vld [vmem:[%s4552 + $0xdd0] sm:$0xff]
        %v4996 = vld [vmem:[%s4552 + $0xdd8] sm:$0xff]
        %v4997 = vld [vmem:[%s4552 + $0xde0] sm:$0xff]
        %v4998 = vld [vmem:[%s4552 + $0xde8] sm:$0xff]
        %v4999 = vld [vmem:[%s4552 + $0xdf0] sm:$0xff]
        %v5000 = vld [vmem:[%s4552 + $0xdf8] sm:$0xff]
        %s5001 = scalar_lea.vmem %s373, 4 [#allocation4]
        %v5002 = vld [vmem:[%s5001] sm:$0xf]
        %v5004 = vlaneseq
        %v5005 = vshrl.u32 %v5004, 7
        %v5006 = vsub.s32 0, %v5005
        %v5007 = vrot.slane %v5002, %v5006
        %v5008 = vlaneseq
        %v5009 = vshrl.u32 %v5008, 7
        %v5010 = vsub.s32 1, %v5009
        %v5011 = vrot.slane %v5002, %v5010
        %v5012 = vlaneseq
        %v5013 = vshrl.u32 %v5012, 7
        %v5014 = vsub.s32 2, %v5013
        %v5015 = vrot.slane %v5002, %v5014
        %v5016 = vlaneseq
        %v5017 = vshrl.u32 %v5016, 7
        %v5018 = vsub.s32 3, %v5017
        %v5019 = vrot.slane %v5002, %v5018
        %v5472 = vunpack.c.l.b16 %v4553
        %v5473 = vunpack.c.h.b16 %v4553
        %v5474 = vunpack.c.l.b16 %v4554
        %v5475 = vunpack.c.h.b16 %v4554
        %v5476 = vunpack.c.l.b16 %v4555
        %v5477 = vunpack.c.h.b16 %v4555
        %v5478 = vunpack.c.l.b16 %v4556
        %v5479 = vunpack.c.h.b16 %v4556
        %v5480 = vunpack.c.l.b16 %v4557
        %v5481 = vunpack.c.h.b16 %v4557
        %v5482 = vunpack.c.l.b16 %v4558
        %v5483 = vunpack.c.h.b16 %v4558
        %v5484 = vunpack.c.l.b16 %v4559
        %v5485 = vunpack.c.h.b16 %v4559
        %v5486 = vunpack.c.l.b16 %v4560
        %v5487 = vunpack.c.h.b16 %v4560
        %v5488 = vunpack.c.l.b16 %v4561
        %v5489 = vunpack.c.h.b16 %v4561
        %v5490 = vunpack.c.l.b16 %v4562
        %v5491 = vunpack.c.h.b16 %v4562
        %v5492 = vunpack.c.l.b16 %v4563
        %v5493 = vunpack.c.h.b16 %v4563
        %v5494 = vunpack.c.l.b16 %v4564
        %v5495 = vunpack.c.h.b16 %v4564
        %v5496 = vunpack.c.l.b16 %v4565
        %v5497 = vunpack.c.h.b16 %v4565
        %v5498 = vunpack.c.l.b16 %v4566
        %v5499 = vunpack.c.h.b16 %v4566
        %v5500 = vunpack.c.l.b16 %v4567
        %v5501 = vunpack.c.h.b16 %v4567
        %v5502 = vunpack.c.l.b16 %v4568
        %v5503 = vunpack.c.h.b16 %v4568
        %v5504 = vunpack.c.l.b16 %v4569
        %v5505 = vunpack.c.h.b16 %v4569
        %v5506 = vunpack.c.l.b16 %v4570
        %v5507 = vunpack.c.h.b16 %v4570
        %v5508 = vunpack.c.l.b16 %v4571
        %v5509 = vunpack.c.h.b16 %v4571
        %v5510 = vunpack.c.l.b16 %v4572
        %v5511 = vunpack.c.h.b16 %v4572
        %v5512 = vunpack.c.l.b16 %v4573
        %v5513 = vunpack.c.h.b16 %v4573
        %v5514 = vunpack.c.l.b16 %v4574
        %v5515 = vunpack.c.h.b16 %v4574
        %v5516 = vunpack.c.l.b16 %v4575
        %v5517 = vunpack.c.h.b16 %v4575
        %v5518 = vunpack.c.l.b16 %v4576
        %v5519 = vunpack.c.h.b16 %v4576
        %v5520 = vunpack.c.l.b16 %v4577
        %v5521 = vunpack.c.h.b16 %v4577
        %v5522 = vunpack.c.l.b16 %v4578
        %v5523 = vunpack.c.h.b16 %v4578
        %v5524 = vunpack.c.l.b16 %v4579
        %v5525 = vunpack.c.h.b16 %v4579
        %v5526 = vunpack.c.l.b16 %v4580
        %v5527 = vunpack.c.h.b16 %v4580
        %v5528 = vunpack.c.l.b16 %v4581
        %v5529 = vunpack.c.h.b16 %v4581
        %v5530 = vunpack.c.l.b16 %v4582
        %v5531 = vunpack.c.h.b16 %v4582
        %v5532 = vunpack.c.l.b16 %v4583
        %v5533 = vunpack.c.h.b16 %v4583
        %v5534 = vunpack.c.l.b16 %v4584
        %v5535 = vunpack.c.h.b16 %v4584
        %v5536 = vunpack.c.l.b16 %v4585
        %v5537 = vunpack.c.h.b16 %v4585
        %v5538 = vunpack.c.l.b16 %v4586
        %v5539 = vunpack.c.h.b16 %v4586
        %v5540 = vunpack.c.l.b16 %v4587
        %v5541 = vunpack.c.h.b16 %v4587
        %v5542 = vunpack.c.l.b16 %v4588
        %v5543 = vunpack.c.h.b16 %v4588
        %v5544 = vunpack.c.l.b16 %v4589
        %v5545 = vunpack.c.h.b16 %v4589
        %v5546 = vunpack.c.l.b16 %v4590
        %v5547 = vunpack.c.h.b16 %v4590
        %v5548 = vunpack.c.l.b16 %v4591
        %v5549 = vunpack.c.h.b16 %v4591
        %v5550 = vunpack.c.l.b16 %v4592
        %v5551 = vunpack.c.h.b16 %v4592
        %v5552 = vunpack.c.l.b16 %v4593
        %v5553 = vunpack.c.h.b16 %v4593
        %v5554 = vunpack.c.l.b16 %v4594
        %v5555 = vunpack.c.h.b16 %v4594
        %v5556 = vunpack.c.l.b16 %v4595
        %v5557 = vunpack.c.h.b16 %v4595
        %v5558 = vunpack.c.l.b16 %v4596
        %v5559 = vunpack.c.h.b16 %v4596
        %v5560 = vunpack.c.l.b16 %v4597
        %v5561 = vunpack.c.h.b16 %v4597
        %v5562 = vunpack.c.l.b16 %v4598
        %v5563 = vunpack.c.h.b16 %v4598
        %v5564 = vunpack.c.l.b16 %v4599
        %v5565 = vunpack.c.h.b16 %v4599
        %v5566 = vunpack.c.l.b16 %v4600
        %v5567 = vunpack.c.h.b16 %v4600
        %v5568 = vunpack.c.l.b16 %v4601
        %v5569 = vunpack.c.h.b16 %v4601
        %v5570 = vunpack.c.l.b16 %v4602
        %v5571 = vunpack.c.h.b16 %v4602
        %v5572 = vunpack.c.l.b16 %v4603
        %v5573 = vunpack.c.h.b16 %v4603
        %v5574 = vunpack.c.l.b16 %v4604
        %v5575 = vunpack.c.h.b16 %v4604
        %v5576 = vunpack.c.l.b16 %v4605
        %v5577 = vunpack.c.h.b16 %v4605
        %v5578 = vunpack.c.l.b16 %v4606
        %v5579 = vunpack.c.h.b16 %v4606
        %v5580 = vunpack.c.l.b16 %v4607
        %v5581 = vunpack.c.h.b16 %v4607
        %v5582 = vunpack.c.l.b16 %v4608
        %v5583 = vunpack.c.h.b16 %v4608
        %v5584 = vunpack.c.l.b16 %v4609
        %v5585 = vunpack.c.h.b16 %v4609
        %v5586 = vunpack.c.l.b16 %v4610
        %v5587 = vunpack.c.h.b16 %v4610
        %v5588 = vunpack.c.l.b16 %v4611
        %v5589 = vunpack.c.h.b16 %v4611
        %v5590 = vunpack.c.l.b16 %v4612
        %v5591 = vunpack.c.h.b16 %v4612
        %v5592 = vunpack.c.l.b16 %v4613
        %v5593 = vunpack.c.h.b16 %v4613
        %v5594 = vunpack.c.l.b16 %v4614
        %v5595 = vunpack.c.h.b16 %v4614
        %v5596 = vunpack.c.l.b16 %v4615
        %v5597 = vunpack.c.h.b16 %v4615
        %v5598 = vunpack.c.l.b16 %v4616
        %v5599 = vunpack.c.h.b16 %v4616
        %v5600 = vunpack.c.l.b16 %v4617
        %v5601 = vunpack.c.h.b16 %v4617
        %v5602 = vunpack.c.l.b16 %v4618
        %v5603 = vunpack.c.h.b16 %v4618
        %v5604 = vunpack.c.l.b16 %v4619
        %v5605 = vunpack.c.h.b16 %v4619
        %v5606 = vunpack.c.l.b16 %v4620
        %v5607 = vunpack.c.h.b16 %v4620
        %v5608 = vunpack.c.l.b16 %v4621
        %v5609 = vunpack.c.h.b16 %v4621
        %v5610 = vunpack.c.l.b16 %v4622
        %v5611 = vunpack.c.h.b16 %v4622
        %v5612 = vunpack.c.l.b16 %v4623
        %v5613 = vunpack.c.h.b16 %v4623
        %v5614 = vunpack.c.l.b16 %v4624
        %v5615 = vunpack.c.h.b16 %v4624
        %v5616 = vunpack.c.l.b16 %v4625
        %v5617 = vunpack.c.h.b16 %v4625
        %v5618 = vunpack.c.l.b16 %v4626
        %v5619 = vunpack.c.h.b16 %v4626
        %v5620 = vunpack.c.l.b16 %v4627
        %v5621 = vunpack.c.h.b16 %v4627
        %v5622 = vunpack.c.l.b16 %v4628
        %v5623 = vunpack.c.h.b16 %v4628
        %v5624 = vunpack.c.l.b16 %v4629
        %v5625 = vunpack.c.h.b16 %v4629
        %v5626 = vunpack.c.l.b16 %v4630
        %v5627 = vunpack.c.h.b16 %v4630
        %v5628 = vunpack.c.l.b16 %v4631
        %v5629 = vunpack.c.h.b16 %v4631
        %v5630 = vunpack.c.l.b16 %v4632
        %v5631 = vunpack.c.h.b16 %v4632
        %v5632 = vunpack.c.l.b16 %v4633
        %v5633 = vunpack.c.h.b16 %v4633
        %v5634 = vunpack.c.l.b16 %v4634
        %v5635 = vunpack.c.h.b16 %v4634
        %v5636 = vunpack.c.l.b16 %v4635
        %v5637 = vunpack.c.h.b16 %v4635
        %v5638 = vunpack.c.l.b16 %v4636
        %v5639 = vunpack.c.h.b16 %v4636
        %v5640 = vunpack.c.l.b16 %v4637
        %v5641 = vunpack.c.h.b16 %v4637
        %v5642 = vunpack.c.l.b16 %v4638
        %v5643 = vunpack.c.h.b16 %v4638
        %v5644 = vunpack.c.l.b16 %v4639
        %v5645 = vunpack.c.h.b16 %v4639
        %v5646 = vunpack.c.l.b16 %v4640
        %v5647 = vunpack.c.h.b16 %v4640
        %v5648 = vunpack.c.l.b16 %v4641
        %v5649 = vunpack.c.h.b16 %v4641
        %v5650 = vunpack.c.l.b16 %v4642
        %v5651 = vunpack.c.h.b16 %v4642
        %v5652 = vunpack.c.l.b16 %v4643
        %v5653 = vunpack.c.h.b16 %v4643
        %v5654 = vunpack.c.l.b16 %v4644
        %v5655 = vunpack.c.h.b16 %v4644
        %v5656 = vunpack.c.l.b16 %v4645
        %v5657 = vunpack.c.h.b16 %v4645
        %v5658 = vunpack.c.l.b16 %v4646
        %v5659 = vunpack.c.h.b16 %v4646
        %v5660 = vunpack.c.l.b16 %v4647
        %v5661 = vunpack.c.h.b16 %v4647
        %v5662 = vunpack.c.l.b16 %v4648
        %v5663 = vunpack.c.h.b16 %v4648
        %v5664 = vunpack.c.l.b16 %v4649
        %v5665 = vunpack.c.h.b16 %v4649
        %v5666 = vunpack.c.l.b16 %v4650
        %v5667 = vunpack.c.h.b16 %v4650
        %v5668 = vunpack.c.l.b16 %v4651
        %v5669 = vunpack.c.h.b16 %v4651
        %v5670 = vunpack.c.l.b16 %v4652
        %v5671 = vunpack.c.h.b16 %v4652
        %v5672 = vunpack.c.l.b16 %v4653
        %v5673 = vunpack.c.h.b16 %v4653
        %v5674 = vunpack.c.l.b16 %v4654
        %v5675 = vunpack.c.h.b16 %v4654
        %v5676 = vunpack.c.l.b16 %v4655
        %v5677 = vunpack.c.h.b16 %v4655
        %v5678 = vunpack.c.l.b16 %v4656
        %v5679 = vunpack.c.h.b16 %v4656
        %v5680 = vunpack.c.l.b16 %v4657
        %v5681 = vunpack.c.h.b16 %v4657
        %v5682 = vunpack.c.l.b16 %v4658
        %v5683 = vunpack.c.h.b16 %v4658
        %v5684 = vunpack.c.l.b16 %v4659
        %v5685 = vunpack.c.h.b16 %v4659
        %v5686 = vunpack.c.l.b16 %v4660
        %v5687 = vunpack.c.h.b16 %v4660
        %v5688 = vunpack.c.l.b16 %v4661
        %v5689 = vunpack.c.h.b16 %v4661
        %v5690 = vunpack.c.l.b16 %v4662
        %v5691 = vunpack.c.h.b16 %v4662
        %v5692 = vunpack.c.l.b16 %v4663
        %v5693 = vunpack.c.h.b16 %v4663
        %v5694 = vunpack.c.l.b16 %v4664
        %v5695 = vunpack.c.h.b16 %v4664
        %v5696 = vunpack.c.l.b16 %v4665
        %v5697 = vunpack.c.h.b16 %v4665
        %v5698 = vunpack.c.l.b16 %v4666
        %v5699 = vunpack.c.h.b16 %v4666
        %v5700 = vunpack.c.l.b16 %v4667
        %v5701 = vunpack.c.h.b16 %v4667
        %v5702 = vunpack.c.l.b16 %v4668
        %v5703 = vunpack.c.h.b16 %v4668
        %v5704 = vunpack.c.l.b16 %v4669
        %v5705 = vunpack.c.h.b16 %v4669
        %v5706 = vunpack.c.l.b16 %v4670
        %v5707 = vunpack.c.h.b16 %v4670
        %v5708 = vunpack.c.l.b16 %v4671
        %v5709 = vunpack.c.h.b16 %v4671
        %v5710 = vunpack.c.l.b16 %v4672
        %v5711 = vunpack.c.h.b16 %v4672
        %v5712 = vunpack.c.l.b16 %v4673
        %v5713 = vunpack.c.h.b16 %v4673
        %v5714 = vunpack.c.l.b16 %v4674
        %v5715 = vunpack.c.h.b16 %v4674
        %v5716 = vunpack.c.l.b16 %v4675
        %v5717 = vunpack.c.h.b16 %v4675
        %v5718 = vunpack.c.l.b16 %v4676
        %v5719 = vunpack.c.h.b16 %v4676
        %v5720 = vunpack.c.l.b16 %v4677
        %v5721 = vunpack.c.h.b16 %v4677
        %v5722 = vunpack.c.l.b16 %v4678
        %v5723 = vunpack.c.h.b16 %v4678
        %v5724 = vunpack.c.l.b16 %v4679
        %v5725 = vunpack.c.h.b16 %v4679
        %v5726 = vunpack.c.l.b16 %v4680
        %v5727 = vunpack.c.h.b16 %v4680
        %v5728 = vunpack.c.l.b16 %v4681
        %v5729 = vunpack.c.h.b16 %v4681
        %v5730 = vunpack.c.l.b16 %v4682
        %v5731 = vunpack.c.h.b16 %v4682
        %v5732 = vunpack.c.l.b16 %v4683
        %v5733 = vunpack.c.h.b16 %v4683
        %v5734 = vunpack.c.l.b16 %v4684
        %v5735 = vunpack.c.h.b16 %v4684
        %v5736 = vunpack.c.l.b16 %v4685
        %v5737 = vunpack.c.h.b16 %v4685
        %v5738 = vunpack.c.l.b16 %v4686
        %v5739 = vunpack.c.h.b16 %v4686
        %v5740 = vunpack.c.l.b16 %v4687
        %v5741 = vunpack.c.h.b16 %v4687
        %v5742 = vunpack.c.l.b16 %v4688
        %v5743 = vunpack.c.h.b16 %v4688
        %v5744 = vunpack.c.l.b16 %v4689
        %v5745 = vunpack.c.h.b16 %v4689
        %v5746 = vunpack.c.l.b16 %v4690
        %v5747 = vunpack.c.h.b16 %v4690
        %v5748 = vunpack.c.l.b16 %v4691
        %v5749 = vunpack.c.h.b16 %v4691
        %v5750 = vunpack.c.l.b16 %v4692
        %v5751 = vunpack.c.h.b16 %v4692
        %v5752 = vunpack.c.l.b16 %v4693
        %v5753 = vunpack.c.h.b16 %v4693
        %v5754 = vunpack.c.l.b16 %v4694
        %v5755 = vunpack.c.h.b16 %v4694
        %v5756 = vunpack.c.l.b16 %v4695
        %v5757 = vunpack.c.h.b16 %v4695
        %v5758 = vunpack.c.l.b16 %v4696
        %v5759 = vunpack.c.h.b16 %v4696
        %v5760 = vunpack.c.l.b16 %v4697
        %v5761 = vunpack.c.h.b16 %v4697
        %v5762 = vunpack.c.l.b16 %v4698
        %v5763 = vunpack.c.h.b16 %v4698
        %v5764 = vunpack.c.l.b16 %v4699
        %v5765 = vunpack.c.h.b16 %v4699
        %v5766 = vunpack.c.l.b16 %v4700
        %v5767 = vunpack.c.h.b16 %v4700
        %v5768 = vunpack.c.l.b16 %v4701
        %v5769 = vunpack.c.h.b16 %v4701
        %v5770 = vunpack.c.l.b16 %v4702
        %v5771 = vunpack.c.h.b16 %v4702
        %v5772 = vunpack.c.l.b16 %v4703
        %v5773 = vunpack.c.h.b16 %v4703
        %v5774 = vunpack.c.l.b16 %v4704
        %v5775 = vunpack.c.h.b16 %v4704
        %v5776 = vunpack.c.l.b16 %v4705
        %v5777 = vunpack.c.h.b16 %v4705
        %v5778 = vunpack.c.l.b16 %v4706
        %v5779 = vunpack.c.h.b16 %v4706
        %v5780 = vunpack.c.l.b16 %v4707
        %v5781 = vunpack.c.h.b16 %v4707
        %v5782 = vunpack.c.l.b16 %v4708
        %v5783 = vunpack.c.h.b16 %v4708
        %v5784 = vunpack.c.l.b16 %v4709
        %v5785 = vunpack.c.h.b16 %v4709
        %v5786 = vunpack.c.l.b16 %v4710
        %v5787 = vunpack.c.h.b16 %v4710
        %v5788 = vunpack.c.l.b16 %v4711
        %v5789 = vunpack.c.h.b16 %v4711
        %v5790 = vunpack.c.l.b16 %v4712
        %v5791 = vunpack.c.h.b16 %v4712
        %v5792 = vunpack.c.l.b16 %v4713
        %v5793 = vunpack.c.h.b16 %v4713
        %v5794 = vunpack.c.l.b16 %v4714
        %v5795 = vunpack.c.h.b16 %v4714
        %v5796 = vunpack.c.l.b16 %v4715
        %v5797 = vunpack.c.h.b16 %v4715
        %v5798 = vunpack.c.l.b16 %v4716
        %v5799 = vunpack.c.h.b16 %v4716
        %v5800 = vunpack.c.l.b16 %v4717
        %v5801 = vunpack.c.h.b16 %v4717
        %v5802 = vunpack.c.l.b16 %v4718
        %v5803 = vunpack.c.h.b16 %v4718
        %v5804 = vunpack.c.l.b16 %v4719
        %v5805 = vunpack.c.h.b16 %v4719
        %v5806 = vunpack.c.l.b16 %v4720
        %v5807 = vunpack.c.h.b16 %v4720
        %v5808 = vunpack.c.l.b16 %v4721
        %v5809 = vunpack.c.h.b16 %v4721
        %v5810 = vunpack.c.l.b16 %v4722
        %v5811 = vunpack.c.h.b16 %v4722
        %v5812 = vunpack.c.l.b16 %v4723
        %v5813 = vunpack.c.h.b16 %v4723
        %v5814 = vunpack.c.l.b16 %v4724
        %v5815 = vunpack.c.h.b16 %v4724
        %v5816 = vunpack.c.l.b16 %v4725
        %v5817 = vunpack.c.h.b16 %v4725
        %v5818 = vunpack.c.l.b16 %v4726
        %v5819 = vunpack.c.h.b16 %v4726
        %v5820 = vunpack.c.l.b16 %v4727
        %v5821 = vunpack.c.h.b16 %v4727
        %v5822 = vunpack.c.l.b16 %v4728
        %v5823 = vunpack.c.h.b16 %v4728
        %v5824 = vunpack.c.l.b16 %v4729
        %v5825 = vunpack.c.h.b16 %v4729
        %v5826 = vunpack.c.l.b16 %v4730
        %v5827 = vunpack.c.h.b16 %v4730
        %v5828 = vunpack.c.l.b16 %v4731
        %v5829 = vunpack.c.h.b16 %v4731
        %v5830 = vunpack.c.l.b16 %v4732
        %v5831 = vunpack.c.h.b16 %v4732
        %v5832 = vunpack.c.l.b16 %v4733
        %v5833 = vunpack.c.h.b16 %v4733
        %v5834 = vunpack.c.l.b16 %v4734
        %v5835 = vunpack.c.h.b16 %v4734
        %v5836 = vunpack.c.l.b16 %v4735
        %v5837 = vunpack.c.h.b16 %v4735
        %v5838 = vunpack.c.l.b16 %v4736
        %v5839 = vunpack.c.h.b16 %v4736
        %v5840 = vunpack.c.l.b16 %v4737
        %v5841 = vunpack.c.h.b16 %v4737
        %v5842 = vunpack.c.l.b16 %v4738
        %v5843 = vunpack.c.h.b16 %v4738
        %v5844 = vunpack.c.l.b16 %v4739
        %v5845 = vunpack.c.h.b16 %v4739
        %v5846 = vunpack.c.l.b16 %v4740
        %v5847 = vunpack.c.h.b16 %v4740
        %v5848 = vunpack.c.l.b16 %v4741
        %v5849 = vunpack.c.h.b16 %v4741
        %v5850 = vunpack.c.l.b16 %v4742
        %v5851 = vunpack.c.h.b16 %v4742
        %v5852 = vunpack.c.l.b16 %v4743
        %v5853 = vunpack.c.h.b16 %v4743
        %v5854 = vunpack.c.l.b16 %v4744
        %v5855 = vunpack.c.h.b16 %v4744
        %v5856 = vunpack.c.l.b16 %v4745
        %v5857 = vunpack.c.h.b16 %v4745
        %v5858 = vunpack.c.l.b16 %v4746
        %v5859 = vunpack.c.h.b16 %v4746
        %v5860 = vunpack.c.l.b16 %v4747
        %v5861 = vunpack.c.h.b16 %v4747
        %v5862 = vunpack.c.l.b16 %v4748
        %v5863 = vunpack.c.h.b16 %v4748
        %v5864 = vunpack.c.l.b16 %v4749
        %v5865 = vunpack.c.h.b16 %v4749
        %v5866 = vunpack.c.l.b16 %v4750
        %v5867 = vunpack.c.h.b16 %v4750
        %v5868 = vunpack.c.l.b16 %v4751
        %v5869 = vunpack.c.h.b16 %v4751
        %v5870 = vunpack.c.l.b16 %v4752
        %v5871 = vunpack.c.h.b16 %v4752
        %v5872 = vunpack.c.l.b16 %v4753
        %v5873 = vunpack.c.h.b16 %v4753
        %v5874 = vunpack.c.l.b16 %v4754
        %v5875 = vunpack.c.h.b16 %v4754
        %v5876 = vunpack.c.l.b16 %v4755
        %v5877 = vunpack.c.h.b16 %v4755
        %v5878 = vunpack.c.l.b16 %v4756
        %v5879 = vunpack.c.h.b16 %v4756
        %v5880 = vunpack.c.l.b16 %v4757
        %v5881 = vunpack.c.h.b16 %v4757
        %v5882 = vunpack.c.l.b16 %v4758
        %v5883 = vunpack.c.h.b16 %v4758
        %v5884 = vunpack.c.l.b16 %v4759
        %v5885 = vunpack.c.h.b16 %v4759
        %v5886 = vunpack.c.l.b16 %v4760
        %v5887 = vunpack.c.h.b16 %v4760
        %v5888 = vunpack.c.l.b16 %v4761
        %v5889 = vunpack.c.h.b16 %v4761
        %v5890 = vunpack.c.l.b16 %v4762
        %v5891 = vunpack.c.h.b16 %v4762
        %v5892 = vunpack.c.l.b16 %v4763
        %v5893 = vunpack.c.h.b16 %v4763
        %v5894 = vunpack.c.l.b16 %v4764
        %v5895 = vunpack.c.h.b16 %v4764
        %v5896 = vunpack.c.l.b16 %v4765
        %v5897 = vunpack.c.h.b16 %v4765
        %v5898 = vunpack.c.l.b16 %v4766
        %v5899 = vunpack.c.h.b16 %v4766
        %v5900 = vunpack.c.l.b16 %v4767
        %v5901 = vunpack.c.h.b16 %v4767
        %v5902 = vunpack.c.l.b16 %v4768
        %v5903 = vunpack.c.h.b16 %v4768
        %v5904 = vunpack.c.l.b16 %v4769
        %v5905 = vunpack.c.h.b16 %v4769
        %v5906 = vunpack.c.l.b16 %v4770
        %v5907 = vunpack.c.h.b16 %v4770
        %v5908 = vunpack.c.l.b16 %v4771
        %v5909 = vunpack.c.h.b16 %v4771
        %v5910 = vunpack.c.l.b16 %v4772
        %v5911 = vunpack.c.h.b16 %v4772
        %v5912 = vunpack.c.l.b16 %v4773
        %v5913 = vunpack.c.h.b16 %v4773
        %v5914 = vunpack.c.l.b16 %v4774
        %v5915 = vunpack.c.h.b16 %v4774
        %v5916 = vunpack.c.l.b16 %v4775
        %v5917 = vunpack.c.h.b16 %v4775
        %v5918 = vunpack.c.l.b16 %v4776
        %v5919 = vunpack.c.h.b16 %v4776
        %v5920 = vunpack.c.l.b16 %v4777
        %v5921 = vunpack.c.h.b16 %v4777
        %v5922 = vunpack.c.l.b16 %v4778
        %v5923 = vunpack.c.h.b16 %v4778
        %v5924 = vunpack.c.l.b16 %v4779
        %v5925 = vunpack.c.h.b16 %v4779
        %v5926 = vunpack.c.l.b16 %v4780
        %v5927 = vunpack.c.h.b16 %v4780
        %v5928 = vunpack.c.l.b16 %v4781
        %v5929 = vunpack.c.h.b16 %v4781
        %v5930 = vunpack.c.l.b16 %v4782
        %v5931 = vunpack.c.h.b16 %v4782
        %v5932 = vunpack.c.l.b16 %v4783
        %v5933 = vunpack.c.h.b16 %v4783
        %v5934 = vunpack.c.l.b16 %v4784
        %v5935 = vunpack.c.h.b16 %v4784
        %v5936 = vunpack.c.l.b16 %v4785
        %v5937 = vunpack.c.h.b16 %v4785
        %v5938 = vunpack.c.l.b16 %v4786
        %v5939 = vunpack.c.h.b16 %v4786
        %v5940 = vunpack.c.l.b16 %v4787
        %v5941 = vunpack.c.h.b16 %v4787
        %v5942 = vunpack.c.l.b16 %v4788
        %v5943 = vunpack.c.h.b16 %v4788
        %v5944 = vunpack.c.l.b16 %v4789
        %v5945 = vunpack.c.h.b16 %v4789
        %v5946 = vunpack.c.l.b16 %v4790
        %v5947 = vunpack.c.h.b16 %v4790
        %v5948 = vunpack.c.l.b16 %v4791
        %v5949 = vunpack.c.h.b16 %v4791
        %v5950 = vunpack.c.l.b16 %v4792
        %v5951 = vunpack.c.h.b16 %v4792
        %v5952 = vunpack.c.l.b16 %v4793
        %v5953 = vunpack.c.h.b16 %v4793
        %v5954 = vunpack.c.l.b16 %v4794
        %v5955 = vunpack.c.h.b16 %v4794
        %v5956 = vunpack.c.l.b16 %v4795
        %v5957 = vunpack.c.h.b16 %v4795
        %v5958 = vunpack.c.l.b16 %v4796
        %v5959 = vunpack.c.h.b16 %v4796
        %v5960 = vunpack.c.l.b16 %v4797
        %v5961 = vunpack.c.h.b16 %v4797
        %v5962 = vunpack.c.l.b16 %v4798
        %v5963 = vunpack.c.h.b16 %v4798
        %v5964 = vunpack.c.l.b16 %v4799
        %v5965 = vunpack.c.h.b16 %v4799
        %v5966 = vunpack.c.l.b16 %v4800
        %v5967 = vunpack.c.h.b16 %v4800
        %v5968 = vunpack.c.l.b16 %v4801
        %v5969 = vunpack.c.h.b16 %v4801
        %v5970 = vunpack.c.l.b16 %v4802
        %v5971 = vunpack.c.h.b16 %v4802
        %v5972 = vunpack.c.l.b16 %v4803
        %v5973 = vunpack.c.h.b16 %v4803
        %v5974 = vunpack.c.l.b16 %v4804
        %v5975 = vunpack.c.h.b16 %v4804
        %v5976 = vunpack.c.l.b16 %v4805
        %v5977 = vunpack.c.h.b16 %v4805
        %v5978 = vunpack.c.l.b16 %v4806
        %v5979 = vunpack.c.h.b16 %v4806
        %v5980 = vunpack.c.l.b16 %v4807
        %v5981 = vunpack.c.h.b16 %v4807
        %v5982 = vunpack.c.l.b16 %v4808
        %v5983 = vunpack.c.h.b16 %v4808
        %v5984 = vunpack.c.l.b16 %v4809
        %v5985 = vunpack.c.h.b16 %v4809
        %v5986 = vunpack.c.l.b16 %v4810
        %v5987 = vunpack.c.h.b16 %v4810
        %v5988 = vunpack.c.l.b16 %v4811
        %v5989 = vunpack.c.h.b16 %v4811
        %v5990 = vunpack.c.l.b16 %v4812
        %v5991 = vunpack.c.h.b16 %v4812
        %v5992 = vunpack.c.l.b16 %v4813
        %v5993 = vunpack.c.h.b16 %v4813
        %v5994 = vunpack.c.l.b16 %v4814
        %v5995 = vunpack.c.h.b16 %v4814
        %v5996 = vunpack.c.l.b16 %v4815
        %v5997 = vunpack.c.h.b16 %v4815
        %v5998 = vunpack.c.l.b16 %v4816
        %v5999 = vunpack.c.h.b16 %v4816
        %v6000 = vunpack.c.l.b16 %v4817
        %v6001 = vunpack.c.h.b16 %v4817
        %v6002 = vunpack.c.l.b16 %v4818
        %v6003 = vunpack.c.h.b16 %v4818
        %v6004 = vunpack.c.l.b16 %v4819
        %v6005 = vunpack.c.h.b16 %v4819
        %v6006 = vunpack.c.l.b16 %v4820
        %v6007 = vunpack.c.h.b16 %v4820
        %v6008 = vunpack.c.l.b16 %v4821
        %v6009 = vunpack.c.h.b16 %v4821
        %v6010 = vunpack.c.l.b16 %v4822
        %v6011 = vunpack.c.h.b16 %v4822
        %v6012 = vunpack.c.l.b16 %v4823
        %v6013 = vunpack.c.h.b16 %v4823
        %v6014 = vunpack.c.l.b16 %v4824
        %v6015 = vunpack.c.h.b16 %v4824
        %v6016 = vunpack.c.l.b16 %v4825
        %v6017 = vunpack.c.h.b16 %v4825
        %v6018 = vunpack.c.l.b16 %v4826
        %v6019 = vunpack.c.h.b16 %v4826
        %v6020 = vunpack.c.l.b16 %v4827
        %v6021 = vunpack.c.h.b16 %v4827
        %v6022 = vunpack.c.l.b16 %v4828
        %v6023 = vunpack.c.h.b16 %v4828
        %v6024 = vunpack.c.l.b16 %v4829
        %v6025 = vunpack.c.h.b16 %v4829
        %v6026 = vunpack.c.l.b16 %v4830
        %v6027 = vunpack.c.h.b16 %v4830
        %v6028 = vunpack.c.l.b16 %v4831
        %v6029 = vunpack.c.h.b16 %v4831
        %v6030 = vunpack.c.l.b16 %v4832
        %v6031 = vunpack.c.h.b16 %v4832
        %v6032 = vunpack.c.l.b16 %v4833
        %v6033 = vunpack.c.h.b16 %v4833
        %v6034 = vunpack.c.l.b16 %v4834
        %v6035 = vunpack.c.h.b16 %v4834
        %v6036 = vunpack.c.l.b16 %v4835
        %v6037 = vunpack.c.h.b16 %v4835
        %v6038 = vunpack.c.l.b16 %v4836
        %v6039 = vunpack.c.h.b16 %v4836
        %v6040 = vunpack.c.l.b16 %v4837
        %v6041 = vunpack.c.h.b16 %v4837
        %v6042 = vunpack.c.l.b16 %v4838
        %v6043 = vunpack.c.h.b16 %v4838
        %v6044 = vunpack.c.l.b16 %v4839
        %v6045 = vunpack.c.h.b16 %v4839
        %v6046 = vunpack.c.l.b16 %v4840
        %v6047 = vunpack.c.h.b16 %v4840
        %v6048 = vunpack.c.l.b16 %v4841
        %v6049 = vunpack.c.h.b16 %v4841
        %v6050 = vunpack.c.l.b16 %v4842
        %v6051 = vunpack.c.h.b16 %v4842
        %v6052 = vunpack.c.l.b16 %v4843
        %v6053 = vunpack.c.h.b16 %v4843
        %v6054 = vunpack.c.l.b16 %v4844
        %v6055 = vunpack.c.h.b16 %v4844
        %v6056 = vunpack.c.l.b16 %v4845
        %v6057 = vunpack.c.h.b16 %v4845
        %v6058 = vunpack.c.l.b16 %v4846
        %v6059 = vunpack.c.h.b16 %v4846
        %v6060 = vunpack.c.l.b16 %v4847
        %v6061 = vunpack.c.h.b16 %v4847
        %v6062 = vunpack.c.l.b16 %v4848
        %v6063 = vunpack.c.h.b16 %v4848
        %v6064 = vunpack.c.l.b16 %v4849
        %v6065 = vunpack.c.h.b16 %v4849
        %v6066 = vunpack.c.l.b16 %v4850
        %v6067 = vunpack.c.h.b16 %v4850
        %v6068 = vunpack.c.l.b16 %v4851
        %v6069 = vunpack.c.h.b16 %v4851
        %v6070 = vunpack.c.l.b16 %v4852
        %v6071 = vunpack.c.h.b16 %v4852
        %v6072 = vunpack.c.l.b16 %v4853
        %v6073 = vunpack.c.h.b16 %v4853
        %v6074 = vunpack.c.l.b16 %v4854
        %v6075 = vunpack.c.h.b16 %v4854
        %v6076 = vunpack.c.l.b16 %v4855
        %v6077 = vunpack.c.h.b16 %v4855
        %v6078 = vunpack.c.l.b16 %v4856
        %v6079 = vunpack.c.h.b16 %v4856
        %v6080 = vunpack.c.l.b16 %v4857
        %v6081 = vunpack.c.h.b16 %v4857
        %v6082 = vunpack.c.l.b16 %v4858
        %v6083 = vunpack.c.h.b16 %v4858
        %v6084 = vunpack.c.l.b16 %v4859
        %v6085 = vunpack.c.h.b16 %v4859
        %v6086 = vunpack.c.l.b16 %v4860
        %v6087 = vunpack.c.h.b16 %v4860
        %v6088 = vunpack.c.l.b16 %v4861
        %v6089 = vunpack.c.h.b16 %v4861
        %v6090 = vunpack.c.l.b16 %v4862
        %v6091 = vunpack.c.h.b16 %v4862
        %v6092 = vunpack.c.l.b16 %v4863
        %v6093 = vunpack.c.h.b16 %v4863
        %v6094 = vunpack.c.l.b16 %v4864
        %v6095 = vunpack.c.h.b16 %v4864
        %v6096 = vunpack.c.l.b16 %v4865
        %v6097 = vunpack.c.h.b16 %v4865
        %v6098 = vunpack.c.l.b16 %v4866
        %v6099 = vunpack.c.h.b16 %v4866
        %v6100 = vunpack.c.l.b16 %v4867
        %v6101 = vunpack.c.h.b16 %v4867
        %v6102 = vunpack.c.l.b16 %v4868
        %v6103 = vunpack.c.h.b16 %v4868
        %v6104 = vunpack.c.l.b16 %v4869
        %v6105 = vunpack.c.h.b16 %v4869
        %v6106 = vunpack.c.l.b16 %v4870
        %v6107 = vunpack.c.h.b16 %v4870
        %v6108 = vunpack.c.l.b16 %v4871
        %v6109 = vunpack.c.h.b16 %v4871
        %v6110 = vunpack.c.l.b16 %v4872
        %v6111 = vunpack.c.h.b16 %v4872
        %v6112 = vunpack.c.l.b16 %v4873
        %v6113 = vunpack.c.h.b16 %v4873
        %v6114 = vunpack.c.l.b16 %v4874
        %v6115 = vunpack.c.h.b16 %v4874
        %v6116 = vunpack.c.l.b16 %v4875
        %v6117 = vunpack.c.h.b16 %v4875
        %v6118 = vunpack.c.l.b16 %v4876
        %v6119 = vunpack.c.h.b16 %v4876
        %v6120 = vunpack.c.l.b16 %v4877
        %v6121 = vunpack.c.h.b16 %v4877
        %v6122 = vunpack.c.l.b16 %v4878
        %v6123 = vunpack.c.h.b16 %v4878
        %v6124 = vunpack.c.l.b16 %v4879
        %v6125 = vunpack.c.h.b16 %v4879
        %v6126 = vunpack.c.l.b16 %v4880
        %v6127 = vunpack.c.h.b16 %v4880
        %v6128 = vunpack.c.l.b16 %v4881
        %v6129 = vunpack.c.h.b16 %v4881
        %v6130 = vunpack.c.l.b16 %v4882
        %v6131 = vunpack.c.h.b16 %v4882
        %v6132 = vunpack.c.l.b16 %v4883
        %v6133 = vunpack.c.h.b16 %v4883
        %v6134 = vunpack.c.l.b16 %v4884
        %v6135 = vunpack.c.h.b16 %v4884
        %v6136 = vunpack.c.l.b16 %v4885
        %v6137 = vunpack.c.h.b16 %v4885
        %v6138 = vunpack.c.l.b16 %v4886
        %v6139 = vunpack.c.h.b16 %v4886
        %v6140 = vunpack.c.l.b16 %v4887
        %v6141 = vunpack.c.h.b16 %v4887
        %v6142 = vunpack.c.l.b16 %v4888
        %v6143 = vunpack.c.h.b16 %v4888
        %v6144 = vunpack.c.l.b16 %v4889
        %v6145 = vunpack.c.h.b16 %v4889
        %v6146 = vunpack.c.l.b16 %v4890
        %v6147 = vunpack.c.h.b16 %v4890
        %v6148 = vunpack.c.l.b16 %v4891
        %v6149 = vunpack.c.h.b16 %v4891
        %v6150 = vunpack.c.l.b16 %v4892
        %v6151 = vunpack.c.h.b16 %v4892
        %v6152 = vunpack.c.l.b16 %v4893
        %v6153 = vunpack.c.h.b16 %v4893
        %v6154 = vunpack.c.l.b16 %v4894
        %v6155 = vunpack.c.h.b16 %v4894
        %v6156 = vunpack.c.l.b16 %v4895
        %v6157 = vunpack.c.h.b16 %v4895
        %v6158 = vunpack.c.l.b16 %v4896
        %v6159 = vunpack.c.h.b16 %v4896
        %v6160 = vunpack.c.l.b16 %v4897
        %v6161 = vunpack.c.h.b16 %v4897
        %v6162 = vunpack.c.l.b16 %v4898
        %v6163 = vunpack.c.h.b16 %v4898
        %v6164 = vunpack.c.l.b16 %v4899
        %v6165 = vunpack.c.h.b16 %v4899
        %v6166 = vunpack.c.l.b16 %v4900
        %v6167 = vunpack.c.h.b16 %v4900
        %v6168 = vunpack.c.l.b16 %v4901
        %v6169 = vunpack.c.h.b16 %v4901
        %v6170 = vunpack.c.l.b16 %v4902
        %v6171 = vunpack.c.h.b16 %v4902
        %v6172 = vunpack.c.l.b16 %v4903
        %v6173 = vunpack.c.h.b16 %v4903
        %v6174 = vunpack.c.l.b16 %v4904
        %v6175 = vunpack.c.h.b16 %v4904
        %v6176 = vunpack.c.l.b16 %v4905
        %v6177 = vunpack.c.h.b16 %v4905
        %v6178 = vunpack.c.l.b16 %v4906
        %v6179 = vunpack.c.h.b16 %v4906
        %v6180 = vunpack.c.l.b16 %v4907
        %v6181 = vunpack.c.h.b16 %v4907
        %v6182 = vunpack.c.l.b16 %v4908
        %v6183 = vunpack.c.h.b16 %v4908
        %v6184 = vunpack.c.l.b16 %v4909
        %v6185 = vunpack.c.h.b16 %v4909
        %v6186 = vunpack.c.l.b16 %v4910
        %v6187 = vunpack.c.h.b16 %v4910
        %v6188 = vunpack.c.l.b16 %v4911
        %v6189 = vunpack.c.h.b16 %v4911
        %v6190 = vunpack.c.l.b16 %v4912
        %v6191 = vunpack.c.h.b16 %v4912
        %v6192 = vunpack.c.l.b16 %v4913
        %v6193 = vunpack.c.h.b16 %v4913
        %v6194 = vunpack.c.l.b16 %v4914
        %v6195 = vunpack.c.h.b16 %v4914
        %v6196 = vunpack.c.l.b16 %v4915
        %v6197 = vunpack.c.h.b16 %v4915
        %v6198 = vunpack.c.l.b16 %v4916
        %v6199 = vunpack.c.h.b16 %v4916
        %v6200 = vunpack.c.l.b16 %v4917
        %v6201 = vunpack.c.h.b16 %v4917
        %v6202 = vunpack.c.l.b16 %v4918
        %v6203 = vunpack.c.h.b16 %v4918
        %v6204 = vunpack.c.l.b16 %v4919
        %v6205 = vunpack.c.h.b16 %v4919
        %v6206 = vunpack.c.l.b16 %v4920
        %v6207 = vunpack.c.h.b16 %v4920
        %v6208 = vunpack.c.l.b16 %v4921
        %v6209 = vunpack.c.h.b16 %v4921
        %v6210 = vunpack.c.l.b16 %v4922
        %v6211 = vunpack.c.h.b16 %v4922
        %v6212 = vunpack.c.l.b16 %v4923
        %v6213 = vunpack.c.h.b16 %v4923
        %v6214 = vunpack.c.l.b16 %v4924
        %v6215 = vunpack.c.h.b16 %v4924
        %v6216 = vunpack.c.l.b16 %v4925
        %v6217 = vunpack.c.h.b16 %v4925
        %v6218 = vunpack.c.l.b16 %v4926
        %v6219 = vunpack.c.h.b16 %v4926
        %v6220 = vunpack.c.l.b16 %v4927
        %v6221 = vunpack.c.h.b16 %v4927
        %v6222 = vunpack.c.l.b16 %v4928
        %v6223 = vunpack.c.h.b16 %v4928
        %v6224 = vunpack.c.l.b16 %v4929
        %v6225 = vunpack.c.h.b16 %v4929
        %v6226 = vunpack.c.l.b16 %v4930
        %v6227 = vunpack.c.h.b16 %v4930
        %v6228 = vunpack.c.l.b16 %v4931
        %v6229 = vunpack.c.h.b16 %v4931
        %v6230 = vunpack.c.l.b16 %v4932
        %v6231 = vunpack.c.h.b16 %v4932
        %v6232 = vunpack.c.l.b16 %v4933
        %v6233 = vunpack.c.h.b16 %v4933
        %v6234 = vunpack.c.l.b16 %v4934
        %v6235 = vunpack.c.h.b16 %v4934
        %v6236 = vunpack.c.l.b16 %v4935
        %v6237 = vunpack.c.h.b16 %v4935
        %v6238 = vunpack.c.l.b16 %v4936
        %v6239 = vunpack.c.h.b16 %v4936
        %v6240 = vunpack.c.l.b16 %v4937
        %v6241 = vunpack.c.h.b16 %v4937
        %v6242 = vunpack.c.l.b16 %v4938
        %v6243 = vunpack.c.h.b16 %v4938
        %v6244 = vunpack.c.l.b16 %v4939
        %v6245 = vunpack.c.h.b16 %v4939
        %v6246 = vunpack.c.l.b16 %v4940
        %v6247 = vunpack.c.h.b16 %v4940
        %v6248 = vunpack.c.l.b16 %v4941
        %v6249 = vunpack.c.h.b16 %v4941
        %v6250 = vunpack.c.l.b16 %v4942
        %v6251 = vunpack.c.h.b16 %v4942
        %v6252 = vunpack.c.l.b16 %v4943
        %v6253 = vunpack.c.h.b16 %v4943
        %v6254 = vunpack.c.l.b16 %v4944
        %v6255 = vunpack.c.h.b16 %v4944
        %v6256 = vunpack.c.l.b16 %v4945
        %v6257 = vunpack.c.h.b16 %v4945
        %v6258 = vunpack.c.l.b16 %v4946
        %v6259 = vunpack.c.h.b16 %v4946
        %v6260 = vunpack.c.l.b16 %v4947
        %v6261 = vunpack.c.h.b16 %v4947
        %v6262 = vunpack.c.l.b16 %v4948
        %v6263 = vunpack.c.h.b16 %v4948
        %v6264 = vunpack.c.l.b16 %v4949
        %v6265 = vunpack.c.h.b16 %v4949
        %v6266 = vunpack.c.l.b16 %v4950
        %v6267 = vunpack.c.h.b16 %v4950
        %v6268 = vunpack.c.l.b16 %v4951
        %v6269 = vunpack.c.h.b16 %v4951
        %v6270 = vunpack.c.l.b16 %v4952
        %v6271 = vunpack.c.h.b16 %v4952
        %v6272 = vunpack.c.l.b16 %v4953
        %v6273 = vunpack.c.h.b16 %v4953
        %v6274 = vunpack.c.l.b16 %v4954
        %v6275 = vunpack.c.h.b16 %v4954
        %v6276 = vunpack.c.l.b16 %v4955
        %v6277 = vunpack.c.h.b16 %v4955
        %v6278 = vunpack.c.l.b16 %v4956
        %v6279 = vunpack.c.h.b16 %v4956
        %v6280 = vunpack.c.l.b16 %v4957
        %v6281 = vunpack.c.h.b16 %v4957
        %v6282 = vunpack.c.l.b16 %v4958
        %v6283 = vunpack.c.h.b16 %v4958
        %v6284 = vunpack.c.l.b16 %v4959
        %v6285 = vunpack.c.h.b16 %v4959
        %v6286 = vunpack.c.l.b16 %v4960
        %v6287 = vunpack.c.h.b16 %v4960
        %v6288 = vunpack.c.l.b16 %v4961
        %v6289 = vunpack.c.h.b16 %v4961
        %v6290 = vunpack.c.l.b16 %v4962
        %v6291 = vunpack.c.h.b16 %v4962
        %v6292 = vunpack.c.l.b16 %v4963
        %v6293 = vunpack.c.h.b16 %v4963
        %v6294 = vunpack.c.l.b16 %v4964
        %v6295 = vunpack.c.h.b16 %v4964
        %v6296 = vunpack.c.l.b16 %v4965
        %v6297 = vunpack.c.h.b16 %v4965
        %v6298 = vunpack.c.l.b16 %v4966
        %v6299 = vunpack.c.h.b16 %v4966
        %v6300 = vunpack.c.l.b16 %v4967
        %v6301 = vunpack.c.h.b16 %v4967
        %v6302 = vunpack.c.l.b16 %v4968
        %v6303 = vunpack.c.h.b16 %v4968
        %v6304 = vunpack.c.l.b16 %v4969
        %v6305 = vunpack.c.h.b16 %v4969
        %v6306 = vunpack.c.l.b16 %v4970
        %v6307 = vunpack.c.h.b16 %v4970
        %v6308 = vunpack.c.l.b16 %v4971
        %v6309 = vunpack.c.h.b16 %v4971
        %v6310 = vunpack.c.l.b16 %v4972
        %v6311 = vunpack.c.h.b16 %v4972
        %v6312 = vunpack.c.l.b16 %v4973
        %v6313 = vunpack.c.h.b16 %v4973
        %v6314 = vunpack.c.l.b16 %v4974
        %v6315 = vunpack.c.h.b16 %v4974
        %v6316 = vunpack.c.l.b16 %v4975
        %v6317 = vunpack.c.h.b16 %v4975
        %v6318 = vunpack.c.l.b16 %v4976
        %v6319 = vunpack.c.h.b16 %v4976
        %v6320 = vunpack.c.l.b16 %v4977
        %v6321 = vunpack.c.h.b16 %v4977
        %v6322 = vunpack.c.l.b16 %v4978
        %v6323 = vunpack.c.h.b16 %v4978
        %v6324 = vunpack.c.l.b16 %v4979
        %v6325 = vunpack.c.h.b16 %v4979
        %v6326 = vunpack.c.l.b16 %v4980
        %v6327 = vunpack.c.h.b16 %v4980
        %v6328 = vunpack.c.l.b16 %v4981
        %v6329 = vunpack.c.h.b16 %v4981
        %v6330 = vunpack.c.l.b16 %v4982
        %v6331 = vunpack.c.h.b16 %v4982
        %v6332 = vunpack.c.l.b16 %v4983
        %v6333 = vunpack.c.h.b16 %v4983
        %v6334 = vunpack.c.l.b16 %v4984
        %v6335 = vunpack.c.h.b16 %v4984
        %v6336 = vunpack.c.l.b16 %v4985
        %v6337 = vunpack.c.h.b16 %v4985
        %v6338 = vunpack.c.l.b16 %v4986
        %v6339 = vunpack.c.h.b16 %v4986
        %v6340 = vunpack.c.l.b16 %v4987
        %v6341 = vunpack.c.h.b16 %v4987
        %v6342 = vunpack.c.l.b16 %v4988
        %v6343 = vunpack.c.h.b16 %v4988
        %v6344 = vunpack.c.l.b16 %v4989
        %v6345 = vunpack.c.h.b16 %v4989
        %v6346 = vunpack.c.l.b16 %v4990
        %v6347 = vunpack.c.h.b16 %v4990
        %v6348 = vunpack.c.l.b16 %v4991
        %v6349 = vunpack.c.h.b16 %v4991
        %v6350 = vunpack.c.l.b16 %v4992
        %v6351 = vunpack.c.h.b16 %v4992
        %v6352 = vunpack.c.l.b16 %v4993
        %v6353 = vunpack.c.h.b16 %v4993
        %v6354 = vunpack.c.l.b16 %v4994
        %v6355 = vunpack.c.h.b16 %v4994
        %v6356 = vunpack.c.l.b16 %v4995
        %v6357 = vunpack.c.h.b16 %v4995
        %v6358 = vunpack.c.l.b16 %v4996
        %v6359 = vunpack.c.h.b16 %v4996
        %v6360 = vunpack.c.l.b16 %v4997
        %v6361 = vunpack.c.h.b16 %v4997
        %v6362 = vunpack.c.l.b16 %v4998
        %v6363 = vunpack.c.h.b16 %v4998
        %v6364 = vunpack.c.l.b16 %v4999
        %v6365 = vunpack.c.h.b16 %v4999
        %v6366 = vunpack.c.l.b16 %v5000
        %v6367 = vunpack.c.h.b16 %v5000
        %v6368 = vpack.c.b16 %v5476, %v5472
        %v6369 = vpack.c.b16 %v5477, %v5473
        %v6370 = vpack.c.b16 %v5478, %v5474
        %v6371 = vpack.c.b16 %v5479, %v5475
        %v6372 = vpack.c.b16 %v5484, %v5480
        %v6373 = vpack.c.b16 %v5485, %v5481
        %v6374 = vpack.c.b16 %v5486, %v5482
        %v6375 = vpack.c.b16 %v5487, %v5483
        %v6376 = vpack.c.b16 %v5492, %v5488
        %v6377 = vpack.c.b16 %v5493, %v5489
        %v6378 = vpack.c.b16 %v5494, %v5490
        %v6379 = vpack.c.b16 %v5495, %v5491
        %v6380 = vpack.c.b16 %v5500, %v5496
        %v6381 = vpack.c.b16 %v5501, %v5497
        %v6382 = vpack.c.b16 %v5502, %v5498
        %v6383 = vpack.c.b16 %v5503, %v5499
        %v6384 = vpack.c.b16 %v5508, %v5504
        %v6385 = vpack.c.b16 %v5509, %v5505
        %v6386 = vpack.c.b16 %v5510, %v5506
        %v6387 = vpack.c.b16 %v5511, %v5507
        %v6388 = vpack.c.b16 %v5516, %v5512
        %v6389 = vpack.c.b16 %v5517, %v5513
        %v6390 = vpack.c.b16 %v5518, %v5514
        %v6391 = vpack.c.b16 %v5519, %v5515
        %v6392 = vpack.c.b16 %v5524, %v5520
        %v6393 = vpack.c.b16 %v5525, %v5521
        %v6394 = vpack.c.b16 %v5526, %v5522
        %v6395 = vpack.c.b16 %v5527, %v5523
        %v6396 = vpack.c.b16 %v5532, %v5528
        %v6397 = vpack.c.b16 %v5533, %v5529
        %v6398 = vpack.c.b16 %v5534, %v5530
        %v6399 = vpack.c.b16 %v5535, %v5531
        %v6400 = vpack.c.b16 %v5540, %v5536
        %v6401 = vpack.c.b16 %v5541, %v5537
        %v6402 = vpack.c.b16 %v5542, %v5538
        %v6403 = vpack.c.b16 %v5543, %v5539
        %v6404 = vpack.c.b16 %v5548, %v5544
        %v6405 = vpack.c.b16 %v5549, %v5545
        %v6406 = vpack.c.b16 %v5550, %v5546
        %v6407 = vpack.c.b16 %v5551, %v5547
        %v6408 = vpack.c.b16 %v5556, %v5552
        %v6409 = vpack.c.b16 %v5557, %v5553
        %v6410 = vpack.c.b16 %v5558, %v5554
        %v6411 = vpack.c.b16 %v5559, %v5555
        %v6412 = vpack.c.b16 %v5564, %v5560
        %v6413 = vpack.c.b16 %v5565, %v5561
        %v6414 = vpack.c.b16 %v5566, %v5562
        %v6415 = vpack.c.b16 %v5567, %v5563
        %v6416 = vpack.c.b16 %v5572, %v5568
        %v6417 = vpack.c.b16 %v5573, %v5569
        %v6418 = vpack.c.b16 %v5574, %v5570
        %v6419 = vpack.c.b16 %v5575, %v5571
        %v6420 = vpack.c.b16 %v5580, %v5576
        %v6421 = vpack.c.b16 %v5581, %v5577
        %v6422 = vpack.c.b16 %v5582, %v5578
        %v6423 = vpack.c.b16 %v5583, %v5579
        %v6424 = vpack.c.b16 %v5588, %v5584
        %v6425 = vpack.c.b16 %v5589, %v5585
        %v6426 = vpack.c.b16 %v5590, %v5586
        %v6427 = vpack.c.b16 %v5591, %v5587
        %v6428 = vpack.c.b16 %v5596, %v5592
        %v6429 = vpack.c.b16 %v5597, %v5593
        %v6430 = vpack.c.b16 %v5598, %v5594
        %v6431 = vpack.c.b16 %v5599, %v5595
        %v6432 = vpack.c.b16 %v5604, %v5600
        %v6433 = vpack.c.b16 %v5605, %v5601
        %v6434 = vpack.c.b16 %v5606, %v5602
        %v6435 = vpack.c.b16 %v5607, %v5603
        %v6436 = vpack.c.b16 %v5612, %v5608
        %v6437 = vpack.c.b16 %v5613, %v5609
        %v6438 = vpack.c.b16 %v5614, %v5610
        %v6439 = vpack.c.b16 %v5615, %v5611
        %v6440 = vpack.c.b16 %v5620, %v5616
        %v6441 = vpack.c.b16 %v5621, %v5617
        %v6442 = vpack.c.b16 %v5622, %v5618
        %v6443 = vpack.c.b16 %v5623, %v5619
        %v6444 = vpack.c.b16 %v5628, %v5624
        %v6445 = vpack.c.b16 %v5629, %v5625
        %v6446 = vpack.c.b16 %v5630, %v5626
        %v6447 = vpack.c.b16 %v5631, %v5627
        %v6448 = vpack.c.b16 %v5636, %v5632
        %v6449 = vpack.c.b16 %v5637, %v5633
        %v6450 = vpack.c.b16 %v5638, %v5634
        %v6451 = vpack.c.b16 %v5639, %v5635
        %v6452 = vpack.c.b16 %v5644, %v5640
        %v6453 = vpack.c.b16 %v5645, %v5641
        %v6454 = vpack.c.b16 %v5646, %v5642
        %v6455 = vpack.c.b16 %v5647, %v5643
        %v6456 = vpack.c.b16 %v5652, %v5648
        %v6457 = vpack.c.b16 %v5653, %v5649
        %v6458 = vpack.c.b16 %v5654, %v5650
        %v6459 = vpack.c.b16 %v5655, %v5651
        %v6460 = vpack.c.b16 %v5660, %v5656
        %v6461 = vpack.c.b16 %v5661, %v5657
        %v6462 = vpack.c.b16 %v5662, %v5658
        %v6463 = vpack.c.b16 %v5663, %v5659
        %v6464 = vpack.c.b16 %v5668, %v5664
        %v6465 = vpack.c.b16 %v5669, %v5665
        %v6466 = vpack.c.b16 %v5670, %v5666
        %v6467 = vpack.c.b16 %v5671, %v5667
        %v6468 = vpack.c.b16 %v5676, %v5672
        %v6469 = vpack.c.b16 %v5677, %v5673
        %v6470 = vpack.c.b16 %v5678, %v5674
        %v6471 = vpack.c.b16 %v5679, %v5675
        %v6472 = vpack.c.b16 %v5684, %v5680
        %v6473 = vpack.c.b16 %v5685, %v5681
        %v6474 = vpack.c.b16 %v5686, %v5682
        %v6475 = vpack.c.b16 %v5687, %v5683
        %v6476 = vpack.c.b16 %v5692, %v5688
        %v6477 = vpack.c.b16 %v5693, %v5689
        %v6478 = vpack.c.b16 %v5694, %v5690
        %v6479 = vpack.c.b16 %v5695, %v5691
        %v6480 = vpack.c.b16 %v5700, %v5696
        %v6481 = vpack.c.b16 %v5701, %v5697
        %v6482 = vpack.c.b16 %v5702, %v5698
        %v6483 = vpack.c.b16 %v5703, %v5699
        %v6484 = vpack.c.b16 %v5708, %v5704
        %v6485 = vpack.c.b16 %v5709, %v5705
        %v6486 = vpack.c.b16 %v5710, %v5706
        %v6487 = vpack.c.b16 %v5711, %v5707
        %v6488 = vpack.c.b16 %v5716, %v5712
        %v6489 = vpack.c.b16 %v5717, %v5713
        %v6490 = vpack.c.b16 %v5718, %v5714
        %v6491 = vpack.c.b16 %v5719, %v5715
        %v6492 = vpack.c.b16 %v5724, %v5720
        %v6493 = vpack.c.b16 %v5725, %v5721
        %v6494 = vpack.c.b16 %v5726, %v5722
        %v6495 = vpack.c.b16 %v5727, %v5723
        %v6496 = vpack.c.b16 %v5732, %v5728
        %v6497 = vpack.c.b16 %v5733, %v5729
        %v6498 = vpack.c.b16 %v5734, %v5730
        %v6499 = vpack.c.b16 %v5735, %v5731
        %v6500 = vpack.c.b16 %v5740, %v5736
        %v6501 = vpack.c.b16 %v5741, %v5737
        %v6502 = vpack.c.b16 %v5742, %v5738
        %v6503 = vpack.c.b16 %v5743, %v5739
        %v6504 = vpack.c.b16 %v5748, %v5744
        %v6505 = vpack.c.b16 %v5749, %v5745
        %v6506 = vpack.c.b16 %v5750, %v5746
        %v6507 = vpack.c.b16 %v5751, %v5747
        %v6508 = vpack.c.b16 %v5756, %v5752
        %v6509 = vpack.c.b16 %v5757, %v5753
        %v6510 = vpack.c.b16 %v5758, %v5754
        %v6511 = vpack.c.b16 %v5759, %v5755
        %v6512 = vpack.c.b16 %v5764, %v5760
        %v6513 = vpack.c.b16 %v5765, %v5761
        %v6514 = vpack.c.b16 %v5766, %v5762
        %v6515 = vpack.c.b16 %v5767, %v5763
        %v6516 = vpack.c.b16 %v5772, %v5768
        %v6517 = vpack.c.b16 %v5773, %v5769
        %v6518 = vpack.c.b16 %v5774, %v5770
        %v6519 = vpack.c.b16 %v5775, %v5771
        %v6520 = vpack.c.b16 %v5780, %v5776
        %v6521 = vpack.c.b16 %v5781, %v5777
        %v6522 = vpack.c.b16 %v5782, %v5778
        %v6523 = vpack.c.b16 %v5783, %v5779
        %v6524 = vpack.c.b16 %v5788, %v5784
        %v6525 = vpack.c.b16 %v5789, %v5785
        %v6526 = vpack.c.b16 %v5790, %v5786
        %v6527 = vpack.c.b16 %v5791, %v5787
        %v6528 = vpack.c.b16 %v5796, %v5792
        %v6529 = vpack.c.b16 %v5797, %v5793
        %v6530 = vpack.c.b16 %v5798, %v5794
        %v6531 = vpack.c.b16 %v5799, %v5795
        %v6532 = vpack.c.b16 %v5804, %v5800
        %v6533 = vpack.c.b16 %v5805, %v5801
        %v6534 = vpack.c.b16 %v5806, %v5802
        %v6535 = vpack.c.b16 %v5807, %v5803
        %v6536 = vpack.c.b16 %v5812, %v5808
        %v6537 = vpack.c.b16 %v5813, %v5809
        %v6538 = vpack.c.b16 %v5814, %v5810
        %v6539 = vpack.c.b16 %v5815, %v5811
        %v6540 = vpack.c.b16 %v5820, %v5816
        %v6541 = vpack.c.b16 %v5821, %v5817
        %v6542 = vpack.c.b16 %v5822, %v5818
        %v6543 = vpack.c.b16 %v5823, %v5819
        %v6544 = vpack.c.b16 %v5828, %v5824
        %v6545 = vpack.c.b16 %v5829, %v5825
        %v6546 = vpack.c.b16 %v5830, %v5826
        %v6547 = vpack.c.b16 %v5831, %v5827
        %v6548 = vpack.c.b16 %v5836, %v5832
        %v6549 = vpack.c.b16 %v5837, %v5833
        %v6550 = vpack.c.b16 %v5838, %v5834
        %v6551 = vpack.c.b16 %v5839, %v5835
        %v6552 = vpack.c.b16 %v5844, %v5840
        %v6553 = vpack.c.b16 %v5845, %v5841
        %v6554 = vpack.c.b16 %v5846, %v5842
        %v6555 = vpack.c.b16 %v5847, %v5843
        %v6556 = vpack.c.b16 %v5852, %v5848
        %v6557 = vpack.c.b16 %v5853, %v5849
        %v6558 = vpack.c.b16 %v5854, %v5850
        %v6559 = vpack.c.b16 %v5855, %v5851
        %v6560 = vpack.c.b16 %v5860, %v5856
        %v6561 = vpack.c.b16 %v5861, %v5857
        %v6562 = vpack.c.b16 %v5862, %v5858
        %v6563 = vpack.c.b16 %v5863, %v5859
        %v6564 = vpack.c.b16 %v5868, %v5864
        %v6565 = vpack.c.b16 %v5869, %v5865
        %v6566 = vpack.c.b16 %v5870, %v5866
        %v6567 = vpack.c.b16 %v5871, %v5867
        %v6568 = vpack.c.b16 %v5876, %v5872
        %v6569 = vpack.c.b16 %v5877, %v5873
        %v6570 = vpack.c.b16 %v5878, %v5874
        %v6571 = vpack.c.b16 %v5879, %v5875
        %v6572 = vpack.c.b16 %v5884, %v5880
        %v6573 = vpack.c.b16 %v5885, %v5881
        %v6574 = vpack.c.b16 %v5886, %v5882
        %v6575 = vpack.c.b16 %v5887, %v5883
        %v6576 = vpack.c.b16 %v5892, %v5888
        %v6577 = vpack.c.b16 %v5893, %v5889
        %v6578 = vpack.c.b16 %v5894, %v5890
        %v6579 = vpack.c.b16 %v5895, %v5891
        %v6580 = vpack.c.b16 %v5900, %v5896
        %v6581 = vpack.c.b16 %v5901, %v5897
        %v6582 = vpack.c.b16 %v5902, %v5898
        %v6583 = vpack.c.b16 %v5903, %v5899
        %v6584 = vpack.c.b16 %v5908, %v5904
        %v6585 = vpack.c.b16 %v5909, %v5905
        %v6586 = vpack.c.b16 %v5910, %v5906
        %v6587 = vpack.c.b16 %v5911, %v5907
        %v6588 = vpack.c.b16 %v5916, %v5912
        %v6589 = vpack.c.b16 %v5917, %v5913
        %v6590 = vpack.c.b16 %v5918, %v5914
        %v6591 = vpack.c.b16 %v5919, %v5915
        %v6592 = vpack.c.b16 %v5924, %v5920
        %v6593 = vpack.c.b16 %v5925, %v5921
        %v6594 = vpack.c.b16 %v5926, %v5922
        %v6595 = vpack.c.b16 %v5927, %v5923
        %v6596 = vpack.c.b16 %v5932, %v5928
        %v6597 = vpack.c.b16 %v5933, %v5929
        %v6598 = vpack.c.b16 %v5934, %v5930
        %v6599 = vpack.c.b16 %v5935, %v5931
        %v6600 = vpack.c.b16 %v5940, %v5936
        %v6601 = vpack.c.b16 %v5941, %v5937
        %v6602 = vpack.c.b16 %v5942, %v5938
        %v6603 = vpack.c.b16 %v5943, %v5939
        %v6604 = vpack.c.b16 %v5948, %v5944
        %v6605 = vpack.c.b16 %v5949, %v5945
        %v6606 = vpack.c.b16 %v5950, %v5946
        %v6607 = vpack.c.b16 %v5951, %v5947
        %v6608 = vpack.c.b16 %v5956, %v5952
        %v6609 = vpack.c.b16 %v5957, %v5953
        %v6610 = vpack.c.b16 %v5958, %v5954
        %v6611 = vpack.c.b16 %v5959, %v5955
        %v6612 = vpack.c.b16 %v5964, %v5960
        %v6613 = vpack.c.b16 %v5965, %v5961
        %v6614 = vpack.c.b16 %v5966, %v5962
        %v6615 = vpack.c.b16 %v5967, %v5963
        %v6616 = vpack.c.b16 %v5972, %v5968
        %v6617 = vpack.c.b16 %v5973, %v5969
        %v6618 = vpack.c.b16 %v5974, %v5970
        %v6619 = vpack.c.b16 %v5975, %v5971
        %v6620 = vpack.c.b16 %v5980, %v5976
        %v6621 = vpack.c.b16 %v5981, %v5977
        %v6622 = vpack.c.b16 %v5982, %v5978
        %v6623 = vpack.c.b16 %v5983, %v5979
        %v6624 = vpack.c.b16 %v5988, %v5984
        %v6625 = vpack.c.b16 %v5989, %v5985
        %v6626 = vpack.c.b16 %v5990, %v5986
        %v6627 = vpack.c.b16 %v5991, %v5987
        %v6628 = vpack.c.b16 %v5996, %v5992
        %v6629 = vpack.c.b16 %v5997, %v5993
        %v6630 = vpack.c.b16 %v5998, %v5994
        %v6631 = vpack.c.b16 %v5999, %v5995
        %v6632 = vpack.c.b16 %v6004, %v6000
        %v6633 = vpack.c.b16 %v6005, %v6001
        %v6634 = vpack.c.b16 %v6006, %v6002
        %v6635 = vpack.c.b16 %v6007, %v6003
        %v6636 = vpack.c.b16 %v6012, %v6008
        %v6637 = vpack.c.b16 %v6013, %v6009
        %v6638 = vpack.c.b16 %v6014, %v6010
        %v6639 = vpack.c.b16 %v6015, %v6011
        %v6640 = vpack.c.b16 %v6020, %v6016
        %v6641 = vpack.c.b16 %v6021, %v6017
        %v6642 = vpack.c.b16 %v6022, %v6018
        %v6643 = vpack.c.b16 %v6023, %v6019
        %v6644 = vpack.c.b16 %v6028, %v6024
        %v6645 = vpack.c.b16 %v6029, %v6025
        %v6646 = vpack.c.b16 %v6030, %v6026
        %v6647 = vpack.c.b16 %v6031, %v6027
        %v6648 = vpack.c.b16 %v6036, %v6032
        %v6649 = vpack.c.b16 %v6037, %v6033
        %v6650 = vpack.c.b16 %v6038, %v6034
        %v6651 = vpack.c.b16 %v6039, %v6035
        %v6652 = vpack.c.b16 %v6044, %v6040
        %v6653 = vpack.c.b16 %v6045, %v6041
        %v6654 = vpack.c.b16 %v6046, %v6042
        %v6655 = vpack.c.b16 %v6047, %v6043
        %v6656 = vpack.c.b16 %v6052, %v6048
        %v6657 = vpack.c.b16 %v6053, %v6049
        %v6658 = vpack.c.b16 %v6054, %v6050
        %v6659 = vpack.c.b16 %v6055, %v6051
        %v6660 = vpack.c.b16 %v6060, %v6056
        %v6661 = vpack.c.b16 %v6061, %v6057
        %v6662 = vpack.c.b16 %v6062, %v6058
        %v6663 = vpack.c.b16 %v6063, %v6059
        %v6664 = vpack.c.b16 %v6068, %v6064
        %v6665 = vpack.c.b16 %v6069, %v6065
        %v6666 = vpack.c.b16 %v6070, %v6066
        %v6667 = vpack.c.b16 %v6071, %v6067
        %v6668 = vpack.c.b16 %v6076, %v6072
        %v6669 = vpack.c.b16 %v6077, %v6073
        %v6670 = vpack.c.b16 %v6078, %v6074
        %v6671 = vpack.c.b16 %v6079, %v6075
        %v6672 = vpack.c.b16 %v6084, %v6080
        %v6673 = vpack.c.b16 %v6085, %v6081
        %v6674 = vpack.c.b16 %v6086, %v6082
        %v6675 = vpack.c.b16 %v6087, %v6083
        %v6676 = vpack.c.b16 %v6092, %v6088
        %v6677 = vpack.c.b16 %v6093, %v6089
        %v6678 = vpack.c.b16 %v6094, %v6090
        %v6679 = vpack.c.b16 %v6095, %v6091
        %v6680 = vpack.c.b16 %v6100, %v6096
        %v6681 = vpack.c.b16 %v6101, %v6097
        %v6682 = vpack.c.b16 %v6102, %v6098
        %v6683 = vpack.c.b16 %v6103, %v6099
        %v6684 = vpack.c.b16 %v6108, %v6104
        %v6685 = vpack.c.b16 %v6109, %v6105
        %v6686 = vpack.c.b16 %v6110, %v6106
        %v6687 = vpack.c.b16 %v6111, %v6107
        %v6688 = vpack.c.b16 %v6116, %v6112
        %v6689 = vpack.c.b16 %v6117, %v6113
        %v6690 = vpack.c.b16 %v6118, %v6114
        %v6691 = vpack.c.b16 %v6119, %v6115
        %v6692 = vpack.c.b16 %v6124, %v6120
        %v6693 = vpack.c.b16 %v6125, %v6121
        %v6694 = vpack.c.b16 %v6126, %v6122
        %v6695 = vpack.c.b16 %v6127, %v6123
        %v6696 = vpack.c.b16 %v6132, %v6128
        %v6697 = vpack.c.b16 %v6133, %v6129
        %v6698 = vpack.c.b16 %v6134, %v6130
        %v6699 = vpack.c.b16 %v6135, %v6131
        %v6700 = vpack.c.b16 %v6140, %v6136
        %v6701 = vpack.c.b16 %v6141, %v6137
        %v6702 = vpack.c.b16 %v6142, %v6138
        %v6703 = vpack.c.b16 %v6143, %v6139
        %v6704 = vpack.c.b16 %v6148, %v6144
        %v6705 = vpack.c.b16 %v6149, %v6145
        %v6706 = vpack.c.b16 %v6150, %v6146
        %v6707 = vpack.c.b16 %v6151, %v6147
        %v6708 = vpack.c.b16 %v6156, %v6152
        %v6709 = vpack.c.b16 %v6157, %v6153
        %v6710 = vpack.c.b16 %v6158, %v6154
        %v6711 = vpack.c.b16 %v6159, %v6155
        %v6712 = vpack.c.b16 %v6164, %v6160
        %v6713 = vpack.c.b16 %v6165, %v6161
        %v6714 = vpack.c.b16 %v6166, %v6162
        %v6715 = vpack.c.b16 %v6167, %v6163
        %v6716 = vpack.c.b16 %v6172, %v6168
        %v6717 = vpack.c.b16 %v6173, %v6169
        %v6718 = vpack.c.b16 %v6174, %v6170
        %v6719 = vpack.c.b16 %v6175, %v6171
        %v6720 = vpack.c.b16 %v6180, %v6176
        %v6721 = vpack.c.b16 %v6181, %v6177
        %v6722 = vpack.c.b16 %v6182, %v6178
        %v6723 = vpack.c.b16 %v6183, %v6179
        %v6724 = vpack.c.b16 %v6188, %v6184
        %v6725 = vpack.c.b16 %v6189, %v6185
        %v6726 = vpack.c.b16 %v6190, %v6186
        %v6727 = vpack.c.b16 %v6191, %v6187
        %v6728 = vpack.c.b16 %v6196, %v6192
        %v6729 = vpack.c.b16 %v6197, %v6193
        %v6730 = vpack.c.b16 %v6198, %v6194
        %v6731 = vpack.c.b16 %v6199, %v6195
        %v6732 = vpack.c.b16 %v6204, %v6200
        %v6733 = vpack.c.b16 %v6205, %v6201
        %v6734 = vpack.c.b16 %v6206, %v6202
        %v6735 = vpack.c.b16 %v6207, %v6203
        %v6736 = vpack.c.b16 %v6212, %v6208
        %v6737 = vpack.c.b16 %v6213, %v6209
        %v6738 = vpack.c.b16 %v6214, %v6210
        %v6739 = vpack.c.b16 %v6215, %v6211
        %v6740 = vpack.c.b16 %v6220, %v6216
        %v6741 = vpack.c.b16 %v6221, %v6217
        %v6742 = vpack.c.b16 %v6222, %v6218
        %v6743 = vpack.c.b16 %v6223, %v6219
        %v6744 = vpack.c.b16 %v6228, %v6224
        %v6745 = vpack.c.b16 %v6229, %v6225
        %v6746 = vpack.c.b16 %v6230, %v6226
        %v6747 = vpack.c.b16 %v6231, %v6227
        %v6748 = vpack.c.b16 %v6236, %v6232
        %v6749 = vpack.c.b16 %v6237, %v6233
        %v6750 = vpack.c.b16 %v6238, %v6234
        %v6751 = vpack.c.b16 %v6239, %v6235
        %v6752 = vpack.c.b16 %v6244, %v6240
        %v6753 = vpack.c.b16 %v6245, %v6241
        %v6754 = vpack.c.b16 %v6246, %v6242
        %v6755 = vpack.c.b16 %v6247, %v6243
        %v6756 = vpack.c.b16 %v6252, %v6248
        %v6757 = vpack.c.b16 %v6253, %v6249
        %v6758 = vpack.c.b16 %v6254, %v6250
        %v6759 = vpack.c.b16 %v6255, %v6251
        %v6760 = vpack.c.b16 %v6260, %v6256
        %v6761 = vpack.c.b16 %v6261, %v6257
        %v6762 = vpack.c.b16 %v6262, %v6258
        %v6763 = vpack.c.b16 %v6263, %v6259
        %v6764 = vpack.c.b16 %v6268, %v6264
        %v6765 = vpack.c.b16 %v6269, %v6265
        %v6766 = vpack.c.b16 %v6270, %v6266
        %v6767 = vpack.c.b16 %v6271, %v6267
        %v6768 = vpack.c.b16 %v6276, %v6272
        %v6769 = vpack.c.b16 %v6277, %v6273
        %v6770 = vpack.c.b16 %v6278, %v6274
        %v6771 = vpack.c.b16 %v6279, %v6275
        %v6772 = vpack.c.b16 %v6284, %v6280
        %v6773 = vpack.c.b16 %v6285, %v6281
        %v6774 = vpack.c.b16 %v6286, %v6282
        %v6775 = vpack.c.b16 %v6287, %v6283
        %v6776 = vpack.c.b16 %v6292, %v6288
        %v6777 = vpack.c.b16 %v6293, %v6289
        %v6778 = vpack.c.b16 %v6294, %v6290
        %v6779 = vpack.c.b16 %v6295, %v6291
        %v6780 = vpack.c.b16 %v6300, %v6296
        %v6781 = vpack.c.b16 %v6301, %v6297
        %v6782 = vpack.c.b16 %v6302, %v6298
        %v6783 = vpack.c.b16 %v6303, %v6299
        %v6784 = vpack.c.b16 %v6308, %v6304
        %v6785 = vpack.c.b16 %v6309, %v6305
        %v6786 = vpack.c.b16 %v6310, %v6306
        %v6787 = vpack.c.b16 %v6311, %v6307
        %v6788 = vpack.c.b16 %v6316, %v6312
        %v6789 = vpack.c.b16 %v6317, %v6313
        %v6790 = vpack.c.b16 %v6318, %v6314
        %v6791 = vpack.c.b16 %v6319, %v6315
        %v6792 = vpack.c.b16 %v6324, %v6320
        %v6793 = vpack.c.b16 %v6325, %v6321
        %v6794 = vpack.c.b16 %v6326, %v6322
        %v6795 = vpack.c.b16 %v6327, %v6323
        %v6796 = vpack.c.b16 %v6332, %v6328
        %v6797 = vpack.c.b16 %v6333, %v6329
        %v6798 = vpack.c.b16 %v6334, %v6330
        %v6799 = vpack.c.b16 %v6335, %v6331
        %v6800 = vpack.c.b16 %v6340, %v6336
        %v6801 = vpack.c.b16 %v6341, %v6337
        %v6802 = vpack.c.b16 %v6342, %v6338
        %v6803 = vpack.c.b16 %v6343, %v6339
        %v6804 = vpack.c.b16 %v6348, %v6344
        %v6805 = vpack.c.b16 %v6349, %v6345
        %v6806 = vpack.c.b16 %v6350, %v6346
        %v6807 = vpack.c.b16 %v6351, %v6347
        %v6808 = vpack.c.b16 %v6356, %v6352
        %v6809 = vpack.c.b16 %v6357, %v6353
        %v6810 = vpack.c.b16 %v6358, %v6354
        %v6811 = vpack.c.b16 %v6359, %v6355
        %v6812 = vpack.c.b16 %v6364, %v6360
        %v6813 = vpack.c.b16 %v6365, %v6361
        %v6814 = vpack.c.b16 %v6366, %v6362
        %v6815 = vpack.c.b16 %v6367, %v6363
        %7264 = vmatprep.subr.bf16.mxu0 %v6397
        %7265 = vmatpush1.bf16.msra.mxu0 %v6396
        %7266 = vmatprep.subr.bf16.mxu0 %v6393
        %7267 = vmatpush1.bf16.msra.mxu0 %v6392
        %7268 = vmatprep.subr.bf16.mxu0 %v6389
        %7269 = vmatpush1.bf16.msra.mxu0 %v6388
        %7270 = vmatprep.subr.bf16.mxu0 %v6385
        %7271 = vmatpush1.bf16.msra.mxu0 %v6384
        %7272 = vmatprep.subr.bf16.mxu0 %v6381
        %7273 = vmatpush1.bf16.msra.mxu0 %v6380
        %7274 = vmatprep.subr.bf16.mxu0 %v6377
        %7275 = vmatpush1.bf16.msra.mxu0 %v6376
        %7276 = vmatprep.subr.bf16.mxu0 %v6373
        %7277 = vmatpush1.bf16.msra.mxu0 %v6372
        %7278 = vmatprep.subr.bf16.mxu0 %v6369
        %7279 = vmatpush1.bf16.msra.mxu0 %v6368
        %7280 = vmatprep.subr.bf16.mxu0 %v6429
        %7281 = vmatpush2.bf16.msra.mxu0 %v6428
        %7282 = vmatprep.subr.bf16.mxu0 %v6425
        %7283 = vmatpush2.bf16.msra.mxu0 %v6424
        %7284 = vmatprep.subr.bf16.mxu0 %v6421
        %7285 = vmatpush2.bf16.msra.mxu0 %v6420
        %7286 = vmatprep.subr.bf16.mxu0 %v6417
        %7287 = vmatpush2.bf16.msra.mxu0 %v6416
        %7288 = vmatprep.subr.bf16.mxu0 %v6413
        %7289 = vmatpush2.bf16.msra.mxu0 %v6412
        %7290 = vmatprep.subr.bf16.mxu0 %v6409
        %7291 = vmatpush2.bf16.msra.mxu0 %v6408
        %7292 = vmatprep.subr.bf16.mxu0 %v6405
        %7293 = vmatpush2.bf16.msra.mxu0 %v6404
        %7294 = vmatprep.subr.bf16.mxu0 %v6401
        %7295 = vmatpush2.bf16.msra.mxu0 %v6400
        %7296 = vmatprep.mubr.bf16.mxu0 %v552
        %7297 = vmatmul.mubr.bf16.gmra.mxu0 %v551
        %v7298 = vpop.f32.mrf.mxu0
        %v7299 = vadd.f32 %v5007, %v7298
        %v7300 = vpop.f32.mrf.mxu0
        %v7301 = vadd.f32 %v5011, %v7300
        %v7302 = vpop.f32.mrf.mxu0
        %v7303 = vpop.f32.mrf.mxu0
        %7304 = vdwg.mxu0
        %7305 = vmatprep.subr.bf16.mxu0 %v6461
        %7306 = vmatpush1.bf16.msra.mxu0 %v6460
        %7307 = vmatprep.subr.bf16.mxu0 %v6457
        %7308 = vmatpush1.bf16.msra.mxu0 %v6456
        %7309 = vmatprep.subr.bf16.mxu0 %v6453
        %7310 = vmatpush1.bf16.msra.mxu0 %v6452
        %7311 = vmatprep.subr.bf16.mxu0 %v6449
        %7312 = vmatpush1.bf16.msra.mxu0 %v6448
        %7313 = vmatprep.subr.bf16.mxu0 %v6445
        %7314 = vmatpush1.bf16.msra.mxu0 %v6444
        %7315 = vmatprep.subr.bf16.mxu0 %v6441
        %7316 = vmatpush1.bf16.msra.mxu0 %v6440
        %7317 = vmatprep.subr.bf16.mxu0 %v6437
        %7318 = vmatpush1.bf16.msra.mxu0 %v6436
        %7319 = vmatprep.subr.bf16.mxu0 %v6433
        %7320 = vmatpush1.bf16.msra.mxu0 %v6432
        %7321 = vmatprep.subr.bf16.mxu0 %v6493
        %7322 = vmatpush2.bf16.msra.mxu0 %v6492
        %7323 = vmatprep.subr.bf16.mxu0 %v6489
        %7324 = vmatpush2.bf16.msra.mxu0 %v6488
        %7325 = vmatprep.subr.bf16.mxu0 %v6485
        %7326 = vmatpush2.bf16.msra.mxu0 %v6484
        %7327 = vmatprep.subr.bf16.mxu0 %v6481
        %7328 = vmatpush2.bf16.msra.mxu0 %v6480
        %7329 = vmatprep.subr.bf16.mxu0 %v6477
        %7330 = vmatpush2.bf16.msra.mxu0 %v6476
        %7331 = vmatprep.subr.bf16.mxu0 %v6473
        %7332 = vmatpush2.bf16.msra.mxu0 %v6472
        %7333 = vmatprep.subr.bf16.mxu0 %v6469
        %7334 = vmatpush2.bf16.msra.mxu0 %v6468
        %7335 = vmatprep.subr.bf16.mxu0 %v6465
        %7336 = vmatpush2.bf16.msra.mxu0 %v6464
        %7337 = vmatprep.mubr.bf16.mxu0 %v554
        %7338 = vmatmul.mubr.bf16.gmra.mxu0 %v553
        %v7339 = vpop.f32.mrf.mxu0
        %v7340 = vadd.f32 %v7299, %v7339
        %v7341 = vpop.f32.mrf.mxu0
        %v7342 = vadd.f32 %v7301, %v7341
        %v7343 = vpop.f32.mrf.mxu0
        %v7344 = vpop.f32.mrf.mxu0
        %7345 = vdwg.mxu0
        %7346 = vmatprep.subr.bf16.mxu0 %v6525
        %7347 = vmatpush1.bf16.msra.mxu0 %v6524
        %7348 = vmatprep.subr.bf16.mxu0 %v6521
        %7349 = vmatpush1.bf16.msra.mxu0 %v6520
        %7350 = vmatprep.subr.bf16.mxu0 %v6517
        %7351 = vmatpush1.bf16.msra.mxu0 %v6516
        %7352 = vmatprep.subr.bf16.mxu0 %v6513
        %7353 = vmatpush1.bf16.msra.mxu0 %v6512
        %7354 = vmatprep.subr.bf16.mxu0 %v6509
        %7355 = vmatpush1.bf16.msra.mxu0 %v6508
        %7356 = vmatprep.subr.bf16.mxu0 %v6505
        %7357 = vmatpush1.bf16.msra.mxu0 %v6504
        %7358 = vmatprep.subr.bf16.mxu0 %v6501
        %7359 = vmatpush1.bf16.msra.mxu0 %v6500
        %7360 = vmatprep.subr.bf16.mxu0 %v6497
        %7361 = vmatpush1.bf16.msra.mxu0 %v6496
        %7362 = vmatprep.subr.bf16.mxu0 %v6557
        %7363 = vmatpush2.bf16.msra.mxu0 %v6556
        %7364 = vmatprep.subr.bf16.mxu0 %v6553
        %7365 = vmatpush2.bf16.msra.mxu0 %v6552
        %7366 = vmatprep.subr.bf16.mxu0 %v6549
        %7367 = vmatpush2.bf16.msra.mxu0 %v6548
        %7368 = vmatprep.subr.bf16.mxu0 %v6545
        %7369 = vmatpush2.bf16.msra.mxu0 %v6544
        %7370 = vmatprep.subr.bf16.mxu0 %v6541
        %7371 = vmatpush2.bf16.msra.mxu0 %v6540
        %7372 = vmatprep.subr.bf16.mxu0 %v6537
        %7373 = vmatpush2.bf16.msra.mxu0 %v6536
        %7374 = vmatprep.subr.bf16.mxu0 %v6533
        %7375 = vmatpush2.bf16.msra.mxu0 %v6532
        %7376 = vmatprep.subr.bf16.mxu0 %v6529
        %7377 = vmatpush2.bf16.msra.mxu0 %v6528
        %7378 = vmatprep.mubr.bf16.mxu0 %v556
        %7379 = vmatmul.mubr.bf16.gmra.mxu0 %v555
        %v7380 = vpop.f32.mrf.mxu0
        %v7381 = vadd.f32 %v7340, %v7380
        %v7382 = vpop.f32.mrf.mxu0
        %v7383 = vadd.f32 %v7342, %v7382
        %v7384 = vpop.f32.mrf.mxu0
        %v7385 = vpop.f32.mrf.mxu0
        %7386 = vdwg.mxu0
        %7387 = vmatprep.subr.bf16.mxu0 %v6589
        %7388 = vmatpush1.bf16.msra.mxu0 %v6588
        %7389 = vmatprep.subr.bf16.mxu0 %v6585
        %7390 = vmatpush1.bf16.msra.mxu0 %v6584
        %7391 = vmatprep.subr.bf16.mxu0 %v6581
        %7392 = vmatpush1.bf16.msra.mxu0 %v6580
        %7393 = vmatprep.subr.bf16.mxu0 %v6577
        %7394 = vmatpush1.bf16.msra.mxu0 %v6576
        %7395 = vmatprep.subr.bf16.mxu0 %v6573
        %7396 = vmatpush1.bf16.msra.mxu0 %v6572
        %7397 = vmatprep.subr.bf16.mxu0 %v6569
        %7398 = vmatpush1.bf16.msra.mxu0 %v6568
        %7399 = vmatprep.subr.bf16.mxu0 %v6565
        %7400 = vmatpush1.bf16.msra.mxu0 %v6564
        %7401 = vmatprep.subr.bf16.mxu0 %v6561
        %7402 = vmatpush1.bf16.msra.mxu0 %v6560
        %7403 = vmatprep.subr.bf16.mxu0 %v6621
        %7404 = vmatpush2.bf16.msra.mxu0 %v6620
        %7405 = vmatprep.subr.bf16.mxu0 %v6617
        %7406 = vmatpush2.bf16.msra.mxu0 %v6616
        %7407 = vmatprep.subr.bf16.mxu0 %v6613
        %7408 = vmatpush2.bf16.msra.mxu0 %v6612
        %7409 = vmatprep.subr.bf16.mxu0 %v6609
        %7410 = vmatpush2.bf16.msra.mxu0 %v6608
        %7411 = vmatprep.subr.bf16.mxu0 %v6605
        %7412 = vmatpush2.bf16.msra.mxu0 %v6604
        %7413 = vmatprep.subr.bf16.mxu0 %v6601
        %7414 = vmatpush2.bf16.msra.mxu0 %v6600
        %7415 = vmatprep.subr.bf16.mxu0 %v6597
        %7416 = vmatpush2.bf16.msra.mxu0 %v6596
        %7417 = vmatprep.subr.bf16.mxu0 %v6593
        %7418 = vmatpush2.bf16.msra.mxu0 %v6592
        %7419 = vmatprep.mubr.bf16.mxu0 %v558
        %7420 = vmatmul.mubr.bf16.gmra.mxu0 %v557
        %v7421 = vpop.f32.mrf.mxu0
        %v7422 = vadd.f32 %v7381, %v7421
        %v7423 = vpop.f32.mrf.mxu0
        %v7424 = vadd.f32 %v7383, %v7423
        %v7425 = vpop.f32.mrf.mxu0
        %v7426 = vpop.f32.mrf.mxu0
        %7427 = vdwg.mxu0
        %7428 = vmatprep.subr.bf16.mxu0 %v6653
        %7429 = vmatpush1.bf16.msra.mxu0 %v6652
        %7430 = vmatprep.subr.bf16.mxu0 %v6649
        %7431 = vmatpush1.bf16.msra.mxu0 %v6648
        %7432 = vmatprep.subr.bf16.mxu0 %v6645
        %7433 = vmatpush1.bf16.msra.mxu0 %v6644
        %7434 = vmatprep.subr.bf16.mxu0 %v6641
        %7435 = vmatpush1.bf16.msra.mxu0 %v6640
        %7436 = vmatprep.subr.bf16.mxu0 %v6637
        %7437 = vmatpush1.bf16.msra.mxu0 %v6636
        %7438 = vmatprep.subr.bf16.mxu0 %v6633
        %7439 = vmatpush1.bf16.msra.mxu0 %v6632
        %7440 = vmatprep.subr.bf16.mxu0 %v6629
        %7441 = vmatpush1.bf16.msra.mxu0 %v6628
        %7442 = vmatprep.subr.bf16.mxu0 %v6625
        %7443 = vmatpush1.bf16.msra.mxu0 %v6624
        %7444 = vmatprep.subr.bf16.mxu0 %v6685
        %7445 = vmatpush2.bf16.msra.mxu0 %v6684
        %7446 = vmatprep.subr.bf16.mxu0 %v6681
        %7447 = vmatpush2.bf16.msra.mxu0 %v6680
        %7448 = vmatprep.subr.bf16.mxu0 %v6677
        %7449 = vmatpush2.bf16.msra.mxu0 %v6676
        %7450 = vmatprep.subr.bf16.mxu0 %v6673
        %7451 = vmatpush2.bf16.msra.mxu0 %v6672
        %7452 = vmatprep.subr.bf16.mxu0 %v6669
        %7453 = vmatpush2.bf16.msra.mxu0 %v6668
        %7454 = vmatprep.subr.bf16.mxu0 %v6665
        %7455 = vmatpush2.bf16.msra.mxu0 %v6664
        %7456 = vmatprep.subr.bf16.mxu0 %v6661
        %7457 = vmatpush2.bf16.msra.mxu0 %v6660
        %7458 = vmatprep.subr.bf16.mxu0 %v6657
        %7459 = vmatpush2.bf16.msra.mxu0 %v6656
        %7460 = vmatprep.mubr.bf16.mxu0 %v560
        %7461 = vmatmul.mubr.bf16.gmra.mxu0 %v559
        %v7462 = vpop.f32.mrf.mxu0
        %v7463 = vadd.f32 %v7422, %v7462
        %v7464 = vpop.f32.mrf.mxu0
        %v7465 = vadd.f32 %v7424, %v7464
        %v7466 = vpop.f32.mrf.mxu0
        %v7467 = vpop.f32.mrf.mxu0
        %7468 = vdwg.mxu0
        %7469 = vmatprep.subr.bf16.mxu0 %v6717
        %7470 = vmatpush1.bf16.msra.mxu0 %v6716
        %7471 = vmatprep.subr.bf16.mxu0 %v6713
        %7472 = vmatpush1.bf16.msra.mxu0 %v6712
        %7473 = vmatprep.subr.bf16.mxu0 %v6709
        %7474 = vmatpush1.bf16.msra.mxu0 %v6708
        %7475 = vmatprep.subr.bf16.mxu0 %v6705
        %7476 = vmatpush1.bf16.msra.mxu0 %v6704
        %7477 = vmatprep.subr.bf16.mxu0 %v6701
        %7478 = vmatpush1.bf16.msra.mxu0 %v6700
        %7479 = vmatprep.subr.bf16.mxu0 %v6697
        %7480 = vmatpush1.bf16.msra.mxu0 %v6696
        %7481 = vmatprep.subr.bf16.mxu0 %v6693
        %7482 = vmatpush1.bf16.msra.mxu0 %v6692
        %7483 = vmatprep.subr.bf16.mxu0 %v6689
        %7484 = vmatpush1.bf16.msra.mxu0 %v6688
        %7485 = vmatprep.subr.bf16.mxu0 %v6749
        %7486 = vmatpush2.bf16.msra.mxu0 %v6748
        %7487 = vmatprep.subr.bf16.mxu0 %v6745
        %7488 = vmatpush2.bf16.msra.mxu0 %v6744
        %7489 = vmatprep.subr.bf16.mxu0 %v6741
        %7490 = vmatpush2.bf16.msra.mxu0 %v6740
        %7491 = vmatprep.subr.bf16.mxu0 %v6737
        %7492 = vmatpush2.bf16.msra.mxu0 %v6736
        %7493 = vmatprep.subr.bf16.mxu0 %v6733
        %7494 = vmatpush2.bf16.msra.mxu0 %v6732
        %7495 = vmatprep.subr.bf16.mxu0 %v6729
        %7496 = vmatpush2.bf16.msra.mxu0 %v6728
        %7497 = vmatprep.subr.bf16.mxu0 %v6725
        %7498 = vmatpush2.bf16.msra.mxu0 %v6724
        %7499 = vmatprep.subr.bf16.mxu0 %v6721
        %7500 = vmatpush2.bf16.msra.mxu0 %v6720
        %7501 = vmatprep.mubr.bf16.mxu0 %v562
        %7502 = vmatmul.mubr.bf16.gmra.mxu0 %v561
        %v7503 = vpop.f32.mrf.mxu0
        %v7504 = vadd.f32 %v7463, %v7503
        %v7505 = vpop.f32.mrf.mxu0
        %v7506 = vadd.f32 %v7465, %v7505
        %v7507 = vpop.f32.mrf.mxu0
        %v7508 = vpop.f32.mrf.mxu0
        %7509 = vdwg.mxu0
        %7510 = vmatprep.subr.bf16.mxu0 %v6781
        %7511 = vmatpush1.bf16.msra.mxu0 %v6780
        %7512 = vmatprep.subr.bf16.mxu0 %v6777
        %7513 = vmatpush1.bf16.msra.mxu0 %v6776
        %7514 = vmatprep.subr.bf16.mxu0 %v6773
        %7515 = vmatpush1.bf16.msra.mxu0 %v6772
        %7516 = vmatprep.subr.bf16.mxu0 %v6769
        %7517 = vmatpush1.bf16.msra.mxu0 %v6768
        %7518 = vmatprep.subr.bf16.mxu0 %v6765
        %7519 = vmatpush1.bf16.msra.mxu0 %v6764
        %7520 = vmatprep.subr.bf16.mxu0 %v6761
        %7521 = vmatpush1.bf16.msra.mxu0 %v6760
        %7522 = vmatprep.subr.bf16.mxu0 %v6757
        %7523 = vmatpush1.bf16.msra.mxu0 %v6756
        %7524 = vmatprep.subr.bf16.mxu0 %v6753
        %7525 = vmatpush1.bf16.msra.mxu0 %v6752
        %7526 = vmatprep.subr.bf16.mxu0 %v6813
        %7527 = vmatpush2.bf16.msra.mxu0 %v6812
        %7528 = vmatprep.subr.bf16.mxu0 %v6809
        %7529 = vmatpush2.bf16.msra.mxu0 %v6808
        %7530 = vmatprep.subr.bf16.mxu0 %v6805
        %7531 = vmatpush2.bf16.msra.mxu0 %v6804
        %7532 = vmatprep.subr.bf16.mxu0 %v6801
        %7533 = vmatpush2.bf16.msra.mxu0 %v6800
        %7534 = vmatprep.subr.bf16.mxu0 %v6797
        %7535 = vmatpush2.bf16.msra.mxu0 %v6796
        %7536 = vmatprep.subr.bf16.mxu0 %v6793
        %7537 = vmatpush2.bf16.msra.mxu0 %v6792
        %7538 = vmatprep.subr.bf16.mxu0 %v6789
        %7539 = vmatpush2.bf16.msra.mxu0 %v6788
        %7540 = vmatprep.subr.bf16.mxu0 %v6785
        %7541 = vmatpush2.bf16.msra.mxu0 %v6784
        %7542 = vmatprep.mubr.bf16.mxu0 %v564
        %7543 = vmatmul.mubr.bf16.gmra.mxu0 %v563
        %v7544 = vpop.f32.mrf.mxu0
        %v7545 = vadd.f32 %v7504, %v7544
        %v7546 = vpop.f32.mrf.mxu0
        %v7547 = vadd.f32 %v7506, %v7546
        %v7548 = vpop.f32.mrf.mxu0
        %v7549 = vpop.f32.mrf.mxu0
        %7550 = vdwg.mxu0
        %7551 = vmatprep.subr.bf16.mxu0 %v6399
        %7552 = vmatpush1.bf16.msra.mxu0 %v6398
        %7553 = vmatprep.subr.bf16.mxu0 %v6395
        %7554 = vmatpush1.bf16.msra.mxu0 %v6394
        %7555 = vmatprep.subr.bf16.mxu0 %v6391
        %7556 = vmatpush1.bf16.msra.mxu0 %v6390
        %7557 = vmatprep.subr.bf16.mxu0 %v6387
        %7558 = vmatpush1.bf16.msra.mxu0 %v6386
        %7559 = vmatprep.subr.bf16.mxu0 %v6383
        %7560 = vmatpush1.bf16.msra.mxu0 %v6382
        %7561 = vmatprep.subr.bf16.mxu0 %v6379
        %7562 = vmatpush1.bf16.msra.mxu0 %v6378
        %7563 = vmatprep.subr.bf16.mxu0 %v6375
        %7564 = vmatpush1.bf16.msra.mxu0 %v6374
        %7565 = vmatprep.subr.bf16.mxu0 %v6371
        %7566 = vmatpush1.bf16.msra.mxu0 %v6370
        %7567 = vmatprep.subr.bf16.mxu0 %v6431
        %7568 = vmatpush2.bf16.msra.mxu0 %v6430
        %7569 = vmatprep.subr.bf16.mxu0 %v6427
        %7570 = vmatpush2.bf16.msra.mxu0 %v6426
        %7571 = vmatprep.subr.bf16.mxu0 %v6423
        %7572 = vmatpush2.bf16.msra.mxu0 %v6422
        %7573 = vmatprep.subr.bf16.mxu0 %v6419
        %7574 = vmatpush2.bf16.msra.mxu0 %v6418
        %7575 = vmatprep.subr.bf16.mxu0 %v6415
        %7576 = vmatpush2.bf16.msra.mxu0 %v6414
        %7577 = vmatprep.subr.bf16.mxu0 %v6411
        %7578 = vmatpush2.bf16.msra.mxu0 %v6410
        %7579 = vmatprep.subr.bf16.mxu0 %v6407
        %7580 = vmatpush2.bf16.msra.mxu0 %v6406
        %7581 = vmatprep.subr.bf16.mxu0 %v6403
        %7582 = vmatpush2.bf16.msra.mxu0 %v6402
        %7583 = vmatprep.mubr.bf16.mxu0 %v552
        %7584 = vmatmul.mubr.bf16.gmra.mxu0 %v551
        %v7585 = vpop.f32.mrf.mxu0
        %v7586 = vadd.f32 %v5015, %v7585
        %v7587 = vpop.f32.mrf.mxu0
        %v7588 = vadd.f32 %v5019, %v7587
        %v7589 = vpop.f32.mrf.mxu0
        %v7590 = vpop.f32.mrf.mxu0
        %7591 = vdwg.mxu0
        %7592 = vmatprep.subr.bf16.mxu0 %v6463
        %7593 = vmatpush1.bf16.msra.mxu0 %v6462
        %7594 = vmatprep.subr.bf16.mxu0 %v6459
        %7595 = vmatpush1.bf16.msra.mxu0 %v6458
        %7596 = vmatprep.subr.bf16.mxu0 %v6455
        %7597 = vmatpush1.bf16.msra.mxu0 %v6454
        %7598 = vmatprep.subr.bf16.mxu0 %v6451
        %7599 = vmatpush1.bf16.msra.mxu0 %v6450
        %7600 = vmatprep.subr.bf16.mxu0 %v6447
        %7601 = vmatpush1.bf16.msra.mxu0 %v6446
        %7602 = vmatprep.subr.bf16.mxu0 %v6443
        %7603 = vmatpush1.bf16.msra.mxu0 %v6442
        %7604 = vmatprep.subr.bf16.mxu0 %v6439
        %7605 = vmatpush1.bf16.msra.mxu0 %v6438
        %7606 = vmatprep.subr.bf16.mxu0 %v6435
        %7607 = vmatpush1.bf16.msra.mxu0 %v6434
        %7608 = vmatprep.subr.bf16.mxu0 %v6495
        %7609 = vmatpush2.bf16.msra.mxu0 %v6494
        %7610 = vmatprep.subr.bf16.mxu0 %v6491
        %7611 = vmatpush2.bf16.msra.mxu0 %v6490
        %7612 = vmatprep.subr.bf16.mxu0 %v6487
        %7613 = vmatpush2.bf16.msra.mxu0 %v6486
        %7614 = vmatprep.subr.bf16.mxu0 %v6483
        %7615 = vmatpush2.bf16.msra.mxu0 %v6482
        %7616 = vmatprep.subr.bf16.mxu0 %v6479
        %7617 = vmatpush2.bf16.msra.mxu0 %v6478
        %7618 = vmatprep.subr.bf16.mxu0 %v6475
        %7619 = vmatpush2.bf16.msra.mxu0 %v6474
        %7620 = vmatprep.subr.bf16.mxu0 %v6471
        %7621 = vmatpush2.bf16.msra.mxu0 %v6470
        %7622 = vmatprep.subr.bf16.mxu0 %v6467
        %7623 = vmatpush2.bf16.msra.mxu0 %v6466
        %7624 = vmatprep.mubr.bf16.mxu0 %v554
        %7625 = vmatmul.mubr.bf16.gmra.mxu0 %v553
        %v7626 = vpop.f32.mrf.mxu0
        %v7627 = vadd.f32 %v7586, %v7626
        %v7628 = vpop.f32.mrf.mxu0
        %v7629 = vadd.f32 %v7588, %v7628
        %v7630 = vpop.f32.mrf.mxu0
        %v7631 = vpop.f32.mrf.mxu0
        %7632 = vdwg.mxu0
        %7633 = vmatprep.subr.bf16.mxu0 %v6527
        %7634 = vmatpush1.bf16.msra.mxu0 %v6526
        %7635 = vmatprep.subr.bf16.mxu0 %v6523
        %7636 = vmatpush1.bf16.msra.mxu0 %v6522
        %7637 = vmatprep.subr.bf16.mxu0 %v6519
        %7638 = vmatpush1.bf16.msra.mxu0 %v6518
        %7639 = vmatprep.subr.bf16.mxu0 %v6515
        %7640 = vmatpush1.bf16.msra.mxu0 %v6514
        %7641 = vmatprep.subr.bf16.mxu0 %v6511
        %7642 = vmatpush1.bf16.msra.mxu0 %v6510
        %7643 = vmatprep.subr.bf16.mxu0 %v6507
        %7644 = vmatpush1.bf16.msra.mxu0 %v6506
        %7645 = vmatprep.subr.bf16.mxu0 %v6503
        %7646 = vmatpush1.bf16.msra.mxu0 %v6502
        %7647 = vmatprep.subr.bf16.mxu0 %v6499
        %7648 = vmatpush1.bf16.msra.mxu0 %v6498
        %7649 = vmatprep.subr.bf16.mxu0 %v6559
        %7650 = vmatpush2.bf16.msra.mxu0 %v6558
        %7651 = vmatprep.subr.bf16.mxu0 %v6555
        %7652 = vmatpush2.bf16.msra.mxu0 %v6554
        %7653 = vmatprep.subr.bf16.mxu0 %v6551
        %7654 = vmatpush2.bf16.msra.mxu0 %v6550
        %7655 = vmatprep.subr.bf16.mxu0 %v6547
        %7656 = vmatpush2.bf16.msra.mxu0 %v6546
        %7657 = vmatprep.subr.bf16.mxu0 %v6543
        %7658 = vmatpush2.bf16.msra.mxu0 %v6542
        %7659 = vmatprep.subr.bf16.mxu0 %v6539
        %7660 = vmatpush2.bf16.msra.mxu0 %v6538
        %7661 = vmatprep.subr.bf16.mxu0 %v6535
        %7662 = vmatpush2.bf16.msra.mxu0 %v6534
        %7663 = vmatprep.subr.bf16.mxu0 %v6531
        %7664 = vmatpush2.bf16.msra.mxu0 %v6530
        %7665 = vmatprep.mubr.bf16.mxu0 %v556
        %7666 = vmatmul.mubr.bf16.gmra.mxu0 %v555
        %v7667 = vpop.f32.mrf.mxu0
        %v7668 = vadd.f32 %v7627, %v7667
        %v7669 = vpop.f32.mrf.mxu0
        %v7670 = vadd.f32 %v7629, %v7669
        %v7671 = vpop.f32.mrf.mxu0
        %v7672 = vpop.f32.mrf.mxu0
        %7673 = vdwg.mxu0
        %7674 = vmatprep.subr.bf16.mxu0 %v6591
        %7675 = vmatpush1.bf16.msra.mxu0 %v6590
        %7676 = vmatprep.subr.bf16.mxu0 %v6587
        %7677 = vmatpush1.bf16.msra.mxu0 %v6586
        %7678 = vmatprep.subr.bf16.mxu0 %v6583
        %7679 = vmatpush1.bf16.msra.mxu0 %v6582
        %7680 = vmatprep.subr.bf16.mxu0 %v6579
        %7681 = vmatpush1.bf16.msra.mxu0 %v6578
        %7682 = vmatprep.subr.bf16.mxu0 %v6575
        %7683 = vmatpush1.bf16.msra.mxu0 %v6574
        %7684 = vmatprep.subr.bf16.mxu0 %v6571
        %7685 = vmatpush1.bf16.msra.mxu0 %v6570
        %7686 = vmatprep.subr.bf16.mxu0 %v6567
        %7687 = vmatpush1.bf16.msra.mxu0 %v6566
        %7688 = vmatprep.subr.bf16.mxu0 %v6563
        %7689 = vmatpush1.bf16.msra.mxu0 %v6562
        %7690 = vmatprep.subr.bf16.mxu0 %v6623
        %7691 = vmatpush2.bf16.msra.mxu0 %v6622
        %7692 = vmatprep.subr.bf16.mxu0 %v6619
        %7693 = vmatpush2.bf16.msra.mxu0 %v6618
        %7694 = vmatprep.subr.bf16.mxu0 %v6615
        %7695 = vmatpush2.bf16.msra.mxu0 %v6614
        %7696 = vmatprep.subr.bf16.mxu0 %v6611
        %7697 = vmatpush2.bf16.msra.mxu0 %v6610
        %7698 = vmatprep.subr.bf16.mxu0 %v6607
        %7699 = vmatpush2.bf16.msra.mxu0 %v6606
        %7700 = vmatprep.subr.bf16.mxu0 %v6603
        %7701 = vmatpush2.bf16.msra.mxu0 %v6602
        %7702 = vmatprep.subr.bf16.mxu0 %v6599
        %7703 = vmatpush2.bf16.msra.mxu0 %v6598
        %7704 = vmatprep.subr.bf16.mxu0 %v6595
        %7705 = vmatpush2.bf16.msra.mxu0 %v6594
        %7706 = vmatprep.mubr.bf16.mxu0 %v558
        %7707 = vmatmul.mubr.bf16.gmra.mxu0 %v557
        %v7708 = vpop.f32.mrf.mxu0
        %v7709 = vadd.f32 %v7668, %v7708
        %v7710 = vpop.f32.mrf.mxu0
        %v7711 = vadd.f32 %v7670, %v7710
        %v7712 = vpop.f32.mrf.mxu0
        %v7713 = vpop.f32.mrf.mxu0
        %7714 = vdwg.mxu0
        %7715 = vmatprep.subr.bf16.mxu0 %v6655
        %7716 = vmatpush1.bf16.msra.mxu0 %v6654
        %7717 = vmatprep.subr.bf16.mxu0 %v6651
        %7718 = vmatpush1.bf16.msra.mxu0 %v6650
        %7719 = vmatprep.subr.bf16.mxu0 %v6647
        %7720 = vmatpush1.bf16.msra.mxu0 %v6646
        %7721 = vmatprep.subr.bf16.mxu0 %v6643
        %7722 = vmatpush1.bf16.msra.mxu0 %v6642
        %7723 = vmatprep.subr.bf16.mxu0 %v6639
        %7724 = vmatpush1.bf16.msra.mxu0 %v6638
        %7725 = vmatprep.subr.bf16.mxu0 %v6635
        %7726 = vmatpush1.bf16.msra.mxu0 %v6634
        %7727 = vmatprep.subr.bf16.mxu0 %v6631
        %7728 = vmatpush1.bf16.msra.mxu0 %v6630
        %7729 = vmatprep.subr.bf16.mxu0 %v6627
        %7730 = vmatpush1.bf16.msra.mxu0 %v6626
        %7731 = vmatprep.subr.bf16.mxu0 %v6687
        %7732 = vmatpush2.bf16.msra.mxu0 %v6686
        %7733 = vmatprep.subr.bf16.mxu0 %v6683
        %7734 = vmatpush2.bf16.msra.mxu0 %v6682
        %7735 = vmatprep.subr.bf16.mxu0 %v6679
        %7736 = vmatpush2.bf16.msra.mxu0 %v6678
        %7737 = vmatprep.subr.bf16.mxu0 %v6675
        %7738 = vmatpush2.bf16.msra.mxu0 %v6674
        %7739 = vmatprep.subr.bf16.mxu0 %v6671
        %7740 = vmatpush2.bf16.msra.mxu0 %v6670
        %7741 = vmatprep.subr.bf16.mxu0 %v6667
        %7742 = vmatpush2.bf16.msra.mxu0 %v6666
        %7743 = vmatprep.subr.bf16.mxu0 %v6663
        %7744 = vmatpush2.bf16.msra.mxu0 %v6662
        %7745 = vmatprep.subr.bf16.mxu0 %v6659
        %7746 = vmatpush2.bf16.msra.mxu0 %v6658
        %7747 = vmatprep.mubr.bf16.mxu0 %v560
        %7748 = vmatmul.mubr.bf16.gmra.mxu0 %v559
        %v7749 = vpop.f32.mrf.mxu0
        %v7750 = vadd.f32 %v7709, %v7749
        %v7751 = vpop.f32.mrf.mxu0
        %v7752 = vadd.f32 %v7711, %v7751
        %v7753 = vpop.f32.mrf.mxu0
        %v7754 = vpop.f32.mrf.mxu0
        %7755 = vdwg.mxu0
        %7756 = vmatprep.subr.bf16.mxu0 %v6719
        %7757 = vmatpush1.bf16.msra.mxu0 %v6718
        %7758 = vmatprep.subr.bf16.mxu0 %v6715
        %7759 = vmatpush1.bf16.msra.mxu0 %v6714
        %7760 = vmatprep.subr.bf16.mxu0 %v6711
        %7761 = vmatpush1.bf16.msra.mxu0 %v6710
        %7762 = vmatprep.subr.bf16.mxu0 %v6707
        %7763 = vmatpush1.bf16.msra.mxu0 %v6706
        %7764 = vmatprep.subr.bf16.mxu0 %v6703
        %7765 = vmatpush1.bf16.msra.mxu0 %v6702
        %7766 = vmatprep.subr.bf16.mxu0 %v6699
        %7767 = vmatpush1.bf16.msra.mxu0 %v6698
        %7768 = vmatprep.subr.bf16.mxu0 %v6695
        %7769 = vmatpush1.bf16.msra.mxu0 %v6694
        %7770 = vmatprep.subr.bf16.mxu0 %v6691
        %7771 = vmatpush1.bf16.msra.mxu0 %v6690
        %7772 = vmatprep.subr.bf16.mxu0 %v6751
        %7773 = vmatpush2.bf16.msra.mxu0 %v6750
        %7774 = vmatprep.subr.bf16.mxu0 %v6747
        %7775 = vmatpush2.bf16.msra.mxu0 %v6746
        %7776 = vmatprep.subr.bf16.mxu0 %v6743
        %7777 = vmatpush2.bf16.msra.mxu0 %v6742
        %7778 = vmatprep.subr.bf16.mxu0 %v6739
        %7779 = vmatpush2.bf16.msra.mxu0 %v6738
        %7780 = vmatprep.subr.bf16.mxu0 %v6735
        %7781 = vmatpush2.bf16.msra.mxu0 %v6734
        %7782 = vmatprep.subr.bf16.mxu0 %v6731
        %7783 = vmatpush2.bf16.msra.mxu0 %v6730
        %7784 = vmatprep.subr.bf16.mxu0 %v6727
        %7785 = vmatpush2.bf16.msra.mxu0 %v6726
        %7786 = vmatprep.subr.bf16.mxu0 %v6723
        %7787 = vmatpush2.bf16.msra.mxu0 %v6722
        %7788 = vmatprep.mubr.bf16.mxu0 %v562
        %7789 = vmatmul.mubr.bf16.gmra.mxu0 %v561
        %v7790 = vpop.f32.mrf.mxu0
        %v7791 = vadd.f32 %v7750, %v7790
        %v7792 = vpop.f32.mrf.mxu0
        %v7793 = vadd.f32 %v7752, %v7792
        %v7794 = vpop.f32.mrf.mxu0
        %v7795 = vpop.f32.mrf.mxu0
        %7796 = vdwg.mxu0
        %7797 = vmatprep.subr.bf16.mxu0 %v6783
        %7798 = vmatpush1.bf16.msra.mxu0 %v6782
        %7799 = vmatprep.subr.bf16.mxu0 %v6779
        %7800 = vmatpush1.bf16.msra.mxu0 %v6778
        %7801 = vmatprep.subr.bf16.mxu0 %v6775
        %7802 = vmatpush1.bf16.msra.mxu0 %v6774
        %7803 = vmatprep.subr.bf16.mxu0 %v6771
        %7804 = vmatpush1.bf16.msra.mxu0 %v6770
        %7805 = vmatprep.subr.bf16.mxu0 %v6767
        %7806 = vmatpush1.bf16.msra.mxu0 %v6766
        %7807 = vmatprep.subr.bf16.mxu0 %v6763
        %7808 = vmatpush1.bf16.msra.mxu0 %v6762
        %7809 = vmatprep.subr.bf16.mxu0 %v6759
        %7810 = vmatpush1.bf16.msra.mxu0 %v6758
        %7811 = vmatprep.subr.bf16.mxu0 %v6755
        %7812 = vmatpush1.bf16.msra.mxu0 %v6754
        %7813 = vmatprep.subr.bf16.mxu0 %v6815
        %7814 = vmatpush2.bf16.msra.mxu0 %v6814
        %7815 = vmatprep.subr.bf16.mxu0 %v6811
        %7816 = vmatpush2.bf16.msra.mxu0 %v6810
        %7817 = vmatprep.subr.bf16.mxu0 %v6807
        %7818 = vmatpush2.bf16.msra.mxu0 %v6806
        %7819 = vmatprep.subr.bf16.mxu0 %v6803
        %7820 = vmatpush2.bf16.msra.mxu0 %v6802
        %7821 = vmatprep.subr.bf16.mxu0 %v6799
        %7822 = vmatpush2.bf16.msra.mxu0 %v6798
        %7823 = vmatprep.subr.bf16.mxu0 %v6795
        %7824 = vmatpush2.bf16.msra.mxu0 %v6794
        %7825 = vmatprep.subr.bf16.mxu0 %v6791
        %7826 = vmatpush2.bf16.msra.mxu0 %v6790
        %7827 = vmatprep.subr.bf16.mxu0 %v6787
        %7828 = vmatpush2.bf16.msra.mxu0 %v6786
        %7829 = vmatprep.mubr.bf16.mxu0 %v564
        %7830 = vmatmul.mubr.bf16.gmra.mxu0 %v563
        %v7831 = vpop.f32.mrf.mxu0
        %v7832 = vadd.f32 %v7791, %v7831
        %v7833 = vpop.f32.mrf.mxu0
        %v7834 = vadd.f32 %v7793, %v7833
        %v7835 = vpop.f32.mrf.mxu0
        %v7836 = vpop.f32.mrf.mxu0
        %7837 = vdwg.mxu0
        %v7838 = vxor.u32 %v7545, 2147483648
        %v7839 = vxor.u32 %v7547, 2147483648
        %v7840 = vxor.u32 %v7832, 2147483648
        %v7841 = vxor.u32 %v7834, 2147483648
        %v7842 = vmul.f32 %v7838, 1.442695
        %v7843 = vpow.pop %v7842
        %v7844 = vmul.f32 %v7839, 1.442695
        %v7845 = vpow.pop %v7844
        %v7846 = vmul.f32 %v7840, 1.442695
        %v7847 = vpow.pop %v7846
        %v7848 = vmul.f32 %v7841, 1.442695
        %v7849 = vpow.pop %v7848
        %v7850 = vadd.f32 %v7843, 1.0
        %v7851 = vadd.f32 %v7845, 1.0
        %v7852 = vadd.f32 %v7847, 1.0
        %v7853 = vadd.f32 %v7849, 1.0
        %v7854 = vrcp.pop %v7850
        %v7855 = vmul.f32 1.0, %v7854
        %v7856 = vrcp.pop %v7851
        %v7857 = vmul.f32 1.0, %v7856
        %v7858 = vrcp.pop %v7852
        %v7859 = vmul.f32 1.0, %v7858
        %v7860 = vrcp.pop %v7853
        %v7861 = vmul.f32 1.0, %v7860
        %v7862 = vmul.f32 %v7545, %v7855
        %v7863 = vmul.f32 %v7547, %v7857
        %v7864 = vmul.f32 %v7832, %v7859
        %v7865 = vmul.f32 %v7834, %v7861
        %v7866 = vpack.c.bf16 %v7862, %v7862
        %v7867 = vpack.c.bf16 %v7863, %v7863
        %v7868 = vpack.c.bf16 %v7864, %v7864
        %v7869 = vpack.c.bf16 %v7865, %v7865
        %s7870 = scalar_lea.vmem %s382, 512 [#allocation6]
        %v7871 = vld [vmem:[%s7870] sm:$0xff]
        %v7872 = vld [vmem:[%s7870 + $0x8] sm:$0xff]
        %v7873 = vld [vmem:[%s7870 + $0x10] sm:$0xff]
        %v7874 = vld [vmem:[%s7870 + $0x18] sm:$0xff]
        %v7875 = vld [vmem:[%s7870 + $0x20] sm:$0xff]
        %v7876 = vld [vmem:[%s7870 + $0x28] sm:$0xff]
        %v7877 = vld [vmem:[%s7870 + $0x30] sm:$0xff]
        %v7878 = vld [vmem:[%s7870 + $0x38] sm:$0xff]
        %v7879 = vld [vmem:[%s7870 + $0x40] sm:$0xff]
        %v7880 = vld [vmem:[%s7870 + $0x48] sm:$0xff]
        %v7881 = vld [vmem:[%s7870 + $0x50] sm:$0xff]
        %v7882 = vld [vmem:[%s7870 + $0x58] sm:$0xff]
        %v7883 = vld [vmem:[%s7870 + $0x60] sm:$0xff]
        %v7884 = vld [vmem:[%s7870 + $0x68] sm:$0xff]
        %v7885 = vld [vmem:[%s7870 + $0x70] sm:$0xff]
        %v7886 = vld [vmem:[%s7870 + $0x78] sm:$0xff]
        %v7887 = vld [vmem:[%s7870 + $0x80] sm:$0xff]
        %v7888 = vld [vmem:[%s7870 + $0x88] sm:$0xff]
        %v7889 = vld [vmem:[%s7870 + $0x90] sm:$0xff]
        %v7890 = vld [vmem:[%s7870 + $0x98] sm:$0xff]
        %v7891 = vld [vmem:[%s7870 + $0xa0] sm:$0xff]
        %v7892 = vld [vmem:[%s7870 + $0xa8] sm:$0xff]
        %v7893 = vld [vmem:[%s7870 + $0xb0] sm:$0xff]
        %v7894 = vld [vmem:[%s7870 + $0xb8] sm:$0xff]
        %v7895 = vld [vmem:[%s7870 + $0xc0] sm:$0xff]
        %v7896 = vld [vmem:[%s7870 + $0xc8] sm:$0xff]
        %v7897 = vld [vmem:[%s7870 + $0xd0] sm:$0xff]
        %v7898 = vld [vmem:[%s7870 + $0xd8] sm:$0xff]
        %v7899 = vld [vmem:[%s7870 + $0xe0] sm:$0xff]
        %v7900 = vld [vmem:[%s7870 + $0xe8] sm:$0xff]
        %v7901 = vld [vmem:[%s7870 + $0xf0] sm:$0xff]
        %v7902 = vld [vmem:[%s7870 + $0xf8] sm:$0xff]
        %v7903 = vld [vmem:[%s7870 + $0x100] sm:$0xff]
        %v7904 = vld [vmem:[%s7870 + $0x108] sm:$0xff]
        %v7905 = vld [vmem:[%s7870 + $0x110] sm:$0xff]
        %v7906 = vld [vmem:[%s7870 + $0x118] sm:$0xff]
        %v7907 = vld [vmem:[%s7870 + $0x120] sm:$0xff]
        %v7908 = vld [vmem:[%s7870 + $0x128] sm:$0xff]
        %v7909 = vld [vmem:[%s7870 + $0x130] sm:$0xff]
        %v7910 = vld [vmem:[%s7870 + $0x138] sm:$0xff]
        %v7911 = vld [vmem:[%s7870 + $0x140] sm:$0xff]
        %v7912 = vld [vmem:[%s7870 + $0x148] sm:$0xff]
        %v7913 = vld [vmem:[%s7870 + $0x150] sm:$0xff]
        %v7914 = vld [vmem:[%s7870 + $0x158] sm:$0xff]
        %v7915 = vld [vmem:[%s7870 + $0x160] sm:$0xff]
        %v7916 = vld [vmem:[%s7870 + $0x168] sm:$0xff]
        %v7917 = vld [vmem:[%s7870 + $0x170] sm:$0xff]
        %v7918 = vld [vmem:[%s7870 + $0x178] sm:$0xff]
        %v7919 = vld [vmem:[%s7870 + $0x180] sm:$0xff]
        %v7920 = vld [vmem:[%s7870 + $0x188] sm:$0xff]
        %v7921 = vld [vmem:[%s7870 + $0x190] sm:$0xff]
        %v7922 = vld [vmem:[%s7870 + $0x198] sm:$0xff]
        %v7923 = vld [vmem:[%s7870 + $0x1a0] sm:$0xff]
        %v7924 = vld [vmem:[%s7870 + $0x1a8] sm:$0xff]
        %v7925 = vld [vmem:[%s7870 + $0x1b0] sm:$0xff]
        %v7926 = vld [vmem:[%s7870 + $0x1b8] sm:$0xff]
        %v7927 = vld [vmem:[%s7870 + $0x1c0] sm:$0xff]
        %v7928 = vld [vmem:[%s7870 + $0x1c8] sm:$0xff]
        %v7929 = vld [vmem:[%s7870 + $0x1d0] sm:$0xff]
        %v7930 = vld [vmem:[%s7870 + $0x1d8] sm:$0xff]
        %v7931 = vld [vmem:[%s7870 + $0x1e0] sm:$0xff]
        %v7932 = vld [vmem:[%s7870 + $0x1e8] sm:$0xff]
        %v7933 = vld [vmem:[%s7870 + $0x1f0] sm:$0xff]
        %v7934 = vld [vmem:[%s7870 + $0x1f8] sm:$0xff]
        %s7935 = scalar_lea.vmem %s391, 2 [#allocation7]
        %v7936 = vld [vmem:[%s7935] sm:$0x3]
        %v7938 = vlaneseq
        %v7939 = vshrl.u32 %v7938, 7
        %v7940 = vsub.s32 0, %v7939
        %v7941 = vrot.slane %v7936, %v7940
        %v7942 = vlaneseq
        %v7943 = vshrl.u32 %v7942, 7
        %v7944 = vsub.s32 1, %v7943
        %v7945 = vrot.slane %v7936, %v7944
        %v8012 = vunpack.c.l.b16 %v7871
        %v8013 = vunpack.c.h.b16 %v7871
        %v8014 = vunpack.c.l.b16 %v7872
        %v8015 = vunpack.c.h.b16 %v7872
        %v8016 = vunpack.c.l.b16 %v7873
        %v8017 = vunpack.c.h.b16 %v7873
        %v8018 = vunpack.c.l.b16 %v7874
        %v8019 = vunpack.c.h.b16 %v7874
        %v8020 = vunpack.c.l.b16 %v7875
        %v8021 = vunpack.c.h.b16 %v7875
        %v8022 = vunpack.c.l.b16 %v7876
        %v8023 = vunpack.c.h.b16 %v7876
        %v8024 = vunpack.c.l.b16 %v7877
        %v8025 = vunpack.c.h.b16 %v7877
        %v8026 = vunpack.c.l.b16 %v7878
        %v8027 = vunpack.c.h.b16 %v7878
        %v8028 = vunpack.c.l.b16 %v7879
        %v8029 = vunpack.c.h.b16 %v7879
        %v8030 = vunpack.c.l.b16 %v7880
        %v8031 = vunpack.c.h.b16 %v7880
        %v8032 = vunpack.c.l.b16 %v7881
        %v8033 = vunpack.c.h.b16 %v7881
        %v8034 = vunpack.c.l.b16 %v7882
        %v8035 = vunpack.c.h.b16 %v7882
        %v8036 = vunpack.c.l.b16 %v7883
        %v8037 = vunpack.c.h.b16 %v7883
        %v8038 = vunpack.c.l.b16 %v7884
        %v8039 = vunpack.c.h.b16 %v7884
        %v8040 = vunpack.c.l.b16 %v7885
        %v8041 = vunpack.c.h.b16 %v7885
        %v8042 = vunpack.c.l.b16 %v7886
        %v8043 = vunpack.c.h.b16 %v7886
        %v8044 = vunpack.c.l.b16 %v7887
        %v8045 = vunpack.c.h.b16 %v7887
        %v8046 = vunpack.c.l.b16 %v7888
        %v8047 = vunpack.c.h.b16 %v7888
        %v8048 = vunpack.c.l.b16 %v7889
        %v8049 = vunpack.c.h.b16 %v7889
        %v8050 = vunpack.c.l.b16 %v7890
        %v8051 = vunpack.c.h.b16 %v7890
        %v8052 = vunpack.c.l.b16 %v7891
        %v8053 = vunpack.c.h.b16 %v7891
        %v8054 = vunpack.c.l.b16 %v7892
        %v8055 = vunpack.c.h.b16 %v7892
        %v8056 = vunpack.c.l.b16 %v7893
        %v8057 = vunpack.c.h.b16 %v7893
        %v8058 = vunpack.c.l.b16 %v7894
        %v8059 = vunpack.c.h.b16 %v7894
        %v8060 = vunpack.c.l.b16 %v7895
        %v8061 = vunpack.c.h.b16 %v7895
        %v8062 = vunpack.c.l.b16 %v7896
        %v8063 = vunpack.c.h.b16 %v7896
        %v8064 = vunpack.c.l.b16 %v7897
        %v8065 = vunpack.c.h.b16 %v7897
        %v8066 = vunpack.c.l.b16 %v7898
        %v8067 = vunpack.c.h.b16 %v7898
        %v8068 = vunpack.c.l.b16 %v7899
        %v8069 = vunpack.c.h.b16 %v7899
        %v8070 = vunpack.c.l.b16 %v7900
        %v8071 = vunpack.c.h.b16 %v7900
        %v8072 = vunpack.c.l.b16 %v7901
        %v8073 = vunpack.c.h.b16 %v7901
        %v8074 = vunpack.c.l.b16 %v7902
        %v8075 = vunpack.c.h.b16 %v7902
        %v8076 = vunpack.c.l.b16 %v7903
        %v8077 = vunpack.c.h.b16 %v7903
        %v8078 = vunpack.c.l.b16 %v7904
        %v8079 = vunpack.c.h.b16 %v7904
        %v8080 = vunpack.c.l.b16 %v7905
        %v8081 = vunpack.c.h.b16 %v7905
        %v8082 = vunpack.c.l.b16 %v7906
        %v8083 = vunpack.c.h.b16 %v7906
        %v8084 = vunpack.c.l.b16 %v7907
        %v8085 = vunpack.c.h.b16 %v7907
        %v8086 = vunpack.c.l.b16 %v7908
        %v8087 = vunpack.c.h.b16 %v7908
        %v8088 = vunpack.c.l.b16 %v7909
        %v8089 = vunpack.c.h.b16 %v7909
        %v8090 = vunpack.c.l.b16 %v7910
        %v8091 = vunpack.c.h.b16 %v7910
        %v8092 = vunpack.c.l.b16 %v7911
        %v8093 = vunpack.c.h.b16 %v7911
        %v8094 = vunpack.c.l.b16 %v7912
        %v8095 = vunpack.c.h.b16 %v7912
        %v8096 = vunpack.c.l.b16 %v7913
        %v8097 = vunpack.c.h.b16 %v7913
        %v8098 = vunpack.c.l.b16 %v7914
        %v8099 = vunpack.c.h.b16 %v7914
        %v8100 = vunpack.c.l.b16 %v7915
        %v8101 = vunpack.c.h.b16 %v7915
        %v8102 = vunpack.c.l.b16 %v7916
        %v8103 = vunpack.c.h.b16 %v7916
        %v8104 = vunpack.c.l.b16 %v7917
        %v8105 = vunpack.c.h.b16 %v7917
        %v8106 = vunpack.c.l.b16 %v7918
        %v8107 = vunpack.c.h.b16 %v7918
        %v8108 = vunpack.c.l.b16 %v7919
        %v8109 = vunpack.c.h.b16 %v7919
        %v8110 = vunpack.c.l.b16 %v7920
        %v8111 = vunpack.c.h.b16 %v7920
        %v8112 = vunpack.c.l.b16 %v7921
        %v8113 = vunpack.c.h.b16 %v7921
        %v8114 = vunpack.c.l.b16 %v7922
        %v8115 = vunpack.c.h.b16 %v7922
        %v8116 = vunpack.c.l.b16 %v7923
        %v8117 = vunpack.c.h.b16 %v7923
        %v8118 = vunpack.c.l.b16 %v7924
        %v8119 = vunpack.c.h.b16 %v7924
        %v8120 = vunpack.c.l.b16 %v7925
        %v8121 = vunpack.c.h.b16 %v7925
        %v8122 = vunpack.c.l.b16 %v7926
        %v8123 = vunpack.c.h.b16 %v7926
        %v8124 = vunpack.c.l.b16 %v7927
        %v8125 = vunpack.c.h.b16 %v7927
        %v8126 = vunpack.c.l.b16 %v7928
        %v8127 = vunpack.c.h.b16 %v7928
        %v8128 = vunpack.c.l.b16 %v7929
        %v8129 = vunpack.c.h.b16 %v7929
        %v8130 = vunpack.c.l.b16 %v7930
        %v8131 = vunpack.c.h.b16 %v7930
        %v8132 = vunpack.c.l.b16 %v7931
        %v8133 = vunpack.c.h.b16 %v7931
        %v8134 = vunpack.c.l.b16 %v7932
        %v8135 = vunpack.c.h.b16 %v7932
        %v8136 = vunpack.c.l.b16 %v7933
        %v8137 = vunpack.c.h.b16 %v7933
        %v8138 = vunpack.c.l.b16 %v7934
        %v8139 = vunpack.c.h.b16 %v7934
        %v8140 = vpack.c.b16 %v8014, %v8012
        %v8141 = vpack.c.b16 %v8015, %v8013
        %v8142 = vpack.c.b16 %v8018, %v8016
        %v8143 = vpack.c.b16 %v8019, %v8017
        %v8144 = vpack.c.b16 %v8022, %v8020
        %v8145 = vpack.c.b16 %v8023, %v8021
        %v8146 = vpack.c.b16 %v8026, %v8024
        %v8147 = vpack.c.b16 %v8027, %v8025
        %v8148 = vpack.c.b16 %v8030, %v8028
        %v8149 = vpack.c.b16 %v8031, %v8029
        %v8150 = vpack.c.b16 %v8034, %v8032
        %v8151 = vpack.c.b16 %v8035, %v8033
        %v8152 = vpack.c.b16 %v8038, %v8036
        %v8153 = vpack.c.b16 %v8039, %v8037
        %v8154 = vpack.c.b16 %v8042, %v8040
        %v8155 = vpack.c.b16 %v8043, %v8041
        %v8156 = vpack.c.b16 %v8046, %v8044
        %v8157 = vpack.c.b16 %v8047, %v8045
        %v8158 = vpack.c.b16 %v8050, %v8048
        %v8159 = vpack.c.b16 %v8051, %v8049
        %v8160 = vpack.c.b16 %v8054, %v8052
        %v8161 = vpack.c.b16 %v8055, %v8053
        %v8162 = vpack.c.b16 %v8058, %v8056
        %v8163 = vpack.c.b16 %v8059, %v8057
        %v8164 = vpack.c.b16 %v8062, %v8060
        %v8165 = vpack.c.b16 %v8063, %v8061
        %v8166 = vpack.c.b16 %v8066, %v8064
        %v8167 = vpack.c.b16 %v8067, %v8065
        %v8168 = vpack.c.b16 %v8070, %v8068
        %v8169 = vpack.c.b16 %v8071, %v8069
        %v8170 = vpack.c.b16 %v8074, %v8072
        %v8171 = vpack.c.b16 %v8075, %v8073
        %v8172 = vpack.c.b16 %v8078, %v8076
        %v8173 = vpack.c.b16 %v8079, %v8077
        %v8174 = vpack.c.b16 %v8082, %v8080
        %v8175 = vpack.c.b16 %v8083, %v8081
        %v8176 = vpack.c.b16 %v8086, %v8084
        %v8177 = vpack.c.b16 %v8087, %v8085
        %v8178 = vpack.c.b16 %v8090, %v8088
        %v8179 = vpack.c.b16 %v8091, %v8089
        %v8180 = vpack.c.b16 %v8094, %v8092
        %v8181 = vpack.c.b16 %v8095, %v8093
        %v8182 = vpack.c.b16 %v8098, %v8096
        %v8183 = vpack.c.b16 %v8099, %v8097
        %v8184 = vpack.c.b16 %v8102, %v8100
        %v8185 = vpack.c.b16 %v8103, %v8101
        %v8186 = vpack.c.b16 %v8106, %v8104
        %v8187 = vpack.c.b16 %v8107, %v8105
        %v8188 = vpack.c.b16 %v8110, %v8108
        %v8189 = vpack.c.b16 %v8111, %v8109
        %v8190 = vpack.c.b16 %v8114, %v8112
        %v8191 = vpack.c.b16 %v8115, %v8113
        %v8192 = vpack.c.b16 %v8118, %v8116
        %v8193 = vpack.c.b16 %v8119, %v8117
        %v8194 = vpack.c.b16 %v8122, %v8120
        %v8195 = vpack.c.b16 %v8123, %v8121
        %v8196 = vpack.c.b16 %v8126, %v8124
        %v8197 = vpack.c.b16 %v8127, %v8125
        %v8198 = vpack.c.b16 %v8130, %v8128
        %v8199 = vpack.c.b16 %v8131, %v8129
        %v8200 = vpack.c.b16 %v8134, %v8132
        %v8201 = vpack.c.b16 %v8135, %v8133
        %v8202 = vpack.c.b16 %v8138, %v8136
        %v8203 = vpack.c.b16 %v8139, %v8137
        %8268 = vmatprep.subr.bf16.mxu0 %v8155
        %8269 = vmatpush1.bf16.msra.mxu0 %v8154
        %8270 = vmatprep.subr.bf16.mxu0 %v8153
        %8271 = vmatpush1.bf16.msra.mxu0 %v8152
        %8272 = vmatprep.subr.bf16.mxu0 %v8151
        %8273 = vmatpush1.bf16.msra.mxu0 %v8150
        %8274 = vmatprep.subr.bf16.mxu0 %v8149
        %8275 = vmatpush1.bf16.msra.mxu0 %v8148
        %8276 = vmatprep.subr.bf16.mxu0 %v8147
        %8277 = vmatpush1.bf16.msra.mxu0 %v8146
        %8278 = vmatprep.subr.bf16.mxu0 %v8145
        %8279 = vmatpush1.bf16.msra.mxu0 %v8144
        %8280 = vmatprep.subr.bf16.mxu0 %v8143
        %8281 = vmatpush1.bf16.msra.mxu0 %v8142
        %8282 = vmatprep.subr.bf16.mxu0 %v8141
        %8283 = vmatpush1.bf16.msra.mxu0 %v8140
        %8284 = vmatprep.subr.bf16.mxu0 %v8171
        %8285 = vmatpush2.bf16.msra.mxu0 %v8170
        %8286 = vmatprep.subr.bf16.mxu0 %v8169
        %8287 = vmatpush2.bf16.msra.mxu0 %v8168
        %8288 = vmatprep.subr.bf16.mxu0 %v8167
        %8289 = vmatpush2.bf16.msra.mxu0 %v8166
        %8290 = vmatprep.subr.bf16.mxu0 %v8165
        %8291 = vmatpush2.bf16.msra.mxu0 %v8164
        %8292 = vmatprep.subr.bf16.mxu0 %v8163
        %8293 = vmatpush2.bf16.msra.mxu0 %v8162
        %8294 = vmatprep.subr.bf16.mxu0 %v8161
        %8295 = vmatpush2.bf16.msra.mxu0 %v8160
        %8296 = vmatprep.subr.bf16.mxu0 %v8159
        %8297 = vmatpush2.bf16.msra.mxu0 %v8158
        %8298 = vmatprep.subr.bf16.mxu0 %v8157
        %8299 = vmatpush2.bf16.msra.mxu0 %v8156
        %8300 = vmatprep.mubr.bf16.mxu0 %v7867
        %8301 = vmatmul.mubr.bf16.gmra.mxu0 %v7866
        %v8302 = vpop.f32.mrf.mxu0
        %v8303 = vadd.f32 %v7941, %v8302
        %v8304 = vpop.f32.mrf.mxu0
        %v8305 = vadd.f32 %v7945, %v8304
        %v8306 = vpop.f32.mrf.mxu0
        %v8307 = vpop.f32.mrf.mxu0
        %8308 = vdwg.mxu0
        %8309 = vmatprep.subr.bf16.mxu0 %v8187
        %8310 = vmatpush1.bf16.msra.mxu0 %v8186
        %8311 = vmatprep.subr.bf16.mxu0 %v8185
        %8312 = vmatpush1.bf16.msra.mxu0 %v8184
        %8313 = vmatprep.subr.bf16.mxu0 %v8183
        %8314 = vmatpush1.bf16.msra.mxu0 %v8182
        %8315 = vmatprep.subr.bf16.mxu0 %v8181
        %8316 = vmatpush1.bf16.msra.mxu0 %v8180
        %8317 = vmatprep.subr.bf16.mxu0 %v8179
        %8318 = vmatpush1.bf16.msra.mxu0 %v8178
        %8319 = vmatprep.subr.bf16.mxu0 %v8177
        %8320 = vmatpush1.bf16.msra.mxu0 %v8176
        %8321 = vmatprep.subr.bf16.mxu0 %v8175
        %8322 = vmatpush1.bf16.msra.mxu0 %v8174
        %8323 = vmatprep.subr.bf16.mxu0 %v8173
        %8324 = vmatpush1.bf16.msra.mxu0 %v8172
        %8325 = vmatprep.subr.bf16.mxu0 %v8203
        %8326 = vmatpush2.bf16.msra.mxu0 %v8202
        %8327 = vmatprep.subr.bf16.mxu0 %v8201
        %8328 = vmatpush2.bf16.msra.mxu0 %v8200
        %8329 = vmatprep.subr.bf16.mxu0 %v8199
        %8330 = vmatpush2.bf16.msra.mxu0 %v8198
        %8331 = vmatprep.subr.bf16.mxu0 %v8197
        %8332 = vmatpush2.bf16.msra.mxu0 %v8196
        %8333 = vmatprep.subr.bf16.mxu0 %v8195
        %8334 = vmatpush2.bf16.msra.mxu0 %v8194
        %8335 = vmatprep.subr.bf16.mxu0 %v8193
        %8336 = vmatpush2.bf16.msra.mxu0 %v8192
        %8337 = vmatprep.subr.bf16.mxu0 %v8191
        %8338 = vmatpush2.bf16.msra.mxu0 %v8190
        %8339 = vmatprep.subr.bf16.mxu0 %v8189
        %8340 = vmatpush2.bf16.msra.mxu0 %v8188
        %8341 = vmatprep.mubr.bf16.mxu0 %v7869
        %8342 = vmatmul.mubr.bf16.gmra.mxu0 %v7868
        %v8343 = vpop.f32.mrf.mxu0
        %v8344 = vadd.f32 %v8303, %v8343
        %v8345 = vpop.f32.mrf.mxu0
        %v8346 = vadd.f32 %v8305, %v8345
        %v8347 = vpop.f32.mrf.mxu0
        %v8348 = vpop.f32.mrf.mxu0
        %8349 = vdwg.mxu0
        %v8350 = vxor.u32 %v8344, 2147483648
        %v8351 = vxor.u32 %v8346, 2147483648
        %v8352 = vmul.f32 %v8350, 1.442695
        %v8353 = vpow.pop %v8352
        %v8354 = vmul.f32 %v8351, 1.442695
        %v8355 = vpow.pop %v8354
        %v8356 = vadd.f32 %v8353, 1.0
        %v8357 = vadd.f32 %v8355, 1.0
        %v8358 = vrcp.pop %v8356
        %v8359 = vmul.f32 1.0, %v8358
        %v8360 = vrcp.pop %v8357
        %v8361 = vmul.f32 1.0, %v8360
        %v8362 = vmul.f32 %v8344, %v8359
        %v8363 = vmul.f32 %v8346, %v8361
        %v8364 = vpack.c.bf16 %v8362, %v8362
        %v8365 = vpack.c.bf16 %v8363, %v8363
        %s8366 = scalar_lea.vmem %s456, 128
        %v8367 = vld [vmem:[%s8366] sm:$0xf]
        %v8368 = vld [vmem:[%s8366 + $0x4] sm:$0xf]
        %v8369 = vld [vmem:[%s8366 + $0x8] sm:$0xf]
        %v8370 = vld [vmem:[%s8366 + $0xc] sm:$0xf]
        %v8371 = vld [vmem:[%s8366 + $0x10] sm:$0xf]
        %v8372 = vld [vmem:[%s8366 + $0x14] sm:$0xf]
        %v8373 = vld [vmem:[%s8366 + $0x18] sm:$0xf]
        %v8374 = vld [vmem:[%s8366 + $0x1c] sm:$0xf]
        %v8375 = vld [vmem:[%s8366 + $0x20] sm:$0xf]
        %v8376 = vld [vmem:[%s8366 + $0x24] sm:$0xf]
        %v8377 = vld [vmem:[%s8366 + $0x28] sm:$0xf]
        %v8378 = vld [vmem:[%s8366 + $0x2c] sm:$0xf]
        %v8379 = vld [vmem:[%s8366 + $0x30] sm:$0xf]
        %v8380 = vld [vmem:[%s8366 + $0x34] sm:$0xf]
        %v8381 = vld [vmem:[%s8366 + $0x38] sm:$0xf]
        %v8382 = vld [vmem:[%s8366 + $0x3c] sm:$0xf]
        %v8383 = vld [vmem:[%s8366 + $0x40] sm:$0xf]
        %v8384 = vld [vmem:[%s8366 + $0x44] sm:$0xf]
        %v8385 = vld [vmem:[%s8366 + $0x48] sm:$0xf]
        %v8386 = vld [vmem:[%s8366 + $0x4c] sm:$0xf]
        %v8387 = vld [vmem:[%s8366 + $0x50] sm:$0xf]
        %v8388 = vld [vmem:[%s8366 + $0x54] sm:$0xf]
        %v8389 = vld [vmem:[%s8366 + $0x58] sm:$0xf]
        %v8390 = vld [vmem:[%s8366 + $0x5c] sm:$0xf]
        %v8391 = vld [vmem:[%s8366 + $0x60] sm:$0xf]
        %v8392 = vld [vmem:[%s8366 + $0x64] sm:$0xf]
        %v8393 = vld [vmem:[%s8366 + $0x68] sm:$0xf]
        %v8394 = vld [vmem:[%s8366 + $0x6c] sm:$0xf]
        %v8395 = vld [vmem:[%s8366 + $0x70] sm:$0xf]
        %v8396 = vld [vmem:[%s8366 + $0x74] sm:$0xf]
        %v8397 = vld [vmem:[%s8366 + $0x78] sm:$0xf]
        %v8398 = vld [vmem:[%s8366 + $0x7c] sm:$0xf]
        %s8399 = scalar_lea.vmem %s461, 1
        %v8400 = vld [vmem:[%s8399] sm:$0x1]
        %v8402 = vlaneseq
        %v8403 = vshrl.u32 %v8402, 7
        %v8404 = vsub.s32 0, %v8403
        %v8405 = vrot.slane %v8400, %v8404
        %v8439 = vunpack.c.l.b16 %v8367
        %v8440 = vunpack.c.l.b16 %v8368
        %v8441 = vunpack.c.l.b16 %v8369
        %v8442 = vunpack.c.l.b16 %v8370
        %v8443 = vunpack.c.l.b16 %v8371
        %v8444 = vunpack.c.l.b16 %v8372
        %v8445 = vunpack.c.l.b16 %v8373
        %v8446 = vunpack.c.l.b16 %v8374
        %v8447 = vunpack.c.l.b16 %v8375
        %v8448 = vunpack.c.l.b16 %v8376
        %v8449 = vunpack.c.l.b16 %v8377
        %v8450 = vunpack.c.l.b16 %v8378
        %v8451 = vunpack.c.l.b16 %v8379
        %v8452 = vunpack.c.l.b16 %v8380
        %v8453 = vunpack.c.l.b16 %v8381
        %v8454 = vunpack.c.l.b16 %v8382
        %v8455 = vunpack.c.l.b16 %v8383
        %v8456 = vunpack.c.l.b16 %v8384
        %v8457 = vunpack.c.l.b16 %v8385
        %v8458 = vunpack.c.l.b16 %v8386
        %v8459 = vunpack.c.l.b16 %v8387
        %v8460 = vunpack.c.l.b16 %v8388
        %v8461 = vunpack.c.l.b16 %v8389
        %v8462 = vunpack.c.l.b16 %v8390
        %v8463 = vunpack.c.l.b16 %v8391
        %v8464 = vunpack.c.l.b16 %v8392
        %v8465 = vunpack.c.l.b16 %v8393
        %v8466 = vunpack.c.l.b16 %v8394
        %v8467 = vunpack.c.l.b16 %v8395
        %v8468 = vunpack.c.l.b16 %v8396
        %v8469 = vunpack.c.l.b16 %v8397
        %v8470 = vunpack.c.l.b16 %v8398
        %v8471 = vpack.c.b16 %v8440, %v8439
        %v8472 = vpack.c.b16 %v8442, %v8441
        %v8473 = vpack.c.b16 %v8444, %v8443
        %v8474 = vpack.c.b16 %v8446, %v8445
        %v8475 = vpack.c.b16 %v8448, %v8447
        %v8476 = vpack.c.b16 %v8450, %v8449
        %v8477 = vpack.c.b16 %v8452, %v8451
        %v8478 = vpack.c.b16 %v8454, %v8453
        %v8479 = vpack.c.b16 %v8456, %v8455
        %v8480 = vpack.c.b16 %v8458, %v8457
        %v8481 = vpack.c.b16 %v8460, %v8459
        %v8482 = vpack.c.b16 %v8462, %v8461
        %v8483 = vpack.c.b16 %v8464, %v8463
        %v8484 = vpack.c.b16 %v8466, %v8465
        %v8485 = vpack.c.b16 %v8468, %v8467
        %v8486 = vpack.c.b16 %v8470, %v8469
        %8503 = vmatprep.subr.bf16.mxu0 0
        %8504 = vmatpush1.bf16.msra.mxu0 %v8478
        %8505 = vmatprep.subr.bf16.mxu0 0
        %8506 = vmatpush1.bf16.msra.mxu0 %v8477
        %8507 = vmatprep.subr.bf16.mxu0 0
        %8508 = vmatpush1.bf16.msra.mxu0 %v8476
        %8509 = vmatprep.subr.bf16.mxu0 0
        %8510 = vmatpush1.bf16.msra.mxu0 %v8475
        %8511 = vmatprep.subr.bf16.mxu0 0
        %8512 = vmatpush1.bf16.msra.mxu0 %v8474
        %8513 = vmatprep.subr.bf16.mxu0 0
        %8514 = vmatpush1.bf16.msra.mxu0 %v8473
        %8515 = vmatprep.subr.bf16.mxu0 0
        %8516 = vmatpush1.bf16.msra.mxu0 %v8472
        %8517 = vmatprep.subr.bf16.mxu0 0
        %8518 = vmatpush1.bf16.msra.mxu0 %v8471
        %8519 = vmatprep.subr.bf16.mxu0 0
        %8520 = vmatpush2.bf16.msra.mxu0 %v8486
        %8521 = vmatprep.subr.bf16.mxu0 0
        %8522 = vmatpush2.bf16.msra.mxu0 %v8485
        %8523 = vmatprep.subr.bf16.mxu0 0
        %8524 = vmatpush2.bf16.msra.mxu0 %v8484
        %8525 = vmatprep.subr.bf16.mxu0 0
        %8526 = vmatpush2.bf16.msra.mxu0 %v8483
        %8527 = vmatprep.subr.bf16.mxu0 0
        %8528 = vmatpush2.bf16.msra.mxu0 %v8482
        %8529 = vmatprep.subr.bf16.mxu0 0
        %8530 = vmatpush2.bf16.msra.mxu0 %v8481
        %8531 = vmatprep.subr.bf16.mxu0 0
        %8532 = vmatpush2.bf16.msra.mxu0 %v8480
        %8533 = vmatprep.subr.bf16.mxu0 0
        %8534 = vmatpush2.bf16.msra.mxu0 %v8479
        %8535 = vmatprep.mubr.bf16.mxu0 %v8365
        %8536 = vmatmul.mubr.bf16.gmra.mxu0 %v8364
        %v8537 = vpop.f32.mrf.mxu0
        %v8538 = vadd.f32 %v8405, %v8537
        %v8539 = vpop.f32.mrf.mxu0
        %v8540 = vpop.f32.mrf.mxu0
        %v8541 = vpop.f32.mrf.mxu0
        %8542 = vdwg.mxu0
        %s8543 = scalar_lea.vmem %s467, 2
        %8544 = vst.msk [vmem:[%s8543] sm:$0x3] %vm4550, %v8538
        %s8545 = smul.u32 2, %s27
        %p8546 = scmp.lt.s32.totalorder %s8545, 7
        %s8547 = scalar_select %p8546, %s8545, 7
        %s8548 = smul.addr %s8547, 2
        %s8549 = scalar_lea.vmem %s7, %s8548
        // Predicated region
        $region65: #{model_forward.3} parent=47 // pred_check
          %p8550 = pneg %p222
        $region66: #{model_forward.3} parent=47 // pred_check_branch
          %8552 = sbr.rel (%p8550) target = $region68
        $region67: #{model_forward.3} parent=47 // pred_region
          %s8553 = smul.u32 2, %s27
        $region68: #{model_forward.3} parent=47 // pred_fallthru
          _
      $region48: #{model_forward.3} parent=5 // pred_fallthru
        _
      %p8554 = scmp.le.s32.totalorder 2, %s22
      // Predicated region
      $region69: #{model_forward.3} parent=5 // pred_check
        %p8555 = pneg %p8554
      $region70: #{model_forward.3} parent=5 // pred_check_branch
        %8557 = sbr.rel (%p8555) target = $region72
      $region71: #{model_forward.3} parent=5 // pred_region
        %s8558 = ssub.s32 %s22, 2
        // Predicated region
        $region73: #{model_forward.3} parent=71 // pred_check
          %p8559 = pneg %p228
        $region74: #{model_forward.3} parent=71 // pred_check_branch
          %8561 = sbr.rel (%p8559) target = $region76
        $region75: #{model_forward.3} parent=71 // pred_region
          %s8562 = smul.u32 2, %s28
          %p8563 = scmp.lt.s32.totalorder %s8562, 7
          %s8564 = scalar_select %p8563, %s8562, 7
          %s8565 = smul.addr %s8564, 2
          %s8566 = scalar_lea.vmem %s7, %s8565
        $region76: #{model_forward.3} parent=71 // pred_fallthru
          _
      $region72: #{model_forward.3} parent=5 // pred_fallthru
        _
    $region6: #{model_forward.3} parent=1 // loop_footer
      %s26 = sadd.s32 1, %s22
    $region7: #{model_forward.3} parent=1 // loop_footer_branch
      %21 = sbr.rel target = $region3
    $region8: #{model_forward.3} parent=1 // loop_exit
      _
    %8567 = vsyncpa [#allocation3], 1
    %s8568 = scalar_lea.sflag [#allocation3], 1
    %8569 = vsyncpa %s8568, 1
    %8570 = vsyncpa [#allocation5], 1
    %s8571 = scalar_lea.sflag [#allocation5], 1
    %8572 = vsyncpa %s8571, 1
    %8573 = vsyncpa [#allocation8], 1
    %s8574 = scalar_lea.sflag [#allocation8], 1
    %8575 = vsyncpa %s8574, 1

</llo_original>
